<compile_context>
chip_gen: v6e
topology: v6e:2x2x1
jax: 0.10.0
libtpu: 0.0.40
codegen_flags: <defaults>
</compile_context>

<pallas_src>
import functools

import jax
import jax.numpy as jnp
from jax.experimental import pallas as pl
from jax.experimental.pallas import tpu as pltpu

# vgg19_bn config 'E' up to features[:40] (ends with the 4th MaxPool)
VGG19_CFG = [64, 64, "M", 128, 128, "M", 256, 256, 256, 256, "M",
             512, 512, 512, 512, "M"]
BN_EPS = 1e-5


# ----------------------------------------------------------------------------
# Per-generation VMEM budget
# ----------------------------------------------------------------------------
@functools.lru_cache(maxsize=None)
def _vmem_limit_bytes():
    try:
        cap = int(pltpu.get_tpu_info().vmem_capacity_bytes)
    except Exception:
        cap = 64 << 20                      # conservative (v7x-sized) fallback
    return (cap * 3) // 4                   # leave ~25% headroom


def _tile_budget():
    return (_vmem_limit_bytes() * 11) // 20  # ~55% of the limit for tile sizing


def _divisors_desc(n):
    return [d for d in range(n, 0, -1) if n % d == 0]


# ----------------------------------------------------------------------------
# Conv 3x3 (pad=1) + folded BN + ReLU   (flat NHWC, bf16 MXU, f32 accumulate)
# ----------------------------------------------------------------------------
def _conv_kernel(*refs, W, fold, halo):
    """One (Cout-tile, row-tile) block of a 3x3 same-pad conv + shift + ReLU.

    refs (halo variant):    w, shift, xm, xt, xb, o
    refs (no-halo variant): w, shift, xm, o

    w_ref:     (3, 3*Cin, TCO) bf16   BN-scale-folded weights [dh, dw*Cin+ci, co]
    shift_ref: (1, TCO)        f32    beta + (conv_bias - mean) * scale
    xm_ref:    (N, th*W, Cin)  f32    main rows (flat H*W layout)
    xt_ref:    (N, W, Cin)     f32    image row above the tile (clamped)
    xb_ref:    (N, W, Cin)     f32    image row below the tile (clamped)
    o_ref:     (N, th*W, TCO)  f32
    """
    if halo:
        w_ref, shift_ref, xm_ref, xt_ref, xb_ref, o_ref = refs
    else:
        w_ref, shift_ref, xm_ref, o_ref = refs

    N, TM, cin = xm_ref.shape            # TM = th * W
    tco = o_ref.shape[-1]
    R = TM + 2 * W                       # rows of the extended window (flat)

    xm = xm_ref[...]
    if halo:
        r = pl.program_id(1)
        nr = pl.num_programs(1)
        top = xt_ref[...] * jnp.where(r == 0, 0.0, 1.0)        # zero-pad at image edge
        bot = xb_ref[...] * jnp.where(r == nr - 1, 0.0, 1.0)
    else:
        top = jnp.zeros((N, W, cin), xm.dtype)
        bot = top
    xc = jnp.concatenate([top, xm, bot], axis=1)               # (N, R, Cin)

    # Width-shifted variants via XLU roll along the flat row axis; the
    # out-of-image columns (w==0 / w==W-1) are zero-masked with a flat%W iota.
    col = jax.lax.broadcasted_iota(jnp.int32, (R, 1), 0) % W
    xl = jnp.where(col == 0, 0.0, pltpu.roll(xc, 1, axis=1))       # x[.., w-1, ..]
    xr = jnp.where(col == W - 1, 0.0, pltpu.roll(xc, R - 1, axis=1))  # x[.., w+1, ..]

    acc = jnp.zeros((N * TM, tco), jnp.float32)
    if fold:
        # Fold the 3 dw taps into the contraction: K = 3*Cin (good MXU fill
        # for Cin <= 128 on all generations).
        xk = jnp.concatenate([xl, xc, xr], axis=-1)            # (N, R, 3*Cin)
        for dh in range(3):
            a = xk[:, dh * W: dh * W + TM, :].reshape(N * TM, 3 * cin)
            acc = acc + jnp.dot(a.astype(jnp.bfloat16), w_ref[dh],
                                preferred_element_type=jnp.float32)
    else:
        taps = (xl, xc, xr)
        for dh in range(3):
            for dw in range(3):
                a = taps[dw][:, dh * W: dh * W + TM, :].reshape(N * TM, cin)
                wk = w_ref[dh, dw * cin:(dw + 1) * cin, :]
                acc = acc + jnp.dot(a.astype(jnp.bfloat16), wk,
                                    preferred_element_type=jnp.float32)

    y = jnp.maximum(acc + shift_ref[...], 0.0)                 # f32 shift + ReLU
    o_ref[...] = y.reshape(N, TM, tco)


def _conv_vmem_estimate(N, th, W, cin, tco, fold, halo):
    f = 4
    TM = th * W
    R = TM + 2 * W
    x_main = N * TM * cin * f
    x_halo = (2 * N * W * cin * f) if halo else 0
    w_t = 9 * cin * tco * 2                                    # bf16 weights
    sh = tco * f
    o_t = N * TM * tco * f
    ext = N * R * cin * f
    tmp = 3 * ext + (3 * ext if fold else 0)                   # xc/xl/xr (+xk)
    opnd = N * TM * (3 * cin if fold else cin) * 2             # bf16 operand
    acc = N * TM * tco * f
    # inputs / outputs are double-buffered by the pipeline
    return 2 * (x_main + x_halo + o_t + w_t + sh) + tmp + 2 * opnd + acc


def _conv_tiles(N, H, W, cin, cout):
    """Pick (th, tco, fold).  th*W must stay a multiple of 8 (sublane-dense)."""
    fold = cin <= 128
    budget = _tile_budget()
    tcos = [cout] if cout <= 256 else [256, 128]
    for tco in tcos:
        for th in _divisors_desc(H):
            if th != H and (th * W) % 8 != 0:
                continue
            halo = th != H
            if _conv_vmem_estimate(N, th, W, cin, tco, fold, halo) <= budget:
                nco = cout // tco
                # Give dual-TC chips (v7x) >= 2 parallel grid steps when cheap.
                if nco * (H // th) == 1 and H % 2 == 0 and W % 8 == 0:
                    th2 = H // 2
                    if ((th2 * W) % 8 == 0 and
                            _conv_vmem_estimate(N, th2, W, cin, tco, fold, True)
                            <= budget):
                        th = th2
                return th, tco, fold
    return 1, tcos[-1], fold


def conv3x3_bn_relu(x, w_k, shift, *, H, W):
    """x: (N, H*W, Cin) f32; w_k: (3, 3*Cin, Cout) bf16; shift: (1, Cout) f32."""
    N, HW, cin = x.shape
    cout = w_k.shape[-1]
    th, tco, fold = _conv_tiles(N, H, W, cin, cout)
    nco, nr = cout // tco, H // th
    halo = nr > 1

    in_specs = [
        pl.BlockSpec((3, 3 * cin, tco), lambda co, r: (0, 0, co)),
        pl.BlockSpec((1, tco), lambda co, r: (0, co)),
        pl.BlockSpec((N, th * W, cin), lambda co, r: (0, r, 0)),
    ]
    args = [w_k, shift, x]
    if halo:
        # 1-image-row halos: block size W along the flat axis -> index is a row
        in_specs.append(pl.BlockSpec(
            (N, W, cin), lambda co, r: (0, jnp.maximum(r * th - 1, 0), 0)))
        in_specs.append(pl.BlockSpec(
            (N, W, cin), lambda co, r: (0, jnp.minimum(r * th + th, H - 1), 0)))
        args += [x, x]

    flops = 2 * N * H * W * cin * cout * 9
    bytes_acc = (4 * N * H * W * cin * nco + 2 * 9 * cin * cout
                 + 4 * N * H * W * cout + 4 * cout)
    return pl.pallas_call(
        functools.partial(_conv_kernel, W=W, fold=fold, halo=halo),
        out_shape=jax.ShapeDtypeStruct((N, H * W, cout), jnp.float32),
        grid=(nco, nr),
        in_specs=in_specs,
        out_specs=pl.BlockSpec((N, th * W, tco), lambda co, r: (0, r, co)),
        compiler_params=pltpu.CompilerParams(
            dimension_semantics=("parallel", "parallel"),
            vmem_limit_bytes=_vmem_limit_bytes()),
        cost_estimate=pl.CostEstimate(flops=flops, transcendentals=0,
                                      bytes_accessed=bytes_acc),
    )(*args)


# ----------------------------------------------------------------------------
# MaxPool2d(2, 2)   (lane-dense: W-pair folded into lanes by a host reshape)
# ----------------------------------------------------------------------------
def _maxpool_kernel(x_ref, o_ref):
    """x_ref: (N, thp, 2, Wo, 2C); o_ref: (N, thp*Wo, C) flat output."""
    N, thp, _, Wo, twoC = x_ref.shape
    C = twoC // 2
    x = x_ref[...]
    m = jnp.maximum(x[:, :, 0], x[:, :, 1])          # reduce the H window
    p = jnp.maximum(m[..., :C], m[..., C:])          # reduce the W window (lanes)
    o_ref[...] = p.reshape(N, thp * Wo, C)


def _pool_tiles(N, Ho, Wo, C):
    budget = _tile_budget()

    def fits(t):
        in_b = N * t * 2 * Wo * 2 * C * 4
        out_b = N * t * Wo * C * 4
        return 2 * (in_b + out_b) <= budget

    cands = [t for t in _divisors_desc(Ho)
             if (t == Ho or (t * Wo) % 8 == 0) and fits(t)]
    if not cands:
        return 1
    thp = cands[0]
    # >= 2 grid steps so both v7x TensorCores stream HBM
    if Ho // thp == 1 and Ho % 2 == 0:
        t2 = Ho // 2
        if (t2 * Wo) % 8 == 0 and fits(t2):
            thp = t2
    return thp


def maxpool2x2(x, H, W):
    """x: (N, H*W, C) f32 -> (N, (H//2)*(W//2), C)."""
    N, HW, C = x.shape
    Ho, Wo = H // 2, W // 2
    thp = _pool_tiles(N, Ho, Wo, C)
    xr = x.reshape(N, Ho, 2, Wo, 2 * C)              # row-major relabel (XLA side)
    return pl.pallas_call(
        _maxpool_kernel,
        out_shape=jax.ShapeDtypeStruct((N, Ho * Wo, C), jnp.float32),
        grid=(Ho // thp,),
        in_specs=[pl.BlockSpec((N, thp, 2, Wo, 2 * C),
                               lambda r: (0, r, 0, 0, 0))],
        out_specs=pl.BlockSpec((N, thp * Wo, C), lambda r: (0, r, 0)),
        compiler_params=pltpu.CompilerParams(
            dimension_semantics=("parallel",),
            vmem_limit_bytes=_vmem_limit_bytes()),
        cost_estimate=pl.CostEstimate(
            flops=3 * N * Ho * Wo * C, transcendentals=0,
            bytes_accessed=4 * (N * H * W * C + N * Ho * Wo * C)),
    )(xr)


# ----------------------------------------------------------------------------
# Deterministic parameter init (same tensor shapes as torchvision vgg19_bn)
# ----------------------------------------------------------------------------
def init_params(key):
    params = []
    cin = 3
    for v in VGG19_CFG:
        if v == "M":
            params.append(("M", None))
            continue
        cout = v
        key, k_w, k_b, k_g, k_be, k_m, k_v = jax.random.split(key, 7)
        w = jax.random.normal(k_w, (cout, cin, 3, 3), jnp.float32) * \
            jnp.sqrt(2.0 / (9.0 * cin))
        b = 0.01 * jax.random.normal(k_b, (cout,), jnp.float32)
        gamma = 1.0 + 0.1 * jax.random.normal(k_g, (cout,), jnp.float32)
        beta = 0.1 * jax.random.normal(k_be, (cout,), jnp.float32)
        mean = 0.1 * jax.random.normal(k_m, (cout,), jnp.float32)
        var = jnp.abs(jax.random.normal(k_v, (cout,), jnp.float32)) + 0.5
        params.append(("C", (w, b, gamma, beta, mean, var)))
        cin = cout
    return params


# ----------------------------------------------------------------------------
# VGG19 forward (mirrors the PyTorch module's forward loop)
# ----------------------------------------------------------------------------
class VGG19:
    def __init__(self, raw_params):
        self.layers = []
        for kind, p in raw_params:
            if kind == "M":
                self.layers.append(("M", None))
                continue
            w, b, gamma, beta, mean, var = p
            cout, cin = int(w.shape[0]), int(w.shape[1])
            s = gamma / jnp.sqrt(var + BN_EPS)
            # fold BN scale into the weights (then cast to bf16 for the MXU);
            # BN shift (+ conv bias) stays f32 for the epilogue.
            w_hwio = jnp.transpose(w, (2, 3, 1, 0)) * s          # OIHW -> HWIO, scaled
            w_k = w_hwio.reshape(3, 3 * cin, cout).astype(jnp.bfloat16)
            shift = (beta + (b - mean) * s).reshape(1, cout).astype(jnp.float32)
            self.layers.append(("C", (w_k, shift, cin, cout)))

    def __call__(self, x_nchw):
        N = int(x_nchw.shape[0])
        H, W = int(x_nchw.shape[2]), int(x_nchw.shape[3])
        x = jnp.transpose(x_nchw, (0, 2, 3, 1)).astype(jnp.float32)   # NCHW -> NHWC
        x = x.reshape(N, H * W, x.shape[-1])                          # flat NHWC
        feats, sizes = [], []
        n_layers = len(self.layers)
        for idx, (kind, p) in enumerate(self.layers):
            if kind == "M":
                # torch forward: record x *before* the pool, then pool.
                feats.append(jnp.transpose(x.reshape(N, H, W, -1), (0, 3, 1, 2)))
                sizes.append((H, W))
                if idx != n_layers - 1:
                    # output of the final MaxPool (features[39]) is never returned
                    x = maxpool2x2(x, H, W)
                    H, W = H // 2, W // 2
            else:
                w_k, shift, cin, cout = p
                x = conv3x3_bn_relu(x, w_k, shift, H=H, W=W)
        return feats, sizes


# ----------------------------------------------------------------------------
# Pure-JAX (XLA) reference with the same folded-BN / bf16-MXU math
# ----------------------------------------------------------------------------
def reference_forward(raw_params, x_nchw):
    x = jnp.transpose(x_nchw, (0, 2, 3, 1)).astype(jnp.float32)
    feats, sizes = [], []
    n = len(raw_params)
    for idx, (kind, p) in enumerate(raw_params):
        if kind == "M":
            feats.append(jnp.transpose(x, (0, 3, 1, 2)))
            sizes.append((x.shape[1], x.shape[2]))
            if idx != n - 1:
                x = jax.lax.reduce_window(x, -jnp.inf, jax.lax.max,
                                          (1, 2, 2, 1), (1, 2, 2, 1), "VALID")
        else:
            w, b, gamma, beta, mean, var = p
            s = gamma / jnp.sqrt(var + BN_EPS)
            w_hwio = (jnp.transpose(w, (2, 3, 1, 0)) * s).astype(jnp.bfloat16)
            y = jax.lax.conv_general_dilated(
                x.astype(jnp.bfloat16), w_hwio, (1, 1), "SAME",
                dimension_numbers=("NHWC", "HWIO", "NHWC"),
                preferred_element_type=jnp.float32)
            shift = beta + (b - mean) * s
            x = jnp.maximum(y + shift, 0.0)
    return feats, sizes


# ----------------------------------------------------------------------------
if __name__ == "__main__":
    key = jax.random.PRNGKey(0)
    k_x, k_p = jax.random.split(key)

    # Small input consistent with the module: NCHW, 3 input channels.
    x = jax.random.normal(k_x, (2, 3, 32, 32), jnp.float32)

    raw = init_params(k_p)
    model = VGG19(raw)
    feats, sizes = model(x)
    feats = [jax.block_until_ready(f) for f in feats]

    expected_shapes = [(2, 64, 32, 32), (2, 128, 16, 16),
                       (2, 256, 8, 8), (2, 512, 4, 4)]
    expected_sizes = [(32, 32), (16, 16), (8, 8), (4, 4)]
    assert [tuple(f.shape) for f in feats] == expected_shapes, \
        [tuple(f.shape) for f in feats]
    assert list(sizes) == expected_sizes, sizes
    assert all(bool(jnp.isfinite(f).all()) for f in feats)

    # numerical check against a bf16-MXU-matched pure-JAX reference
    # (both sides round matmul operands to bf16, accumulate in f32, so the
    # remaining difference is accumulation order -> tight tolerances).
    ref_feats, ref_sizes = reference_forward(raw, x)
    assert list(ref_sizes) == expected_sizes
    tols = [0.01, 0.02, 0.03, 0.04]
    for got, ref, tol in zip(feats, ref_feats, tols):
        err = float(jnp.max(jnp.abs(got - ref)))
        scale = float(jnp.max(jnp.abs(ref))) + 1e-6
        assert err / scale < tol, (err, scale, tol)

    print("KERNEL_OK")
</pallas_src>

<mosaic_0001>
module attributes {stable_mosaic.version = 11 : i64} {
  func.func @_conv_kernel(%arg0: i32, %arg1: i32, %arg2: memref<3x9x64xbf16, #tpu.memory_space<vmem>>, %arg3: memref<1x64xf32, #tpu.memory_space<vmem>>, %arg4: memref<2x512x3xf32, #tpu.memory_space<vmem>>, %arg5: memref<2x32x3xf32, #tpu.memory_space<vmem>>, %arg6: memref<2x32x3xf32, #tpu.memory_space<vmem>>, %arg7: memref<2x512x64xf32, #tpu.memory_space<vmem>>) attributes {dimension_semantics = [#tpu.dimension_semantics<parallel>, #tpu.dimension_semantics<parallel>], iteration_bounds = array<i64: 1, 2>, scalar_prefetch = 0 : i64, scratch_operands = 0 : i64, tpu.core_type = #tpu.core_type<tc>, window_params = [{transform_indices = @transform_0, window_bounds = array<i64: 3, 9, 64>}, {transform_indices = @transform_1, window_bounds = array<i64: 1, 64>}, {transform_indices = @transform_2, window_bounds = array<i64: 2, 512, 3>}, {transform_indices = @transform_3, window_bounds = array<i64: 2, 32, 3>}, {transform_indices = @transform_4, window_bounds = array<i64: 2, 32, 3>}, {transform_indices = @transform_5, window_bounds = array<i64: 2, 512, 64>}]} {
    %c0 = arith.constant 0 : index
    %c0_0 = arith.constant 0 : index
    %c0_1 = arith.constant 0 : index
    %0 = vector.load %arg4[%c0, %c0_0, %c0_1] : memref<2x512x3xf32, #tpu.memory_space<vmem>>, vector<2x512x3xf32>
    %c0_2 = arith.constant 0 : index
    %c0_3 = arith.constant 0 : index
    %c0_4 = arith.constant 0 : index
    %1 = vector.load %arg5[%c0_2, %c0_3, %c0_4] : memref<2x32x3xf32, #tpu.memory_space<vmem>>, vector<2x32x3xf32>
    %c0_i32 = arith.constant 0 : i32
    %2 = arith.cmpi eq, %arg1, %c0_i32 : i32
    %cst = arith.constant 0.000000e+00 : f32
    %cst_5 = arith.constant 1.000000e+00 : f32
    %3 = arith.select %2, %cst, %cst_5 : f32
    %4 = vector.broadcast %3 : f32 to vector<2x32x3xf32>
    %5 = arith.mulf %1, %4 : vector<2x32x3xf32>
    %c0_6 = arith.constant 0 : index
    %c0_7 = arith.constant 0 : index
    %c0_8 = arith.constant 0 : index
    %6 = vector.load %arg6[%c0_6, %c0_7, %c0_8] : memref<2x32x3xf32, #tpu.memory_space<vmem>>, vector<2x32x3xf32>
    %c1_i32 = arith.constant 1 : i32
    %7 = arith.cmpi eq, %arg1, %c1_i32 : i32
    %cst_9 = arith.constant 0.000000e+00 : f32
    %cst_10 = arith.constant 1.000000e+00 : f32
    %8 = arith.select %7, %cst_9, %cst_10 : f32
    %9 = vector.broadcast %8 : f32 to vector<2x32x3xf32>
    %10 = arith.mulf %6, %9 : vector<2x32x3xf32>
    %11 = tpu.concatenate %5, %0, %10 in 1 : vector<2x32x3xf32>, vector<2x512x3xf32>, vector<2x32x3xf32> -> vector<2x576x3xf32>
    %12 = tpu.iota {dimensions = array<i32: 0>} : vector<576x1xi32>
    %c32_i32 = arith.constant 32 : i32
    %c0_i32_11 = arith.constant 0 : i32
    %13 = arith.cmpi eq, %c32_i32, %c0_i32_11 : i32
    %c1_i32_12 = arith.constant 1 : i32
    %14 = arith.select %13, %c1_i32_12, %c32_i32 : i32
    %15 = vector.broadcast %14 : i32 to vector<576x1xi32>
    %16 = arith.remsi %12, %15 : vector<576x1xi32>
    %c0_i32_13 = arith.constant 0 : i32
    %17 = vector.broadcast %c0_i32_13 : i32 to vector<576x1xi32>
    %18 = arith.cmpi ne, %16, %17 : vector<576x1xi32>
    %c0_i32_14 = arith.constant 0 : i32
    %19 = vector.broadcast %c0_i32_14 : i32 to vector<576x1xi32>
    %20 = arith.cmpi slt, %16, %19 : vector<576x1xi32>
    %c0_i32_15 = arith.constant 0 : i32
    %21 = arith.cmpi slt, %14, %c0_i32_15 : i32
    %22 = vector.broadcast %21 : i1 to vector<576x1xi1>
    %23 = vector.broadcast %22 : vector<576x1xi1> to vector<576x1xi1>
    %24 = arith.xori %20, %23 : vector<576x1xi1>
    %25 = arith.andi %24, %18 : vector<576x1xi1>
    %26 = vector.broadcast %14 : i32 to vector<576x1xi32>
    %27 = arith.addi %16, %26 : vector<576x1xi32>
    %28 = arith.select %25, %27, %16 : vector<576x1xi1>, vector<576x1xi32>
    %c0_i32_16 = arith.constant 0 : i32
    %29 = vector.broadcast %c0_i32_16 : i32 to vector<576x1xi32>
    %30 = arith.cmpi eq, %28, %29 : vector<576x1xi32>
    %c1_i32_17 = arith.constant 1 : i32
    %31 = tpu.dynamic_rotate %11 by %c1_i32_17 dim 1 : vector<2x576x3xf32>, i32 -> vector<2x576x3xf32>
    %cst_18 = arith.constant 0.000000e+00 : f32
    %32 = vector.shape_cast %30 : vector<576x1xi1> to vector<1x576x1xi1>
    %33 = vector.broadcast %32 : vector<1x576x1xi1> to vector<2x576x3xi1>
    %34 = vector.broadcast %cst_18 : f32 to vector<2x576x3xf32>
    %35 = arith.select %33, %34, %31 : vector<2x576x3xi1>, vector<2x576x3xf32>
    %c31_i32 = arith.constant 31 : i32
    %36 = vector.broadcast %c31_i32 : i32 to vector<576x1xi32>
    %37 = arith.cmpi eq, %28, %36 : vector<576x1xi32>
    %c575_i32 = arith.constant 575 : i32
    %38 = tpu.dynamic_rotate %11 by %c575_i32 dim 1 : vector<2x576x3xf32>, i32 -> vector<2x576x3xf32>
    %cst_19 = arith.constant 0.000000e+00 : f32
    %39 = vector.shape_cast %37 : vector<576x1xi1> to vector<1x576x1xi1>
    %40 = vector.broadcast %39 : vector<1x576x1xi1> to vector<2x576x3xi1>
    %41 = vector.broadcast %cst_19 : f32 to vector<2x576x3xf32>
    %42 = arith.select %40, %41, %38 : vector<2x576x3xi1>, vector<2x576x3xf32>
    %cst_20 = arith.constant 0.000000e+00 : f32
    %43 = vector.broadcast %cst_20 : f32 to vector<1024x64xf32>
    %44 = tpu.concatenate %35, %11, %42 in 2 : vector<2x576x3xf32>, vector<2x576x3xf32>, vector<2x576x3xf32> -> vector<2x576x9xf32>
    %45 = vector.extract_strided_slice %44 {offsets = [0, 0, 0], sizes = [2, 512, 9], strides = [1, 1, 1]} : vector<2x576x9xf32> to vector<2x512x9xf32>
    %46 = vector.shape_cast %45 : vector<2x512x9xf32> to vector<1024x9xf32>
    %47 = arith.truncf %46 : vector<1024x9xf32> to vector<1024x9xbf16>
    %c0_21 = arith.constant 0 : index
    %c0_22 = arith.constant 0 : index
    %c0_23 = arith.constant 0 : index
    %48 = vector.load %arg2[%c0_21, %c0_22, %c0_23] : memref<3x9x64xbf16, #tpu.memory_space<vmem>>, vector<1x9x64xbf16>
    %49 = vector.shape_cast %48 : vector<1x9x64xbf16> to vector<9x64xbf16>
    %cst_24 = arith.constant dense<0.000000e+00> : vector<1024x64xf32>
    %50 = tpu.matmul %47, %49, %cst_24 {dimension_numbers = #tpu.dot_dimension_numbers<[1], [0], [0], [1], [0, 0, 1, 1], [], []>} : vector<1024x9xbf16>, vector<9x64xbf16>, vector<1024x64xf32> -> vector<1024x64xf32>
    %51 = arith.addf %43, %50 : vector<1024x64xf32>
    %52 = vector.extract_strided_slice %44 {offsets = [0, 32, 0], sizes = [2, 512, 9], strides = [1, 1, 1]} : vector<2x576x9xf32> to vector<2x512x9xf32>
    %53 = vector.shape_cast %52 : vector<2x512x9xf32> to vector<1024x9xf32>
    %54 = arith.truncf %53 : vector<1024x9xf32> to vector<1024x9xbf16>
    %c1 = arith.constant 1 : index
    %c0_25 = arith.constant 0 : index
    %c0_26 = arith.constant 0 : index
    %55 = vector.load %arg2[%c1, %c0_25, %c0_26] : memref<3x9x64xbf16, #tpu.memory_space<vmem>>, vector<1x9x64xbf16>
    %56 = vector.shape_cast %55 : vector<1x9x64xbf16> to vector<9x64xbf16>
    %cst_27 = arith.constant dense<0.000000e+00> : vector<1024x64xf32>
    %57 = tpu.matmul %54, %56, %cst_27 {dimension_numbers = #tpu.dot_dimension_numbers<[1], [0], [0], [1], [0, 0, 1, 1], [], []>} : vector<1024x9xbf16>, vector<9x64xbf16>, vector<1024x64xf32> -> vector<1024x64xf32>
    %58 = arith.addf %51, %57 : vector<1024x64xf32>
    %59 = vector.extract_strided_slice %44 {offsets = [0, 64, 0], sizes = [2, 512, 9], strides = [1, 1, 1]} : vector<2x576x9xf32> to vector<2x512x9xf32>
    %60 = vector.shape_cast %59 : vector<2x512x9xf32> to vector<1024x9xf32>
    %61 = arith.truncf %60 : vector<1024x9xf32> to vector<1024x9xbf16>
    %c2 = arith.constant 2 : index
    %c0_28 = arith.constant 0 : index
    %c0_29 = arith.constant 0 : index
    %62 = vector.load %arg2[%c2, %c0_28, %c0_29] : memref<3x9x64xbf16, #tpu.memory_space<vmem>>, vector<1x9x64xbf16>
    %63 = vector.shape_cast %62 : vector<1x9x64xbf16> to vector<9x64xbf16>
    %cst_30 = arith.constant dense<0.000000e+00> : vector<1024x64xf32>
    %64 = tpu.matmul %61, %63, %cst_30 {dimension_numbers = #tpu.dot_dimension_numbers<[1], [0], [0], [1], [0, 0, 1, 1], [], []>} : vector<1024x9xbf16>, vector<9x64xbf16>, vector<1024x64xf32> -> vector<1024x64xf32>
    %65 = arith.addf %58, %64 : vector<1024x64xf32>
    %c0_31 = arith.constant 0 : index
    %c0_32 = arith.constant 0 : index
    %66 = vector.load %arg3[%c0_31, %c0_32] : memref<1x64xf32, #tpu.memory_space<vmem>>, vector<1x64xf32>
    %67 = vector.broadcast %66 : vector<1x64xf32> to vector<1024x64xf32>
    %68 = arith.addf %65, %67 : vector<1024x64xf32>
    %cst_33 = arith.constant 0.000000e+00 : f32
    %69 = vector.broadcast %cst_33 : f32 to vector<1024x64xf32>
    %70 = arith.maximumf %68, %69 : vector<1024x64xf32>
    %71 = vector.shape_cast %70 : vector<1024x64xf32> to vector<2x512x64xf32>
    %c0_34 = arith.constant 0 : index
    %c0_35 = arith.constant 0 : index
    %c0_36 = arith.constant 0 : index
    %72 = vector.load %arg7[%c0_34, %c0_35, %c0_36] : memref<2x512x64xf32, #tpu.memory_space<vmem>>, vector<2x512x64xf32>
    tpu.vector_store %arg7[%c0_34, %c0_35, %c0_36], %71 {strides = array<i32>} : memref<2x512x64xf32, #tpu.memory_space<vmem>>, vector<2x512x64xf32>,
    return
  }
  func.func @transform_0(%arg0: i32, %arg1: i32) -> (i32, i32, i32) {
    %c0_i32 = arith.constant 0 : i32
    %c0_i32_0 = arith.constant 0 : i32
    %c0_i32_1 = arith.constant 0 : i32
    return %c0_i32, %c0_i32_0, %arg0 : i32, i32, i32
  }
  func.func @transform_1(%arg0: i32, %arg1: i32) -> (i32, i32) {
    %c0_i32 = arith.constant 0 : i32
    %c0_i32_0 = arith.constant 0 : i32
    return %c0_i32, %arg0 : i32, i32
  }
  func.func @transform_2(%arg0: i32, %arg1: i32) -> (i32, i32, i32) {
    %c0_i32 = arith.constant 0 : i32
    %c0_i32_0 = arith.constant 0 : i32
    %c0_i32_1 = arith.constant 0 : i32
    return %c0_i32, %arg1, %c0_i32_0 : i32, i32, i32
  }
  func.func @transform_3(%arg0: i32, %arg1: i32) -> (i32, i32, i32) {
    %c16_i32 = arith.constant 16 : i32
    %0 = arith.muli %arg1, %c16_i32 : i32
    %c1_i32 = arith.constant 1 : i32
    %1 = arith.subi %0, %c1_i32 : i32
    %c0_i32 = arith.constant 0 : i32
    %2 = arith.maxsi %1, %c0_i32 : i32
    %c0_i32_0 = arith.constant 0 : i32
    %c0_i32_1 = arith.constant 0 : i32
    %c0_i32_2 = arith.constant 0 : i32
    return %c0_i32_0, %2, %c0_i32_1 : i32, i32, i32
  }
  func.func @transform_4(%arg0: i32, %arg1: i32) -> (i32, i32, i32) {
    %c16_i32 = arith.constant 16 : i32
    %0 = arith.muli %arg1, %c16_i32 : i32
    %c16_i32_0 = arith.constant 16 : i32
    %1 = arith.addi %0, %c16_i32_0 : i32
    %c31_i32 = arith.constant 31 : i32
    %2 = arith.minsi %1, %c31_i32 : i32
    %c0_i32 = arith.constant 0 : i32
    %c0_i32_1 = arith.constant 0 : i32
    %c0_i32_2 = arith.constant 0 : i32
    return %c0_i32, %2, %c0_i32_1 : i32, i32, i32
  }
  func.func @transform_5(%arg0: i32, %arg1: i32) -> (i32, i32, i32) {
    %c0_i32 = arith.constant 0 : i32
    %c0_i32_0 = arith.constant 0 : i32
    return %c0_i32, %arg1, %arg0 : i32, i32, i32
  }
}

</mosaic_0001>

<llo_original>
// kernel: tpu_custom_call.1
$region0: #{tpu_custom_call.1}
  #allocation0 [shape = 'u32[]', space=smem, size = 0x4, offset = 0x4, fixed_abs, tag = 'smem constant byte address 0x4 - core index']
  #allocation1 [shape = 'u32[144,128]{1,0:T(1,128)}', space=vmem, size = 0x12000, scoped, tag = 'internal scratch']
  %s0 = inlined_call_operand.vmem [shape: bf16[3,9,64], index: 0, kind: input, shape index: {}]
  %s1 = inlined_call_operand.vmem [shape: f32[1,64], index: 1, kind: input, shape index: {}]
  %s2 = inlined_call_operand.vmem [shape: f32[2,1024,3], index: 2, kind: input, shape index: {}]
  %s3 = inlined_call_operand.vmem [shape: f32[2,1024,3], index: 3, kind: input, shape index: {}]
  %s4 = inlined_call_operand.vmem [shape: f32[2,1024,3], index: 4, kind: input, shape index: {}]
  %s5 = inlined_call_operand.vmem [shape: f32[2,1024,64], index: 5, kind: output, shape index: {}]
  %s6 = sld [smem:[#allocation0]]
  $region201: #{tpu_custom_call.1} parent=0
    _
  %s8 = ssub.s32 1, %s6
  %s9 = scalar_select 0, %s8, %s6
  $region1: #{tpu_custom_call.1} parent=0
    #allocation2 [shape = 'u8[1048576]{0}', space=vmem, size = 0x100000, scoped, tag = 'input window, operand 2']
    #allocation3 [shape = 'u8[65536]{0}', space=vmem, size = 0x10000, scoped, tag = 'input window, operand 3']
    #allocation4 [shape = 'u8[65536]{0}', space=vmem, size = 0x10000, scoped, tag = 'input window, operand 4']
    #allocation5 [shape = 'u8[1048576]{0}', space=vmem, size = 0x100000, scoped, tag = 'output window, operand 0']
    loop: start=0, step=1, limit=4
    $region2: #{tpu_custom_call.1} parent=1 // loop_pre_header
      _
    $region3: #{tpu_custom_call.1} parent=1 // loop_header
      %s11 = sphi 0, %s15
      %p12 = scmp.ge.s32.totalorder %s11, 4
      %s18 = sphi 0, %s30
      %s19 = sphi 0, %s26
      %s20 = sphi 0, %s18
      %s21 = sphi 0, %s19
      %s22 = sphi 0, %s20
      %s23 = sphi 0, %s21
      %s33 = sphi 0, %s35
      %s36 = sphi 0, %s33
      %s37 = sphi 0, %s36
      %s53 = sphi 0, %s37
      %s59 = sphi 0, %s61
      %s62 = sphi 0, %s59
      %s63 = sphi 0, %s62
      %s79 = sphi 0, %s63
      %s85 = sphi 0, %s87
      %s88 = sphi 0, %s85
      %s89 = sphi 0, %s88
      %s105 = sphi 0, %s89
      %s119 = sphi 0, %s121
      %s122 = sphi 0, %s119
      %s123 = sphi 0, %s122
      %s139 = sphi 0, %s123
      %s153 = sphi 0, %s155
      %s156 = sphi 0, %s153
      %s157 = sphi 0, %s156
      %s173 = sphi 0, %s157
      %s181 = sphi 0, %s183
      %s184 = sphi 0, %s181
      %s185 = sphi 0, %s184
      %s201 = sphi 0, %s185
    $region4: #{tpu_custom_call.1} parent=1 // loop_header_branch
      %14 = sbr.rel (%p12) target = $region8
    $region5: #{tpu_custom_call.1} parent=1 // loop_body
      %s16 = ssub.s32 %s11, 1
      %s17 = ssub.s32 %s11, 2
      %s24 = sadd.s32 1, %s19
      %p25 = scmp.ge.s32.totalorder %s24, 2
      %s26 = scalar_select %p25, 0, %s24
      %s27 = sadd.s32 1, %s18
      %s28 = scalar_select %p25, %s27, %s18
      %p29 = scmp.ge.s32.totalorder %s28, 1
      %s30 = scalar_select %p29, 0, %s28
      %s31 = ssub.s32 %s18, %s30
      %p32 = scmp.eq.s32.totalorder %s31, 0
      %s34 = sadd.s32 %s33, 1
      %s35 = scalar_select %p32, %s33, %s34
      %p38 = pneg %p32
      %p39 = scmp.eq.s32.totalorder %s11, 1
      %p40 = por %p38, %p39
      %p41 = scmp.ne.s32.totalorder %s33, %s36
      %p42 = scmp.eq.s32.totalorder %s11, 0
      %p43 = por %p41, %p42
      %p44 = scmp.ne.s32.totalorder %s33, %s36
      %p45 = scmp.eq.s32.totalorder %s16, 1
      %p46 = por %p44, %p45
      %p47 = scmp.ne.s32.totalorder %s36, %s37
      %p48 = scmp.eq.s32.totalorder %s16, 0
      %p49 = por %p47, %p48
      %p50 = scmp.ne.s32.totalorder %s36, %s37
      %p51 = scmp.eq.s32.totalorder %s17, 1
      %p52 = por %p50, %p51
      %p54 = scmp.ne.s32.totalorder %s37, %s53
      %p55 = scmp.eq.s32.totalorder %s17, 0
      %p56 = por %p54, %p55
      %s57 = ssub.s32 %s18, %s30
      %p58 = scmp.eq.s32.totalorder %s57, 0
      %s60 = sadd.s32 %s59, 1
      %s61 = scalar_select %p58, %s59, %s60
      %p64 = pneg %p58
      %p65 = scmp.eq.s32.totalorder %s11, 1
      %p66 = por %p64, %p65
      %p67 = scmp.ne.s32.totalorder %s59, %s62
      %p68 = scmp.eq.s32.totalorder %s11, 0
      %p69 = por %p67, %p68
      %p70 = scmp.ne.s32.totalorder %s59, %s62
      %p71 = scmp.eq.s32.totalorder %s16, 1
      %p72 = por %p70, %p71
      %p73 = scmp.ne.s32.totalorder %s62, %s63
      %p74 = scmp.eq.s32.totalorder %s16, 0
      %p75 = por %p73, %p74
      %p76 = scmp.ne.s32.totalorder %s62, %s63
      %p77 = scmp.eq.s32.totalorder %s17, 1
      %p78 = por %p76, %p77
      %p80 = scmp.ne.s32.totalorder %s63, %s79
      %p81 = scmp.eq.s32.totalorder %s17, 0
      %p82 = por %p80, %p81
      %s83 = ssub.s32 %s19, %s26
      %p84 = scmp.eq.s32.totalorder %s83, 0
      %s86 = sadd.s32 %s85, 1
      %s87 = scalar_select %p84, %s85, %s86
      %p90 = pneg %p84
      %p91 = scmp.eq.s32.totalorder %s11, 1
      %p92 = por %p90, %p91
      %p93 = scmp.ne.s32.totalorder %s85, %s88
      %p94 = scmp.eq.s32.totalorder %s11, 0
      %p95 = por %p93, %p94
      %p96 = scmp.ne.s32.totalorder %s85, %s88
      %p97 = scmp.eq.s32.totalorder %s16, 1
      %p98 = por %p96, %p97
      %p99 = scmp.ne.s32.totalorder %s88, %s89
      %p100 = scmp.eq.s32.totalorder %s16, 0
      %p101 = por %p99, %p100
      %p102 = scmp.ne.s32.totalorder %s88, %s89
      %p103 = scmp.eq.s32.totalorder %s17, 1
      %p104 = por %p102, %p103
      %p106 = scmp.ne.s32.totalorder %s89, %s105
      %p107 = scmp.eq.s32.totalorder %s17, 0
      %p108 = por %p106, %p107
      %s109 = smul.u32 %s19, 16
      %s110 = ssub.s32 %s109, 1
      %p111 = scmp.gt.s32.totalorder %s110, 0
      %s112 = scalar_select %p111, %s110, 0
      %s113 = smul.u32 %s26, 16
      %s114 = ssub.s32 %s113, 1
      %p115 = scmp.gt.s32.totalorder %s114, 0
      %s116 = scalar_select %p115, %s114, 0
      %s117 = ssub.s32 %s112, %s116
      %p118 = scmp.eq.s32.totalorder %s117, 0
      %s120 = sadd.s32 %s119, 1
      %s121 = scalar_select %p118, %s119, %s120
      %p124 = pneg %p118
      %p125 = scmp.eq.s32.totalorder %s11, 1
      %p126 = por %p124, %p125
      %p127 = scmp.ne.s32.totalorder %s119, %s122
      %p128 = scmp.eq.s32.totalorder %s11, 0
      %p129 = por %p127, %p128
      %p130 = scmp.ne.s32.totalorder %s119, %s122
      %p131 = scmp.eq.s32.totalorder %s16, 1
      %p132 = por %p130, %p131
      %p133 = scmp.ne.s32.totalorder %s122, %s123
      %p134 = scmp.eq.s32.totalorder %s16, 0
      %p135 = por %p133, %p134
      %p136 = scmp.ne.s32.totalorder %s122, %s123
      %p137 = scmp.eq.s32.totalorder %s17, 1
      %p138 = por %p136, %p137
      %p140 = scmp.ne.s32.totalorder %s123, %s139
      %p141 = scmp.eq.s32.totalorder %s17, 0
      %p142 = por %p140, %p141
      %s143 = smul.u32 %s19, 16
      %s144 = sadd.s32 %s143, 16
      %p145 = scmp.lt.s32.totalorder %s144, 31
      %s146 = scalar_select %p145, %s144, 31
      %s147 = smul.u32 %s26, 16
      %s148 = sadd.s32 %s147, 16
      %p149 = scmp.lt.s32.totalorder %s148, 31
      %s150 = scalar_select %p149, %s148, 31
      %s151 = ssub.s32 %s146, %s150
      %p152 = scmp.eq.s32.totalorder %s151, 0
      %s154 = sadd.s32 %s153, 1
      %s155 = scalar_select %p152, %s153, %s154
      %p158 = pneg %p152
      %p159 = scmp.eq.s32.totalorder %s11, 1
      %p160 = por %p158, %p159
      %p161 = scmp.ne.s32.totalorder %s153, %s156
      %p162 = scmp.eq.s32.totalorder %s11, 0
      %p163 = por %p161, %p162
      %p164 = scmp.ne.s32.totalorder %s153, %s156
      %p165 = scmp.eq.s32.totalorder %s16, 1
      %p166 = por %p164, %p165
      %p167 = scmp.ne.s32.totalorder %s156, %s157
      %p168 = scmp.eq.s32.totalorder %s16, 0
      %p169 = por %p167, %p168
      %p170 = scmp.ne.s32.totalorder %s156, %s157
      %p171 = scmp.eq.s32.totalorder %s17, 1
      %p172 = por %p170, %p171
      %p174 = scmp.ne.s32.totalorder %s157, %s173
      %p175 = scmp.eq.s32.totalorder %s17, 0
      %p176 = por %p174, %p175
      %s177 = ssub.s32 %s19, %s26
      %s178 = ssub.s32 %s18, %s30
      %s179 = sor.u32 %s177, %s178
      %p180 = scmp.eq.s32.totalorder %s179, 0
      %s182 = sadd.s32 %s181, 1
      %s183 = scalar_select %p180, %s181, %s182
      %p186 = pneg %p180
      %p187 = scmp.eq.s32.totalorder %s11, 1
      %p188 = por %p186, %p187
      %p189 = scmp.ne.s32.totalorder %s181, %s184
      %p190 = scmp.eq.s32.totalorder %s11, 0
      %p191 = por %p189, %p190
      %p192 = scmp.ne.s32.totalorder %s181, %s184
      %p193 = scmp.eq.s32.totalorder %s16, 1
      %p194 = por %p192, %p193
      %p195 = scmp.ne.s32.totalorder %s184, %s185
      %p196 = scmp.eq.s32.totalorder %s16, 0
      %p197 = por %p195, %p196
      %p198 = scmp.ne.s32.totalorder %s184, %s185
      %p199 = scmp.eq.s32.totalorder %s17, 1
      %p200 = por %p198, %p199
      %p202 = scmp.ne.s32.totalorder %s185, %s201
      %p203 = scmp.eq.s32.totalorder %s17, 0
      %p204 = por %p202, %p203
      %p205 = scmp.le.s32.totalorder 1, %s11
      %p206 = scmp.lt.s32.totalorder %s11, 3
      %p207 = pnand %p205, %p206
      %p208 = pneg %p207
      // Predicated region
      $region9: #{tpu_custom_call.1} parent=5 // pred_check
        _
      $region10: #{tpu_custom_call.1} parent=5 // pred_check_branch
        %210 = sbr.rel (%p207) target = $region12
      $region11: #{tpu_custom_call.1} parent=5 // pred_region
        %s211 = ssub.s32 %s11, 1
        // Predicated region
        $region13: #{tpu_custom_call.1} parent=11 // pred_check
          %p212 = pneg %p49
        $region14: #{tpu_custom_call.1} parent=11 // pred_check_branch
          %214 = sbr.rel (%p212) target = $region16
        $region15: #{tpu_custom_call.1} parent=11 // pred_region
          %p215 = scmp.lt.s32.totalorder %s20, 0
          %s216 = scalar_select %p215, %s20, 0
          %s217 = smul.addr %s216, 4
          %s218 = scalar_lea.vmem %s0, %s217
        $region16: #{tpu_custom_call.1} parent=11 // pred_fallthru
          _
        // Predicated region
        $region17: #{tpu_custom_call.1} parent=11 // pred_check
          %p219 = pneg %p75
        $region18: #{tpu_custom_call.1} parent=11 // pred_check_branch
          %221 = sbr.rel (%p219) target = $region20
        $region19: #{tpu_custom_call.1} parent=11 // pred_region
          %p222 = scmp.lt.s32.totalorder %s20, 0
          %s223 = scalar_select %p222, %s20, 0
          %s224 = scalar_lea.vmem %s1, %s223
        $region20: #{tpu_custom_call.1} parent=11 // pred_fallthru
          _
      $region12: #{tpu_custom_call.1} parent=5 // pred_fallthru
        _
      %p225 = scmp.lt.s32.totalorder %s11, 2
      // Predicated region
      $region21: #{tpu_custom_call.1} parent=5 // pred_check
        %p226 = pneg %p225
      $region22: #{tpu_custom_call.1} parent=5 // pred_check_branch
        %228 = sbr.rel (%p226) target = $region24
      $region23: #{tpu_custom_call.1} parent=5 // pred_region
        // Predicated region
        $region25: #{tpu_custom_call.1} parent=23 // pred_check
          %p229 = pneg %p95
        $region26: #{tpu_custom_call.1} parent=23 // pred_check_branch
          %231 = sbr.rel (%p229) target = $region28
        $region27: #{tpu_custom_call.1} parent=23 // pred_region
          %s232 = sand.u32 %s85, 1
          %s233 = sand.u32 %s85, 1
          %s234 = smul.addr %s233, 1024
          %s235 = scalar_lea.vmem [#allocation2], %s234
          %s236 = smul.u32 64, %s19
          %s237 = smul.addr %s236, 8
          %s238 = scalar_lea.vmem %s2, %s237
          // Predicated region
          $region29: #{tpu_custom_call.1} parent=27 // pred_check
            _
          $region30: #{tpu_custom_call.1} parent=27 // pred_check_branch
            %240 = sbr.rel (0) target = $region32
          $region31: #{tpu_custom_call.1} parent=27 // pred_region
            // Predicated region
            $region33: #{tpu_custom_call.1} parent=31 // pred_check
              _
            $region34: #{tpu_custom_call.1} parent=31 // pred_check_branch
              %242 = sbr.rel (0) target = $region36
            $region35: #{tpu_custom_call.1} parent=31 // pred_region
              // Predicated region
              $region48: #{tpu_custom_call.1} parent=35 // pred_check
                _
              $region49: #{tpu_custom_call.1} parent=35 // pred_check_branch
                %512 = sbr.rel (0) target = $region51
              $region50: #{tpu_custom_call.1} parent=35 // pred_region
                loop: start=0, step=1, limit=1
                $region52: #{tpu_custom_call.1} parent=50 // loop_pre_header
                  _
                $region53: #{tpu_custom_call.1} parent=50 // loop_header
                  %s514 = sphi 0, %s518
                  %p515 = scmp.ge.s32.totalorder %s514, 1
                  %s519 = sphi %s238, %s238
                  %s520 = sphi %s235, %s235
                $region54: #{tpu_custom_call.1} parent=50 // loop_header_branch
                  %517 = sbr.rel (%p515) target = $region58
                $region55: #{tpu_custom_call.1} parent=50 // loop_body
                  %v521 = vld [vmem:[%s519] sm:$0xff]
                  %522 = vst [vmem:[%s520] sm:$0xff] %v521
                  %v523 = vld [vmem:[%s519 + $0x8] sm:$0xff]
                  %524 = vst [vmem:[%s520 + $0x8] sm:$0xff] %v523
                  %v525 = vld [vmem:[%s519 + $0x10] sm:$0xff]
                  %526 = vst [vmem:[%s520 + $0x10] sm:$0xff] %v525
                  %v527 = vld [vmem:[%s519 + $0x18] sm:$0xff]
                  %528 = vst [vmem:[%s520 + $0x18] sm:$0xff] %v527
                  %v529 = vld [vmem:[%s519 + $0x20] sm:$0xff]
                  %530 = vst [vmem:[%s520 + $0x20] sm:$0xff] %v529
                  %v531 = vld [vmem:[%s519 + $0x28] sm:$0xff]
                  %532 = vst [vmem:[%s520 + $0x28] sm:$0xff] %v531
                  %v533 = vld [vmem:[%s519 + $0x30] sm:$0xff]
                  %534 = vst [vmem:[%s520 + $0x30] sm:$0xff] %v533
                  %v535 = vld [vmem:[%s519 + $0x38] sm:$0xff]
                  %536 = vst [vmem:[%s520 + $0x38] sm:$0xff] %v535
                  %v537 = vld [vmem:[%s519 + $0x40] sm:$0xff]
                  %538 = vst [vmem:[%s520 + $0x40] sm:$0xff] %v537
                  %v539 = vld [vmem:[%s519 + $0x48] sm:$0xff]
                  %540 = vst [vmem:[%s520 + $0x48] sm:$0xff] %v539
                  %v541 = vld [vmem:[%s519 + $0x50] sm:$0xff]
                  %542 = vst [vmem:[%s520 + $0x50] sm:$0xff] %v541
                  %v543 = vld [vmem:[%s519 + $0x58] sm:$0xff]
                  %544 = vst [vmem:[%s520 + $0x58] sm:$0xff] %v543
                  %v545 = vld [vmem:[%s519 + $0x60] sm:$0xff]
                  %546 = vst [vmem:[%s520 + $0x60] sm:$0xff] %v545
                  %v547 = vld [vmem:[%s519 + $0x68] sm:$0xff]
                  %548 = vst [vmem:[%s520 + $0x68] sm:$0xff] %v547
                  %v549 = vld [vmem:[%s519 + $0x70] sm:$0xff]
                  %550 = vst [vmem:[%s520 + $0x70] sm:$0xff] %v549
                  %v551 = vld [vmem:[%s519 + $0x78] sm:$0xff]
                  %552 = vst [vmem:[%s520 + $0x78] sm:$0xff] %v551
                  %v553 = vld [vmem:[%s519 + $0x80] sm:$0xff]
                  %554 = vst [vmem:[%s520 + $0x80] sm:$0xff] %v553
                  %v555 = vld [vmem:[%s519 + $0x88] sm:$0xff]
                  %556 = vst [vmem:[%s520 + $0x88] sm:$0xff] %v555
                  %v557 = vld [vmem:[%s519 + $0x90] sm:$0xff]
                  %558 = vst [vmem:[%s520 + $0x90] sm:$0xff] %v557
                  %v559 = vld [vmem:[%s519 + $0x98] sm:$0xff]
                  %560 = vst [vmem:[%s520 + $0x98] sm:$0xff] %v559
                  %v561 = vld [vmem:[%s519 + $0xa0] sm:$0xff]
                  %562 = vst [vmem:[%s520 + $0xa0] sm:$0xff] %v561
                  %v563 = vld [vmem:[%s519 + $0xa8] sm:$0xff]
                  %564 = vst [vmem:[%s520 + $0xa8] sm:$0xff] %v563
                  %v565 = vld [vmem:[%s519 + $0xb0] sm:$0xff]
                  %566 = vst [vmem:[%s520 + $0xb0] sm:$0xff] %v565
                  %v567 = vld [vmem:[%s519 + $0xb8] sm:$0xff]
                  %568 = vst [vmem:[%s520 + $0xb8] sm:$0xff] %v567
                  %v569 = vld [vmem:[%s519 + $0xc0] sm:$0xff]
                  %570 = vst [vmem:[%s520 + $0xc0] sm:$0xff] %v569
                  %v571 = vld [vmem:[%s519 + $0xc8] sm:$0xff]
                  %572 = vst [vmem:[%s520 + $0xc8] sm:$0xff] %v571
                  %v573 = vld [vmem:[%s519 + $0xd0] sm:$0xff]
                  %574 = vst [vmem:[%s520 + $0xd0] sm:$0xff] %v573
                  %v575 = vld [vmem:[%s519 + $0xd8] sm:$0xff]
                  %576 = vst [vmem:[%s520 + $0xd8] sm:$0xff] %v575
                  %v577 = vld [vmem:[%s519 + $0xe0] sm:$0xff]
                  %578 = vst [vmem:[%s520 + $0xe0] sm:$0xff] %v577
                  %v579 = vld [vmem:[%s519 + $0xe8] sm:$0xff]
                  %580 = vst [vmem:[%s520 + $0xe8] sm:$0xff] %v579
                  %v581 = vld [vmem:[%s519 + $0xf0] sm:$0xff]
                  %582 = vst [vmem:[%s520 + $0xf0] sm:$0xff] %v581
                  %v583 = vld [vmem:[%s519 + $0xf8] sm:$0xff]
                  %584 = vst [vmem:[%s520 + $0xf8] sm:$0xff] %v583
                  %v585 = vld [vmem:[%s519 + $0x100] sm:$0xff]
                  %586 = vst [vmem:[%s520 + $0x100] sm:$0xff] %v585
                  %v587 = vld [vmem:[%s519 + $0x108] sm:$0xff]
                  %588 = vst [vmem:[%s520 + $0x108] sm:$0xff] %v587
                  %v589 = vld [vmem:[%s519 + $0x110] sm:$0xff]
                  %590 = vst [vmem:[%s520 + $0x110] sm:$0xff] %v589
                  %v591 = vld [vmem:[%s519 + $0x118] sm:$0xff]
                  %592 = vst [vmem:[%s520 + $0x118] sm:$0xff] %v591
                  %v593 = vld [vmem:[%s519 + $0x120] sm:$0xff]
                  %594 = vst [vmem:[%s520 + $0x120] sm:$0xff] %v593
                  %v595 = vld [vmem:[%s519 + $0x128] sm:$0xff]
                  %596 = vst [vmem:[%s520 + $0x128] sm:$0xff] %v595
                  %v597 = vld [vmem:[%s519 + $0x130] sm:$0xff]
                  %598 = vst [vmem:[%s520 + $0x130] sm:$0xff] %v597
                  %v599 = vld [vmem:[%s519 + $0x138] sm:$0xff]
                  %600 = vst [vmem:[%s520 + $0x138] sm:$0xff] %v599
                  %v601 = vld [vmem:[%s519 + $0x140] sm:$0xff]
                  %602 = vst [vmem:[%s520 + $0x140] sm:$0xff] %v601
                  %v603 = vld [vmem:[%s519 + $0x148] sm:$0xff]
                  %604 = vst [vmem:[%s520 + $0x148] sm:$0xff] %v603
                  %v605 = vld [vmem:[%s519 + $0x150] sm:$0xff]
                  %606 = vst [vmem:[%s520 + $0x150] sm:$0xff] %v605
                  %v607 = vld [vmem:[%s519 + $0x158] sm:$0xff]
                  %608 = vst [vmem:[%s520 + $0x158] sm:$0xff] %v607
                  %v609 = vld [vmem:[%s519 + $0x160] sm:$0xff]
                  %610 = vst [vmem:[%s520 + $0x160] sm:$0xff] %v609
                  %v611 = vld [vmem:[%s519 + $0x168] sm:$0xff]
                  %612 = vst [vmem:[%s520 + $0x168] sm:$0xff] %v611
                  %v613 = vld [vmem:[%s519 + $0x170] sm:$0xff]
                  %614 = vst [vmem:[%s520 + $0x170] sm:$0xff] %v613
                  %v615 = vld [vmem:[%s519 + $0x178] sm:$0xff]
                  %616 = vst [vmem:[%s520 + $0x178] sm:$0xff] %v615
                  %v617 = vld [vmem:[%s519 + $0x180] sm:$0xff]
                  %618 = vst [vmem:[%s520 + $0x180] sm:$0xff] %v617
                  %v619 = vld [vmem:[%s519 + $0x188] sm:$0xff]
                  %620 = vst [vmem:[%s520 + $0x188] sm:$0xff] %v619
                  %v621 = vld [vmem:[%s519 + $0x190] sm:$0xff]
                  %622 = vst [vmem:[%s520 + $0x190] sm:$0xff] %v621
                  %v623 = vld [vmem:[%s519 + $0x198] sm:$0xff]
                  %624 = vst [vmem:[%s520 + $0x198] sm:$0xff] %v623
                  %v625 = vld [vmem:[%s519 + $0x1a0] sm:$0xff]
                  %626 = vst [vmem:[%s520 + $0x1a0] sm:$0xff] %v625
                  %v627 = vld [vmem:[%s519 + $0x1a8] sm:$0xff]
                  %628 = vst [vmem:[%s520 + $0x1a8] sm:$0xff] %v627
                  %v629 = vld [vmem:[%s519 + $0x1b0] sm:$0xff]
                  %630 = vst [vmem:[%s520 + $0x1b0] sm:$0xff] %v629
                  %v631 = vld [vmem:[%s519 + $0x1b8] sm:$0xff]
                  %632 = vst [vmem:[%s520 + $0x1b8] sm:$0xff] %v631
                  %v633 = vld [vmem:[%s519 + $0x1c0] sm:$0xff]
                  %634 = vst [vmem:[%s520 + $0x1c0] sm:$0xff] %v633
                  %v635 = vld [vmem:[%s519 + $0x1c8] sm:$0xff]
                  %636 = vst [vmem:[%s520 + $0x1c8] sm:$0xff] %v635
                  %v637 = vld [vmem:[%s519 + $0x1d0] sm:$0xff]
                  %638 = vst [vmem:[%s520 + $0x1d0] sm:$0xff] %v637
                  %v639 = vld [vmem:[%s519 + $0x1d8] sm:$0xff]
                  %640 = vst [vmem:[%s520 + $0x1d8] sm:$0xff] %v639
                  %v641 = vld [vmem:[%s519 + $0x1e0] sm:$0xff]
                  %642 = vst [vmem:[%s520 + $0x1e0] sm:$0xff] %v641
                  %v643 = vld [vmem:[%s519 + $0x1e8] sm:$0xff]
                  %644 = vst [vmem:[%s520 + $0x1e8] sm:$0xff] %v643
                  %v645 = vld [vmem:[%s519 + $0x1f0] sm:$0xff]
                  %646 = vst [vmem:[%s520 + $0x1f0] sm:$0xff] %v645
                  %v647 = vld [vmem:[%s519 + $0x1f8] sm:$0xff]
                  %648 = vst [vmem:[%s520 + $0x1f8] sm:$0xff] %v647
                  %v649 = vld [vmem:[%s519 + $0x400] sm:$0xff]
                  %650 = vst [vmem:[%s520 + $0x200] sm:$0xff] %v649
                  %v651 = vld [vmem:[%s519 + $0x408] sm:$0xff]
                  %652 = vst [vmem:[%s520 + $0x208] sm:$0xff] %v651
                  %v653 = vld [vmem:[%s519 + $0x410] sm:$0xff]
                  %654 = vst [vmem:[%s520 + $0x210] sm:$0xff] %v653
                  %v655 = vld [vmem:[%s519 + $0x418] sm:$0xff]
                  %656 = vst [vmem:[%s520 + $0x218] sm:$0xff] %v655
                  %v657 = vld [vmem:[%s519 + $0x420] sm:$0xff]
                  %658 = vst [vmem:[%s520 + $0x220] sm:$0xff] %v657
                  %v659 = vld [vmem:[%s519 + $0x428] sm:$0xff]
                  %660 = vst [vmem:[%s520 + $0x228] sm:$0xff] %v659
                  %v661 = vld [vmem:[%s519 + $0x430] sm:$0xff]
                  %662 = vst [vmem:[%s520 + $0x230] sm:$0xff] %v661
                  %v663 = vld [vmem:[%s519 + $0x438] sm:$0xff]
                  %664 = vst [vmem:[%s520 + $0x238] sm:$0xff] %v663
                  %v665 = vld [vmem:[%s519 + $0x440] sm:$0xff]
                  %666 = vst [vmem:[%s520 + $0x240] sm:$0xff] %v665
                  %v667 = vld [vmem:[%s519 + $0x448] sm:$0xff]
                  %668 = vst [vmem:[%s520 + $0x248] sm:$0xff] %v667
                  %v669 = vld [vmem:[%s519 + $0x450] sm:$0xff]
                  %670 = vst [vmem:[%s520 + $0x250] sm:$0xff] %v669
                  %v671 = vld [vmem:[%s519 + $0x458] sm:$0xff]
                  %672 = vst [vmem:[%s520 + $0x258] sm:$0xff] %v671
                  %v673 = vld [vmem:[%s519 + $0x460] sm:$0xff]
                  %674 = vst [vmem:[%s520 + $0x260] sm:$0xff] %v673
                  %v675 = vld [vmem:[%s519 + $0x468] sm:$0xff]
                  %676 = vst [vmem:[%s520 + $0x268] sm:$0xff] %v675
                  %v677 = vld [vmem:[%s519 + $0x470] sm:$0xff]
                  %678 = vst [vmem:[%s520 + $0x270] sm:$0xff] %v677
                  %v679 = vld [vmem:[%s519 + $0x478] sm:$0xff]
                  %680 = vst [vmem:[%s520 + $0x278] sm:$0xff] %v679
                  %v681 = vld [vmem:[%s519 + $0x480] sm:$0xff]
                  %682 = vst [vmem:[%s520 + $0x280] sm:$0xff] %v681
                  %v683 = vld [vmem:[%s519 + $0x488] sm:$0xff]
                  %684 = vst [vmem:[%s520 + $0x288] sm:$0xff] %v683
                  %v685 = vld [vmem:[%s519 + $0x490] sm:$0xff]
                  %686 = vst [vmem:[%s520 + $0x290] sm:$0xff] %v685
                  %v687 = vld [vmem:[%s519 + $0x498] sm:$0xff]
                  %688 = vst [vmem:[%s520 + $0x298] sm:$0xff] %v687
                  %v689 = vld [vmem:[%s519 + $0x4a0] sm:$0xff]
                  %690 = vst [vmem:[%s520 + $0x2a0] sm:$0xff] %v689
                  %v691 = vld [vmem:[%s519 + $0x4a8] sm:$0xff]
                  %692 = vst [vmem:[%s520 + $0x2a8] sm:$0xff] %v691
                  %v693 = vld [vmem:[%s519 + $0x4b0] sm:$0xff]
                  %694 = vst [vmem:[%s520 + $0x2b0] sm:$0xff] %v693
                  %v695 = vld [vmem:[%s519 + $0x4b8] sm:$0xff]
                  %696 = vst [vmem:[%s520 + $0x2b8] sm:$0xff] %v695
                  %v697 = vld [vmem:[%s519 + $0x4c0] sm:$0xff]
                  %698 = vst [vmem:[%s520 + $0x2c0] sm:$0xff] %v697
                  %v699 = vld [vmem:[%s519 + $0x4c8] sm:$0xff]
                  %700 = vst [vmem:[%s520 + $0x2c8] sm:$0xff] %v699
                  %v701 = vld [vmem:[%s519 + $0x4d0] sm:$0xff]
                  %702 = vst [vmem:[%s520 + $0x2d0] sm:$0xff] %v701
                  %v703 = vld [vmem:[%s519 + $0x4d8] sm:$0xff]
                  %704 = vst [vmem:[%s520 + $0x2d8] sm:$0xff] %v703
                  %v705 = vld [vmem:[%s519 + $0x4e0] sm:$0xff]
                  %706 = vst [vmem:[%s520 + $0x2e0] sm:$0xff] %v705
                  %v707 = vld [vmem:[%s519 + $0x4e8] sm:$0xff]
                  %708 = vst [vmem:[%s520 + $0x2e8] sm:$0xff] %v707
                  %v709 = vld [vmem:[%s519 + $0x4f0] sm:$0xff]
                  %710 = vst [vmem:[%s520 + $0x2f0] sm:$0xff] %v709
                  %v711 = vld [vmem:[%s519 + $0x4f8] sm:$0xff]
                  %712 = vst [vmem:[%s520 + $0x2f8] sm:$0xff] %v711
                  %v713 = vld [vmem:[%s519 + $0x500] sm:$0xff]
                  %714 = vst [vmem:[%s520 + $0x300] sm:$0xff] %v713
                  %v715 = vld [vmem:[%s519 + $0x508] sm:$0xff]
                  %716 = vst [vmem:[%s520 + $0x308] sm:$0xff] %v715
                  %v717 = vld [vmem:[%s519 + $0x510] sm:$0xff]
                  %718 = vst [vmem:[%s520 + $0x310] sm:$0xff] %v717
                  %v719 = vld [vmem:[%s519 + $0x518] sm:$0xff]
                  %720 = vst [vmem:[%s520 + $0x318] sm:$0xff] %v719
                  %v721 = vld [vmem:[%s519 + $0x520] sm:$0xff]
                  %722 = vst [vmem:[%s520 + $0x320] sm:$0xff] %v721
                  %v723 = vld [vmem:[%s519 + $0x528] sm:$0xff]
                  %724 = vst [vmem:[%s520 + $0x328] sm:$0xff] %v723
                  %v725 = vld [vmem:[%s519 + $0x530] sm:$0xff]
                  %726 = vst [vmem:[%s520 + $0x330] sm:$0xff] %v725
                  %v727 = vld [vmem:[%s519 + $0x538] sm:$0xff]
                  %728 = vst [vmem:[%s520 + $0x338] sm:$0xff] %v727
                  %v729 = vld [vmem:[%s519 + $0x540] sm:$0xff]
                  %730 = vst [vmem:[%s520 + $0x340] sm:$0xff] %v729
                  %v731 = vld [vmem:[%s519 + $0x548] sm:$0xff]
                  %732 = vst [vmem:[%s520 + $0x348] sm:$0xff] %v731
                  %v733 = vld [vmem:[%s519 + $0x550] sm:$0xff]
                  %734 = vst [vmem:[%s520 + $0x350] sm:$0xff] %v733
                  %v735 = vld [vmem:[%s519 + $0x558] sm:$0xff]
                  %736 = vst [vmem:[%s520 + $0x358] sm:$0xff] %v735
                  %v737 = vld [vmem:[%s519 + $0x560] sm:$0xff]
                  %738 = vst [vmem:[%s520 + $0x360] sm:$0xff] %v737
                  %v739 = vld [vmem:[%s519 + $0x568] sm:$0xff]
                  %740 = vst [vmem:[%s520 + $0x368] sm:$0xff] %v739
                  %v741 = vld [vmem:[%s519 + $0x570] sm:$0xff]
                  %742 = vst [vmem:[%s520 + $0x370] sm:$0xff] %v741
                  %v743 = vld [vmem:[%s519 + $0x578] sm:$0xff]
                  %744 = vst [vmem:[%s520 + $0x378] sm:$0xff] %v743
                  %v745 = vld [vmem:[%s519 + $0x580] sm:$0xff]
                  %746 = vst [vmem:[%s520 + $0x380] sm:$0xff] %v745
                  %v747 = vld [vmem:[%s519 + $0x588] sm:$0xff]
                  %748 = vst [vmem:[%s520 + $0x388] sm:$0xff] %v747
                  %v749 = vld [vmem:[%s519 + $0x590] sm:$0xff]
                  %750 = vst [vmem:[%s520 + $0x390] sm:$0xff] %v749
                  %v751 = vld [vmem:[%s519 + $0x598] sm:$0xff]
                  %752 = vst [vmem:[%s520 + $0x398] sm:$0xff] %v751
                  %v753 = vld [vmem:[%s519 + $0x5a0] sm:$0xff]
                  %754 = vst [vmem:[%s520 + $0x3a0] sm:$0xff] %v753
                  %v755 = vld [vmem:[%s519 + $0x5a8] sm:$0xff]
                  %756 = vst [vmem:[%s520 + $0x3a8] sm:$0xff] %v755
                  %v757 = vld [vmem:[%s519 + $0x5b0] sm:$0xff]
                  %758 = vst [vmem:[%s520 + $0x3b0] sm:$0xff] %v757
                  %v759 = vld [vmem:[%s519 + $0x5b8] sm:$0xff]
                  %760 = vst [vmem:[%s520 + $0x3b8] sm:$0xff] %v759
                  %v761 = vld [vmem:[%s519 + $0x5c0] sm:$0xff]
                  %762 = vst [vmem:[%s520 + $0x3c0] sm:$0xff] %v761
                  %v763 = vld [vmem:[%s519 + $0x5c8] sm:$0xff]
                  %764 = vst [vmem:[%s520 + $0x3c8] sm:$0xff] %v763
                  %v765 = vld [vmem:[%s519 + $0x5d0] sm:$0xff]
                  %766 = vst [vmem:[%s520 + $0x3d0] sm:$0xff] %v765
                  %v767 = vld [vmem:[%s519 + $0x5d8] sm:$0xff]
                  %768 = vst [vmem:[%s520 + $0x3d8] sm:$0xff] %v767
                  %v769 = vld [vmem:[%s519 + $0x5e0] sm:$0xff]
                  %770 = vst [vmem:[%s520 + $0x3e0] sm:$0xff] %v769
                  %v771 = vld [vmem:[%s519 + $0x5e8] sm:$0xff]
                  %772 = vst [vmem:[%s520 + $0x3e8] sm:$0xff] %v771
                  %v773 = vld [vmem:[%s519 + $0x5f0] sm:$0xff]
                  %774 = vst [vmem:[%s520 + $0x3f0] sm:$0xff] %v773
                  %v775 = vld [vmem:[%s519 + $0x5f8] sm:$0xff]
                  %776 = vst [vmem:[%s520 + $0x3f8] sm:$0xff] %v775
                $region56: #{tpu_custom_call.1} parent=50 // loop_footer
                  %s518 = sadd.s32 1, %s514
                $region57: #{tpu_custom_call.1} parent=50 // loop_footer_branch
                  %513 = sbr.rel target = $region53
                $region58: #{tpu_custom_call.1} parent=50 // loop_exit
                  _
              $region51: #{tpu_custom_call.1} parent=35 // pred_fallthru
                _
              // Predicated region
              $region59: #{tpu_custom_call.1} parent=35 // pred_check
                _
              $region60: #{tpu_custom_call.1} parent=35 // pred_check_branch
                %778 = sbr.rel target = $region62
              $region61: #{tpu_custom_call.1} parent=35 // pred_region
                _
              $region62: #{tpu_custom_call.1} parent=35 // pred_fallthru
                _
            $region36: #{tpu_custom_call.1} parent=31 // pred_fallthru
              _
            // Predicated region
            $region37: #{tpu_custom_call.1} parent=31 // pred_check
              _
            $region38: #{tpu_custom_call.1} parent=31 // pred_check_branch
              %244 = sbr.rel target = $region40
            $region39: #{tpu_custom_call.1} parent=31 // pred_region
              %s246 = ssub.s32 256, 1
              loop: start=0, step=1, limit=1
              $region41: #{tpu_custom_call.1} parent=39 // loop_pre_header
                _
              $region42: #{tpu_custom_call.1} parent=39 // loop_header
                %s248 = sphi 0, %s252
                %p249 = scmp.ge.s32.totalorder %s248, 1
                %s253 = sphi %s238, %s238
                %s254 = sphi %s235, %s235
              $region43: #{tpu_custom_call.1} parent=39 // loop_header_branch
                %251 = sbr.rel (%p249) target = $region47
              $region44: #{tpu_custom_call.1} parent=39 // loop_body
                %v255 = vld [vmem:[%s253] sm:%s246]
                %256 = vst [vmem:[%s254] sm:%s246] %v255
                %v257 = vld [vmem:[%s253 + $0x8] sm:%s246]
                %258 = vst [vmem:[%s254 + $0x8] sm:%s246] %v257
                %v259 = vld [vmem:[%s253 + $0x10] sm:%s246]
                %260 = vst [vmem:[%s254 + $0x10] sm:%s246] %v259
                %v261 = vld [vmem:[%s253 + $0x18] sm:%s246]
                %262 = vst [vmem:[%s254 + $0x18] sm:%s246] %v261
                %v263 = vld [vmem:[%s253 + $0x20] sm:%s246]
                %264 = vst [vmem:[%s254 + $0x20] sm:%s246] %v263
                %v265 = vld [vmem:[%s253 + $0x28] sm:%s246]
                %266 = vst [vmem:[%s254 + $0x28] sm:%s246] %v265
                %v267 = vld [vmem:[%s253 + $0x30] sm:%s246]
                %268 = vst [vmem:[%s254 + $0x30] sm:%s246] %v267
                %v269 = vld [vmem:[%s253 + $0x38] sm:%s246]
                %270 = vst [vmem:[%s254 + $0x38] sm:%s246] %v269
                %v271 = vld [vmem:[%s253 + $0x40] sm:%s246]
                %272 = vst [vmem:[%s254 + $0x40] sm:%s246] %v271
                %v273 = vld [vmem:[%s253 + $0x48] sm:%s246]
                %274 = vst [vmem:[%s254 + $0x48] sm:%s246] %v273
                %v275 = vld [vmem:[%s253 + $0x50] sm:%s246]
                %276 = vst [vmem:[%s254 + $0x50] sm:%s246] %v275
                %v277 = vld [vmem:[%s253 + $0x58] sm:%s246]
                %278 = vst [vmem:[%s254 + $0x58] sm:%s246] %v277
                %v279 = vld [vmem:[%s253 + $0x60] sm:%s246]
                %280 = vst [vmem:[%s254 + $0x60] sm:%s246] %v279
                %v281 = vld [vmem:[%s253 + $0x68] sm:%s246]
                %282 = vst [vmem:[%s254 + $0x68] sm:%s246] %v281
                %v283 = vld [vmem:[%s253 + $0x70] sm:%s246]
                %284 = vst [vmem:[%s254 + $0x70] sm:%s246] %v283
                %v285 = vld [vmem:[%s253 + $0x78] sm:%s246]
                %286 = vst [vmem:[%s254 + $0x78] sm:%s246] %v285
                %v287 = vld [vmem:[%s253 + $0x80] sm:%s246]
                %288 = vst [vmem:[%s254 + $0x80] sm:%s246] %v287
                %v289 = vld [vmem:[%s253 + $0x88] sm:%s246]
                %290 = vst [vmem:[%s254 + $0x88] sm:%s246] %v289
                %v291 = vld [vmem:[%s253 + $0x90] sm:%s246]
                %292 = vst [vmem:[%s254 + $0x90] sm:%s246] %v291
                %v293 = vld [vmem:[%s253 + $0x98] sm:%s246]
                %294 = vst [vmem:[%s254 + $0x98] sm:%s246] %v293
                %v295 = vld [vmem:[%s253 + $0xa0] sm:%s246]
                %296 = vst [vmem:[%s254 + $0xa0] sm:%s246] %v295
                %v297 = vld [vmem:[%s253 + $0xa8] sm:%s246]
                %298 = vst [vmem:[%s254 + $0xa8] sm:%s246] %v297
                %v299 = vld [vmem:[%s253 + $0xb0] sm:%s246]
                %300 = vst [vmem:[%s254 + $0xb0] sm:%s246] %v299
                %v301 = vld [vmem:[%s253 + $0xb8] sm:%s246]
                %302 = vst [vmem:[%s254 + $0xb8] sm:%s246] %v301
                %v303 = vld [vmem:[%s253 + $0xc0] sm:%s246]
                %304 = vst [vmem:[%s254 + $0xc0] sm:%s246] %v303
                %v305 = vld [vmem:[%s253 + $0xc8] sm:%s246]
                %306 = vst [vmem:[%s254 + $0xc8] sm:%s246] %v305
                %v307 = vld [vmem:[%s253 + $0xd0] sm:%s246]
                %308 = vst [vmem:[%s254 + $0xd0] sm:%s246] %v307
                %v309 = vld [vmem:[%s253 + $0xd8] sm:%s246]
                %310 = vst [vmem:[%s254 + $0xd8] sm:%s246] %v309
                %v311 = vld [vmem:[%s253 + $0xe0] sm:%s246]
                %312 = vst [vmem:[%s254 + $0xe0] sm:%s246] %v311
                %v313 = vld [vmem:[%s253 + $0xe8] sm:%s246]
                %314 = vst [vmem:[%s254 + $0xe8] sm:%s246] %v313
                %v315 = vld [vmem:[%s253 + $0xf0] sm:%s246]
                %316 = vst [vmem:[%s254 + $0xf0] sm:%s246] %v315
                %v317 = vld [vmem:[%s253 + $0xf8] sm:%s246]
                %318 = vst [vmem:[%s254 + $0xf8] sm:%s246] %v317
                %v319 = vld [vmem:[%s253 + $0x100] sm:%s246]
                %320 = vst [vmem:[%s254 + $0x100] sm:%s246] %v319
                %v321 = vld [vmem:[%s253 + $0x108] sm:%s246]
                %322 = vst [vmem:[%s254 + $0x108] sm:%s246] %v321
                %v323 = vld [vmem:[%s253 + $0x110] sm:%s246]
                %324 = vst [vmem:[%s254 + $0x110] sm:%s246] %v323
                %v325 = vld [vmem:[%s253 + $0x118] sm:%s246]
                %326 = vst [vmem:[%s254 + $0x118] sm:%s246] %v325
                %v327 = vld [vmem:[%s253 + $0x120] sm:%s246]
                %328 = vst [vmem:[%s254 + $0x120] sm:%s246] %v327
                %v329 = vld [vmem:[%s253 + $0x128] sm:%s246]
                %330 = vst [vmem:[%s254 + $0x128] sm:%s246] %v329
                %v331 = vld [vmem:[%s253 + $0x130] sm:%s246]
                %332 = vst [vmem:[%s254 + $0x130] sm:%s246] %v331
                %v333 = vld [vmem:[%s253 + $0x138] sm:%s246]
                %334 = vst [vmem:[%s254 + $0x138] sm:%s246] %v333
                %v335 = vld [vmem:[%s253 + $0x140] sm:%s246]
                %336 = vst [vmem:[%s254 + $0x140] sm:%s246] %v335
                %v337 = vld [vmem:[%s253 + $0x148] sm:%s246]
                %338 = vst [vmem:[%s254 + $0x148] sm:%s246] %v337
                %v339 = vld [vmem:[%s253 + $0x150] sm:%s246]
                %340 = vst [vmem:[%s254 + $0x150] sm:%s246] %v339
                %v341 = vld [vmem:[%s253 + $0x158] sm:%s246]
                %342 = vst [vmem:[%s254 + $0x158] sm:%s246] %v341
                %v343 = vld [vmem:[%s253 + $0x160] sm:%s246]
                %344 = vst [vmem:[%s254 + $0x160] sm:%s246] %v343
                %v345 = vld [vmem:[%s253 + $0x168] sm:%s246]
                %346 = vst [vmem:[%s254 + $0x168] sm:%s246] %v345
                %v347 = vld [vmem:[%s253 + $0x170] sm:%s246]
                %348 = vst [vmem:[%s254 + $0x170] sm:%s246] %v347
                %v349 = vld [vmem:[%s253 + $0x178] sm:%s246]
                %350 = vst [vmem:[%s254 + $0x178] sm:%s246] %v349
                %v351 = vld [vmem:[%s253 + $0x180] sm:%s246]
                %352 = vst [vmem:[%s254 + $0x180] sm:%s246] %v351
                %v353 = vld [vmem:[%s253 + $0x188] sm:%s246]
                %354 = vst [vmem:[%s254 + $0x188] sm:%s246] %v353
                %v355 = vld [vmem:[%s253 + $0x190] sm:%s246]
                %356 = vst [vmem:[%s254 + $0x190] sm:%s246] %v355
                %v357 = vld [vmem:[%s253 + $0x198] sm:%s246]
                %358 = vst [vmem:[%s254 + $0x198] sm:%s246] %v357
                %v359 = vld [vmem:[%s253 + $0x1a0] sm:%s246]
                %360 = vst [vmem:[%s254 + $0x1a0] sm:%s246] %v359
                %v361 = vld [vmem:[%s253 + $0x1a8] sm:%s246]
                %362 = vst [vmem:[%s254 + $0x1a8] sm:%s246] %v361
                %v363 = vld [vmem:[%s253 + $0x1b0] sm:%s246]
                %364 = vst [vmem:[%s254 + $0x1b0] sm:%s246] %v363
                %v365 = vld [vmem:[%s253 + $0x1b8] sm:%s246]
                %366 = vst [vmem:[%s254 + $0x1b8] sm:%s246] %v365
                %v367 = vld [vmem:[%s253 + $0x1c0] sm:%s246]
                %368 = vst [vmem:[%s254 + $0x1c0] sm:%s246] %v367
                %v369 = vld [vmem:[%s253 + $0x1c8] sm:%s246]
                %370 = vst [vmem:[%s254 + $0x1c8] sm:%s246] %v369
                %v371 = vld [vmem:[%s253 + $0x1d0] sm:%s246]
                %372 = vst [vmem:[%s254 + $0x1d0] sm:%s246] %v371
                %v373 = vld [vmem:[%s253 + $0x1d8] sm:%s246]
                %374 = vst [vmem:[%s254 + $0x1d8] sm:%s246] %v373
                %v375 = vld [vmem:[%s253 + $0x1e0] sm:%s246]
                %376 = vst [vmem:[%s254 + $0x1e0] sm:%s246] %v375
                %v377 = vld [vmem:[%s253 + $0x1e8] sm:%s246]
                %378 = vst [vmem:[%s254 + $0x1e8] sm:%s246] %v377
                %v379 = vld [vmem:[%s253 + $0x1f0] sm:%s246]
                %380 = vst [vmem:[%s254 + $0x1f0] sm:%s246] %v379
                %v381 = vld [vmem:[%s253 + $0x1f8] sm:%s246]
                %382 = vst [vmem:[%s254 + $0x1f8] sm:%s246] %v381
                %v383 = vld [vmem:[%s253 + $0x400] sm:%s246]
                %384 = vst [vmem:[%s254 + $0x200] sm:%s246] %v383
                %v385 = vld [vmem:[%s253 + $0x408] sm:%s246]
                %386 = vst [vmem:[%s254 + $0x208] sm:%s246] %v385
                %v387 = vld [vmem:[%s253 + $0x410] sm:%s246]
                %388 = vst [vmem:[%s254 + $0x210] sm:%s246] %v387
                %v389 = vld [vmem:[%s253 + $0x418] sm:%s246]
                %390 = vst [vmem:[%s254 + $0x218] sm:%s246] %v389
                %v391 = vld [vmem:[%s253 + $0x420] sm:%s246]
                %392 = vst [vmem:[%s254 + $0x220] sm:%s246] %v391
                %v393 = vld [vmem:[%s253 + $0x428] sm:%s246]
                %394 = vst [vmem:[%s254 + $0x228] sm:%s246] %v393
                %v395 = vld [vmem:[%s253 + $0x430] sm:%s246]
                %396 = vst [vmem:[%s254 + $0x230] sm:%s246] %v395
                %v397 = vld [vmem:[%s253 + $0x438] sm:%s246]
                %398 = vst [vmem:[%s254 + $0x238] sm:%s246] %v397
                %v399 = vld [vmem:[%s253 + $0x440] sm:%s246]
                %400 = vst [vmem:[%s254 + $0x240] sm:%s246] %v399
                %v401 = vld [vmem:[%s253 + $0x448] sm:%s246]
                %402 = vst [vmem:[%s254 + $0x248] sm:%s246] %v401
                %v403 = vld [vmem:[%s253 + $0x450] sm:%s246]
                %404 = vst [vmem:[%s254 + $0x250] sm:%s246] %v403
                %v405 = vld [vmem:[%s253 + $0x458] sm:%s246]
                %406 = vst [vmem:[%s254 + $0x258] sm:%s246] %v405
                %v407 = vld [vmem:[%s253 + $0x460] sm:%s246]
                %408 = vst [vmem:[%s254 + $0x260] sm:%s246] %v407
                %v409 = vld [vmem:[%s253 + $0x468] sm:%s246]
                %410 = vst [vmem:[%s254 + $0x268] sm:%s246] %v409
                %v411 = vld [vmem:[%s253 + $0x470] sm:%s246]
                %412 = vst [vmem:[%s254 + $0x270] sm:%s246] %v411
                %v413 = vld [vmem:[%s253 + $0x478] sm:%s246]
                %414 = vst [vmem:[%s254 + $0x278] sm:%s246] %v413
                %v415 = vld [vmem:[%s253 + $0x480] sm:%s246]
                %416 = vst [vmem:[%s254 + $0x280] sm:%s246] %v415
                %v417 = vld [vmem:[%s253 + $0x488] sm:%s246]
                %418 = vst [vmem:[%s254 + $0x288] sm:%s246] %v417
                %v419 = vld [vmem:[%s253 + $0x490] sm:%s246]
                %420 = vst [vmem:[%s254 + $0x290] sm:%s246] %v419
                %v421 = vld [vmem:[%s253 + $0x498] sm:%s246]
                %422 = vst [vmem:[%s254 + $0x298] sm:%s246] %v421
                %v423 = vld [vmem:[%s253 + $0x4a0] sm:%s246]
                %424 = vst [vmem:[%s254 + $0x2a0] sm:%s246] %v423
                %v425 = vld [vmem:[%s253 + $0x4a8] sm:%s246]
                %426 = vst [vmem:[%s254 + $0x2a8] sm:%s246] %v425
                %v427 = vld [vmem:[%s253 + $0x4b0] sm:%s246]
                %428 = vst [vmem:[%s254 + $0x2b0] sm:%s246] %v427
                %v429 = vld [vmem:[%s253 + $0x4b8] sm:%s246]
                %430 = vst [vmem:[%s254 + $0x2b8] sm:%s246] %v429
                %v431 = vld [vmem:[%s253 + $0x4c0] sm:%s246]
                %432 = vst [vmem:[%s254 + $0x2c0] sm:%s246] %v431
                %v433 = vld [vmem:[%s253 + $0x4c8] sm:%s246]
                %434 = vst [vmem:[%s254 + $0x2c8] sm:%s246] %v433
                %v435 = vld [vmem:[%s253 + $0x4d0] sm:%s246]
                %436 = vst [vmem:[%s254 + $0x2d0] sm:%s246] %v435
                %v437 = vld [vmem:[%s253 + $0x4d8] sm:%s246]
                %438 = vst [vmem:[%s254 + $0x2d8] sm:%s246] %v437
                %v439 = vld [vmem:[%s253 + $0x4e0] sm:%s246]
                %440 = vst [vmem:[%s254 + $0x2e0] sm:%s246] %v439
                %v441 = vld [vmem:[%s253 + $0x4e8] sm:%s246]
                %442 = vst [vmem:[%s254 + $0x2e8] sm:%s246] %v441
                %v443 = vld [vmem:[%s253 + $0x4f0] sm:%s246]
                %444 = vst [vmem:[%s254 + $0x2f0] sm:%s246] %v443
                %v445 = vld [vmem:[%s253 + $0x4f8] sm:%s246]
                %446 = vst [vmem:[%s254 + $0x2f8] sm:%s246] %v445
                %v447 = vld [vmem:[%s253 + $0x500] sm:%s246]
                %448 = vst [vmem:[%s254 + $0x300] sm:%s246] %v447
                %v449 = vld [vmem:[%s253 + $0x508] sm:%s246]
                %450 = vst [vmem:[%s254 + $0x308] sm:%s246] %v449
                %v451 = vld [vmem:[%s253 + $0x510] sm:%s246]
                %452 = vst [vmem:[%s254 + $0x310] sm:%s246] %v451
                %v453 = vld [vmem:[%s253 + $0x518] sm:%s246]
                %454 = vst [vmem:[%s254 + $0x318] sm:%s246] %v453
                %v455 = vld [vmem:[%s253 + $0x520] sm:%s246]
                %456 = vst [vmem:[%s254 + $0x320] sm:%s246] %v455
                %v457 = vld [vmem:[%s253 + $0x528] sm:%s246]
                %458 = vst [vmem:[%s254 + $0x328] sm:%s246] %v457
                %v459 = vld [vmem:[%s253 + $0x530] sm:%s246]
                %460 = vst [vmem:[%s254 + $0x330] sm:%s246] %v459
                %v461 = vld [vmem:[%s253 + $0x538] sm:%s246]
                %462 = vst [vmem:[%s254 + $0x338] sm:%s246] %v461
                %v463 = vld [vmem:[%s253 + $0x540] sm:%s246]
                %464 = vst [vmem:[%s254 + $0x340] sm:%s246] %v463
                %v465 = vld [vmem:[%s253 + $0x548] sm:%s246]
                %466 = vst [vmem:[%s254 + $0x348] sm:%s246] %v465
                %v467 = vld [vmem:[%s253 + $0x550] sm:%s246]
                %468 = vst [vmem:[%s254 + $0x350] sm:%s246] %v467
                %v469 = vld [vmem:[%s253 + $0x558] sm:%s246]
                %470 = vst [vmem:[%s254 + $0x358] sm:%s246] %v469
                %v471 = vld [vmem:[%s253 + $0x560] sm:%s246]
                %472 = vst [vmem:[%s254 + $0x360] sm:%s246] %v471
                %v473 = vld [vmem:[%s253 + $0x568] sm:%s246]
                %474 = vst [vmem:[%s254 + $0x368] sm:%s246] %v473
                %v475 = vld [vmem:[%s253 + $0x570] sm:%s246]
                %476 = vst [vmem:[%s254 + $0x370] sm:%s246] %v475
                %v477 = vld [vmem:[%s253 + $0x578] sm:%s246]
                %478 = vst [vmem:[%s254 + $0x378] sm:%s246] %v477
                %v479 = vld [vmem:[%s253 + $0x580] sm:%s246]
                %480 = vst [vmem:[%s254 + $0x380] sm:%s246] %v479
                %v481 = vld [vmem:[%s253 + $0x588] sm:%s246]
                %482 = vst [vmem:[%s254 + $0x388] sm:%s246] %v481
                %v483 = vld [vmem:[%s253 + $0x590] sm:%s246]
                %484 = vst [vmem:[%s254 + $0x390] sm:%s246] %v483
                %v485 = vld [vmem:[%s253 + $0x598] sm:%s246]
                %486 = vst [vmem:[%s254 + $0x398] sm:%s246] %v485
                %v487 = vld [vmem:[%s253 + $0x5a0] sm:%s246]
                %488 = vst [vmem:[%s254 + $0x3a0] sm:%s246] %v487
                %v489 = vld [vmem:[%s253 + $0x5a8] sm:%s246]
                %490 = vst [vmem:[%s254 + $0x3a8] sm:%s246] %v489
                %v491 = vld [vmem:[%s253 + $0x5b0] sm:%s246]
                %492 = vst [vmem:[%s254 + $0x3b0] sm:%s246] %v491
                %v493 = vld [vmem:[%s253 + $0x5b8] sm:%s246]
                %494 = vst [vmem:[%s254 + $0x3b8] sm:%s246] %v493
                %v495 = vld [vmem:[%s253 + $0x5c0] sm:%s246]
                %496 = vst [vmem:[%s254 + $0x3c0] sm:%s246] %v495
                %v497 = vld [vmem:[%s253 + $0x5c8] sm:%s246]
                %498 = vst [vmem:[%s254 + $0x3c8] sm:%s246] %v497
                %v499 = vld [vmem:[%s253 + $0x5d0] sm:%s246]
                %500 = vst [vmem:[%s254 + $0x3d0] sm:%s246] %v499
                %v501 = vld [vmem:[%s253 + $0x5d8] sm:%s246]
                %502 = vst [vmem:[%s254 + $0x3d8] sm:%s246] %v501
                %v503 = vld [vmem:[%s253 + $0x5e0] sm:%s246]
                %504 = vst [vmem:[%s254 + $0x3e0] sm:%s246] %v503
                %v505 = vld [vmem:[%s253 + $0x5e8] sm:%s246]
                %506 = vst [vmem:[%s254 + $0x3e8] sm:%s246] %v505
                %v507 = vld [vmem:[%s253 + $0x5f0] sm:%s246]
                %508 = vst [vmem:[%s254 + $0x3f0] sm:%s246] %v507
                %v509 = vld [vmem:[%s253 + $0x5f8] sm:%s246]
                %510 = vst [vmem:[%s254 + $0x3f8] sm:%s246] %v509
              $region45: #{tpu_custom_call.1} parent=39 // loop_footer
                %s252 = sadd.s32 1, %s248
              $region46: #{tpu_custom_call.1} parent=39 // loop_footer_branch
                %247 = sbr.rel target = $region42
              $region47: #{tpu_custom_call.1} parent=39 // loop_exit
                _
            $region40: #{tpu_custom_call.1} parent=31 // pred_fallthru
              _
          $region32: #{tpu_custom_call.1} parent=27 // pred_fallthru
            _
          %779 = vnop
        $region28: #{tpu_custom_call.1} parent=23 // pred_fallthru
          _
        // Predicated region
        $region63: #{tpu_custom_call.1} parent=23 // pred_check
          %p780 = pneg %p129
        $region64: #{tpu_custom_call.1} parent=23 // pred_check_branch
          %782 = sbr.rel (%p780) target = $region66
        $region65: #{tpu_custom_call.1} parent=23 // pred_region
          %s783 = sand.u32 %s119, 1
          %s784 = sand.u32 %s119, 1
          %s785 = smul.addr %s784, 64
          %s786 = scalar_lea.vmem [#allocation3], %s785
          %s787 = smul.u32 %s19, 16
          %s788 = ssub.s32 %s787, 1
          %p789 = scmp.gt.s32.totalorder %s788, 0
          %s790 = scalar_select %p789, %s788, 0
          %s791 = smul.u32 4, %s790
          %s792 = smul.addr %s791, 8
          %s793 = scalar_lea.vmem %s3, %s792
          // Predicated region
          $region67: #{tpu_custom_call.1} parent=65 // pred_check
            _
          $region68: #{tpu_custom_call.1} parent=65 // pred_check_branch
            %795 = sbr.rel (0) target = $region70
          $region69: #{tpu_custom_call.1} parent=65 // pred_region
            // Predicated region
            $region71: #{tpu_custom_call.1} parent=69 // pred_check
              _
            $region72: #{tpu_custom_call.1} parent=69 // pred_check_branch
              %797 = sbr.rel (0) target = $region74
            $region73: #{tpu_custom_call.1} parent=69 // pred_region
              // Predicated region
              $region86: #{tpu_custom_call.1} parent=73 // pred_check
                _
              $region87: #{tpu_custom_call.1} parent=73 // pred_check_branch
                %827 = sbr.rel (0) target = $region89
              $region88: #{tpu_custom_call.1} parent=73 // pred_region
                loop: start=0, step=1, limit=1
                $region90: #{tpu_custom_call.1} parent=88 // loop_pre_header
                  _
                $region91: #{tpu_custom_call.1} parent=88 // loop_header
                  %s829 = sphi 0, %s833
                  %p830 = scmp.ge.s32.totalorder %s829, 1
                  %s834 = sphi %s793, %s793
                  %s835 = sphi %s786, %s786
                $region92: #{tpu_custom_call.1} parent=88 // loop_header_branch
                  %832 = sbr.rel (%p830) target = $region96
                $region93: #{tpu_custom_call.1} parent=88 // loop_body
                  %v836 = vld [vmem:[%s834] sm:$0xff]
                  %837 = vst [vmem:[%s835] sm:$0xff] %v836
                  %v838 = vld [vmem:[%s834 + $0x8] sm:$0xff]
                  %839 = vst [vmem:[%s835 + $0x8] sm:$0xff] %v838
                  %v840 = vld [vmem:[%s834 + $0x10] sm:$0xff]
                  %841 = vst [vmem:[%s835 + $0x10] sm:$0xff] %v840
                  %v842 = vld [vmem:[%s834 + $0x18] sm:$0xff]
                  %843 = vst [vmem:[%s835 + $0x18] sm:$0xff] %v842
                  %v844 = vld [vmem:[%s834 + $0x400] sm:$0xff]
                  %845 = vst [vmem:[%s835 + $0x20] sm:$0xff] %v844
                  %v846 = vld [vmem:[%s834 + $0x408] sm:$0xff]
                  %847 = vst [vmem:[%s835 + $0x28] sm:$0xff] %v846
                  %v848 = vld [vmem:[%s834 + $0x410] sm:$0xff]
                  %849 = vst [vmem:[%s835 + $0x30] sm:$0xff] %v848
                  %v850 = vld [vmem:[%s834 + $0x418] sm:$0xff]
                  %851 = vst [vmem:[%s835 + $0x38] sm:$0xff] %v850
                $region94: #{tpu_custom_call.1} parent=88 // loop_footer
                  %s833 = sadd.s32 1, %s829
                $region95: #{tpu_custom_call.1} parent=88 // loop_footer_branch
                  %828 = sbr.rel target = $region91
                $region96: #{tpu_custom_call.1} parent=88 // loop_exit
                  _
              $region89: #{tpu_custom_call.1} parent=73 // pred_fallthru
                _
              // Predicated region
              $region97: #{tpu_custom_call.1} parent=73 // pred_check
                _
              $region98: #{tpu_custom_call.1} parent=73 // pred_check_branch
                %853 = sbr.rel target = $region100
              $region99: #{tpu_custom_call.1} parent=73 // pred_region
                _
              $region100: #{tpu_custom_call.1} parent=73 // pred_fallthru
                _
            $region74: #{tpu_custom_call.1} parent=69 // pred_fallthru
              _
            // Predicated region
            $region75: #{tpu_custom_call.1} parent=69 // pred_check
              _
            $region76: #{tpu_custom_call.1} parent=69 // pred_check_branch
              %799 = sbr.rel target = $region78
            $region77: #{tpu_custom_call.1} parent=69 // pred_region
              %s801 = ssub.s32 256, 1
              loop: start=0, step=1, limit=1
              $region79: #{tpu_custom_call.1} parent=77 // loop_pre_header
                _
              $region80: #{tpu_custom_call.1} parent=77 // loop_header
                %s803 = sphi 0, %s807
                %p804 = scmp.ge.s32.totalorder %s803, 1
                %s808 = sphi %s793, %s793
                %s809 = sphi %s786, %s786
              $region81: #{tpu_custom_call.1} parent=77 // loop_header_branch
                %806 = sbr.rel (%p804) target = $region85
              $region82: #{tpu_custom_call.1} parent=77 // loop_body
                %v810 = vld [vmem:[%s808] sm:%s801]
                %811 = vst [vmem:[%s809] sm:%s801] %v810
                %v812 = vld [vmem:[%s808 + $0x8] sm:%s801]
                %813 = vst [vmem:[%s809 + $0x8] sm:%s801] %v812
                %v814 = vld [vmem:[%s808 + $0x10] sm:%s801]
                %815 = vst [vmem:[%s809 + $0x10] sm:%s801] %v814
                %v816 = vld [vmem:[%s808 + $0x18] sm:%s801]
                %817 = vst [vmem:[%s809 + $0x18] sm:%s801] %v816
                %v818 = vld [vmem:[%s808 + $0x400] sm:%s801]
                %819 = vst [vmem:[%s809 + $0x20] sm:%s801] %v818
                %v820 = vld [vmem:[%s808 + $0x408] sm:%s801]
                %821 = vst [vmem:[%s809 + $0x28] sm:%s801] %v820
                %v822 = vld [vmem:[%s808 + $0x410] sm:%s801]
                %823 = vst [vmem:[%s809 + $0x30] sm:%s801] %v822
                %v824 = vld [vmem:[%s808 + $0x418] sm:%s801]
                %825 = vst [vmem:[%s809 + $0x38] sm:%s801] %v824
              $region83: #{tpu_custom_call.1} parent=77 // loop_footer
                %s807 = sadd.s32 1, %s803
              $region84: #{tpu_custom_call.1} parent=77 // loop_footer_branch
                %802 = sbr.rel target = $region80
              $region85: #{tpu_custom_call.1} parent=77 // loop_exit
                _
            $region78: #{tpu_custom_call.1} parent=69 // pred_fallthru
              _
          $region70: #{tpu_custom_call.1} parent=65 // pred_fallthru
            _
          %854 = vnop
        $region66: #{tpu_custom_call.1} parent=23 // pred_fallthru
          _
        // Predicated region
        $region101: #{tpu_custom_call.1} parent=23 // pred_check
          %p855 = pneg %p163
        $region102: #{tpu_custom_call.1} parent=23 // pred_check_branch
          %857 = sbr.rel (%p855) target = $region104
        $region103: #{tpu_custom_call.1} parent=23 // pred_region
          %s858 = sand.u32 %s153, 1
          %s859 = sand.u32 %s153, 1
          %s860 = smul.addr %s859, 64
          %s861 = scalar_lea.vmem [#allocation4], %s860
          %s862 = smul.u32 %s19, 16
          %s863 = sadd.s32 %s862, 16
          %p864 = scmp.lt.s32.totalorder %s863, 31
          %s865 = scalar_select %p864, %s863, 31
          %s866 = smul.u32 4, %s865
          %s867 = smul.addr %s866, 8
          %s868 = scalar_lea.vmem %s4, %s867
          // Predicated region
          $region105: #{tpu_custom_call.1} parent=103 // pred_check
            _
          $region106: #{tpu_custom_call.1} parent=103 // pred_check_branch
            %870 = sbr.rel (0) target = $region108
          $region107: #{tpu_custom_call.1} parent=103 // pred_region
            // Predicated region
            $region109: #{tpu_custom_call.1} parent=107 // pred_check
              _
            $region110: #{tpu_custom_call.1} parent=107 // pred_check_branch
              %872 = sbr.rel (0) target = $region112
            $region111: #{tpu_custom_call.1} parent=107 // pred_region
              // Predicated region
              $region124: #{tpu_custom_call.1} parent=111 // pred_check
                _
              $region125: #{tpu_custom_call.1} parent=111 // pred_check_branch
                %902 = sbr.rel (0) target = $region127
              $region126: #{tpu_custom_call.1} parent=111 // pred_region
                loop: start=0, step=1, limit=1
                $region128: #{tpu_custom_call.1} parent=126 // loop_pre_header
                  _
                $region129: #{tpu_custom_call.1} parent=126 // loop_header
                  %s904 = sphi 0, %s908
                  %p905 = scmp.ge.s32.totalorder %s904, 1
                  %s909 = sphi %s868, %s868
                  %s910 = sphi %s861, %s861
                $region130: #{tpu_custom_call.1} parent=126 // loop_header_branch
                  %907 = sbr.rel (%p905) target = $region134
                $region131: #{tpu_custom_call.1} parent=126 // loop_body
                  %v911 = vld [vmem:[%s909] sm:$0xff]
                  %912 = vst [vmem:[%s910] sm:$0xff] %v911
                  %v913 = vld [vmem:[%s909 + $0x8] sm:$0xff]
                  %914 = vst [vmem:[%s910 + $0x8] sm:$0xff] %v913
                  %v915 = vld [vmem:[%s909 + $0x10] sm:$0xff]
                  %916 = vst [vmem:[%s910 + $0x10] sm:$0xff] %v915
                  %v917 = vld [vmem:[%s909 + $0x18] sm:$0xff]
                  %918 = vst [vmem:[%s910 + $0x18] sm:$0xff] %v917
                  %v919 = vld [vmem:[%s909 + $0x400] sm:$0xff]
                  %920 = vst [vmem:[%s910 + $0x20] sm:$0xff] %v919
                  %v921 = vld [vmem:[%s909 + $0x408] sm:$0xff]
                  %922 = vst [vmem:[%s910 + $0x28] sm:$0xff] %v921
                  %v923 = vld [vmem:[%s909 + $0x410] sm:$0xff]
                  %924 = vst [vmem:[%s910 + $0x30] sm:$0xff] %v923
                  %v925 = vld [vmem:[%s909 + $0x418] sm:$0xff]
                  %926 = vst [vmem:[%s910 + $0x38] sm:$0xff] %v925
                $region132: #{tpu_custom_call.1} parent=126 // loop_footer
                  %s908 = sadd.s32 1, %s904
                $region133: #{tpu_custom_call.1} parent=126 // loop_footer_branch
                  %903 = sbr.rel target = $region129
                $region134: #{tpu_custom_call.1} parent=126 // loop_exit
                  _
              $region127: #{tpu_custom_call.1} parent=111 // pred_fallthru
                _
              // Predicated region
              $region135: #{tpu_custom_call.1} parent=111 // pred_check
                _
              $region136: #{tpu_custom_call.1} parent=111 // pred_check_branch
                %928 = sbr.rel target = $region138
              $region137: #{tpu_custom_call.1} parent=111 // pred_region
                _
              $region138: #{tpu_custom_call.1} parent=111 // pred_fallthru
                _
            $region112: #{tpu_custom_call.1} parent=107 // pred_fallthru
              _
            // Predicated region
            $region113: #{tpu_custom_call.1} parent=107 // pred_check
              _
            $region114: #{tpu_custom_call.1} parent=107 // pred_check_branch
              %874 = sbr.rel target = $region116
            $region115: #{tpu_custom_call.1} parent=107 // pred_region
              %s876 = ssub.s32 256, 1
              loop: start=0, step=1, limit=1
              $region117: #{tpu_custom_call.1} parent=115 // loop_pre_header
                _
              $region118: #{tpu_custom_call.1} parent=115 // loop_header
                %s878 = sphi 0, %s882
                %p879 = scmp.ge.s32.totalorder %s878, 1
                %s883 = sphi %s868, %s868
                %s884 = sphi %s861, %s861
              $region119: #{tpu_custom_call.1} parent=115 // loop_header_branch
                %881 = sbr.rel (%p879) target = $region123
              $region120: #{tpu_custom_call.1} parent=115 // loop_body
                %v885 = vld [vmem:[%s883] sm:%s876]
                %886 = vst [vmem:[%s884] sm:%s876] %v885
                %v887 = vld [vmem:[%s883 + $0x8] sm:%s876]
                %888 = vst [vmem:[%s884 + $0x8] sm:%s876] %v887
                %v889 = vld [vmem:[%s883 + $0x10] sm:%s876]
                %890 = vst [vmem:[%s884 + $0x10] sm:%s876] %v889
                %v891 = vld [vmem:[%s883 + $0x18] sm:%s876]
                %892 = vst [vmem:[%s884 + $0x18] sm:%s876] %v891
                %v893 = vld [vmem:[%s883 + $0x400] sm:%s876]
                %894 = vst [vmem:[%s884 + $0x20] sm:%s876] %v893
                %v895 = vld [vmem:[%s883 + $0x408] sm:%s876]
                %896 = vst [vmem:[%s884 + $0x28] sm:%s876] %v895
                %v897 = vld [vmem:[%s883 + $0x410] sm:%s876]
                %898 = vst [vmem:[%s884 + $0x30] sm:%s876] %v897
                %v899 = vld [vmem:[%s883 + $0x418] sm:%s876]
                %900 = vst [vmem:[%s884 + $0x38] sm:%s876] %v899
              $region121: #{tpu_custom_call.1} parent=115 // loop_footer
                %s882 = sadd.s32 1, %s878
              $region122: #{tpu_custom_call.1} parent=115 // loop_footer_branch
                %877 = sbr.rel target = $region118
              $region123: #{tpu_custom_call.1} parent=115 // loop_exit
                _
            $region116: #{tpu_custom_call.1} parent=107 // pred_fallthru
              _
          $region108: #{tpu_custom_call.1} parent=103 // pred_fallthru
            _
          %929 = vnop
        $region104: #{tpu_custom_call.1} parent=23 // pred_fallthru
          _
      $region24: #{tpu_custom_call.1} parent=5 // pred_fallthru
        _
      %p930 = scmp.le.s32.totalorder 1, %s11
      %p931 = scmp.lt.s32.totalorder %s11, 3
      %p932 = pnand %p930, %p931
      %p933 = pneg %p932
      // Predicated region
      $region139: #{tpu_custom_call.1} parent=5 // pred_check
        _
      $region140: #{tpu_custom_call.1} parent=5 // pred_check_branch
        %935 = sbr.rel (%p932) target = $region142
      $region141: #{tpu_custom_call.1} parent=5 // pred_region
        %s936 = ssub.s32 %s11, 1
        %s937 = sand.u32 %s88, 1
        %s938 = sand.u32 %s88, 1
        %s939 = smul.addr %s938, 1024
        %s940 = scalar_lea.vmem [#allocation2], %s939
        // Predicated region
        $region143: #{tpu_custom_call.1} parent=141 // pred_check
          %p941 = pneg %p101
        $region144: #{tpu_custom_call.1} parent=141 // pred_check_branch
          %943 = sbr.rel (%p941) target = $region146
        $region145: #{tpu_custom_call.1} parent=141 // pred_region
          _
        $region146: #{tpu_custom_call.1} parent=141 // pred_fallthru
          _
        %s944 = sand.u32 %s122, 1
        %s945 = sand.u32 %s122, 1
        %s946 = smul.addr %s945, 64
        %s947 = scalar_lea.vmem [#allocation3], %s946
        // Predicated region
        $region147: #{tpu_custom_call.1} parent=141 // pred_check
          %p948 = pneg %p135
        $region148: #{tpu_custom_call.1} parent=141 // pred_check_branch
          %950 = sbr.rel (%p948) target = $region150
        $region149: #{tpu_custom_call.1} parent=141 // pred_region
          _
        $region150: #{tpu_custom_call.1} parent=141 // pred_fallthru
          _
        %s951 = sand.u32 %s156, 1
        %s952 = sand.u32 %s156, 1
        %s953 = smul.addr %s952, 64
        %s954 = scalar_lea.vmem [#allocation4], %s953
        // Predicated region
        $region151: #{tpu_custom_call.1} parent=141 // pred_check
          %p955 = pneg %p169
        $region152: #{tpu_custom_call.1} parent=141 // pred_check_branch
          %957 = sbr.rel (%p955) target = $region154
        $region153: #{tpu_custom_call.1} parent=141 // pred_region
          _
        $region154: #{tpu_custom_call.1} parent=141 // pred_fallthru
          _
        %p958 = scmp.lt.s32.totalorder %s20, 0
        %s959 = scalar_select %p958, %s20, 0
        %s960 = smul.addr %s959, 4
        %s961 = scalar_lea.vmem %s0, %s960
        %p962 = pneg %p49
        %p963 = pneg %p46
        %p964 = scmp.lt.s32.totalorder %s20, 0
        %s965 = scalar_select %p964, %s20, 0
        %s966 = scalar_lea.vmem %s1, %s965
        %p967 = pneg %p75
        %p968 = pneg %p72
        %s969 = sand.u32 %s88, 1
        %s970 = sand.u32 %s88, 1
        %s971 = smul.addr %s970, 1024
        %s972 = scalar_lea.vmem [#allocation2], %s971
        %p973 = pneg %p101
        %p974 = pneg %p98
        %s975 = sand.u32 %s122, 1
        %s976 = sand.u32 %s122, 1
        %s977 = smul.addr %s976, 64
        %s978 = scalar_lea.vmem [#allocation3], %s977
        %p979 = pneg %p135
        %p980 = pneg %p132
        %s981 = sand.u32 %s156, 1
        %s982 = sand.u32 %s156, 1
        %s983 = smul.addr %s982, 64
        %s984 = scalar_lea.vmem [#allocation4], %s983
        %p985 = pneg %p169
        %p986 = pneg %p166
        %p987 = pneg %p197
        %p988 = pneg %p194
        %s989 = sand.u32 %s184, 1
        %s990 = sand.u32 %s184, 1
        %s991 = smul.addr %s990, 1024
        %s992 = scalar_lea.vmem [#allocation5], %s991
        %p993 = scmp.lt.s32.totalorder %s20, 0
        %s994 = scalar_select %p993, %s20, 0
        %s995 = smul.addr %s994, 4
        %s996 = scalar_lea.vmem %s0, %s995
        %p997 = scmp.lt.s32.totalorder %s20, 0
        %s998 = scalar_select %p997, %s20, 0
        %s999 = scalar_lea.vmem %s1, %s998
        %s1000 = smul.u32 64, %s21
        %s1001 = smul.u32 %s21, 16
        %s1002 = ssub.s32 %s1001, 1
        %p1003 = scmp.gt.s32.totalorder %s1002, 0
        %s1004 = scalar_select %p1003, %s1002, 0
        %s1005 = smul.u32 4, %s1004
        %s1006 = smul.u32 %s21, 16
        %s1007 = sadd.s32 %s1006, 16
        %p1008 = scmp.lt.s32.totalorder %s1007, 31
        %s1009 = scalar_select %p1008, %s1007, 31
        %s1010 = smul.u32 4, %s1009
        %s1011 = smul.u32 64, %s21
        %v1013 = vld [vmem:[%s940] sm:$0xff]
        %v1014 = vld [vmem:[%s940 + $0x8] sm:$0xff]
        %v1015 = vld [vmem:[%s940 + $0x10] sm:$0xff]
        %v1016 = vld [vmem:[%s940 + $0x18] sm:$0xff]
        %v1017 = vld [vmem:[%s940 + $0x20] sm:$0xff]
        %v1018 = vld [vmem:[%s940 + $0x28] sm:$0xff]
        %v1019 = vld [vmem:[%s940 + $0x30] sm:$0xff]
        %v1020 = vld [vmem:[%s940 + $0x38] sm:$0xff]
        %v1021 = vld [vmem:[%s940 + $0x40] sm:$0xff]
        %v1022 = vld [vmem:[%s940 + $0x48] sm:$0xff]
        %v1023 = vld [vmem:[%s940 + $0x50] sm:$0xff]
        %v1024 = vld [vmem:[%s940 + $0x58] sm:$0xff]
        %v1025 = vld [vmem:[%s940 + $0x60] sm:$0xff]
        %v1026 = vld [vmem:[%s940 + $0x68] sm:$0xff]
        %v1027 = vld [vmem:[%s940 + $0x70] sm:$0xff]
        %v1028 = vld [vmem:[%s940 + $0x78] sm:$0xff]
        %v1029 = vld [vmem:[%s940 + $0x80] sm:$0xff]
        %v1030 = vld [vmem:[%s940 + $0x88] sm:$0xff]
        %v1031 = vld [vmem:[%s940 + $0x90] sm:$0xff]
        %v1032 = vld [vmem:[%s940 + $0x98] sm:$0xff]
        %v1033 = vld [vmem:[%s940 + $0xa0] sm:$0xff]
        %v1034 = vld [vmem:[%s940 + $0xa8] sm:$0xff]
        %v1035 = vld [vmem:[%s940 + $0xb0] sm:$0xff]
        %v1036 = vld [vmem:[%s940 + $0xb8] sm:$0xff]
        %v1037 = vld [vmem:[%s940 + $0xc0] sm:$0xff]
        %v1038 = vld [vmem:[%s940 + $0xc8] sm:$0xff]
        %v1039 = vld [vmem:[%s940 + $0xd0] sm:$0xff]
        %v1040 = vld [vmem:[%s940 + $0xd8] sm:$0xff]
        %v1041 = vld [vmem:[%s940 + $0xe0] sm:$0xff]
        %v1042 = vld [vmem:[%s940 + $0xe8] sm:$0xff]
        %v1043 = vld [vmem:[%s940 + $0xf0] sm:$0xff]
        %v1044 = vld [vmem:[%s940 + $0xf8] sm:$0xff]
        %v1045 = vld [vmem:[%s940 + $0x100] sm:$0xff]
        %v1046 = vld [vmem:[%s940 + $0x108] sm:$0xff]
        %v1047 = vld [vmem:[%s940 + $0x110] sm:$0xff]
        %v1048 = vld [vmem:[%s940 + $0x118] sm:$0xff]
        %v1049 = vld [vmem:[%s940 + $0x120] sm:$0xff]
        %v1050 = vld [vmem:[%s940 + $0x128] sm:$0xff]
        %v1051 = vld [vmem:[%s940 + $0x130] sm:$0xff]
        %v1052 = vld [vmem:[%s940 + $0x138] sm:$0xff]
        %v1053 = vld [vmem:[%s940 + $0x140] sm:$0xff]
        %v1054 = vld [vmem:[%s940 + $0x148] sm:$0xff]
        %v1055 = vld [vmem:[%s940 + $0x150] sm:$0xff]
        %v1056 = vld [vmem:[%s940 + $0x158] sm:$0xff]
        %v1057 = vld [vmem:[%s940 + $0x160] sm:$0xff]
        %v1058 = vld [vmem:[%s940 + $0x168] sm:$0xff]
        %v1059 = vld [vmem:[%s940 + $0x170] sm:$0xff]
        %v1060 = vld [vmem:[%s940 + $0x178] sm:$0xff]
        %v1061 = vld [vmem:[%s940 + $0x180] sm:$0xff]
        %v1062 = vld [vmem:[%s940 + $0x188] sm:$0xff]
        %v1063 = vld [vmem:[%s940 + $0x190] sm:$0xff]
        %v1064 = vld [vmem:[%s940 + $0x198] sm:$0xff]
        %v1065 = vld [vmem:[%s940 + $0x1a0] sm:$0xff]
        %v1066 = vld [vmem:[%s940 + $0x1a8] sm:$0xff]
        %v1067 = vld [vmem:[%s940 + $0x1b0] sm:$0xff]
        %v1068 = vld [vmem:[%s940 + $0x1b8] sm:$0xff]
        %v1069 = vld [vmem:[%s940 + $0x1c0] sm:$0xff]
        %v1070 = vld [vmem:[%s940 + $0x1c8] sm:$0xff]
        %v1071 = vld [vmem:[%s940 + $0x1d0] sm:$0xff]
        %v1072 = vld [vmem:[%s940 + $0x1d8] sm:$0xff]
        %v1073 = vld [vmem:[%s940 + $0x1e0] sm:$0xff]
        %v1074 = vld [vmem:[%s940 + $0x1e8] sm:$0xff]
        %v1075 = vld [vmem:[%s940 + $0x1f0] sm:$0xff]
        %v1076 = vld [vmem:[%s940 + $0x1f8] sm:$0xff]
        %v1077 = vld [vmem:[%s940 + $0x200] sm:$0xff]
        %v1078 = vld [vmem:[%s940 + $0x208] sm:$0xff]
        %v1079 = vld [vmem:[%s940 + $0x210] sm:$0xff]
        %v1080 = vld [vmem:[%s940 + $0x218] sm:$0xff]
        %v1081 = vld [vmem:[%s940 + $0x220] sm:$0xff]
        %v1082 = vld [vmem:[%s940 + $0x228] sm:$0xff]
        %v1083 = vld [vmem:[%s940 + $0x230] sm:$0xff]
        %v1084 = vld [vmem:[%s940 + $0x238] sm:$0xff]
        %v1085 = vld [vmem:[%s940 + $0x240] sm:$0xff]
        %v1086 = vld [vmem:[%s940 + $0x248] sm:$0xff]
        %v1087 = vld [vmem:[%s940 + $0x250] sm:$0xff]
        %v1088 = vld [vmem:[%s940 + $0x258] sm:$0xff]
        %v1089 = vld [vmem:[%s940 + $0x260] sm:$0xff]
        %v1090 = vld [vmem:[%s940 + $0x268] sm:$0xff]
        %v1091 = vld [vmem:[%s940 + $0x270] sm:$0xff]
        %v1092 = vld [vmem:[%s940 + $0x278] sm:$0xff]
        %v1093 = vld [vmem:[%s940 + $0x280] sm:$0xff]
        %v1094 = vld [vmem:[%s940 + $0x288] sm:$0xff]
        %v1095 = vld [vmem:[%s940 + $0x290] sm:$0xff]
        %v1096 = vld [vmem:[%s940 + $0x298] sm:$0xff]
        %v1097 = vld [vmem:[%s940 + $0x2a0] sm:$0xff]
        %v1098 = vld [vmem:[%s940 + $0x2a8] sm:$0xff]
        %v1099 = vld [vmem:[%s940 + $0x2b0] sm:$0xff]
        %v1100 = vld [vmem:[%s940 + $0x2b8] sm:$0xff]
        %v1101 = vld [vmem:[%s940 + $0x2c0] sm:$0xff]
        %v1102 = vld [vmem:[%s940 + $0x2c8] sm:$0xff]
        %v1103 = vld [vmem:[%s940 + $0x2d0] sm:$0xff]
        %v1104 = vld [vmem:[%s940 + $0x2d8] sm:$0xff]
        %v1105 = vld [vmem:[%s940 + $0x2e0] sm:$0xff]
        %v1106 = vld [vmem:[%s940 + $0x2e8] sm:$0xff]
        %v1107 = vld [vmem:[%s940 + $0x2f0] sm:$0xff]
        %v1108 = vld [vmem:[%s940 + $0x2f8] sm:$0xff]
        %v1109 = vld [vmem:[%s940 + $0x300] sm:$0xff]
        %v1110 = vld [vmem:[%s940 + $0x308] sm:$0xff]
        %v1111 = vld [vmem:[%s940 + $0x310] sm:$0xff]
        %v1112 = vld [vmem:[%s940 + $0x318] sm:$0xff]
        %v1113 = vld [vmem:[%s940 + $0x320] sm:$0xff]
        %v1114 = vld [vmem:[%s940 + $0x328] sm:$0xff]
        %v1115 = vld [vmem:[%s940 + $0x330] sm:$0xff]
        %v1116 = vld [vmem:[%s940 + $0x338] sm:$0xff]
        %v1117 = vld [vmem:[%s940 + $0x340] sm:$0xff]
        %v1118 = vld [vmem:[%s940 + $0x348] sm:$0xff]
        %v1119 = vld [vmem:[%s940 + $0x350] sm:$0xff]
        %v1120 = vld [vmem:[%s940 + $0x358] sm:$0xff]
        %v1121 = vld [vmem:[%s940 + $0x360] sm:$0xff]
        %v1122 = vld [vmem:[%s940 + $0x368] sm:$0xff]
        %v1123 = vld [vmem:[%s940 + $0x370] sm:$0xff]
        %v1124 = vld [vmem:[%s940 + $0x378] sm:$0xff]
        %v1125 = vld [vmem:[%s940 + $0x380] sm:$0xff]
        %v1126 = vld [vmem:[%s940 + $0x388] sm:$0xff]
        %v1127 = vld [vmem:[%s940 + $0x390] sm:$0xff]
        %v1128 = vld [vmem:[%s940 + $0x398] sm:$0xff]
        %v1129 = vld [vmem:[%s940 + $0x3a0] sm:$0xff]
        %v1130 = vld [vmem:[%s940 + $0x3a8] sm:$0xff]
        %v1131 = vld [vmem:[%s940 + $0x3b0] sm:$0xff]
        %v1132 = vld [vmem:[%s940 + $0x3b8] sm:$0xff]
        %v1133 = vld [vmem:[%s940 + $0x3c0] sm:$0xff]
        %v1134 = vld [vmem:[%s940 + $0x3c8] sm:$0xff]
        %v1135 = vld [vmem:[%s940 + $0x3d0] sm:$0xff]
        %v1136 = vld [vmem:[%s940 + $0x3d8] sm:$0xff]
        %v1137 = vld [vmem:[%s940 + $0x3e0] sm:$0xff]
        %v1138 = vld [vmem:[%s940 + $0x3e8] sm:$0xff]
        %v1139 = vld [vmem:[%s940 + $0x3f0] sm:$0xff]
        %v1140 = vld [vmem:[%s940 + $0x3f8] sm:$0xff]
        %v1141 = vld [vmem:[%s947] sm:$0xff]
        %v1142 = vld [vmem:[%s947 + $0x8] sm:$0xff]
        %v1143 = vld [vmem:[%s947 + $0x10] sm:$0xff]
        %v1144 = vld [vmem:[%s947 + $0x18] sm:$0xff]
        %v1145 = vld [vmem:[%s947 + $0x20] sm:$0xff]
        %v1146 = vld [vmem:[%s947 + $0x28] sm:$0xff]
        %v1147 = vld [vmem:[%s947 + $0x30] sm:$0xff]
        %v1148 = vld [vmem:[%s947 + $0x38] sm:$0xff]
        %p1149 = scmp.eq.s32.totalorder %s21, 0
        %s1150 = scalar_select %p1149, 0.0, 1.0
        %v1151 = vstv %s1150
        %v1152 = vmul.f32 %v1141, %v1151
        %v1153 = vmul.f32 %v1142, %v1151
        %v1154 = vmul.f32 %v1143, %v1151
        %v1155 = vmul.f32 %v1144, %v1151
        %v1156 = vmul.f32 %v1145, %v1151
        %v1157 = vmul.f32 %v1146, %v1151
        %v1158 = vmul.f32 %v1147, %v1151
        %v1159 = vmul.f32 %v1148, %v1151
        %v1160 = vld [vmem:[%s954] sm:$0xff]
        %v1161 = vld [vmem:[%s954 + $0x8] sm:$0xff]
        %v1162 = vld [vmem:[%s954 + $0x10] sm:$0xff]
        %v1163 = vld [vmem:[%s954 + $0x18] sm:$0xff]
        %v1164 = vld [vmem:[%s954 + $0x20] sm:$0xff]
        %v1165 = vld [vmem:[%s954 + $0x28] sm:$0xff]
        %v1166 = vld [vmem:[%s954 + $0x30] sm:$0xff]
        %v1167 = vld [vmem:[%s954 + $0x38] sm:$0xff]
        %p1168 = scmp.eq.s32.totalorder %s21, 1
        %s1169 = scalar_select %p1168, 0.0, 1.0
        %v1170 = vstv %s1169
        %v1171 = vmul.f32 %v1160, %v1170
        %v1172 = vmul.f32 %v1161, %v1170
        %v1173 = vmul.f32 %v1162, %v1170
        %v1174 = vmul.f32 %v1163, %v1170
        %v1175 = vmul.f32 %v1164, %v1170
        %v1176 = vmul.f32 %v1165, %v1170
        %v1177 = vmul.f32 %v1166, %v1170
        %v1178 = vmul.f32 %v1167, %v1170
        %v1179 = vlaneseq
        %v1180 = vshrl.u32 %v1179, 7
        %v1181 = vadd.s32 %v1180, 8
        %v1182 = vadd.s32 %v1180, 16
        %v1183 = vadd.s32 %v1180, 24
        %v1184 = vadd.s32 %v1180, 32
        %v1185 = vadd.s32 %v1180, 40
        %v1186 = vadd.s32 %v1180, 48
        %v1187 = vadd.s32 %v1180, 56
        %v1188 = vadd.s32 %v1180, 64
        %v1189 = vadd.s32 %v1180, 72
        %v1190 = vadd.s32 %v1180, 80
        %v1191 = vadd.s32 %v1180, 88
        %v1192 = vadd.s32 %v1180, 96
        %v1193 = vadd.s32 %v1180, 104
        %v1194 = vadd.s32 %v1180, 112
        %v1195 = vadd.s32 %v1180, 120
        %v1196 = vadd.s32 %v1180, 128
        %v1197 = vadd.s32 %v1180, 136
        %v1198 = vadd.s32 %v1180, 144
        %v1199 = vadd.s32 %v1180, 152
        %v1200 = vadd.s32 %v1180, 160
        %v1201 = vadd.s32 %v1180, 168
        %v1202 = vadd.s32 %v1180, 176
        %v1203 = vadd.s32 %v1180, 184
        %v1204 = vadd.s32 %v1180, 192
        %v1205 = vadd.s32 %v1180, 200
        %v1206 = vadd.s32 %v1180, 208
        %v1207 = vadd.s32 %v1180, 216
        %v1208 = vadd.s32 %v1180, 224
        %v1209 = vadd.s32 %v1180, 232
        %v1210 = vadd.s32 %v1180, 240
        %v1211 = vadd.s32 %v1180, 248
        %v1212 = vadd.s32 %v1180, 256
        %v1213 = vadd.s32 %v1180, 264
        %v1214 = vadd.s32 %v1180, 272
        %v1215 = vadd.s32 %v1180, 280
        %v1216 = vadd.s32 %v1180, 288
        %v1217 = vadd.s32 %v1180, 296
        %v1218 = vadd.s32 %v1180, 304
        %v1219 = vadd.s32 %v1180, 312
        %v1220 = vadd.s32 %v1180, 320
        %v1221 = vadd.s32 %v1180, 328
        %v1222 = vadd.s32 %v1180, 336
        %v1223 = vadd.s32 %v1180, 344
        %v1224 = vadd.s32 %v1180, 352
        %v1225 = vadd.s32 %v1180, 360
        %v1226 = vadd.s32 %v1180, 368
        %v1227 = vadd.s32 %v1180, 376
        %v1228 = vadd.s32 %v1180, 384
        %v1229 = vadd.s32 %v1180, 392
        %v1230 = vadd.s32 %v1180, 400
        %v1231 = vadd.s32 %v1180, 408
        %v1232 = vadd.s32 %v1180, 416
        %v1233 = vadd.s32 %v1180, 424
        %v1234 = vadd.s32 %v1180, 432
        %v1235 = vadd.s32 %v1180, 440
        %v1236 = vadd.s32 %v1180, 448
        %v1237 = vadd.s32 %v1180, 456
        %v1238 = vadd.s32 %v1180, 464
        %v1239 = vadd.s32 %v1180, 472
        %v1240 = vadd.s32 %v1180, 480
        %v1241 = vadd.s32 %v1180, 488
        %v1242 = vadd.s32 %v1180, 496
        %v1243 = vadd.s32 %v1180, 504
        %v1244 = vadd.s32 %v1180, 512
        %v1245 = vadd.s32 %v1180, 520
        %v1246 = vadd.s32 %v1180, 528
        %v1247 = vadd.s32 %v1180, 536
        %v1248 = vadd.s32 %v1180, 544
        %v1249 = vadd.s32 %v1180, 552
        %v1250 = vadd.s32 %v1180, 560
        %v1251 = vadd.s32 %v1180, 568
        %vm1252 = vcmp.lt.s32.totalorder %v1180, 0
        %v1253 = vsub.s32 0, %v1180
        %v1254 = vsel %vm1252, %v1253, %v1180
        %v1255 = vshrl.u32 %v1254, 5
        %v1256 = vand.u32 %v1254, 31
        %v1257 = vsub.s32 0, %v1256
        %v1258 = vsel %vm1252, %v1257, %v1256
        %vm1259 = vcmp.lt.s32.totalorder %v1181, 0
        %v1260 = vsub.s32 0, %v1181
        %v1261 = vsel %vm1259, %v1260, %v1181
        %v1262 = vshrl.u32 %v1261, 5
        %v1263 = vand.u32 %v1261, 31
        %v1264 = vsub.s32 0, %v1263
        %v1265 = vsel %vm1259, %v1264, %v1263
        %vm1266 = vcmp.lt.s32.totalorder %v1182, 0
        %v1267 = vsub.s32 0, %v1182
        %v1268 = vsel %vm1266, %v1267, %v1182
        %v1269 = vshrl.u32 %v1268, 5
        %v1270 = vand.u32 %v1268, 31
        %v1271 = vsub.s32 0, %v1270
        %v1272 = vsel %vm1266, %v1271, %v1270
        %vm1273 = vcmp.lt.s32.totalorder %v1183, 0
        %v1274 = vsub.s32 0, %v1183
        %v1275 = vsel %vm1273, %v1274, %v1183
        %v1276 = vshrl.u32 %v1275, 5
        %v1277 = vand.u32 %v1275, 31
        %v1278 = vsub.s32 0, %v1277
        %v1279 = vsel %vm1273, %v1278, %v1277
        %vm1280 = vcmp.lt.s32.totalorder %v1184, 0
        %v1281 = vsub.s32 0, %v1184
        %v1282 = vsel %vm1280, %v1281, %v1184
        %v1283 = vshrl.u32 %v1282, 5
        %v1284 = vand.u32 %v1282, 31
        %v1285 = vsub.s32 0, %v1284
        %v1286 = vsel %vm1280, %v1285, %v1284
        %vm1287 = vcmp.lt.s32.totalorder %v1185, 0
        %v1288 = vsub.s32 0, %v1185
        %v1289 = vsel %vm1287, %v1288, %v1185
        %v1290 = vshrl.u32 %v1289, 5
        %v1291 = vand.u32 %v1289, 31
        %v1292 = vsub.s32 0, %v1291
        %v1293 = vsel %vm1287, %v1292, %v1291
        %vm1294 = vcmp.lt.s32.totalorder %v1186, 0
        %v1295 = vsub.s32 0, %v1186
        %v1296 = vsel %vm1294, %v1295, %v1186
        %v1297 = vshrl.u32 %v1296, 5
        %v1298 = vand.u32 %v1296, 31
        %v1299 = vsub.s32 0, %v1298
        %v1300 = vsel %vm1294, %v1299, %v1298
        %vm1301 = vcmp.lt.s32.totalorder %v1187, 0
        %v1302 = vsub.s32 0, %v1187
        %v1303 = vsel %vm1301, %v1302, %v1187
        %v1304 = vshrl.u32 %v1303, 5
        %v1305 = vand.u32 %v1303, 31
        %v1306 = vsub.s32 0, %v1305
        %v1307 = vsel %vm1301, %v1306, %v1305
        %vm1308 = vcmp.lt.s32.totalorder %v1188, 0
        %v1309 = vsub.s32 0, %v1188
        %v1310 = vsel %vm1308, %v1309, %v1188
        %v1311 = vshrl.u32 %v1310, 5
        %v1312 = vand.u32 %v1310, 31
        %v1313 = vsub.s32 0, %v1312
        %v1314 = vsel %vm1308, %v1313, %v1312
        %vm1315 = vcmp.lt.s32.totalorder %v1189, 0
        %v1316 = vsub.s32 0, %v1189
        %v1317 = vsel %vm1315, %v1316, %v1189
        %v1318 = vshrl.u32 %v1317, 5
        %v1319 = vand.u32 %v1317, 31
        %v1320 = vsub.s32 0, %v1319
        %v1321 = vsel %vm1315, %v1320, %v1319
        %vm1322 = vcmp.lt.s32.totalorder %v1190, 0
        %v1323 = vsub.s32 0, %v1190
        %v1324 = vsel %vm1322, %v1323, %v1190
        %v1325 = vshrl.u32 %v1324, 5
        %v1326 = vand.u32 %v1324, 31
        %v1327 = vsub.s32 0, %v1326
        %v1328 = vsel %vm1322, %v1327, %v1326
        %vm1329 = vcmp.lt.s32.totalorder %v1191, 0
        %v1330 = vsub.s32 0, %v1191
        %v1331 = vsel %vm1329, %v1330, %v1191
        %v1332 = vshrl.u32 %v1331, 5
        %v1333 = vand.u32 %v1331, 31
        %v1334 = vsub.s32 0, %v1333
        %v1335 = vsel %vm1329, %v1334, %v1333
        %vm1336 = vcmp.lt.s32.totalorder %v1192, 0
        %v1337 = vsub.s32 0, %v1192
        %v1338 = vsel %vm1336, %v1337, %v1192
        %v1339 = vshrl.u32 %v1338, 5
        %v1340 = vand.u32 %v1338, 31
        %v1341 = vsub.s32 0, %v1340
        %v1342 = vsel %vm1336, %v1341, %v1340
        %vm1343 = vcmp.lt.s32.totalorder %v1193, 0
        %v1344 = vsub.s32 0, %v1193
        %v1345 = vsel %vm1343, %v1344, %v1193
        %v1346 = vshrl.u32 %v1345, 5
        %v1347 = vand.u32 %v1345, 31
        %v1348 = vsub.s32 0, %v1347
        %v1349 = vsel %vm1343, %v1348, %v1347
        %vm1350 = vcmp.lt.s32.totalorder %v1194, 0
        %v1351 = vsub.s32 0, %v1194
        %v1352 = vsel %vm1350, %v1351, %v1194
        %v1353 = vshrl.u32 %v1352, 5
        %v1354 = vand.u32 %v1352, 31
        %v1355 = vsub.s32 0, %v1354
        %v1356 = vsel %vm1350, %v1355, %v1354
        %vm1357 = vcmp.lt.s32.totalorder %v1195, 0
        %v1358 = vsub.s32 0, %v1195
        %v1359 = vsel %vm1357, %v1358, %v1195
        %v1360 = vshrl.u32 %v1359, 5
        %v1361 = vand.u32 %v1359, 31
        %v1362 = vsub.s32 0, %v1361
        %v1363 = vsel %vm1357, %v1362, %v1361
        %vm1364 = vcmp.lt.s32.totalorder %v1196, 0
        %v1365 = vsub.s32 0, %v1196
        %v1366 = vsel %vm1364, %v1365, %v1196
        %v1367 = vshrl.u32 %v1366, 5
        %v1368 = vand.u32 %v1366, 31
        %v1369 = vsub.s32 0, %v1368
        %v1370 = vsel %vm1364, %v1369, %v1368
        %vm1371 = vcmp.lt.s32.totalorder %v1197, 0
        %v1372 = vsub.s32 0, %v1197
        %v1373 = vsel %vm1371, %v1372, %v1197
        %v1374 = vshrl.u32 %v1373, 5
        %v1375 = vand.u32 %v1373, 31
        %v1376 = vsub.s32 0, %v1375
        %v1377 = vsel %vm1371, %v1376, %v1375
        %vm1378 = vcmp.lt.s32.totalorder %v1198, 0
        %v1379 = vsub.s32 0, %v1198
        %v1380 = vsel %vm1378, %v1379, %v1198
        %v1381 = vshrl.u32 %v1380, 5
        %v1382 = vand.u32 %v1380, 31
        %v1383 = vsub.s32 0, %v1382
        %v1384 = vsel %vm1378, %v1383, %v1382
        %vm1385 = vcmp.lt.s32.totalorder %v1199, 0
        %v1386 = vsub.s32 0, %v1199
        %v1387 = vsel %vm1385, %v1386, %v1199
        %v1388 = vshrl.u32 %v1387, 5
        %v1389 = vand.u32 %v1387, 31
        %v1390 = vsub.s32 0, %v1389
        %v1391 = vsel %vm1385, %v1390, %v1389
        %vm1392 = vcmp.lt.s32.totalorder %v1200, 0
        %v1393 = vsub.s32 0, %v1200
        %v1394 = vsel %vm1392, %v1393, %v1200
        %v1395 = vshrl.u32 %v1394, 5
        %v1396 = vand.u32 %v1394, 31
        %v1397 = vsub.s32 0, %v1396
        %v1398 = vsel %vm1392, %v1397, %v1396
        %vm1399 = vcmp.lt.s32.totalorder %v1201, 0
        %v1400 = vsub.s32 0, %v1201
        %v1401 = vsel %vm1399, %v1400, %v1201
        %v1402 = vshrl.u32 %v1401, 5
        %v1403 = vand.u32 %v1401, 31
        %v1404 = vsub.s32 0, %v1403
        %v1405 = vsel %vm1399, %v1404, %v1403
        %vm1406 = vcmp.lt.s32.totalorder %v1202, 0
        %v1407 = vsub.s32 0, %v1202
        %v1408 = vsel %vm1406, %v1407, %v1202
        %v1409 = vshrl.u32 %v1408, 5
        %v1410 = vand.u32 %v1408, 31
        %v1411 = vsub.s32 0, %v1410
        %v1412 = vsel %vm1406, %v1411, %v1410
        %vm1413 = vcmp.lt.s32.totalorder %v1203, 0
        %v1414 = vsub.s32 0, %v1203
        %v1415 = vsel %vm1413, %v1414, %v1203
        %v1416 = vshrl.u32 %v1415, 5
        %v1417 = vand.u32 %v1415, 31
        %v1418 = vsub.s32 0, %v1417
        %v1419 = vsel %vm1413, %v1418, %v1417
        %vm1420 = vcmp.lt.s32.totalorder %v1204, 0
        %v1421 = vsub.s32 0, %v1204
        %v1422 = vsel %vm1420, %v1421, %v1204
        %v1423 = vshrl.u32 %v1422, 5
        %v1424 = vand.u32 %v1422, 31
        %v1425 = vsub.s32 0, %v1424
        %v1426 = vsel %vm1420, %v1425, %v1424
        %vm1427 = vcmp.lt.s32.totalorder %v1205, 0
        %v1428 = vsub.s32 0, %v1205
        %v1429 = vsel %vm1427, %v1428, %v1205
        %v1430 = vshrl.u32 %v1429, 5
        %v1431 = vand.u32 %v1429, 31
        %v1432 = vsub.s32 0, %v1431
        %v1433 = vsel %vm1427, %v1432, %v1431
        %vm1434 = vcmp.lt.s32.totalorder %v1206, 0
        %v1435 = vsub.s32 0, %v1206
        %v1436 = vsel %vm1434, %v1435, %v1206
        %v1437 = vshrl.u32 %v1436, 5
        %v1438 = vand.u32 %v1436, 31
        %v1439 = vsub.s32 0, %v1438
        %v1440 = vsel %vm1434, %v1439, %v1438
        %vm1441 = vcmp.lt.s32.totalorder %v1207, 0
        %v1442 = vsub.s32 0, %v1207
        %v1443 = vsel %vm1441, %v1442, %v1207
        %v1444 = vshrl.u32 %v1443, 5
        %v1445 = vand.u32 %v1443, 31
        %v1446 = vsub.s32 0, %v1445
        %v1447 = vsel %vm1441, %v1446, %v1445
        %vm1448 = vcmp.lt.s32.totalorder %v1208, 0
        %v1449 = vsub.s32 0, %v1208
        %v1450 = vsel %vm1448, %v1449, %v1208
        %v1451 = vshrl.u32 %v1450, 5
        %v1452 = vand.u32 %v1450, 31
        %v1453 = vsub.s32 0, %v1452
        %v1454 = vsel %vm1448, %v1453, %v1452
        %vm1455 = vcmp.lt.s32.totalorder %v1209, 0
        %v1456 = vsub.s32 0, %v1209
        %v1457 = vsel %vm1455, %v1456, %v1209
        %v1458 = vshrl.u32 %v1457, 5
        %v1459 = vand.u32 %v1457, 31
        %v1460 = vsub.s32 0, %v1459
        %v1461 = vsel %vm1455, %v1460, %v1459
        %vm1462 = vcmp.lt.s32.totalorder %v1210, 0
        %v1463 = vsub.s32 0, %v1210
        %v1464 = vsel %vm1462, %v1463, %v1210
        %v1465 = vshrl.u32 %v1464, 5
        %v1466 = vand.u32 %v1464, 31
        %v1467 = vsub.s32 0, %v1466
        %v1468 = vsel %vm1462, %v1467, %v1466
        %vm1469 = vcmp.lt.s32.totalorder %v1211, 0
        %v1470 = vsub.s32 0, %v1211
        %v1471 = vsel %vm1469, %v1470, %v1211
        %v1472 = vshrl.u32 %v1471, 5
        %v1473 = vand.u32 %v1471, 31
        %v1474 = vsub.s32 0, %v1473
        %v1475 = vsel %vm1469, %v1474, %v1473
        %vm1476 = vcmp.lt.s32.totalorder %v1212, 0
        %v1477 = vsub.s32 0, %v1212
        %v1478 = vsel %vm1476, %v1477, %v1212
        %v1479 = vshrl.u32 %v1478, 5
        %v1480 = vand.u32 %v1478, 31
        %v1481 = vsub.s32 0, %v1480
        %v1482 = vsel %vm1476, %v1481, %v1480
        %vm1483 = vcmp.lt.s32.totalorder %v1213, 0
        %v1484 = vsub.s32 0, %v1213
        %v1485 = vsel %vm1483, %v1484, %v1213
        %v1486 = vshrl.u32 %v1485, 5
        %v1487 = vand.u32 %v1485, 31
        %v1488 = vsub.s32 0, %v1487
        %v1489 = vsel %vm1483, %v1488, %v1487
        %vm1490 = vcmp.lt.s32.totalorder %v1214, 0
        %v1491 = vsub.s32 0, %v1214
        %v1492 = vsel %vm1490, %v1491, %v1214
        %v1493 = vshrl.u32 %v1492, 5
        %v1494 = vand.u32 %v1492, 31
        %v1495 = vsub.s32 0, %v1494
        %v1496 = vsel %vm1490, %v1495, %v1494
        %vm1497 = vcmp.lt.s32.totalorder %v1215, 0
        %v1498 = vsub.s32 0, %v1215
        %v1499 = vsel %vm1497, %v1498, %v1215
        %v1500 = vshrl.u32 %v1499, 5
        %v1501 = vand.u32 %v1499, 31
        %v1502 = vsub.s32 0, %v1501
        %v1503 = vsel %vm1497, %v1502, %v1501
        %vm1504 = vcmp.lt.s32.totalorder %v1216, 0
        %v1505 = vsub.s32 0, %v1216
        %v1506 = vsel %vm1504, %v1505, %v1216
        %v1507 = vshrl.u32 %v1506, 5
        %v1508 = vand.u32 %v1506, 31
        %v1509 = vsub.s32 0, %v1508
        %v1510 = vsel %vm1504, %v1509, %v1508
        %vm1511 = vcmp.lt.s32.totalorder %v1217, 0
        %v1512 = vsub.s32 0, %v1217
        %v1513 = vsel %vm1511, %v1512, %v1217
        %v1514 = vshrl.u32 %v1513, 5
        %v1515 = vand.u32 %v1513, 31
        %v1516 = vsub.s32 0, %v1515
        %v1517 = vsel %vm1511, %v1516, %v1515
        %vm1518 = vcmp.lt.s32.totalorder %v1218, 0
        %v1519 = vsub.s32 0, %v1218
        %v1520 = vsel %vm1518, %v1519, %v1218
        %v1521 = vshrl.u32 %v1520, 5
        %v1522 = vand.u32 %v1520, 31
        %v1523 = vsub.s32 0, %v1522
        %v1524 = vsel %vm1518, %v1523, %v1522
        %vm1525 = vcmp.lt.s32.totalorder %v1219, 0
        %v1526 = vsub.s32 0, %v1219
        %v1527 = vsel %vm1525, %v1526, %v1219
        %v1528 = vshrl.u32 %v1527, 5
        %v1529 = vand.u32 %v1527, 31
        %v1530 = vsub.s32 0, %v1529
        %v1531 = vsel %vm1525, %v1530, %v1529
        %vm1532 = vcmp.lt.s32.totalorder %v1220, 0
        %v1533 = vsub.s32 0, %v1220
        %v1534 = vsel %vm1532, %v1533, %v1220
        %v1535 = vshrl.u32 %v1534, 5
        %v1536 = vand.u32 %v1534, 31
        %v1537 = vsub.s32 0, %v1536
        %v1538 = vsel %vm1532, %v1537, %v1536
        %vm1539 = vcmp.lt.s32.totalorder %v1221, 0
        %v1540 = vsub.s32 0, %v1221
        %v1541 = vsel %vm1539, %v1540, %v1221
        %v1542 = vshrl.u32 %v1541, 5
        %v1543 = vand.u32 %v1541, 31
        %v1544 = vsub.s32 0, %v1543
        %v1545 = vsel %vm1539, %v1544, %v1543
        %vm1546 = vcmp.lt.s32.totalorder %v1222, 0
        %v1547 = vsub.s32 0, %v1222
        %v1548 = vsel %vm1546, %v1547, %v1222
        %v1549 = vshrl.u32 %v1548, 5
        %v1550 = vand.u32 %v1548, 31
        %v1551 = vsub.s32 0, %v1550
        %v1552 = vsel %vm1546, %v1551, %v1550
        %vm1553 = vcmp.lt.s32.totalorder %v1223, 0
        %v1554 = vsub.s32 0, %v1223
        %v1555 = vsel %vm1553, %v1554, %v1223
        %v1556 = vshrl.u32 %v1555, 5
        %v1557 = vand.u32 %v1555, 31
        %v1558 = vsub.s32 0, %v1557
        %v1559 = vsel %vm1553, %v1558, %v1557
        %vm1560 = vcmp.lt.s32.totalorder %v1224, 0
        %v1561 = vsub.s32 0, %v1224
        %v1562 = vsel %vm1560, %v1561, %v1224
        %v1563 = vshrl.u32 %v1562, 5
        %v1564 = vand.u32 %v1562, 31
        %v1565 = vsub.s32 0, %v1564
        %v1566 = vsel %vm1560, %v1565, %v1564
        %vm1567 = vcmp.lt.s32.totalorder %v1225, 0
        %v1568 = vsub.s32 0, %v1225
        %v1569 = vsel %vm1567, %v1568, %v1225
        %v1570 = vshrl.u32 %v1569, 5
        %v1571 = vand.u32 %v1569, 31
        %v1572 = vsub.s32 0, %v1571
        %v1573 = vsel %vm1567, %v1572, %v1571
        %vm1574 = vcmp.lt.s32.totalorder %v1226, 0
        %v1575 = vsub.s32 0, %v1226
        %v1576 = vsel %vm1574, %v1575, %v1226
        %v1577 = vshrl.u32 %v1576, 5
        %v1578 = vand.u32 %v1576, 31
        %v1579 = vsub.s32 0, %v1578
        %v1580 = vsel %vm1574, %v1579, %v1578
        %vm1581 = vcmp.lt.s32.totalorder %v1227, 0
        %v1582 = vsub.s32 0, %v1227
        %v1583 = vsel %vm1581, %v1582, %v1227
        %v1584 = vshrl.u32 %v1583, 5
        %v1585 = vand.u32 %v1583, 31
        %v1586 = vsub.s32 0, %v1585
        %v1587 = vsel %vm1581, %v1586, %v1585
        %vm1588 = vcmp.lt.s32.totalorder %v1228, 0
        %v1589 = vsub.s32 0, %v1228
        %v1590 = vsel %vm1588, %v1589, %v1228
        %v1591 = vshrl.u32 %v1590, 5
        %v1592 = vand.u32 %v1590, 31
        %v1593 = vsub.s32 0, %v1592
        %v1594 = vsel %vm1588, %v1593, %v1592
        %vm1595 = vcmp.lt.s32.totalorder %v1229, 0
        %v1596 = vsub.s32 0, %v1229
        %v1597 = vsel %vm1595, %v1596, %v1229
        %v1598 = vshrl.u32 %v1597, 5
        %v1599 = vand.u32 %v1597, 31
        %v1600 = vsub.s32 0, %v1599
        %v1601 = vsel %vm1595, %v1600, %v1599
        %vm1602 = vcmp.lt.s32.totalorder %v1230, 0
        %v1603 = vsub.s32 0, %v1230
        %v1604 = vsel %vm1602, %v1603, %v1230
        %v1605 = vshrl.u32 %v1604, 5
        %v1606 = vand.u32 %v1604, 31
        %v1607 = vsub.s32 0, %v1606
        %v1608 = vsel %vm1602, %v1607, %v1606
        %vm1609 = vcmp.lt.s32.totalorder %v1231, 0
        %v1610 = vsub.s32 0, %v1231
        %v1611 = vsel %vm1609, %v1610, %v1231
        %v1612 = vshrl.u32 %v1611, 5
        %v1613 = vand.u32 %v1611, 31
        %v1614 = vsub.s32 0, %v1613
        %v1615 = vsel %vm1609, %v1614, %v1613
        %vm1616 = vcmp.lt.s32.totalorder %v1232, 0
        %v1617 = vsub.s32 0, %v1232
        %v1618 = vsel %vm1616, %v1617, %v1232
        %v1619 = vshrl.u32 %v1618, 5
        %v1620 = vand.u32 %v1618, 31
        %v1621 = vsub.s32 0, %v1620
        %v1622 = vsel %vm1616, %v1621, %v1620
        %vm1623 = vcmp.lt.s32.totalorder %v1233, 0
        %v1624 = vsub.s32 0, %v1233
        %v1625 = vsel %vm1623, %v1624, %v1233
        %v1626 = vshrl.u32 %v1625, 5
        %v1627 = vand.u32 %v1625, 31
        %v1628 = vsub.s32 0, %v1627
        %v1629 = vsel %vm1623, %v1628, %v1627
        %vm1630 = vcmp.lt.s32.totalorder %v1234, 0
        %v1631 = vsub.s32 0, %v1234
        %v1632 = vsel %vm1630, %v1631, %v1234
        %v1633 = vshrl.u32 %v1632, 5
        %v1634 = vand.u32 %v1632, 31
        %v1635 = vsub.s32 0, %v1634
        %v1636 = vsel %vm1630, %v1635, %v1634
        %vm1637 = vcmp.lt.s32.totalorder %v1235, 0
        %v1638 = vsub.s32 0, %v1235
        %v1639 = vsel %vm1637, %v1638, %v1235
        %v1640 = vshrl.u32 %v1639, 5
        %v1641 = vand.u32 %v1639, 31
        %v1642 = vsub.s32 0, %v1641
        %v1643 = vsel %vm1637, %v1642, %v1641
        %vm1644 = vcmp.lt.s32.totalorder %v1236, 0
        %v1645 = vsub.s32 0, %v1236
        %v1646 = vsel %vm1644, %v1645, %v1236
        %v1647 = vshrl.u32 %v1646, 5
        %v1648 = vand.u32 %v1646, 31
        %v1649 = vsub.s32 0, %v1648
        %v1650 = vsel %vm1644, %v1649, %v1648
        %vm1651 = vcmp.lt.s32.totalorder %v1237, 0
        %v1652 = vsub.s32 0, %v1237
        %v1653 = vsel %vm1651, %v1652, %v1237
        %v1654 = vshrl.u32 %v1653, 5
        %v1655 = vand.u32 %v1653, 31
        %v1656 = vsub.s32 0, %v1655
        %v1657 = vsel %vm1651, %v1656, %v1655
        %vm1658 = vcmp.lt.s32.totalorder %v1238, 0
        %v1659 = vsub.s32 0, %v1238
        %v1660 = vsel %vm1658, %v1659, %v1238
        %v1661 = vshrl.u32 %v1660, 5
        %v1662 = vand.u32 %v1660, 31
        %v1663 = vsub.s32 0, %v1662
        %v1664 = vsel %vm1658, %v1663, %v1662
        %vm1665 = vcmp.lt.s32.totalorder %v1239, 0
        %v1666 = vsub.s32 0, %v1239
        %v1667 = vsel %vm1665, %v1666, %v1239
        %v1668 = vshrl.u32 %v1667, 5
        %v1669 = vand.u32 %v1667, 31
        %v1670 = vsub.s32 0, %v1669
        %v1671 = vsel %vm1665, %v1670, %v1669
        %vm1672 = vcmp.lt.s32.totalorder %v1240, 0
        %v1673 = vsub.s32 0, %v1240
        %v1674 = vsel %vm1672, %v1673, %v1240
        %v1675 = vshrl.u32 %v1674, 5
        %v1676 = vand.u32 %v1674, 31
        %v1677 = vsub.s32 0, %v1676
        %v1678 = vsel %vm1672, %v1677, %v1676
        %vm1679 = vcmp.lt.s32.totalorder %v1241, 0
        %v1680 = vsub.s32 0, %v1241
        %v1681 = vsel %vm1679, %v1680, %v1241
        %v1682 = vshrl.u32 %v1681, 5
        %v1683 = vand.u32 %v1681, 31
        %v1684 = vsub.s32 0, %v1683
        %v1685 = vsel %vm1679, %v1684, %v1683
        %vm1686 = vcmp.lt.s32.totalorder %v1242, 0
        %v1687 = vsub.s32 0, %v1242
        %v1688 = vsel %vm1686, %v1687, %v1242
        %v1689 = vshrl.u32 %v1688, 5
        %v1690 = vand.u32 %v1688, 31
        %v1691 = vsub.s32 0, %v1690
        %v1692 = vsel %vm1686, %v1691, %v1690
        %vm1693 = vcmp.lt.s32.totalorder %v1243, 0
        %v1694 = vsub.s32 0, %v1243
        %v1695 = vsel %vm1693, %v1694, %v1243
        %v1696 = vshrl.u32 %v1695, 5
        %v1697 = vand.u32 %v1695, 31
        %v1698 = vsub.s32 0, %v1697
        %v1699 = vsel %vm1693, %v1698, %v1697
        %vm1700 = vcmp.lt.s32.totalorder %v1244, 0
        %v1701 = vsub.s32 0, %v1244
        %v1702 = vsel %vm1700, %v1701, %v1244
        %v1703 = vshrl.u32 %v1702, 5
        %v1704 = vand.u32 %v1702, 31
        %v1705 = vsub.s32 0, %v1704
        %v1706 = vsel %vm1700, %v1705, %v1704
        %vm1707 = vcmp.lt.s32.totalorder %v1245, 0
        %v1708 = vsub.s32 0, %v1245
        %v1709 = vsel %vm1707, %v1708, %v1245
        %v1710 = vshrl.u32 %v1709, 5
        %v1711 = vand.u32 %v1709, 31
        %v1712 = vsub.s32 0, %v1711
        %v1713 = vsel %vm1707, %v1712, %v1711
        %vm1714 = vcmp.lt.s32.totalorder %v1246, 0
        %v1715 = vsub.s32 0, %v1246
        %v1716 = vsel %vm1714, %v1715, %v1246
        %v1717 = vshrl.u32 %v1716, 5
        %v1718 = vand.u32 %v1716, 31
        %v1719 = vsub.s32 0, %v1718
        %v1720 = vsel %vm1714, %v1719, %v1718
        %vm1721 = vcmp.lt.s32.totalorder %v1247, 0
        %v1722 = vsub.s32 0, %v1247
        %v1723 = vsel %vm1721, %v1722, %v1247
        %v1724 = vshrl.u32 %v1723, 5
        %v1725 = vand.u32 %v1723, 31
        %v1726 = vsub.s32 0, %v1725
        %v1727 = vsel %vm1721, %v1726, %v1725
        %vm1728 = vcmp.lt.s32.totalorder %v1248, 0
        %v1729 = vsub.s32 0, %v1248
        %v1730 = vsel %vm1728, %v1729, %v1248
        %v1731 = vshrl.u32 %v1730, 5
        %v1732 = vand.u32 %v1730, 31
        %v1733 = vsub.s32 0, %v1732
        %v1734 = vsel %vm1728, %v1733, %v1732
        %vm1735 = vcmp.lt.s32.totalorder %v1249, 0
        %v1736 = vsub.s32 0, %v1249
        %v1737 = vsel %vm1735, %v1736, %v1249
        %v1738 = vshrl.u32 %v1737, 5
        %v1739 = vand.u32 %v1737, 31
        %v1740 = vsub.s32 0, %v1739
        %v1741 = vsel %vm1735, %v1740, %v1739
        %vm1742 = vcmp.lt.s32.totalorder %v1250, 0
        %v1743 = vsub.s32 0, %v1250
        %v1744 = vsel %vm1742, %v1743, %v1250
        %v1745 = vshrl.u32 %v1744, 5
        %v1746 = vand.u32 %v1744, 31
        %v1747 = vsub.s32 0, %v1746
        %v1748 = vsel %vm1742, %v1747, %v1746
        %vm1749 = vcmp.lt.s32.totalorder %v1251, 0
        %v1750 = vsub.s32 0, %v1251
        %v1751 = vsel %vm1749, %v1750, %v1251
        %v1752 = vshrl.u32 %v1751, 5
        %v1753 = vand.u32 %v1751, 31
        %v1754 = vsub.s32 0, %v1753
        %v1755 = vsel %vm1749, %v1754, %v1753
        %vm1756 = vcmp.ne.s32.totalorder %v1258, 0
        %vm1757 = vcmp.ne.s32.totalorder %v1265, 0
        %vm1758 = vcmp.ne.s32.totalorder %v1272, 0
        %vm1759 = vcmp.ne.s32.totalorder %v1279, 0
        %vm1760 = vcmp.ne.s32.totalorder %v1286, 0
        %vm1761 = vcmp.ne.s32.totalorder %v1293, 0
        %vm1762 = vcmp.ne.s32.totalorder %v1300, 0
        %vm1763 = vcmp.ne.s32.totalorder %v1307, 0
        %vm1764 = vcmp.ne.s32.totalorder %v1314, 0
        %vm1765 = vcmp.ne.s32.totalorder %v1321, 0
        %vm1766 = vcmp.ne.s32.totalorder %v1328, 0
        %vm1767 = vcmp.ne.s32.totalorder %v1335, 0
        %vm1768 = vcmp.ne.s32.totalorder %v1342, 0
        %vm1769 = vcmp.ne.s32.totalorder %v1349, 0
        %vm1770 = vcmp.ne.s32.totalorder %v1356, 0
        %vm1771 = vcmp.ne.s32.totalorder %v1363, 0
        %vm1772 = vcmp.ne.s32.totalorder %v1370, 0
        %vm1773 = vcmp.ne.s32.totalorder %v1377, 0
        %vm1774 = vcmp.ne.s32.totalorder %v1384, 0
        %vm1775 = vcmp.ne.s32.totalorder %v1391, 0
        %vm1776 = vcmp.ne.s32.totalorder %v1398, 0
        %vm1777 = vcmp.ne.s32.totalorder %v1405, 0
        %vm1778 = vcmp.ne.s32.totalorder %v1412, 0
        %vm1779 = vcmp.ne.s32.totalorder %v1419, 0
        %vm1780 = vcmp.ne.s32.totalorder %v1426, 0
        %vm1781 = vcmp.ne.s32.totalorder %v1433, 0
        %vm1782 = vcmp.ne.s32.totalorder %v1440, 0
        %vm1783 = vcmp.ne.s32.totalorder %v1447, 0
        %vm1784 = vcmp.ne.s32.totalorder %v1454, 0
        %vm1785 = vcmp.ne.s32.totalorder %v1461, 0
        %vm1786 = vcmp.ne.s32.totalorder %v1468, 0
        %vm1787 = vcmp.ne.s32.totalorder %v1475, 0
        %vm1788 = vcmp.ne.s32.totalorder %v1482, 0
        %vm1789 = vcmp.ne.s32.totalorder %v1489, 0
        %vm1790 = vcmp.ne.s32.totalorder %v1496, 0
        %vm1791 = vcmp.ne.s32.totalorder %v1503, 0
        %vm1792 = vcmp.ne.s32.totalorder %v1510, 0
        %vm1793 = vcmp.ne.s32.totalorder %v1517, 0
        %vm1794 = vcmp.ne.s32.totalorder %v1524, 0
        %vm1795 = vcmp.ne.s32.totalorder %v1531, 0
        %vm1796 = vcmp.ne.s32.totalorder %v1538, 0
        %vm1797 = vcmp.ne.s32.totalorder %v1545, 0
        %vm1798 = vcmp.ne.s32.totalorder %v1552, 0
        %vm1799 = vcmp.ne.s32.totalorder %v1559, 0
        %vm1800 = vcmp.ne.s32.totalorder %v1566, 0
        %vm1801 = vcmp.ne.s32.totalorder %v1573, 0
        %vm1802 = vcmp.ne.s32.totalorder %v1580, 0
        %vm1803 = vcmp.ne.s32.totalorder %v1587, 0
        %vm1804 = vcmp.ne.s32.totalorder %v1594, 0
        %vm1805 = vcmp.ne.s32.totalorder %v1601, 0
        %vm1806 = vcmp.ne.s32.totalorder %v1608, 0
        %vm1807 = vcmp.ne.s32.totalorder %v1615, 0
        %vm1808 = vcmp.ne.s32.totalorder %v1622, 0
        %vm1809 = vcmp.ne.s32.totalorder %v1629, 0
        %vm1810 = vcmp.ne.s32.totalorder %v1636, 0
        %vm1811 = vcmp.ne.s32.totalorder %v1643, 0
        %vm1812 = vcmp.ne.s32.totalorder %v1650, 0
        %vm1813 = vcmp.ne.s32.totalorder %v1657, 0
        %vm1814 = vcmp.ne.s32.totalorder %v1664, 0
        %vm1815 = vcmp.ne.s32.totalorder %v1671, 0
        %vm1816 = vcmp.ne.s32.totalorder %v1678, 0
        %vm1817 = vcmp.ne.s32.totalorder %v1685, 0
        %vm1818 = vcmp.ne.s32.totalorder %v1692, 0
        %vm1819 = vcmp.ne.s32.totalorder %v1699, 0
        %vm1820 = vcmp.ne.s32.totalorder %v1706, 0
        %vm1821 = vcmp.ne.s32.totalorder %v1713, 0
        %vm1822 = vcmp.ne.s32.totalorder %v1720, 0
        %vm1823 = vcmp.ne.s32.totalorder %v1727, 0
        %vm1824 = vcmp.ne.s32.totalorder %v1734, 0
        %vm1825 = vcmp.ne.s32.totalorder %v1741, 0
        %vm1826 = vcmp.ne.s32.totalorder %v1748, 0
        %vm1827 = vcmp.ne.s32.totalorder %v1755, 0
        %vm1828 = vcmp.lt.s32.totalorder %v1258, 0
        %vm1829 = vcmp.lt.s32.totalorder %v1265, 0
        %vm1830 = vcmp.lt.s32.totalorder %v1272, 0
        %vm1831 = vcmp.lt.s32.totalorder %v1279, 0
        %vm1832 = vcmp.lt.s32.totalorder %v1286, 0
        %vm1833 = vcmp.lt.s32.totalorder %v1293, 0
        %vm1834 = vcmp.lt.s32.totalorder %v1300, 0
        %vm1835 = vcmp.lt.s32.totalorder %v1307, 0
        %vm1836 = vcmp.lt.s32.totalorder %v1314, 0
        %vm1837 = vcmp.lt.s32.totalorder %v1321, 0
        %vm1838 = vcmp.lt.s32.totalorder %v1328, 0
        %vm1839 = vcmp.lt.s32.totalorder %v1335, 0
        %vm1840 = vcmp.lt.s32.totalorder %v1342, 0
        %vm1841 = vcmp.lt.s32.totalorder %v1349, 0
        %vm1842 = vcmp.lt.s32.totalorder %v1356, 0
        %vm1843 = vcmp.lt.s32.totalorder %v1363, 0
        %vm1844 = vcmp.lt.s32.totalorder %v1370, 0
        %vm1845 = vcmp.lt.s32.totalorder %v1377, 0
        %vm1846 = vcmp.lt.s32.totalorder %v1384, 0
        %vm1847 = vcmp.lt.s32.totalorder %v1391, 0
        %vm1848 = vcmp.lt.s32.totalorder %v1398, 0
        %vm1849 = vcmp.lt.s32.totalorder %v1405, 0
        %vm1850 = vcmp.lt.s32.totalorder %v1412, 0
        %vm1851 = vcmp.lt.s32.totalorder %v1419, 0
        %vm1852 = vcmp.lt.s32.totalorder %v1426, 0
        %vm1853 = vcmp.lt.s32.totalorder %v1433, 0
        %vm1854 = vcmp.lt.s32.totalorder %v1440, 0
        %vm1855 = vcmp.lt.s32.totalorder %v1447, 0
        %vm1856 = vcmp.lt.s32.totalorder %v1454, 0
        %vm1857 = vcmp.lt.s32.totalorder %v1461, 0
        %vm1858 = vcmp.lt.s32.totalorder %v1468, 0
        %vm1859 = vcmp.lt.s32.totalorder %v1475, 0
        %vm1860 = vcmp.lt.s32.totalorder %v1482, 0
        %vm1861 = vcmp.lt.s32.totalorder %v1489, 0
        %vm1862 = vcmp.lt.s32.totalorder %v1496, 0
        %vm1863 = vcmp.lt.s32.totalorder %v1503, 0
        %vm1864 = vcmp.lt.s32.totalorder %v1510, 0
        %vm1865 = vcmp.lt.s32.totalorder %v1517, 0
        %vm1866 = vcmp.lt.s32.totalorder %v1524, 0
        %vm1867 = vcmp.lt.s32.totalorder %v1531, 0
        %vm1868 = vcmp.lt.s32.totalorder %v1538, 0
        %vm1869 = vcmp.lt.s32.totalorder %v1545, 0
        %vm1870 = vcmp.lt.s32.totalorder %v1552, 0
        %vm1871 = vcmp.lt.s32.totalorder %v1559, 0
        %vm1872 = vcmp.lt.s32.totalorder %v1566, 0
        %vm1873 = vcmp.lt.s32.totalorder %v1573, 0
        %vm1874 = vcmp.lt.s32.totalorder %v1580, 0
        %vm1875 = vcmp.lt.s32.totalorder %v1587, 0
        %vm1876 = vcmp.lt.s32.totalorder %v1594, 0
        %vm1877 = vcmp.lt.s32.totalorder %v1601, 0
        %vm1878 = vcmp.lt.s32.totalorder %v1608, 0
        %vm1879 = vcmp.lt.s32.totalorder %v1615, 0
        %vm1880 = vcmp.lt.s32.totalorder %v1622, 0
        %vm1881 = vcmp.lt.s32.totalorder %v1629, 0
        %vm1882 = vcmp.lt.s32.totalorder %v1636, 0
        %vm1883 = vcmp.lt.s32.totalorder %v1643, 0
        %vm1884 = vcmp.lt.s32.totalorder %v1650, 0
        %vm1885 = vcmp.lt.s32.totalorder %v1657, 0
        %vm1886 = vcmp.lt.s32.totalorder %v1664, 0
        %vm1887 = vcmp.lt.s32.totalorder %v1671, 0
        %vm1888 = vcmp.lt.s32.totalorder %v1678, 0
        %vm1889 = vcmp.lt.s32.totalorder %v1685, 0
        %vm1890 = vcmp.lt.s32.totalorder %v1692, 0
        %vm1891 = vcmp.lt.s32.totalorder %v1699, 0
        %vm1892 = vcmp.lt.s32.totalorder %v1706, 0
        %vm1893 = vcmp.lt.s32.totalorder %v1713, 0
        %vm1894 = vcmp.lt.s32.totalorder %v1720, 0
        %vm1895 = vcmp.lt.s32.totalorder %v1727, 0
        %vm1896 = vcmp.lt.s32.totalorder %v1734, 0
        %vm1897 = vcmp.lt.s32.totalorder %v1741, 0
        %vm1898 = vcmp.lt.s32.totalorder %v1748, 0
        %vm1899 = vcmp.lt.s32.totalorder %v1755, 0
        %vm1900 = vmand %vm1828, %vm1756
        %vm1901 = vmand %vm1829, %vm1757
        %vm1902 = vmand %vm1830, %vm1758
        %vm1903 = vmand %vm1831, %vm1759
        %vm1904 = vmand %vm1832, %vm1760
        %vm1905 = vmand %vm1833, %vm1761
        %vm1906 = vmand %vm1834, %vm1762
        %vm1907 = vmand %vm1835, %vm1763
        %vm1908 = vmand %vm1836, %vm1764
        %vm1909 = vmand %vm1837, %vm1765
        %vm1910 = vmand %vm1838, %vm1766
        %vm1911 = vmand %vm1839, %vm1767
        %vm1912 = vmand %vm1840, %vm1768
        %vm1913 = vmand %vm1841, %vm1769
        %vm1914 = vmand %vm1842, %vm1770
        %vm1915 = vmand %vm1843, %vm1771
        %vm1916 = vmand %vm1844, %vm1772
        %vm1917 = vmand %vm1845, %vm1773
        %vm1918 = vmand %vm1846, %vm1774
        %vm1919 = vmand %vm1847, %vm1775
        %vm1920 = vmand %vm1848, %vm1776
        %vm1921 = vmand %vm1849, %vm1777
        %vm1922 = vmand %vm1850, %vm1778
        %vm1923 = vmand %vm1851, %vm1779
        %vm1924 = vmand %vm1852, %vm1780
        %vm1925 = vmand %vm1853, %vm1781
        %vm1926 = vmand %vm1854, %vm1782
        %vm1927 = vmand %vm1855, %vm1783
        %vm1928 = vmand %vm1856, %vm1784
        %vm1929 = vmand %vm1857, %vm1785
        %vm1930 = vmand %vm1858, %vm1786
        %vm1931 = vmand %vm1859, %vm1787
        %vm1932 = vmand %vm1860, %vm1788
        %vm1933 = vmand %vm1861, %vm1789
        %vm1934 = vmand %vm1862, %vm1790
        %vm1935 = vmand %vm1863, %vm1791
        %vm1936 = vmand %vm1864, %vm1792
        %vm1937 = vmand %vm1865, %vm1793
        %vm1938 = vmand %vm1866, %vm1794
        %vm1939 = vmand %vm1867, %vm1795
        %vm1940 = vmand %vm1868, %vm1796
        %vm1941 = vmand %vm1869, %vm1797
        %vm1942 = vmand %vm1870, %vm1798
        %vm1943 = vmand %vm1871, %vm1799
        %vm1944 = vmand %vm1872, %vm1800
        %vm1945 = vmand %vm1873, %vm1801
        %vm1946 = vmand %vm1874, %vm1802
        %vm1947 = vmand %vm1875, %vm1803
        %vm1948 = vmand %vm1876, %vm1804
        %vm1949 = vmand %vm1877, %vm1805
        %vm1950 = vmand %vm1878, %vm1806
        %vm1951 = vmand %vm1879, %vm1807
        %vm1952 = vmand %vm1880, %vm1808
        %vm1953 = vmand %vm1881, %vm1809
        %vm1954 = vmand %vm1882, %vm1810
        %vm1955 = vmand %vm1883, %vm1811
        %vm1956 = vmand %vm1884, %vm1812
        %vm1957 = vmand %vm1885, %vm1813
        %vm1958 = vmand %vm1886, %vm1814
        %vm1959 = vmand %vm1887, %vm1815
        %vm1960 = vmand %vm1888, %vm1816
        %vm1961 = vmand %vm1889, %vm1817
        %vm1962 = vmand %vm1890, %vm1818
        %vm1963 = vmand %vm1891, %vm1819
        %vm1964 = vmand %vm1892, %vm1820
        %vm1965 = vmand %vm1893, %vm1821
        %vm1966 = vmand %vm1894, %vm1822
        %vm1967 = vmand %vm1895, %vm1823
        %vm1968 = vmand %vm1896, %vm1824
        %vm1969 = vmand %vm1897, %vm1825
        %vm1970 = vmand %vm1898, %vm1826
        %vm1971 = vmand %vm1899, %vm1827
        %v1972 = vadd.s32 %v1258, 32
        %v1973 = vadd.s32 %v1265, 32
        %v1974 = vadd.s32 %v1272, 32
        %v1975 = vadd.s32 %v1279, 32
        %v1976 = vadd.s32 %v1286, 32
        %v1977 = vadd.s32 %v1293, 32
        %v1978 = vadd.s32 %v1300, 32
        %v1979 = vadd.s32 %v1307, 32
        %v1980 = vadd.s32 %v1314, 32
        %v1981 = vadd.s32 %v1321, 32
        %v1982 = vadd.s32 %v1328, 32
        %v1983 = vadd.s32 %v1335, 32
        %v1984 = vadd.s32 %v1342, 32
        %v1985 = vadd.s32 %v1349, 32
        %v1986 = vadd.s32 %v1356, 32
        %v1987 = vadd.s32 %v1363, 32
        %v1988 = vadd.s32 %v1370, 32
        %v1989 = vadd.s32 %v1377, 32
        %v1990 = vadd.s32 %v1384, 32
        %v1991 = vadd.s32 %v1391, 32
        %v1992 = vadd.s32 %v1398, 32
        %v1993 = vadd.s32 %v1405, 32
        %v1994 = vadd.s32 %v1412, 32
        %v1995 = vadd.s32 %v1419, 32
        %v1996 = vadd.s32 %v1426, 32
        %v1997 = vadd.s32 %v1433, 32
        %v1998 = vadd.s32 %v1440, 32
        %v1999 = vadd.s32 %v1447, 32
        %v2000 = vadd.s32 %v1454, 32
        %v2001 = vadd.s32 %v1461, 32
        %v2002 = vadd.s32 %v1468, 32
        %v2003 = vadd.s32 %v1475, 32
        %v2004 = vadd.s32 %v1482, 32
        %v2005 = vadd.s32 %v1489, 32
        %v2006 = vadd.s32 %v1496, 32
        %v2007 = vadd.s32 %v1503, 32
        %v2008 = vadd.s32 %v1510, 32
        %v2009 = vadd.s32 %v1517, 32
        %v2010 = vadd.s32 %v1524, 32
        %v2011 = vadd.s32 %v1531, 32
        %v2012 = vadd.s32 %v1538, 32
        %v2013 = vadd.s32 %v1545, 32
        %v2014 = vadd.s32 %v1552, 32
        %v2015 = vadd.s32 %v1559, 32
        %v2016 = vadd.s32 %v1566, 32
        %v2017 = vadd.s32 %v1573, 32
        %v2018 = vadd.s32 %v1580, 32
        %v2019 = vadd.s32 %v1587, 32
        %v2020 = vadd.s32 %v1594, 32
        %v2021 = vadd.s32 %v1601, 32
        %v2022 = vadd.s32 %v1608, 32
        %v2023 = vadd.s32 %v1615, 32
        %v2024 = vadd.s32 %v1622, 32
        %v2025 = vadd.s32 %v1629, 32
        %v2026 = vadd.s32 %v1636, 32
        %v2027 = vadd.s32 %v1643, 32
        %v2028 = vadd.s32 %v1650, 32
        %v2029 = vadd.s32 %v1657, 32
        %v2030 = vadd.s32 %v1664, 32
        %v2031 = vadd.s32 %v1671, 32
        %v2032 = vadd.s32 %v1678, 32
        %v2033 = vadd.s32 %v1685, 32
        %v2034 = vadd.s32 %v1692, 32
        %v2035 = vadd.s32 %v1699, 32
        %v2036 = vadd.s32 %v1706, 32
        %v2037 = vadd.s32 %v1713, 32
        %v2038 = vadd.s32 %v1720, 32
        %v2039 = vadd.s32 %v1727, 32
        %v2040 = vadd.s32 %v1734, 32
        %v2041 = vadd.s32 %v1741, 32
        %v2042 = vadd.s32 %v1748, 32
        %v2043 = vadd.s32 %v1755, 32
        %v2044 = vsel %vm1900, %v1972, %v1258
        %v2045 = vsel %vm1901, %v1973, %v1265
        %v2046 = vsel %vm1902, %v1974, %v1272
        %v2047 = vsel %vm1903, %v1975, %v1279
        %v2048 = vsel %vm1904, %v1976, %v1286
        %v2049 = vsel %vm1905, %v1977, %v1293
        %v2050 = vsel %vm1906, %v1978, %v1300
        %v2051 = vsel %vm1907, %v1979, %v1307
        %v2052 = vsel %vm1908, %v1980, %v1314
        %v2053 = vsel %vm1909, %v1981, %v1321
        %v2054 = vsel %vm1910, %v1982, %v1328
        %v2055 = vsel %vm1911, %v1983, %v1335
        %v2056 = vsel %vm1912, %v1984, %v1342
        %v2057 = vsel %vm1913, %v1985, %v1349
        %v2058 = vsel %vm1914, %v1986, %v1356
        %v2059 = vsel %vm1915, %v1987, %v1363
        %v2060 = vsel %vm1916, %v1988, %v1370
        %v2061 = vsel %vm1917, %v1989, %v1377
        %v2062 = vsel %vm1918, %v1990, %v1384
        %v2063 = vsel %vm1919, %v1991, %v1391
        %v2064 = vsel %vm1920, %v1992, %v1398
        %v2065 = vsel %vm1921, %v1993, %v1405
        %v2066 = vsel %vm1922, %v1994, %v1412
        %v2067 = vsel %vm1923, %v1995, %v1419
        %v2068 = vsel %vm1924, %v1996, %v1426
        %v2069 = vsel %vm1925, %v1997, %v1433
        %v2070 = vsel %vm1926, %v1998, %v1440
        %v2071 = vsel %vm1927, %v1999, %v1447
        %v2072 = vsel %vm1928, %v2000, %v1454
        %v2073 = vsel %vm1929, %v2001, %v1461
        %v2074 = vsel %vm1930, %v2002, %v1468
        %v2075 = vsel %vm1931, %v2003, %v1475
        %v2076 = vsel %vm1932, %v2004, %v1482
        %v2077 = vsel %vm1933, %v2005, %v1489
        %v2078 = vsel %vm1934, %v2006, %v1496
        %v2079 = vsel %vm1935, %v2007, %v1503
        %v2080 = vsel %vm1936, %v2008, %v1510
        %v2081 = vsel %vm1937, %v2009, %v1517
        %v2082 = vsel %vm1938, %v2010, %v1524
        %v2083 = vsel %vm1939, %v2011, %v1531
        %v2084 = vsel %vm1940, %v2012, %v1538
        %v2085 = vsel %vm1941, %v2013, %v1545
        %v2086 = vsel %vm1942, %v2014, %v1552
        %v2087 = vsel %vm1943, %v2015, %v1559
        %v2088 = vsel %vm1944, %v2016, %v1566
        %v2089 = vsel %vm1945, %v2017, %v1573
        %v2090 = vsel %vm1946, %v2018, %v1580
        %v2091 = vsel %vm1947, %v2019, %v1587
        %v2092 = vsel %vm1948, %v2020, %v1594
        %v2093 = vsel %vm1949, %v2021, %v1601
        %v2094 = vsel %vm1950, %v2022, %v1608
        %v2095 = vsel %vm1951, %v2023, %v1615
        %v2096 = vsel %vm1952, %v2024, %v1622
        %v2097 = vsel %vm1953, %v2025, %v1629
        %v2098 = vsel %vm1954, %v2026, %v1636
        %v2099 = vsel %vm1955, %v2027, %v1643
        %v2100 = vsel %vm1956, %v2028, %v1650
        %v2101 = vsel %vm1957, %v2029, %v1657
        %v2102 = vsel %vm1958, %v2030, %v1664
        %v2103 = vsel %vm1959, %v2031, %v1671
        %v2104 = vsel %vm1960, %v2032, %v1678
        %v2105 = vsel %vm1961, %v2033, %v1685
        %v2106 = vsel %vm1962, %v2034, %v1692
        %v2107 = vsel %vm1963, %v2035, %v1699
        %v2108 = vsel %vm1964, %v2036, %v1706
        %v2109 = vsel %vm1965, %v2037, %v1713
        %v2110 = vsel %vm1966, %v2038, %v1720
        %v2111 = vsel %vm1967, %v2039, %v1727
        %v2112 = vsel %vm1968, %v2040, %v1734
        %v2113 = vsel %vm1969, %v2041, %v1741
        %v2114 = vsel %vm1970, %v2042, %v1748
        %v2115 = vsel %vm1971, %v2043, %v1755
        %vm2116 = vcmp.eq.s32.totalorder %v2044, 0
        %vm2117 = vcmp.eq.s32.totalorder %v2045, 0
        %vm2118 = vcmp.eq.s32.totalorder %v2046, 0
        %vm2119 = vcmp.eq.s32.totalorder %v2047, 0
        %vm2120 = vcmp.eq.s32.totalorder %v2048, 0
        %vm2121 = vcmp.eq.s32.totalorder %v2049, 0
        %vm2122 = vcmp.eq.s32.totalorder %v2050, 0
        %vm2123 = vcmp.eq.s32.totalorder %v2051, 0
        %vm2124 = vcmp.eq.s32.totalorder %v2052, 0
        %vm2125 = vcmp.eq.s32.totalorder %v2053, 0
        %vm2126 = vcmp.eq.s32.totalorder %v2054, 0
        %vm2127 = vcmp.eq.s32.totalorder %v2055, 0
        %vm2128 = vcmp.eq.s32.totalorder %v2056, 0
        %vm2129 = vcmp.eq.s32.totalorder %v2057, 0
        %vm2130 = vcmp.eq.s32.totalorder %v2058, 0
        %vm2131 = vcmp.eq.s32.totalorder %v2059, 0
        %vm2132 = vcmp.eq.s32.totalorder %v2060, 0
        %vm2133 = vcmp.eq.s32.totalorder %v2061, 0
        %vm2134 = vcmp.eq.s32.totalorder %v2062, 0
        %vm2135 = vcmp.eq.s32.totalorder %v2063, 0
        %vm2136 = vcmp.eq.s32.totalorder %v2064, 0
        %vm2137 = vcmp.eq.s32.totalorder %v2065, 0
        %vm2138 = vcmp.eq.s32.totalorder %v2066, 0
        %vm2139 = vcmp.eq.s32.totalorder %v2067, 0
        %vm2140 = vcmp.eq.s32.totalorder %v2068, 0
        %vm2141 = vcmp.eq.s32.totalorder %v2069, 0
        %vm2142 = vcmp.eq.s32.totalorder %v2070, 0
        %vm2143 = vcmp.eq.s32.totalorder %v2071, 0
        %vm2144 = vcmp.eq.s32.totalorder %v2072, 0
        %vm2145 = vcmp.eq.s32.totalorder %v2073, 0
        %vm2146 = vcmp.eq.s32.totalorder %v2074, 0
        %vm2147 = vcmp.eq.s32.totalorder %v2075, 0
        %vm2148 = vcmp.eq.s32.totalorder %v2076, 0
        %vm2149 = vcmp.eq.s32.totalorder %v2077, 0
        %vm2150 = vcmp.eq.s32.totalorder %v2078, 0
        %vm2151 = vcmp.eq.s32.totalorder %v2079, 0
        %vm2152 = vcmp.eq.s32.totalorder %v2080, 0
        %vm2153 = vcmp.eq.s32.totalorder %v2081, 0
        %vm2154 = vcmp.eq.s32.totalorder %v2082, 0
        %vm2155 = vcmp.eq.s32.totalorder %v2083, 0
        %vm2156 = vcmp.eq.s32.totalorder %v2084, 0
        %vm2157 = vcmp.eq.s32.totalorder %v2085, 0
        %vm2158 = vcmp.eq.s32.totalorder %v2086, 0
        %vm2159 = vcmp.eq.s32.totalorder %v2087, 0
        %vm2160 = vcmp.eq.s32.totalorder %v2088, 0
        %vm2161 = vcmp.eq.s32.totalorder %v2089, 0
        %vm2162 = vcmp.eq.s32.totalorder %v2090, 0
        %vm2163 = vcmp.eq.s32.totalorder %v2091, 0
        %vm2164 = vcmp.eq.s32.totalorder %v2092, 0
        %vm2165 = vcmp.eq.s32.totalorder %v2093, 0
        %vm2166 = vcmp.eq.s32.totalorder %v2094, 0
        %vm2167 = vcmp.eq.s32.totalorder %v2095, 0
        %vm2168 = vcmp.eq.s32.totalorder %v2096, 0
        %vm2169 = vcmp.eq.s32.totalorder %v2097, 0
        %vm2170 = vcmp.eq.s32.totalorder %v2098, 0
        %vm2171 = vcmp.eq.s32.totalorder %v2099, 0
        %vm2172 = vcmp.eq.s32.totalorder %v2100, 0
        %vm2173 = vcmp.eq.s32.totalorder %v2101, 0
        %vm2174 = vcmp.eq.s32.totalorder %v2102, 0
        %vm2175 = vcmp.eq.s32.totalorder %v2103, 0
        %vm2176 = vcmp.eq.s32.totalorder %v2104, 0
        %vm2177 = vcmp.eq.s32.totalorder %v2105, 0
        %vm2178 = vcmp.eq.s32.totalorder %v2106, 0
        %vm2179 = vcmp.eq.s32.totalorder %v2107, 0
        %vm2180 = vcmp.eq.s32.totalorder %v2108, 0
        %vm2181 = vcmp.eq.s32.totalorder %v2109, 0
        %vm2182 = vcmp.eq.s32.totalorder %v2110, 0
        %vm2183 = vcmp.eq.s32.totalorder %v2111, 0
        %vm2184 = vcmp.eq.s32.totalorder %v2112, 0
        %vm2185 = vcmp.eq.s32.totalorder %v2113, 0
        %vm2186 = vcmp.eq.s32.totalorder %v2114, 0
        %vm2187 = vcmp.eq.s32.totalorder %v2115, 0
        %v2188 = vrot.slane %v1152, 7
        %v2189 = vrot.slane %v1156, 7
        %v2190 = vrot.slane %v1153, 7
        %v2191 = vrot.slane %v1157, 7
        %v2192 = vrot.slane %v1154, 7
        %v2193 = vrot.slane %v1158, 7
        %v2194 = vrot.slane %v1155, 7
        %v2195 = vrot.slane %v1159, 7
        %v2196 = vrot.slane %v1013, 7
        %v2197 = vrot.slane %v1077, 7
        %v2198 = vrot.slane %v1014, 7
        %v2199 = vrot.slane %v1078, 7
        %v2200 = vrot.slane %v1015, 7
        %v2201 = vrot.slane %v1079, 7
        %v2202 = vrot.slane %v1016, 7
        %v2203 = vrot.slane %v1080, 7
        %v2204 = vrot.slane %v1017, 7
        %v2205 = vrot.slane %v1081, 7
        %v2206 = vrot.slane %v1018, 7
        %v2207 = vrot.slane %v1082, 7
        %v2208 = vrot.slane %v1019, 7
        %v2209 = vrot.slane %v1083, 7
        %v2210 = vrot.slane %v1020, 7
        %v2211 = vrot.slane %v1084, 7
        %v2212 = vrot.slane %v1021, 7
        %v2213 = vrot.slane %v1085, 7
        %v2214 = vrot.slane %v1022, 7
        %v2215 = vrot.slane %v1086, 7
        %v2216 = vrot.slane %v1023, 7
        %v2217 = vrot.slane %v1087, 7
        %v2218 = vrot.slane %v1024, 7
        %v2219 = vrot.slane %v1088, 7
        %v2220 = vrot.slane %v1025, 7
        %v2221 = vrot.slane %v1089, 7
        %v2222 = vrot.slane %v1026, 7
        %v2223 = vrot.slane %v1090, 7
        %v2224 = vrot.slane %v1027, 7
        %v2225 = vrot.slane %v1091, 7
        %v2226 = vrot.slane %v1028, 7
        %v2227 = vrot.slane %v1092, 7
        %v2228 = vrot.slane %v1029, 7
        %v2229 = vrot.slane %v1093, 7
        %v2230 = vrot.slane %v1030, 7
        %v2231 = vrot.slane %v1094, 7
        %v2232 = vrot.slane %v1031, 7
        %v2233 = vrot.slane %v1095, 7
        %v2234 = vrot.slane %v1032, 7
        %v2235 = vrot.slane %v1096, 7
        %v2236 = vrot.slane %v1033, 7
        %v2237 = vrot.slane %v1097, 7
        %v2238 = vrot.slane %v1034, 7
        %v2239 = vrot.slane %v1098, 7
        %v2240 = vrot.slane %v1035, 7
        %v2241 = vrot.slane %v1099, 7
        %v2242 = vrot.slane %v1036, 7
        %v2243 = vrot.slane %v1100, 7
        %v2244 = vrot.slane %v1037, 7
        %v2245 = vrot.slane %v1101, 7
        %v2246 = vrot.slane %v1038, 7
        %v2247 = vrot.slane %v1102, 7
        %v2248 = vrot.slane %v1039, 7
        %v2249 = vrot.slane %v1103, 7
        %v2250 = vrot.slane %v1040, 7
        %v2251 = vrot.slane %v1104, 7
        %v2252 = vrot.slane %v1041, 7
        %v2253 = vrot.slane %v1105, 7
        %v2254 = vrot.slane %v1042, 7
        %v2255 = vrot.slane %v1106, 7
        %v2256 = vrot.slane %v1043, 7
        %v2257 = vrot.slane %v1107, 7
        %v2258 = vrot.slane %v1044, 7
        %v2259 = vrot.slane %v1108, 7
        %v2260 = vrot.slane %v1045, 7
        %v2261 = vrot.slane %v1109, 7
        %v2262 = vrot.slane %v1046, 7
        %v2263 = vrot.slane %v1110, 7
        %v2264 = vrot.slane %v1047, 7
        %v2265 = vrot.slane %v1111, 7
        %v2266 = vrot.slane %v1048, 7
        %v2267 = vrot.slane %v1112, 7
        %v2268 = vrot.slane %v1049, 7
        %v2269 = vrot.slane %v1113, 7
        %v2270 = vrot.slane %v1050, 7
        %v2271 = vrot.slane %v1114, 7
        %v2272 = vrot.slane %v1051, 7
        %v2273 = vrot.slane %v1115, 7
        %v2274 = vrot.slane %v1052, 7
        %v2275 = vrot.slane %v1116, 7
        %v2276 = vrot.slane %v1053, 7
        %v2277 = vrot.slane %v1117, 7
        %v2278 = vrot.slane %v1054, 7
        %v2279 = vrot.slane %v1118, 7
        %v2280 = vrot.slane %v1055, 7
        %v2281 = vrot.slane %v1119, 7
        %v2282 = vrot.slane %v1056, 7
        %v2283 = vrot.slane %v1120, 7
        %v2284 = vrot.slane %v1057, 7
        %v2285 = vrot.slane %v1121, 7
        %v2286 = vrot.slane %v1058, 7
        %v2287 = vrot.slane %v1122, 7
        %v2288 = vrot.slane %v1059, 7
        %v2289 = vrot.slane %v1123, 7
        %v2290 = vrot.slane %v1060, 7
        %v2291 = vrot.slane %v1124, 7
        %v2292 = vrot.slane %v1061, 7
        %v2293 = vrot.slane %v1125, 7
        %v2294 = vrot.slane %v1062, 7
        %v2295 = vrot.slane %v1126, 7
        %v2296 = vrot.slane %v1063, 7
        %v2297 = vrot.slane %v1127, 7
        %v2298 = vrot.slane %v1064, 7
        %v2299 = vrot.slane %v1128, 7
        %v2300 = vrot.slane %v1065, 7
        %v2301 = vrot.slane %v1129, 7
        %v2302 = vrot.slane %v1066, 7
        %v2303 = vrot.slane %v1130, 7
        %v2304 = vrot.slane %v1067, 7
        %v2305 = vrot.slane %v1131, 7
        %v2306 = vrot.slane %v1068, 7
        %v2307 = vrot.slane %v1132, 7
        %v2308 = vrot.slane %v1069, 7
        %v2309 = vrot.slane %v1133, 7
        %v2310 = vrot.slane %v1070, 7
        %v2311 = vrot.slane %v1134, 7
        %v2312 = vrot.slane %v1071, 7
        %v2313 = vrot.slane %v1135, 7
        %v2314 = vrot.slane %v1072, 7
        %v2315 = vrot.slane %v1136, 7
        %v2316 = vrot.slane %v1073, 7
        %v2317 = vrot.slane %v1137, 7
        %v2318 = vrot.slane %v1074, 7
        %v2319 = vrot.slane %v1138, 7
        %v2320 = vrot.slane %v1075, 7
        %v2321 = vrot.slane %v1139, 7
        %v2322 = vrot.slane %v1076, 7
        %v2323 = vrot.slane %v1140, 7
        %v2324 = vrot.slane %v1171, 7
        %v2325 = vrot.slane %v1175, 7
        %v2326 = vrot.slane %v1172, 7
        %v2327 = vrot.slane %v1176, 7
        %v2328 = vrot.slane %v1173, 7
        %v2329 = vrot.slane %v1177, 7
        %v2330 = vrot.slane %v1174, 7
        %v2331 = vrot.slane %v1178, 7
        %vm2332 = vcmp.lt.s32.totalorder %v1180, 1
        %v2333 = vsel %vm2332, %v2328, %v2330
        %v2334 = vsel %vm2332, %v2329, %v2331
        %v2335 = vsel %vm2332, %v2326, %v2328
        %v2336 = vsel %vm2332, %v2327, %v2329
        %v2337 = vsel %vm2332, %v2324, %v2326
        %v2338 = vsel %vm2332, %v2325, %v2327
        %v2339 = vsel %vm2332, %v2322, %v2324
        %v2340 = vsel %vm2332, %v2323, %v2325
        %v2341 = vsel %vm2332, %v2320, %v2322
        %v2342 = vsel %vm2332, %v2321, %v2323
        %v2343 = vsel %vm2332, %v2318, %v2320
        %v2344 = vsel %vm2332, %v2319, %v2321
        %v2345 = vsel %vm2332, %v2316, %v2318
        %v2346 = vsel %vm2332, %v2317, %v2319
        %v2347 = vsel %vm2332, %v2314, %v2316
        %v2348 = vsel %vm2332, %v2315, %v2317
        %v2349 = vsel %vm2332, %v2312, %v2314
        %v2350 = vsel %vm2332, %v2313, %v2315
        %v2351 = vsel %vm2332, %v2310, %v2312
        %v2352 = vsel %vm2332, %v2311, %v2313
        %v2353 = vsel %vm2332, %v2308, %v2310
        %v2354 = vsel %vm2332, %v2309, %v2311
        %v2355 = vsel %vm2332, %v2306, %v2308
        %v2356 = vsel %vm2332, %v2307, %v2309
        %v2357 = vsel %vm2332, %v2304, %v2306
        %v2358 = vsel %vm2332, %v2305, %v2307
        %v2359 = vsel %vm2332, %v2302, %v2304
        %v2360 = vsel %vm2332, %v2303, %v2305
        %v2361 = vsel %vm2332, %v2300, %v2302
        %v2362 = vsel %vm2332, %v2301, %v2303
        %v2363 = vsel %vm2332, %v2298, %v2300
        %v2364 = vsel %vm2332, %v2299, %v2301
        %v2365 = vsel %vm2332, %v2296, %v2298
        %v2366 = vsel %vm2332, %v2297, %v2299
        %v2367 = vsel %vm2332, %v2294, %v2296
        %v2368 = vsel %vm2332, %v2295, %v2297
        %v2369 = vsel %vm2332, %v2292, %v2294
        %v2370 = vsel %vm2332, %v2293, %v2295
        %v2371 = vsel %vm2332, %v2290, %v2292
        %v2372 = vsel %vm2332, %v2291, %v2293
        %v2373 = vsel %vm2332, %v2288, %v2290
        %v2374 = vsel %vm2332, %v2289, %v2291
        %v2375 = vsel %vm2332, %v2286, %v2288
        %v2376 = vsel %vm2332, %v2287, %v2289
        %v2377 = vsel %vm2332, %v2284, %v2286
        %v2378 = vsel %vm2332, %v2285, %v2287
        %v2379 = vsel %vm2332, %v2282, %v2284
        %v2380 = vsel %vm2332, %v2283, %v2285
        %v2381 = vsel %vm2332, %v2280, %v2282
        %v2382 = vsel %vm2332, %v2281, %v2283
        %v2383 = vsel %vm2332, %v2278, %v2280
        %v2384 = vsel %vm2332, %v2279, %v2281
        %v2385 = vsel %vm2332, %v2276, %v2278
        %v2386 = vsel %vm2332, %v2277, %v2279
        %v2387 = vsel %vm2332, %v2274, %v2276
        %v2388 = vsel %vm2332, %v2275, %v2277
        %v2389 = vsel %vm2332, %v2272, %v2274
        %v2390 = vsel %vm2332, %v2273, %v2275
        %v2391 = vsel %vm2332, %v2270, %v2272
        %v2392 = vsel %vm2332, %v2271, %v2273
        %v2393 = vsel %vm2332, %v2268, %v2270
        %v2394 = vsel %vm2332, %v2269, %v2271
        %v2395 = vsel %vm2332, %v2266, %v2268
        %v2396 = vsel %vm2332, %v2267, %v2269
        %v2397 = vsel %vm2332, %v2264, %v2266
        %v2398 = vsel %vm2332, %v2265, %v2267
        %v2399 = vsel %vm2332, %v2262, %v2264
        %v2400 = vsel %vm2332, %v2263, %v2265
        %v2401 = vsel %vm2332, %v2260, %v2262
        %v2402 = vsel %vm2332, %v2261, %v2263
        %v2403 = vsel %vm2332, %v2258, %v2260
        %v2404 = vsel %vm2332, %v2259, %v2261
        %v2405 = vsel %vm2332, %v2256, %v2258
        %v2406 = vsel %vm2332, %v2257, %v2259
        %v2407 = vsel %vm2332, %v2254, %v2256
        %v2408 = vsel %vm2332, %v2255, %v2257
        %v2409 = vsel %vm2332, %v2252, %v2254
        %v2410 = vsel %vm2332, %v2253, %v2255
        %v2411 = vsel %vm2332, %v2250, %v2252
        %v2412 = vsel %vm2332, %v2251, %v2253
        %v2413 = vsel %vm2332, %v2248, %v2250
        %v2414 = vsel %vm2332, %v2249, %v2251
        %v2415 = vsel %vm2332, %v2246, %v2248
        %v2416 = vsel %vm2332, %v2247, %v2249
        %v2417 = vsel %vm2332, %v2244, %v2246
        %v2418 = vsel %vm2332, %v2245, %v2247
        %v2419 = vsel %vm2332, %v2242, %v2244
        %v2420 = vsel %vm2332, %v2243, %v2245
        %v2421 = vsel %vm2332, %v2240, %v2242
        %v2422 = vsel %vm2332, %v2241, %v2243
        %v2423 = vsel %vm2332, %v2238, %v2240
        %v2424 = vsel %vm2332, %v2239, %v2241
        %v2425 = vsel %vm2332, %v2236, %v2238
        %v2426 = vsel %vm2332, %v2237, %v2239
        %v2427 = vsel %vm2332, %v2234, %v2236
        %v2428 = vsel %vm2332, %v2235, %v2237
        %v2429 = vsel %vm2332, %v2232, %v2234
        %v2430 = vsel %vm2332, %v2233, %v2235
        %v2431 = vsel %vm2332, %v2230, %v2232
        %v2432 = vsel %vm2332, %v2231, %v2233
        %v2433 = vsel %vm2332, %v2228, %v2230
        %v2434 = vsel %vm2332, %v2229, %v2231
        %v2435 = vsel %vm2332, %v2226, %v2228
        %v2436 = vsel %vm2332, %v2227, %v2229
        %v2437 = vsel %vm2332, %v2224, %v2226
        %v2438 = vsel %vm2332, %v2225, %v2227
        %v2439 = vsel %vm2332, %v2222, %v2224
        %v2440 = vsel %vm2332, %v2223, %v2225
        %v2441 = vsel %vm2332, %v2220, %v2222
        %v2442 = vsel %vm2332, %v2221, %v2223
        %v2443 = vsel %vm2332, %v2218, %v2220
        %v2444 = vsel %vm2332, %v2219, %v2221
        %v2445 = vsel %vm2332, %v2216, %v2218
        %v2446 = vsel %vm2332, %v2217, %v2219
        %v2447 = vsel %vm2332, %v2214, %v2216
        %v2448 = vsel %vm2332, %v2215, %v2217
        %v2449 = vsel %vm2332, %v2212, %v2214
        %v2450 = vsel %vm2332, %v2213, %v2215
        %v2451 = vsel %vm2332, %v2210, %v2212
        %v2452 = vsel %vm2332, %v2211, %v2213
        %v2453 = vsel %vm2332, %v2208, %v2210
        %v2454 = vsel %vm2332, %v2209, %v2211
        %v2455 = vsel %vm2332, %v2206, %v2208
        %v2456 = vsel %vm2332, %v2207, %v2209
        %v2457 = vsel %vm2332, %v2204, %v2206
        %v2458 = vsel %vm2332, %v2205, %v2207
        %v2459 = vsel %vm2332, %v2202, %v2204
        %v2460 = vsel %vm2332, %v2203, %v2205
        %v2461 = vsel %vm2332, %v2200, %v2202
        %v2462 = vsel %vm2332, %v2201, %v2203
        %v2463 = vsel %vm2332, %v2198, %v2200
        %v2464 = vsel %vm2332, %v2199, %v2201
        %v2465 = vsel %vm2332, %v2196, %v2198
        %v2466 = vsel %vm2332, %v2197, %v2199
        %v2467 = vsel %vm2332, %v2194, %v2196
        %v2468 = vsel %vm2332, %v2195, %v2197
        %v2469 = vsel %vm2332, %v2192, %v2194
        %v2470 = vsel %vm2332, %v2193, %v2195
        %v2471 = vsel %vm2332, %v2190, %v2192
        %v2472 = vsel %vm2332, %v2191, %v2193
        %v2473 = vsel %vm2332, %v2188, %v2190
        %v2474 = vsel %vm2332, %v2189, %v2191
        %v2475 = vsel %vm2332, %v2330, %v2188
        %v2476 = vsel %vm2332, %v2331, %v2189
        %v2477 = vsel %vm2116, 1, 0
        %v2478 = vsel %vm2117, 1, 0
        %v2479 = vsel %vm2118, 1, 0
        %v2480 = vsel %vm2119, 1, 0
        %v2481 = vsel %vm2120, 1, 0
        %v2482 = vsel %vm2121, 1, 0
        %v2483 = vsel %vm2122, 1, 0
        %v2484 = vsel %vm2123, 1, 0
        %v2485 = vsel %vm2124, 1, 0
        %v2486 = vsel %vm2125, 1, 0
        %v2487 = vsel %vm2126, 1, 0
        %v2488 = vsel %vm2127, 1, 0
        %v2489 = vsel %vm2128, 1, 0
        %v2490 = vsel %vm2129, 1, 0
        %v2491 = vsel %vm2130, 1, 0
        %v2492 = vsel %vm2131, 1, 0
        %v2493 = vsel %vm2132, 1, 0
        %v2494 = vsel %vm2133, 1, 0
        %v2495 = vsel %vm2134, 1, 0
        %v2496 = vsel %vm2135, 1, 0
        %v2497 = vsel %vm2136, 1, 0
        %v2498 = vsel %vm2137, 1, 0
        %v2499 = vsel %vm2138, 1, 0
        %v2500 = vsel %vm2139, 1, 0
        %v2501 = vsel %vm2140, 1, 0
        %v2502 = vsel %vm2141, 1, 0
        %v2503 = vsel %vm2142, 1, 0
        %v2504 = vsel %vm2143, 1, 0
        %v2505 = vsel %vm2144, 1, 0
        %v2506 = vsel %vm2145, 1, 0
        %v2507 = vsel %vm2146, 1, 0
        %v2508 = vsel %vm2147, 1, 0
        %v2509 = vsel %vm2148, 1, 0
        %v2510 = vsel %vm2149, 1, 0
        %v2511 = vsel %vm2150, 1, 0
        %v2512 = vsel %vm2151, 1, 0
        %v2513 = vsel %vm2152, 1, 0
        %v2514 = vsel %vm2153, 1, 0
        %v2515 = vsel %vm2154, 1, 0
        %v2516 = vsel %vm2155, 1, 0
        %v2517 = vsel %vm2156, 1, 0
        %v2518 = vsel %vm2157, 1, 0
        %v2519 = vsel %vm2158, 1, 0
        %v2520 = vsel %vm2159, 1, 0
        %v2521 = vsel %vm2160, 1, 0
        %v2522 = vsel %vm2161, 1, 0
        %v2523 = vsel %vm2162, 1, 0
        %v2524 = vsel %vm2163, 1, 0
        %v2525 = vsel %vm2164, 1, 0
        %v2526 = vsel %vm2165, 1, 0
        %v2527 = vsel %vm2166, 1, 0
        %v2528 = vsel %vm2167, 1, 0
        %v2529 = vsel %vm2168, 1, 0
        %v2530 = vsel %vm2169, 1, 0
        %v2531 = vsel %vm2170, 1, 0
        %v2532 = vsel %vm2171, 1, 0
        %v2533 = vsel %vm2172, 1, 0
        %v2534 = vsel %vm2173, 1, 0
        %v2535 = vsel %vm2174, 1, 0
        %v2536 = vsel %vm2175, 1, 0
        %v2537 = vsel %vm2176, 1, 0
        %v2538 = vsel %vm2177, 1, 0
        %v2539 = vsel %vm2178, 1, 0
        %v2540 = vsel %vm2179, 1, 0
        %v2541 = vsel %vm2180, 1, 0
        %v2542 = vsel %vm2181, 1, 0
        %v2543 = vsel %vm2182, 1, 0
        %v2544 = vsel %vm2183, 1, 0
        %v2545 = vsel %vm2184, 1, 0
        %v2546 = vsel %vm2185, 1, 0
        %v2547 = vsel %vm2186, 1, 0
        %v2548 = vsel %vm2187, 1, 0
        %vm2549 = vcmp.eq.s32.totalorder %v2477, 1
        %vm2550 = vcmp.eq.s32.totalorder %v2478, 1
        %vm2551 = vcmp.eq.s32.totalorder %v2479, 1
        %vm2552 = vcmp.eq.s32.totalorder %v2480, 1
        %vm2553 = vcmp.eq.s32.totalorder %v2481, 1
        %vm2554 = vcmp.eq.s32.totalorder %v2482, 1
        %vm2555 = vcmp.eq.s32.totalorder %v2483, 1
        %vm2556 = vcmp.eq.s32.totalorder %v2484, 1
        %vm2557 = vcmp.eq.s32.totalorder %v2485, 1
        %vm2558 = vcmp.eq.s32.totalorder %v2486, 1
        %vm2559 = vcmp.eq.s32.totalorder %v2487, 1
        %vm2560 = vcmp.eq.s32.totalorder %v2488, 1
        %vm2561 = vcmp.eq.s32.totalorder %v2489, 1
        %vm2562 = vcmp.eq.s32.totalorder %v2490, 1
        %vm2563 = vcmp.eq.s32.totalorder %v2491, 1
        %vm2564 = vcmp.eq.s32.totalorder %v2492, 1
        %vm2565 = vcmp.eq.s32.totalorder %v2493, 1
        %vm2566 = vcmp.eq.s32.totalorder %v2494, 1
        %vm2567 = vcmp.eq.s32.totalorder %v2495, 1
        %vm2568 = vcmp.eq.s32.totalorder %v2496, 1
        %vm2569 = vcmp.eq.s32.totalorder %v2497, 1
        %vm2570 = vcmp.eq.s32.totalorder %v2498, 1
        %vm2571 = vcmp.eq.s32.totalorder %v2499, 1
        %vm2572 = vcmp.eq.s32.totalorder %v2500, 1
        %vm2573 = vcmp.eq.s32.totalorder %v2501, 1
        %vm2574 = vcmp.eq.s32.totalorder %v2502, 1
        %vm2575 = vcmp.eq.s32.totalorder %v2503, 1
        %vm2576 = vcmp.eq.s32.totalorder %v2504, 1
        %vm2577 = vcmp.eq.s32.totalorder %v2505, 1
        %vm2578 = vcmp.eq.s32.totalorder %v2506, 1
        %vm2579 = vcmp.eq.s32.totalorder %v2507, 1
        %vm2580 = vcmp.eq.s32.totalorder %v2508, 1
        %vm2581 = vcmp.eq.s32.totalorder %v2509, 1
        %vm2582 = vcmp.eq.s32.totalorder %v2510, 1
        %vm2583 = vcmp.eq.s32.totalorder %v2511, 1
        %vm2584 = vcmp.eq.s32.totalorder %v2512, 1
        %vm2585 = vcmp.eq.s32.totalorder %v2513, 1
        %vm2586 = vcmp.eq.s32.totalorder %v2514, 1
        %vm2587 = vcmp.eq.s32.totalorder %v2515, 1
        %vm2588 = vcmp.eq.s32.totalorder %v2516, 1
        %vm2589 = vcmp.eq.s32.totalorder %v2517, 1
        %vm2590 = vcmp.eq.s32.totalorder %v2518, 1
        %vm2591 = vcmp.eq.s32.totalorder %v2519, 1
        %vm2592 = vcmp.eq.s32.totalorder %v2520, 1
        %vm2593 = vcmp.eq.s32.totalorder %v2521, 1
        %vm2594 = vcmp.eq.s32.totalorder %v2522, 1
        %vm2595 = vcmp.eq.s32.totalorder %v2523, 1
        %vm2596 = vcmp.eq.s32.totalorder %v2524, 1
        %vm2597 = vcmp.eq.s32.totalorder %v2525, 1
        %vm2598 = vcmp.eq.s32.totalorder %v2526, 1
        %vm2599 = vcmp.eq.s32.totalorder %v2527, 1
        %vm2600 = vcmp.eq.s32.totalorder %v2528, 1
        %vm2601 = vcmp.eq.s32.totalorder %v2529, 1
        %vm2602 = vcmp.eq.s32.totalorder %v2530, 1
        %vm2603 = vcmp.eq.s32.totalorder %v2531, 1
        %vm2604 = vcmp.eq.s32.totalorder %v2532, 1
        %vm2605 = vcmp.eq.s32.totalorder %v2533, 1
        %vm2606 = vcmp.eq.s32.totalorder %v2534, 1
        %vm2607 = vcmp.eq.s32.totalorder %v2535, 1
        %vm2608 = vcmp.eq.s32.totalorder %v2536, 1
        %vm2609 = vcmp.eq.s32.totalorder %v2537, 1
        %vm2610 = vcmp.eq.s32.totalorder %v2538, 1
        %vm2611 = vcmp.eq.s32.totalorder %v2539, 1
        %vm2612 = vcmp.eq.s32.totalorder %v2540, 1
        %vm2613 = vcmp.eq.s32.totalorder %v2541, 1
        %vm2614 = vcmp.eq.s32.totalorder %v2542, 1
        %vm2615 = vcmp.eq.s32.totalorder %v2543, 1
        %vm2616 = vcmp.eq.s32.totalorder %v2544, 1
        %vm2617 = vcmp.eq.s32.totalorder %v2545, 1
        %vm2618 = vcmp.eq.s32.totalorder %v2546, 1
        %vm2619 = vcmp.eq.s32.totalorder %v2547, 1
        %vm2620 = vcmp.eq.s32.totalorder %v2548, 1
        %v2621 = vsel %vm2549, 0.0, %v2475
        %v2622 = vsel %vm2550, 0.0, %v2473
        %v2623 = vsel %vm2551, 0.0, %v2471
        %v2624 = vsel %vm2552, 0.0, %v2469
        %v2625 = vsel %vm2553, 0.0, %v2467
        %v2626 = vsel %vm2554, 0.0, %v2465
        %v2627 = vsel %vm2555, 0.0, %v2463
        %v2628 = vsel %vm2556, 0.0, %v2461
        %v2629 = vsel %vm2557, 0.0, %v2459
        %v2630 = vsel %vm2558, 0.0, %v2457
        %v2631 = vsel %vm2559, 0.0, %v2455
        %v2632 = vsel %vm2560, 0.0, %v2453
        %v2633 = vsel %vm2561, 0.0, %v2451
        %v2634 = vsel %vm2562, 0.0, %v2449
        %v2635 = vsel %vm2563, 0.0, %v2447
        %v2636 = vsel %vm2564, 0.0, %v2445
        %v2637 = vsel %vm2565, 0.0, %v2443
        %v2638 = vsel %vm2566, 0.0, %v2441
        %v2639 = vsel %vm2567, 0.0, %v2439
        %v2640 = vsel %vm2568, 0.0, %v2437
        %v2641 = vsel %vm2569, 0.0, %v2435
        %v2642 = vsel %vm2570, 0.0, %v2433
        %v2643 = vsel %vm2571, 0.0, %v2431
        %v2644 = vsel %vm2572, 0.0, %v2429
        %v2645 = vsel %vm2573, 0.0, %v2427
        %v2646 = vsel %vm2574, 0.0, %v2425
        %v2647 = vsel %vm2575, 0.0, %v2423
        %v2648 = vsel %vm2576, 0.0, %v2421
        %v2649 = vsel %vm2577, 0.0, %v2419
        %v2650 = vsel %vm2578, 0.0, %v2417
        %v2651 = vsel %vm2579, 0.0, %v2415
        %v2652 = vsel %vm2580, 0.0, %v2413
        %v2653 = vsel %vm2581, 0.0, %v2411
        %v2654 = vsel %vm2582, 0.0, %v2409
        %v2655 = vsel %vm2583, 0.0, %v2407
        %v2656 = vsel %vm2584, 0.0, %v2405
        %v2657 = vsel %vm2585, 0.0, %v2403
        %v2658 = vsel %vm2586, 0.0, %v2401
        %v2659 = vsel %vm2587, 0.0, %v2399
        %v2660 = vsel %vm2588, 0.0, %v2397
        %v2661 = vsel %vm2589, 0.0, %v2395
        %v2662 = vsel %vm2590, 0.0, %v2393
        %v2663 = vsel %vm2591, 0.0, %v2391
        %v2664 = vsel %vm2592, 0.0, %v2389
        %v2665 = vsel %vm2593, 0.0, %v2387
        %v2666 = vsel %vm2594, 0.0, %v2385
        %v2667 = vsel %vm2595, 0.0, %v2383
        %v2668 = vsel %vm2596, 0.0, %v2381
        %v2669 = vsel %vm2597, 0.0, %v2379
        %v2670 = vsel %vm2598, 0.0, %v2377
        %v2671 = vsel %vm2599, 0.0, %v2375
        %v2672 = vsel %vm2600, 0.0, %v2373
        %v2673 = vsel %vm2601, 0.0, %v2371
        %v2674 = vsel %vm2602, 0.0, %v2369
        %v2675 = vsel %vm2603, 0.0, %v2367
        %v2676 = vsel %vm2604, 0.0, %v2365
        %v2677 = vsel %vm2605, 0.0, %v2363
        %v2678 = vsel %vm2606, 0.0, %v2361
        %v2679 = vsel %vm2607, 0.0, %v2359
        %v2680 = vsel %vm2608, 0.0, %v2357
        %v2681 = vsel %vm2609, 0.0, %v2355
        %v2682 = vsel %vm2610, 0.0, %v2353
        %v2683 = vsel %vm2611, 0.0, %v2351
        %v2684 = vsel %vm2612, 0.0, %v2349
        %v2685 = vsel %vm2613, 0.0, %v2347
        %v2686 = vsel %vm2614, 0.0, %v2345
        %v2687 = vsel %vm2615, 0.0, %v2343
        %v2688 = vsel %vm2616, 0.0, %v2341
        %v2689 = vsel %vm2617, 0.0, %v2339
        %v2690 = vsel %vm2618, 0.0, %v2337
        %v2691 = vsel %vm2619, 0.0, %v2335
        %v2692 = vsel %vm2620, 0.0, %v2333
        %v2693 = vsel %vm2549, 0.0, %v2476
        %v2694 = vsel %vm2550, 0.0, %v2474
        %v2695 = vsel %vm2551, 0.0, %v2472
        %v2696 = vsel %vm2552, 0.0, %v2470
        %v2697 = vsel %vm2553, 0.0, %v2468
        %v2698 = vsel %vm2554, 0.0, %v2466
        %v2699 = vsel %vm2555, 0.0, %v2464
        %v2700 = vsel %vm2556, 0.0, %v2462
        %v2701 = vsel %vm2557, 0.0, %v2460
        %v2702 = vsel %vm2558, 0.0, %v2458
        %v2703 = vsel %vm2559, 0.0, %v2456
        %v2704 = vsel %vm2560, 0.0, %v2454
        %v2705 = vsel %vm2561, 0.0, %v2452
        %v2706 = vsel %vm2562, 0.0, %v2450
        %v2707 = vsel %vm2563, 0.0, %v2448
        %v2708 = vsel %vm2564, 0.0, %v2446
        %v2709 = vsel %vm2565, 0.0, %v2444
        %v2710 = vsel %vm2566, 0.0, %v2442
        %v2711 = vsel %vm2567, 0.0, %v2440
        %v2712 = vsel %vm2568, 0.0, %v2438
        %v2713 = vsel %vm2569, 0.0, %v2436
        %v2714 = vsel %vm2570, 0.0, %v2434
        %v2715 = vsel %vm2571, 0.0, %v2432
        %v2716 = vsel %vm2572, 0.0, %v2430
        %v2717 = vsel %vm2573, 0.0, %v2428
        %v2718 = vsel %vm2574, 0.0, %v2426
        %v2719 = vsel %vm2575, 0.0, %v2424
        %v2720 = vsel %vm2576, 0.0, %v2422
        %v2721 = vsel %vm2577, 0.0, %v2420
        %v2722 = vsel %vm2578, 0.0, %v2418
        %v2723 = vsel %vm2579, 0.0, %v2416
        %v2724 = vsel %vm2580, 0.0, %v2414
        %v2725 = vsel %vm2581, 0.0, %v2412
        %v2726 = vsel %vm2582, 0.0, %v2410
        %v2727 = vsel %vm2583, 0.0, %v2408
        %v2728 = vsel %vm2584, 0.0, %v2406
        %v2729 = vsel %vm2585, 0.0, %v2404
        %v2730 = vsel %vm2586, 0.0, %v2402
        %v2731 = vsel %vm2587, 0.0, %v2400
        %v2732 = vsel %vm2588, 0.0, %v2398
        %v2733 = vsel %vm2589, 0.0, %v2396
        %v2734 = vsel %vm2590, 0.0, %v2394
        %v2735 = vsel %vm2591, 0.0, %v2392
        %v2736 = vsel %vm2592, 0.0, %v2390
        %v2737 = vsel %vm2593, 0.0, %v2388
        %v2738 = vsel %vm2594, 0.0, %v2386
        %v2739 = vsel %vm2595, 0.0, %v2384
        %v2740 = vsel %vm2596, 0.0, %v2382
        %v2741 = vsel %vm2597, 0.0, %v2380
        %v2742 = vsel %vm2598, 0.0, %v2378
        %v2743 = vsel %vm2599, 0.0, %v2376
        %v2744 = vsel %vm2600, 0.0, %v2374
        %v2745 = vsel %vm2601, 0.0, %v2372
        %v2746 = vsel %vm2602, 0.0, %v2370
        %v2747 = vsel %vm2603, 0.0, %v2368
        %v2748 = vsel %vm2604, 0.0, %v2366
        %v2749 = vsel %vm2605, 0.0, %v2364
        %v2750 = vsel %vm2606, 0.0, %v2362
        %v2751 = vsel %vm2607, 0.0, %v2360
        %v2752 = vsel %vm2608, 0.0, %v2358
        %v2753 = vsel %vm2609, 0.0, %v2356
        %v2754 = vsel %vm2610, 0.0, %v2354
        %v2755 = vsel %vm2611, 0.0, %v2352
        %v2756 = vsel %vm2612, 0.0, %v2350
        %v2757 = vsel %vm2613, 0.0, %v2348
        %v2758 = vsel %vm2614, 0.0, %v2346
        %v2759 = vsel %vm2615, 0.0, %v2344
        %v2760 = vsel %vm2616, 0.0, %v2342
        %v2761 = vsel %vm2617, 0.0, %v2340
        %v2762 = vsel %vm2618, 0.0, %v2338
        %v2763 = vsel %vm2619, 0.0, %v2336
        %v2764 = vsel %vm2620, 0.0, %v2334
        %vm2765 = vcmp.eq.s32.totalorder %v2044, 31
        %vm2766 = vcmp.eq.s32.totalorder %v2045, 31
        %vm2767 = vcmp.eq.s32.totalorder %v2046, 31
        %vm2768 = vcmp.eq.s32.totalorder %v2047, 31
        %vm2769 = vcmp.eq.s32.totalorder %v2048, 31
        %vm2770 = vcmp.eq.s32.totalorder %v2049, 31
        %vm2771 = vcmp.eq.s32.totalorder %v2050, 31
        %vm2772 = vcmp.eq.s32.totalorder %v2051, 31
        %vm2773 = vcmp.eq.s32.totalorder %v2052, 31
        %vm2774 = vcmp.eq.s32.totalorder %v2053, 31
        %vm2775 = vcmp.eq.s32.totalorder %v2054, 31
        %vm2776 = vcmp.eq.s32.totalorder %v2055, 31
        %vm2777 = vcmp.eq.s32.totalorder %v2056, 31
        %vm2778 = vcmp.eq.s32.totalorder %v2057, 31
        %vm2779 = vcmp.eq.s32.totalorder %v2058, 31
        %vm2780 = vcmp.eq.s32.totalorder %v2059, 31
        %vm2781 = vcmp.eq.s32.totalorder %v2060, 31
        %vm2782 = vcmp.eq.s32.totalorder %v2061, 31
        %vm2783 = vcmp.eq.s32.totalorder %v2062, 31
        %vm2784 = vcmp.eq.s32.totalorder %v2063, 31
        %vm2785 = vcmp.eq.s32.totalorder %v2064, 31
        %vm2786 = vcmp.eq.s32.totalorder %v2065, 31
        %vm2787 = vcmp.eq.s32.totalorder %v2066, 31
        %vm2788 = vcmp.eq.s32.totalorder %v2067, 31
        %vm2789 = vcmp.eq.s32.totalorder %v2068, 31
        %vm2790 = vcmp.eq.s32.totalorder %v2069, 31
        %vm2791 = vcmp.eq.s32.totalorder %v2070, 31
        %vm2792 = vcmp.eq.s32.totalorder %v2071, 31
        %vm2793 = vcmp.eq.s32.totalorder %v2072, 31
        %vm2794 = vcmp.eq.s32.totalorder %v2073, 31
        %vm2795 = vcmp.eq.s32.totalorder %v2074, 31
        %vm2796 = vcmp.eq.s32.totalorder %v2075, 31
        %vm2797 = vcmp.eq.s32.totalorder %v2076, 31
        %vm2798 = vcmp.eq.s32.totalorder %v2077, 31
        %vm2799 = vcmp.eq.s32.totalorder %v2078, 31
        %vm2800 = vcmp.eq.s32.totalorder %v2079, 31
        %vm2801 = vcmp.eq.s32.totalorder %v2080, 31
        %vm2802 = vcmp.eq.s32.totalorder %v2081, 31
        %vm2803 = vcmp.eq.s32.totalorder %v2082, 31
        %vm2804 = vcmp.eq.s32.totalorder %v2083, 31
        %vm2805 = vcmp.eq.s32.totalorder %v2084, 31
        %vm2806 = vcmp.eq.s32.totalorder %v2085, 31
        %vm2807 = vcmp.eq.s32.totalorder %v2086, 31
        %vm2808 = vcmp.eq.s32.totalorder %v2087, 31
        %vm2809 = vcmp.eq.s32.totalorder %v2088, 31
        %vm2810 = vcmp.eq.s32.totalorder %v2089, 31
        %vm2811 = vcmp.eq.s32.totalorder %v2090, 31
        %vm2812 = vcmp.eq.s32.totalorder %v2091, 31
        %vm2813 = vcmp.eq.s32.totalorder %v2092, 31
        %vm2814 = vcmp.eq.s32.totalorder %v2093, 31
        %vm2815 = vcmp.eq.s32.totalorder %v2094, 31
        %vm2816 = vcmp.eq.s32.totalorder %v2095, 31
        %vm2817 = vcmp.eq.s32.totalorder %v2096, 31
        %vm2818 = vcmp.eq.s32.totalorder %v2097, 31
        %vm2819 = vcmp.eq.s32.totalorder %v2098, 31
        %vm2820 = vcmp.eq.s32.totalorder %v2099, 31
        %vm2821 = vcmp.eq.s32.totalorder %v2100, 31
        %vm2822 = vcmp.eq.s32.totalorder %v2101, 31
        %vm2823 = vcmp.eq.s32.totalorder %v2102, 31
        %vm2824 = vcmp.eq.s32.totalorder %v2103, 31
        %vm2825 = vcmp.eq.s32.totalorder %v2104, 31
        %vm2826 = vcmp.eq.s32.totalorder %v2105, 31
        %vm2827 = vcmp.eq.s32.totalorder %v2106, 31
        %vm2828 = vcmp.eq.s32.totalorder %v2107, 31
        %vm2829 = vcmp.eq.s32.totalorder %v2108, 31
        %vm2830 = vcmp.eq.s32.totalorder %v2109, 31
        %vm2831 = vcmp.eq.s32.totalorder %v2110, 31
        %vm2832 = vcmp.eq.s32.totalorder %v2111, 31
        %vm2833 = vcmp.eq.s32.totalorder %v2112, 31
        %vm2834 = vcmp.eq.s32.totalorder %v2113, 31
        %vm2835 = vcmp.eq.s32.totalorder %v2114, 31
        %vm2836 = vcmp.eq.s32.totalorder %v2115, 31
        %v2837 = vrot.slane %v1152, 1
        %v2838 = vrot.slane %v1156, 1
        %v2839 = vrot.slane %v1153, 1
        %v2840 = vrot.slane %v1157, 1
        %v2841 = vrot.slane %v1154, 1
        %v2842 = vrot.slane %v1158, 1
        %v2843 = vrot.slane %v1155, 1
        %v2844 = vrot.slane %v1159, 1
        %v2845 = vrot.slane %v1013, 1
        %v2846 = vrot.slane %v1077, 1
        %v2847 = vrot.slane %v1014, 1
        %v2848 = vrot.slane %v1078, 1
        %v2849 = vrot.slane %v1015, 1
        %v2850 = vrot.slane %v1079, 1
        %v2851 = vrot.slane %v1016, 1
        %v2852 = vrot.slane %v1080, 1
        %v2853 = vrot.slane %v1017, 1
        %v2854 = vrot.slane %v1081, 1
        %v2855 = vrot.slane %v1018, 1
        %v2856 = vrot.slane %v1082, 1
        %v2857 = vrot.slane %v1019, 1
        %v2858 = vrot.slane %v1083, 1
        %v2859 = vrot.slane %v1020, 1
        %v2860 = vrot.slane %v1084, 1
        %v2861 = vrot.slane %v1021, 1
        %v2862 = vrot.slane %v1085, 1
        %v2863 = vrot.slane %v1022, 1
        %v2864 = vrot.slane %v1086, 1
        %v2865 = vrot.slane %v1023, 1
        %v2866 = vrot.slane %v1087, 1
        %v2867 = vrot.slane %v1024, 1
        %v2868 = vrot.slane %v1088, 1
        %v2869 = vrot.slane %v1025, 1
        %v2870 = vrot.slane %v1089, 1
        %v2871 = vrot.slane %v1026, 1
        %v2872 = vrot.slane %v1090, 1
        %v2873 = vrot.slane %v1027, 1
        %v2874 = vrot.slane %v1091, 1
        %v2875 = vrot.slane %v1028, 1
        %v2876 = vrot.slane %v1092, 1
        %v2877 = vrot.slane %v1029, 1
        %v2878 = vrot.slane %v1093, 1
        %v2879 = vrot.slane %v1030, 1
        %v2880 = vrot.slane %v1094, 1
        %v2881 = vrot.slane %v1031, 1
        %v2882 = vrot.slane %v1095, 1
        %v2883 = vrot.slane %v1032, 1
        %v2884 = vrot.slane %v1096, 1
        %v2885 = vrot.slane %v1033, 1
        %v2886 = vrot.slane %v1097, 1
        %v2887 = vrot.slane %v1034, 1
        %v2888 = vrot.slane %v1098, 1
        %v2889 = vrot.slane %v1035, 1
        %v2890 = vrot.slane %v1099, 1
        %v2891 = vrot.slane %v1036, 1
        %v2892 = vrot.slane %v1100, 1
        %v2893 = vrot.slane %v1037, 1
        %v2894 = vrot.slane %v1101, 1
        %v2895 = vrot.slane %v1038, 1
        %v2896 = vrot.slane %v1102, 1
        %v2897 = vrot.slane %v1039, 1
        %v2898 = vrot.slane %v1103, 1
        %v2899 = vrot.slane %v1040, 1
        %v2900 = vrot.slane %v1104, 1
        %v2901 = vrot.slane %v1041, 1
        %v2902 = vrot.slane %v1105, 1
        %v2903 = vrot.slane %v1042, 1
        %v2904 = vrot.slane %v1106, 1
        %v2905 = vrot.slane %v1043, 1
        %v2906 = vrot.slane %v1107, 1
        %v2907 = vrot.slane %v1044, 1
        %v2908 = vrot.slane %v1108, 1
        %v2909 = vrot.slane %v1045, 1
        %v2910 = vrot.slane %v1109, 1
        %v2911 = vrot.slane %v1046, 1
        %v2912 = vrot.slane %v1110, 1
        %v2913 = vrot.slane %v1047, 1
        %v2914 = vrot.slane %v1111, 1
        %v2915 = vrot.slane %v1048, 1
        %v2916 = vrot.slane %v1112, 1
        %v2917 = vrot.slane %v1049, 1
        %v2918 = vrot.slane %v1113, 1
        %v2919 = vrot.slane %v1050, 1
        %v2920 = vrot.slane %v1114, 1
        %v2921 = vrot.slane %v1051, 1
        %v2922 = vrot.slane %v1115, 1
        %v2923 = vrot.slane %v1052, 1
        %v2924 = vrot.slane %v1116, 1
        %v2925 = vrot.slane %v1053, 1
        %v2926 = vrot.slane %v1117, 1
        %v2927 = vrot.slane %v1054, 1
        %v2928 = vrot.slane %v1118, 1
        %v2929 = vrot.slane %v1055, 1
        %v2930 = vrot.slane %v1119, 1
        %v2931 = vrot.slane %v1056, 1
        %v2932 = vrot.slane %v1120, 1
        %v2933 = vrot.slane %v1057, 1
        %v2934 = vrot.slane %v1121, 1
        %v2935 = vrot.slane %v1058, 1
        %v2936 = vrot.slane %v1122, 1
        %v2937 = vrot.slane %v1059, 1
        %v2938 = vrot.slane %v1123, 1
        %v2939 = vrot.slane %v1060, 1
        %v2940 = vrot.slane %v1124, 1
        %v2941 = vrot.slane %v1061, 1
        %v2942 = vrot.slane %v1125, 1
        %v2943 = vrot.slane %v1062, 1
        %v2944 = vrot.slane %v1126, 1
        %v2945 = vrot.slane %v1063, 1
        %v2946 = vrot.slane %v1127, 1
        %v2947 = vrot.slane %v1064, 1
        %v2948 = vrot.slane %v1128, 1
        %v2949 = vrot.slane %v1065, 1
        %v2950 = vrot.slane %v1129, 1
        %v2951 = vrot.slane %v1066, 1
        %v2952 = vrot.slane %v1130, 1
        %v2953 = vrot.slane %v1067, 1
        %v2954 = vrot.slane %v1131, 1
        %v2955 = vrot.slane %v1068, 1
        %v2956 = vrot.slane %v1132, 1
        %v2957 = vrot.slane %v1069, 1
        %v2958 = vrot.slane %v1133, 1
        %v2959 = vrot.slane %v1070, 1
        %v2960 = vrot.slane %v1134, 1
        %v2961 = vrot.slane %v1071, 1
        %v2962 = vrot.slane %v1135, 1
        %v2963 = vrot.slane %v1072, 1
        %v2964 = vrot.slane %v1136, 1
        %v2965 = vrot.slane %v1073, 1
        %v2966 = vrot.slane %v1137, 1
        %v2967 = vrot.slane %v1074, 1
        %v2968 = vrot.slane %v1138, 1
        %v2969 = vrot.slane %v1075, 1
        %v2970 = vrot.slane %v1139, 1
        %v2971 = vrot.slane %v1076, 1
        %v2972 = vrot.slane %v1140, 1
        %v2973 = vrot.slane %v1171, 1
        %v2974 = vrot.slane %v1175, 1
        %v2975 = vrot.slane %v1172, 1
        %v2976 = vrot.slane %v1176, 1
        %v2977 = vrot.slane %v1173, 1
        %v2978 = vrot.slane %v1177, 1
        %v2979 = vrot.slane %v1174, 1
        %v2980 = vrot.slane %v1178, 1
        %vm2981 = vcmp.lt.s32.totalorder %v1180, 7
        %v2982 = vsel %vm2981, %v2977, %v2979
        %v2983 = vsel %vm2981, %v2978, %v2980
        %v2984 = vsel %vm2981, %v2975, %v2977
        %v2985 = vsel %vm2981, %v2976, %v2978
        %v2986 = vsel %vm2981, %v2973, %v2975
        %v2987 = vsel %vm2981, %v2974, %v2976
        %v2988 = vsel %vm2981, %v2971, %v2973
        %v2989 = vsel %vm2981, %v2972, %v2974
        %v2990 = vsel %vm2981, %v2969, %v2971
        %v2991 = vsel %vm2981, %v2970, %v2972
        %v2992 = vsel %vm2981, %v2967, %v2969
        %v2993 = vsel %vm2981, %v2968, %v2970
        %v2994 = vsel %vm2981, %v2965, %v2967
        %v2995 = vsel %vm2981, %v2966, %v2968
        %v2996 = vsel %vm2981, %v2963, %v2965
        %v2997 = vsel %vm2981, %v2964, %v2966
        %v2998 = vsel %vm2981, %v2961, %v2963
        %v2999 = vsel %vm2981, %v2962, %v2964
        %v3000 = vsel %vm2981, %v2959, %v2961
        %v3001 = vsel %vm2981, %v2960, %v2962
        %v3002 = vsel %vm2981, %v2957, %v2959
        %v3003 = vsel %vm2981, %v2958, %v2960
        %v3004 = vsel %vm2981, %v2955, %v2957
        %v3005 = vsel %vm2981, %v2956, %v2958
        %v3006 = vsel %vm2981, %v2953, %v2955
        %v3007 = vsel %vm2981, %v2954, %v2956
        %v3008 = vsel %vm2981, %v2951, %v2953
        %v3009 = vsel %vm2981, %v2952, %v2954
        %v3010 = vsel %vm2981, %v2949, %v2951
        %v3011 = vsel %vm2981, %v2950, %v2952
        %v3012 = vsel %vm2981, %v2947, %v2949
        %v3013 = vsel %vm2981, %v2948, %v2950
        %v3014 = vsel %vm2981, %v2945, %v2947
        %v3015 = vsel %vm2981, %v2946, %v2948
        %v3016 = vsel %vm2981, %v2943, %v2945
        %v3017 = vsel %vm2981, %v2944, %v2946
        %v3018 = vsel %vm2981, %v2941, %v2943
        %v3019 = vsel %vm2981, %v2942, %v2944
        %v3020 = vsel %vm2981, %v2939, %v2941
        %v3021 = vsel %vm2981, %v2940, %v2942
        %v3022 = vsel %vm2981, %v2937, %v2939
        %v3023 = vsel %vm2981, %v2938, %v2940
        %v3024 = vsel %vm2981, %v2935, %v2937
        %v3025 = vsel %vm2981, %v2936, %v2938
        %v3026 = vsel %vm2981, %v2933, %v2935
        %v3027 = vsel %vm2981, %v2934, %v2936
        %v3028 = vsel %vm2981, %v2931, %v2933
        %v3029 = vsel %vm2981, %v2932, %v2934
        %v3030 = vsel %vm2981, %v2929, %v2931
        %v3031 = vsel %vm2981, %v2930, %v2932
        %v3032 = vsel %vm2981, %v2927, %v2929
        %v3033 = vsel %vm2981, %v2928, %v2930
        %v3034 = vsel %vm2981, %v2925, %v2927
        %v3035 = vsel %vm2981, %v2926, %v2928
        %v3036 = vsel %vm2981, %v2923, %v2925
        %v3037 = vsel %vm2981, %v2924, %v2926
        %v3038 = vsel %vm2981, %v2921, %v2923
        %v3039 = vsel %vm2981, %v2922, %v2924
        %v3040 = vsel %vm2981, %v2919, %v2921
        %v3041 = vsel %vm2981, %v2920, %v2922
        %v3042 = vsel %vm2981, %v2917, %v2919
        %v3043 = vsel %vm2981, %v2918, %v2920
        %v3044 = vsel %vm2981, %v2915, %v2917
        %v3045 = vsel %vm2981, %v2916, %v2918
        %v3046 = vsel %vm2981, %v2913, %v2915
        %v3047 = vsel %vm2981, %v2914, %v2916
        %v3048 = vsel %vm2981, %v2911, %v2913
        %v3049 = vsel %vm2981, %v2912, %v2914
        %v3050 = vsel %vm2981, %v2909, %v2911
        %v3051 = vsel %vm2981, %v2910, %v2912
        %v3052 = vsel %vm2981, %v2907, %v2909
        %v3053 = vsel %vm2981, %v2908, %v2910
        %v3054 = vsel %vm2981, %v2905, %v2907
        %v3055 = vsel %vm2981, %v2906, %v2908
        %v3056 = vsel %vm2981, %v2903, %v2905
        %v3057 = vsel %vm2981, %v2904, %v2906
        %v3058 = vsel %vm2981, %v2901, %v2903
        %v3059 = vsel %vm2981, %v2902, %v2904
        %v3060 = vsel %vm2981, %v2899, %v2901
        %v3061 = vsel %vm2981, %v2900, %v2902
        %v3062 = vsel %vm2981, %v2897, %v2899
        %v3063 = vsel %vm2981, %v2898, %v2900
        %v3064 = vsel %vm2981, %v2895, %v2897
        %v3065 = vsel %vm2981, %v2896, %v2898
        %v3066 = vsel %vm2981, %v2893, %v2895
        %v3067 = vsel %vm2981, %v2894, %v2896
        %v3068 = vsel %vm2981, %v2891, %v2893
        %v3069 = vsel %vm2981, %v2892, %v2894
        %v3070 = vsel %vm2981, %v2889, %v2891
        %v3071 = vsel %vm2981, %v2890, %v2892
        %v3072 = vsel %vm2981, %v2887, %v2889
        %v3073 = vsel %vm2981, %v2888, %v2890
        %v3074 = vsel %vm2981, %v2885, %v2887
        %v3075 = vsel %vm2981, %v2886, %v2888
        %v3076 = vsel %vm2981, %v2883, %v2885
        %v3077 = vsel %vm2981, %v2884, %v2886
        %v3078 = vsel %vm2981, %v2881, %v2883
        %v3079 = vsel %vm2981, %v2882, %v2884
        %v3080 = vsel %vm2981, %v2879, %v2881
        %v3081 = vsel %vm2981, %v2880, %v2882
        %v3082 = vsel %vm2981, %v2877, %v2879
        %v3083 = vsel %vm2981, %v2878, %v2880
        %v3084 = vsel %vm2981, %v2875, %v2877
        %v3085 = vsel %vm2981, %v2876, %v2878
        %v3086 = vsel %vm2981, %v2873, %v2875
        %v3087 = vsel %vm2981, %v2874, %v2876
        %v3088 = vsel %vm2981, %v2871, %v2873
        %v3089 = vsel %vm2981, %v2872, %v2874
        %v3090 = vsel %vm2981, %v2869, %v2871
        %v3091 = vsel %vm2981, %v2870, %v2872
        %v3092 = vsel %vm2981, %v2867, %v2869
        %v3093 = vsel %vm2981, %v2868, %v2870
        %v3094 = vsel %vm2981, %v2865, %v2867
        %v3095 = vsel %vm2981, %v2866, %v2868
        %v3096 = vsel %vm2981, %v2863, %v2865
        %v3097 = vsel %vm2981, %v2864, %v2866
        %v3098 = vsel %vm2981, %v2861, %v2863
        %v3099 = vsel %vm2981, %v2862, %v2864
        %v3100 = vsel %vm2981, %v2859, %v2861
        %v3101 = vsel %vm2981, %v2860, %v2862
        %v3102 = vsel %vm2981, %v2857, %v2859
        %v3103 = vsel %vm2981, %v2858, %v2860
        %v3104 = vsel %vm2981, %v2855, %v2857
        %v3105 = vsel %vm2981, %v2856, %v2858
        %v3106 = vsel %vm2981, %v2853, %v2855
        %v3107 = vsel %vm2981, %v2854, %v2856
        %v3108 = vsel %vm2981, %v2851, %v2853
        %v3109 = vsel %vm2981, %v2852, %v2854
        %v3110 = vsel %vm2981, %v2849, %v2851
        %v3111 = vsel %vm2981, %v2850, %v2852
        %v3112 = vsel %vm2981, %v2847, %v2849
        %v3113 = vsel %vm2981, %v2848, %v2850
        %v3114 = vsel %vm2981, %v2845, %v2847
        %v3115 = vsel %vm2981, %v2846, %v2848
        %v3116 = vsel %vm2981, %v2843, %v2845
        %v3117 = vsel %vm2981, %v2844, %v2846
        %v3118 = vsel %vm2981, %v2841, %v2843
        %v3119 = vsel %vm2981, %v2842, %v2844
        %v3120 = vsel %vm2981, %v2839, %v2841
        %v3121 = vsel %vm2981, %v2840, %v2842
        %v3122 = vsel %vm2981, %v2837, %v2839
        %v3123 = vsel %vm2981, %v2838, %v2840
        %v3124 = vsel %vm2981, %v2979, %v2837
        %v3125 = vsel %vm2981, %v2980, %v2838
        %v3126 = vsel %vm2765, 1, 0
        %v3127 = vsel %vm2766, 1, 0
        %v3128 = vsel %vm2767, 1, 0
        %v3129 = vsel %vm2768, 1, 0
        %v3130 = vsel %vm2769, 1, 0
        %v3131 = vsel %vm2770, 1, 0
        %v3132 = vsel %vm2771, 1, 0
        %v3133 = vsel %vm2772, 1, 0
        %v3134 = vsel %vm2773, 1, 0
        %v3135 = vsel %vm2774, 1, 0
        %v3136 = vsel %vm2775, 1, 0
        %v3137 = vsel %vm2776, 1, 0
        %v3138 = vsel %vm2777, 1, 0
        %v3139 = vsel %vm2778, 1, 0
        %v3140 = vsel %vm2779, 1, 0
        %v3141 = vsel %vm2780, 1, 0
        %v3142 = vsel %vm2781, 1, 0
        %v3143 = vsel %vm2782, 1, 0
        %v3144 = vsel %vm2783, 1, 0
        %v3145 = vsel %vm2784, 1, 0
        %v3146 = vsel %vm2785, 1, 0
        %v3147 = vsel %vm2786, 1, 0
        %v3148 = vsel %vm2787, 1, 0
        %v3149 = vsel %vm2788, 1, 0
        %v3150 = vsel %vm2789, 1, 0
        %v3151 = vsel %vm2790, 1, 0
        %v3152 = vsel %vm2791, 1, 0
        %v3153 = vsel %vm2792, 1, 0
        %v3154 = vsel %vm2793, 1, 0
        %v3155 = vsel %vm2794, 1, 0
        %v3156 = vsel %vm2795, 1, 0
        %v3157 = vsel %vm2796, 1, 0
        %v3158 = vsel %vm2797, 1, 0
        %v3159 = vsel %vm2798, 1, 0
        %v3160 = vsel %vm2799, 1, 0
        %v3161 = vsel %vm2800, 1, 0
        %v3162 = vsel %vm2801, 1, 0
        %v3163 = vsel %vm2802, 1, 0
        %v3164 = vsel %vm2803, 1, 0
        %v3165 = vsel %vm2804, 1, 0
        %v3166 = vsel %vm2805, 1, 0
        %v3167 = vsel %vm2806, 1, 0
        %v3168 = vsel %vm2807, 1, 0
        %v3169 = vsel %vm2808, 1, 0
        %v3170 = vsel %vm2809, 1, 0
        %v3171 = vsel %vm2810, 1, 0
        %v3172 = vsel %vm2811, 1, 0
        %v3173 = vsel %vm2812, 1, 0
        %v3174 = vsel %vm2813, 1, 0
        %v3175 = vsel %vm2814, 1, 0
        %v3176 = vsel %vm2815, 1, 0
        %v3177 = vsel %vm2816, 1, 0
        %v3178 = vsel %vm2817, 1, 0
        %v3179 = vsel %vm2818, 1, 0
        %v3180 = vsel %vm2819, 1, 0
        %v3181 = vsel %vm2820, 1, 0
        %v3182 = vsel %vm2821, 1, 0
        %v3183 = vsel %vm2822, 1, 0
        %v3184 = vsel %vm2823, 1, 0
        %v3185 = vsel %vm2824, 1, 0
        %v3186 = vsel %vm2825, 1, 0
        %v3187 = vsel %vm2826, 1, 0
        %v3188 = vsel %vm2827, 1, 0
        %v3189 = vsel %vm2828, 1, 0
        %v3190 = vsel %vm2829, 1, 0
        %v3191 = vsel %vm2830, 1, 0
        %v3192 = vsel %vm2831, 1, 0
        %v3193 = vsel %vm2832, 1, 0
        %v3194 = vsel %vm2833, 1, 0
        %v3195 = vsel %vm2834, 1, 0
        %v3196 = vsel %vm2835, 1, 0
        %v3197 = vsel %vm2836, 1, 0
        %vm3198 = vcmp.eq.s32.totalorder %v3126, 1
        %vm3199 = vcmp.eq.s32.totalorder %v3127, 1
        %vm3200 = vcmp.eq.s32.totalorder %v3128, 1
        %vm3201 = vcmp.eq.s32.totalorder %v3129, 1
        %vm3202 = vcmp.eq.s32.totalorder %v3130, 1
        %vm3203 = vcmp.eq.s32.totalorder %v3131, 1
        %vm3204 = vcmp.eq.s32.totalorder %v3132, 1
        %vm3205 = vcmp.eq.s32.totalorder %v3133, 1
        %vm3206 = vcmp.eq.s32.totalorder %v3134, 1
        %vm3207 = vcmp.eq.s32.totalorder %v3135, 1
        %vm3208 = vcmp.eq.s32.totalorder %v3136, 1
        %vm3209 = vcmp.eq.s32.totalorder %v3137, 1
        %vm3210 = vcmp.eq.s32.totalorder %v3138, 1
        %vm3211 = vcmp.eq.s32.totalorder %v3139, 1
        %vm3212 = vcmp.eq.s32.totalorder %v3140, 1
        %vm3213 = vcmp.eq.s32.totalorder %v3141, 1
        %vm3214 = vcmp.eq.s32.totalorder %v3142, 1
        %vm3215 = vcmp.eq.s32.totalorder %v3143, 1
        %vm3216 = vcmp.eq.s32.totalorder %v3144, 1
        %vm3217 = vcmp.eq.s32.totalorder %v3145, 1
        %vm3218 = vcmp.eq.s32.totalorder %v3146, 1
        %vm3219 = vcmp.eq.s32.totalorder %v3147, 1
        %vm3220 = vcmp.eq.s32.totalorder %v3148, 1
        %vm3221 = vcmp.eq.s32.totalorder %v3149, 1
        %vm3222 = vcmp.eq.s32.totalorder %v3150, 1
        %vm3223 = vcmp.eq.s32.totalorder %v3151, 1
        %vm3224 = vcmp.eq.s32.totalorder %v3152, 1
        %vm3225 = vcmp.eq.s32.totalorder %v3153, 1
        %vm3226 = vcmp.eq.s32.totalorder %v3154, 1
        %vm3227 = vcmp.eq.s32.totalorder %v3155, 1
        %vm3228 = vcmp.eq.s32.totalorder %v3156, 1
        %vm3229 = vcmp.eq.s32.totalorder %v3157, 1
        %vm3230 = vcmp.eq.s32.totalorder %v3158, 1
        %vm3231 = vcmp.eq.s32.totalorder %v3159, 1
        %vm3232 = vcmp.eq.s32.totalorder %v3160, 1
        %vm3233 = vcmp.eq.s32.totalorder %v3161, 1
        %vm3234 = vcmp.eq.s32.totalorder %v3162, 1
        %vm3235 = vcmp.eq.s32.totalorder %v3163, 1
        %vm3236 = vcmp.eq.s32.totalorder %v3164, 1
        %vm3237 = vcmp.eq.s32.totalorder %v3165, 1
        %vm3238 = vcmp.eq.s32.totalorder %v3166, 1
        %vm3239 = vcmp.eq.s32.totalorder %v3167, 1
        %vm3240 = vcmp.eq.s32.totalorder %v3168, 1
        %vm3241 = vcmp.eq.s32.totalorder %v3169, 1
        %vm3242 = vcmp.eq.s32.totalorder %v3170, 1
        %vm3243 = vcmp.eq.s32.totalorder %v3171, 1
        %vm3244 = vcmp.eq.s32.totalorder %v3172, 1
        %vm3245 = vcmp.eq.s32.totalorder %v3173, 1
        %vm3246 = vcmp.eq.s32.totalorder %v3174, 1
        %vm3247 = vcmp.eq.s32.totalorder %v3175, 1
        %vm3248 = vcmp.eq.s32.totalorder %v3176, 1
        %vm3249 = vcmp.eq.s32.totalorder %v3177, 1
        %vm3250 = vcmp.eq.s32.totalorder %v3178, 1
        %vm3251 = vcmp.eq.s32.totalorder %v3179, 1
        %vm3252 = vcmp.eq.s32.totalorder %v3180, 1
        %vm3253 = vcmp.eq.s32.totalorder %v3181, 1
        %vm3254 = vcmp.eq.s32.totalorder %v3182, 1
        %vm3255 = vcmp.eq.s32.totalorder %v3183, 1
        %vm3256 = vcmp.eq.s32.totalorder %v3184, 1
        %vm3257 = vcmp.eq.s32.totalorder %v3185, 1
        %vm3258 = vcmp.eq.s32.totalorder %v3186, 1
        %vm3259 = vcmp.eq.s32.totalorder %v3187, 1
        %vm3260 = vcmp.eq.s32.totalorder %v3188, 1
        %vm3261 = vcmp.eq.s32.totalorder %v3189, 1
        %vm3262 = vcmp.eq.s32.totalorder %v3190, 1
        %vm3263 = vcmp.eq.s32.totalorder %v3191, 1
        %vm3264 = vcmp.eq.s32.totalorder %v3192, 1
        %vm3265 = vcmp.eq.s32.totalorder %v3193, 1
        %vm3266 = vcmp.eq.s32.totalorder %v3194, 1
        %vm3267 = vcmp.eq.s32.totalorder %v3195, 1
        %vm3268 = vcmp.eq.s32.totalorder %v3196, 1
        %vm3269 = vcmp.eq.s32.totalorder %v3197, 1
        %v3270 = vsel %vm3198, 0.0, %v3122
        %v3271 = vsel %vm3199, 0.0, %v3120
        %v3272 = vsel %vm3200, 0.0, %v3118
        %v3273 = vsel %vm3201, 0.0, %v3116
        %v3274 = vsel %vm3202, 0.0, %v3114
        %v3275 = vsel %vm3203, 0.0, %v3112
        %v3276 = vsel %vm3204, 0.0, %v3110
        %v3277 = vsel %vm3205, 0.0, %v3108
        %v3278 = vsel %vm3206, 0.0, %v3106
        %v3279 = vsel %vm3207, 0.0, %v3104
        %v3280 = vsel %vm3208, 0.0, %v3102
        %v3281 = vsel %vm3209, 0.0, %v3100
        %v3282 = vsel %vm3210, 0.0, %v3098
        %v3283 = vsel %vm3211, 0.0, %v3096
        %v3284 = vsel %vm3212, 0.0, %v3094
        %v3285 = vsel %vm3213, 0.0, %v3092
        %v3286 = vsel %vm3214, 0.0, %v3090
        %v3287 = vsel %vm3215, 0.0, %v3088
        %v3288 = vsel %vm3216, 0.0, %v3086
        %v3289 = vsel %vm3217, 0.0, %v3084
        %v3290 = vsel %vm3218, 0.0, %v3082
        %v3291 = vsel %vm3219, 0.0, %v3080
        %v3292 = vsel %vm3220, 0.0, %v3078
        %v3293 = vsel %vm3221, 0.0, %v3076
        %v3294 = vsel %vm3222, 0.0, %v3074
        %v3295 = vsel %vm3223, 0.0, %v3072
        %v3296 = vsel %vm3224, 0.0, %v3070
        %v3297 = vsel %vm3225, 0.0, %v3068
        %v3298 = vsel %vm3226, 0.0, %v3066
        %v3299 = vsel %vm3227, 0.0, %v3064
        %v3300 = vsel %vm3228, 0.0, %v3062
        %v3301 = vsel %vm3229, 0.0, %v3060
        %v3302 = vsel %vm3230, 0.0, %v3058
        %v3303 = vsel %vm3231, 0.0, %v3056
        %v3304 = vsel %vm3232, 0.0, %v3054
        %v3305 = vsel %vm3233, 0.0, %v3052
        %v3306 = vsel %vm3234, 0.0, %v3050
        %v3307 = vsel %vm3235, 0.0, %v3048
        %v3308 = vsel %vm3236, 0.0, %v3046
        %v3309 = vsel %vm3237, 0.0, %v3044
        %v3310 = vsel %vm3238, 0.0, %v3042
        %v3311 = vsel %vm3239, 0.0, %v3040
        %v3312 = vsel %vm3240, 0.0, %v3038
        %v3313 = vsel %vm3241, 0.0, %v3036
        %v3314 = vsel %vm3242, 0.0, %v3034
        %v3315 = vsel %vm3243, 0.0, %v3032
        %v3316 = vsel %vm3244, 0.0, %v3030
        %v3317 = vsel %vm3245, 0.0, %v3028
        %v3318 = vsel %vm3246, 0.0, %v3026
        %v3319 = vsel %vm3247, 0.0, %v3024
        %v3320 = vsel %vm3248, 0.0, %v3022
        %v3321 = vsel %vm3249, 0.0, %v3020
        %v3322 = vsel %vm3250, 0.0, %v3018
        %v3323 = vsel %vm3251, 0.0, %v3016
        %v3324 = vsel %vm3252, 0.0, %v3014
        %v3325 = vsel %vm3253, 0.0, %v3012
        %v3326 = vsel %vm3254, 0.0, %v3010
        %v3327 = vsel %vm3255, 0.0, %v3008
        %v3328 = vsel %vm3256, 0.0, %v3006
        %v3329 = vsel %vm3257, 0.0, %v3004
        %v3330 = vsel %vm3258, 0.0, %v3002
        %v3331 = vsel %vm3259, 0.0, %v3000
        %v3332 = vsel %vm3260, 0.0, %v2998
        %v3333 = vsel %vm3261, 0.0, %v2996
        %v3334 = vsel %vm3262, 0.0, %v2994
        %v3335 = vsel %vm3263, 0.0, %v2992
        %v3336 = vsel %vm3264, 0.0, %v2990
        %v3337 = vsel %vm3265, 0.0, %v2988
        %v3338 = vsel %vm3266, 0.0, %v2986
        %v3339 = vsel %vm3267, 0.0, %v2984
        %v3340 = vsel %vm3268, 0.0, %v2982
        %v3341 = vsel %vm3269, 0.0, %v3124
        %v3342 = vsel %vm3198, 0.0, %v3123
        %v3343 = vsel %vm3199, 0.0, %v3121
        %v3344 = vsel %vm3200, 0.0, %v3119
        %v3345 = vsel %vm3201, 0.0, %v3117
        %v3346 = vsel %vm3202, 0.0, %v3115
        %v3347 = vsel %vm3203, 0.0, %v3113
        %v3348 = vsel %vm3204, 0.0, %v3111
        %v3349 = vsel %vm3205, 0.0, %v3109
        %v3350 = vsel %vm3206, 0.0, %v3107
        %v3351 = vsel %vm3207, 0.0, %v3105
        %v3352 = vsel %vm3208, 0.0, %v3103
        %v3353 = vsel %vm3209, 0.0, %v3101
        %v3354 = vsel %vm3210, 0.0, %v3099
        %v3355 = vsel %vm3211, 0.0, %v3097
        %v3356 = vsel %vm3212, 0.0, %v3095
        %v3357 = vsel %vm3213, 0.0, %v3093
        %v3358 = vsel %vm3214, 0.0, %v3091
        %v3359 = vsel %vm3215, 0.0, %v3089
        %v3360 = vsel %vm3216, 0.0, %v3087
        %v3361 = vsel %vm3217, 0.0, %v3085
        %v3362 = vsel %vm3218, 0.0, %v3083
        %v3363 = vsel %vm3219, 0.0, %v3081
        %v3364 = vsel %vm3220, 0.0, %v3079
        %v3365 = vsel %vm3221, 0.0, %v3077
        %v3366 = vsel %vm3222, 0.0, %v3075
        %v3367 = vsel %vm3223, 0.0, %v3073
        %v3368 = vsel %vm3224, 0.0, %v3071
        %v3369 = vsel %vm3225, 0.0, %v3069
        %v3370 = vsel %vm3226, 0.0, %v3067
        %v3371 = vsel %vm3227, 0.0, %v3065
        %v3372 = vsel %vm3228, 0.0, %v3063
        %v3373 = vsel %vm3229, 0.0, %v3061
        %v3374 = vsel %vm3230, 0.0, %v3059
        %v3375 = vsel %vm3231, 0.0, %v3057
        %v3376 = vsel %vm3232, 0.0, %v3055
        %v3377 = vsel %vm3233, 0.0, %v3053
        %v3378 = vsel %vm3234, 0.0, %v3051
        %v3379 = vsel %vm3235, 0.0, %v3049
        %v3380 = vsel %vm3236, 0.0, %v3047
        %v3381 = vsel %vm3237, 0.0, %v3045
        %v3382 = vsel %vm3238, 0.0, %v3043
        %v3383 = vsel %vm3239, 0.0, %v3041
        %v3384 = vsel %vm3240, 0.0, %v3039
        %v3385 = vsel %vm3241, 0.0, %v3037
        %v3386 = vsel %vm3242, 0.0, %v3035
        %v3387 = vsel %vm3243, 0.0, %v3033
        %v3388 = vsel %vm3244, 0.0, %v3031
        %v3389 = vsel %vm3245, 0.0, %v3029
        %v3390 = vsel %vm3246, 0.0, %v3027
        %v3391 = vsel %vm3247, 0.0, %v3025
        %v3392 = vsel %vm3248, 0.0, %v3023
        %v3393 = vsel %vm3249, 0.0, %v3021
        %v3394 = vsel %vm3250, 0.0, %v3019
        %v3395 = vsel %vm3251, 0.0, %v3017
        %v3396 = vsel %vm3252, 0.0, %v3015
        %v3397 = vsel %vm3253, 0.0, %v3013
        %v3398 = vsel %vm3254, 0.0, %v3011
        %v3399 = vsel %vm3255, 0.0, %v3009
        %v3400 = vsel %vm3256, 0.0, %v3007
        %v3401 = vsel %vm3257, 0.0, %v3005
        %v3402 = vsel %vm3258, 0.0, %v3003
        %v3403 = vsel %vm3259, 0.0, %v3001
        %v3404 = vsel %vm3260, 0.0, %v2999
        %v3405 = vsel %vm3261, 0.0, %v2997
        %v3406 = vsel %vm3262, 0.0, %v2995
        %v3407 = vsel %vm3263, 0.0, %v2993
        %v3408 = vsel %vm3264, 0.0, %v2991
        %v3409 = vsel %vm3265, 0.0, %v2989
        %v3410 = vsel %vm3266, 0.0, %v2987
        %v3411 = vsel %vm3267, 0.0, %v2985
        %v3412 = vsel %vm3268, 0.0, %v2983
        %v3413 = vsel %vm3269, 0.0, %v3125
        %3558 = vrot.lane.b32.xlu0 %v1152, 3
        %v3559 = vpop.permute.xlu0 %3558
        %3560 = vrot.lane.b32.xlu0 %v1153, 3
        %v3561 = vpop.permute.xlu0 %3560
        %3562 = vrot.lane.b32.xlu0 %v1154, 3
        %v3563 = vpop.permute.xlu0 %3562
        %3564 = vrot.lane.b32.xlu0 %v1155, 3
        %v3565 = vpop.permute.xlu0 %3564
        %3566 = vrot.lane.b32.xlu0 %v1013, 3
        %v3567 = vpop.permute.xlu0 %3566
        %3568 = vrot.lane.b32.xlu0 %v1014, 3
        %v3569 = vpop.permute.xlu0 %3568
        %3570 = vrot.lane.b32.xlu0 %v1015, 3
        %v3571 = vpop.permute.xlu0 %3570
        %3572 = vrot.lane.b32.xlu0 %v1016, 3
        %v3573 = vpop.permute.xlu0 %3572
        %3574 = vrot.lane.b32.xlu0 %v1017, 3
        %v3575 = vpop.permute.xlu0 %3574
        %3576 = vrot.lane.b32.xlu0 %v1018, 3
        %v3577 = vpop.permute.xlu0 %3576
        %3578 = vrot.lane.b32.xlu0 %v1019, 3
        %v3579 = vpop.permute.xlu0 %3578
        %3580 = vrot.lane.b32.xlu0 %v1020, 3
        %v3581 = vpop.permute.xlu0 %3580
        %3582 = vrot.lane.b32.xlu0 %v1021, 3
        %v3583 = vpop.permute.xlu0 %3582
        %3584 = vrot.lane.b32.xlu0 %v1022, 3
        %v3585 = vpop.permute.xlu0 %3584
        %3586 = vrot.lane.b32.xlu0 %v1023, 3
        %v3587 = vpop.permute.xlu0 %3586
        %3588 = vrot.lane.b32.xlu0 %v1024, 3
        %v3589 = vpop.permute.xlu0 %3588
        %3590 = vrot.lane.b32.xlu0 %v1025, 3
        %v3591 = vpop.permute.xlu0 %3590
        %3592 = vrot.lane.b32.xlu0 %v1026, 3
        %v3593 = vpop.permute.xlu0 %3592
        %3594 = vrot.lane.b32.xlu0 %v1027, 3
        %v3595 = vpop.permute.xlu0 %3594
        %3596 = vrot.lane.b32.xlu0 %v1028, 3
        %v3597 = vpop.permute.xlu0 %3596
        %3598 = vrot.lane.b32.xlu0 %v1029, 3
        %v3599 = vpop.permute.xlu0 %3598
        %3600 = vrot.lane.b32.xlu0 %v1030, 3
        %v3601 = vpop.permute.xlu0 %3600
        %3602 = vrot.lane.b32.xlu0 %v1031, 3
        %v3603 = vpop.permute.xlu0 %3602
        %3604 = vrot.lane.b32.xlu0 %v1032, 3
        %v3605 = vpop.permute.xlu0 %3604
        %3606 = vrot.lane.b32.xlu0 %v1033, 3
        %v3607 = vpop.permute.xlu0 %3606
        %3608 = vrot.lane.b32.xlu0 %v1034, 3
        %v3609 = vpop.permute.xlu0 %3608
        %3610 = vrot.lane.b32.xlu0 %v1035, 3
        %v3611 = vpop.permute.xlu0 %3610
        %3612 = vrot.lane.b32.xlu0 %v1036, 3
        %v3613 = vpop.permute.xlu0 %3612
        %3614 = vrot.lane.b32.xlu0 %v1037, 3
        %v3615 = vpop.permute.xlu0 %3614
        %3616 = vrot.lane.b32.xlu0 %v1038, 3
        %v3617 = vpop.permute.xlu0 %3616
        %3618 = vrot.lane.b32.xlu0 %v1039, 3
        %v3619 = vpop.permute.xlu0 %3618
        %3620 = vrot.lane.b32.xlu0 %v1040, 3
        %v3621 = vpop.permute.xlu0 %3620
        %3622 = vrot.lane.b32.xlu0 %v1041, 3
        %v3623 = vpop.permute.xlu0 %3622
        %3624 = vrot.lane.b32.xlu0 %v1042, 3
        %v3625 = vpop.permute.xlu0 %3624
        %3626 = vrot.lane.b32.xlu0 %v1043, 3
        %v3627 = vpop.permute.xlu0 %3626
        %3628 = vrot.lane.b32.xlu0 %v1044, 3
        %v3629 = vpop.permute.xlu0 %3628
        %3630 = vrot.lane.b32.xlu0 %v1045, 3
        %v3631 = vpop.permute.xlu0 %3630
        %3632 = vrot.lane.b32.xlu0 %v1046, 3
        %v3633 = vpop.permute.xlu0 %3632
        %3634 = vrot.lane.b32.xlu0 %v1047, 3
        %v3635 = vpop.permute.xlu0 %3634
        %3636 = vrot.lane.b32.xlu0 %v1048, 3
        %v3637 = vpop.permute.xlu0 %3636
        %3638 = vrot.lane.b32.xlu0 %v1049, 3
        %v3639 = vpop.permute.xlu0 %3638
        %3640 = vrot.lane.b32.xlu0 %v1050, 3
        %v3641 = vpop.permute.xlu0 %3640
        %3642 = vrot.lane.b32.xlu0 %v1051, 3
        %v3643 = vpop.permute.xlu0 %3642
        %3644 = vrot.lane.b32.xlu0 %v1052, 3
        %v3645 = vpop.permute.xlu0 %3644
        %3646 = vrot.lane.b32.xlu0 %v1053, 3
        %v3647 = vpop.permute.xlu0 %3646
        %3648 = vrot.lane.b32.xlu0 %v1054, 3
        %v3649 = vpop.permute.xlu0 %3648
        %3650 = vrot.lane.b32.xlu0 %v1055, 3
        %v3651 = vpop.permute.xlu0 %3650
        %3652 = vrot.lane.b32.xlu0 %v1056, 3
        %v3653 = vpop.permute.xlu0 %3652
        %3654 = vrot.lane.b32.xlu0 %v1057, 3
        %v3655 = vpop.permute.xlu0 %3654
        %3656 = vrot.lane.b32.xlu0 %v1058, 3
        %v3657 = vpop.permute.xlu0 %3656
        %3658 = vrot.lane.b32.xlu0 %v1059, 3
        %v3659 = vpop.permute.xlu0 %3658
        %3660 = vrot.lane.b32.xlu0 %v1060, 3
        %v3661 = vpop.permute.xlu0 %3660
        %3662 = vrot.lane.b32.xlu0 %v1061, 3
        %v3663 = vpop.permute.xlu0 %3662
        %3664 = vrot.lane.b32.xlu0 %v1062, 3
        %v3665 = vpop.permute.xlu0 %3664
        %3666 = vrot.lane.b32.xlu0 %v1063, 3
        %v3667 = vpop.permute.xlu0 %3666
        %3668 = vrot.lane.b32.xlu0 %v1064, 3
        %v3669 = vpop.permute.xlu0 %3668
        %3670 = vrot.lane.b32.xlu0 %v1065, 3
        %v3671 = vpop.permute.xlu0 %3670
        %3672 = vrot.lane.b32.xlu0 %v1066, 3
        %v3673 = vpop.permute.xlu0 %3672
        %3674 = vrot.lane.b32.xlu0 %v1067, 3
        %v3675 = vpop.permute.xlu0 %3674
        %3676 = vrot.lane.b32.xlu0 %v1068, 3
        %v3677 = vpop.permute.xlu0 %3676
        %3678 = vrot.lane.b32.xlu0 %v1069, 3
        %v3679 = vpop.permute.xlu0 %3678
        %3680 = vrot.lane.b32.xlu0 %v1070, 3
        %v3681 = vpop.permute.xlu0 %3680
        %3682 = vrot.lane.b32.xlu0 %v1071, 3
        %v3683 = vpop.permute.xlu0 %3682
        %3684 = vrot.lane.b32.xlu0 %v1072, 3
        %v3685 = vpop.permute.xlu0 %3684
        %3686 = vrot.lane.b32.xlu0 %v1073, 3
        %v3687 = vpop.permute.xlu0 %3686
        %3688 = vrot.lane.b32.xlu0 %v1074, 3
        %v3689 = vpop.permute.xlu0 %3688
        %3690 = vrot.lane.b32.xlu0 %v1075, 3
        %v3691 = vpop.permute.xlu0 %3690
        %3692 = vrot.lane.b32.xlu0 %v1076, 3
        %v3693 = vpop.permute.xlu0 %3692
        %3694 = vrot.lane.b32.xlu0 %v1171, 3
        %v3695 = vpop.permute.xlu0 %3694
        %3696 = vrot.lane.b32.xlu0 %v1172, 3
        %v3697 = vpop.permute.xlu0 %3696
        %3698 = vrot.lane.b32.xlu0 %v1173, 3
        %v3699 = vpop.permute.xlu0 %3698
        %3700 = vrot.lane.b32.xlu0 %v1174, 3
        %v3701 = vpop.permute.xlu0 %3700
        %3702 = vrot.lane.b32.xlu0 %v1156, 3
        %v3703 = vpop.permute.xlu0 %3702
        %3704 = vrot.lane.b32.xlu0 %v1157, 3
        %v3705 = vpop.permute.xlu0 %3704
        %3706 = vrot.lane.b32.xlu0 %v1158, 3
        %v3707 = vpop.permute.xlu0 %3706
        %3708 = vrot.lane.b32.xlu0 %v1159, 3
        %v3709 = vpop.permute.xlu0 %3708
        %3710 = vrot.lane.b32.xlu0 %v1077, 3
        %v3711 = vpop.permute.xlu0 %3710
        %3712 = vrot.lane.b32.xlu0 %v1078, 3
        %v3713 = vpop.permute.xlu0 %3712
        %3714 = vrot.lane.b32.xlu0 %v1079, 3
        %v3715 = vpop.permute.xlu0 %3714
        %3716 = vrot.lane.b32.xlu0 %v1080, 3
        %v3717 = vpop.permute.xlu0 %3716
        %3718 = vrot.lane.b32.xlu0 %v1081, 3
        %v3719 = vpop.permute.xlu0 %3718
        %3720 = vrot.lane.b32.xlu0 %v1082, 3
        %v3721 = vpop.permute.xlu0 %3720
        %3722 = vrot.lane.b32.xlu0 %v1083, 3
        %v3723 = vpop.permute.xlu0 %3722
        %3724 = vrot.lane.b32.xlu0 %v1084, 3
        %v3725 = vpop.permute.xlu0 %3724
        %3726 = vrot.lane.b32.xlu0 %v1085, 3
        %v3727 = vpop.permute.xlu0 %3726
        %3728 = vrot.lane.b32.xlu0 %v1086, 3
        %v3729 = vpop.permute.xlu0 %3728
        %3730 = vrot.lane.b32.xlu0 %v1087, 3
        %v3731 = vpop.permute.xlu0 %3730
        %3732 = vrot.lane.b32.xlu0 %v1088, 3
        %v3733 = vpop.permute.xlu0 %3732
        %3734 = vrot.lane.b32.xlu0 %v1089, 3
        %v3735 = vpop.permute.xlu0 %3734
        %3736 = vrot.lane.b32.xlu0 %v1090, 3
        %v3737 = vpop.permute.xlu0 %3736
        %3738 = vrot.lane.b32.xlu0 %v1091, 3
        %v3739 = vpop.permute.xlu0 %3738
        %3740 = vrot.lane.b32.xlu0 %v1092, 3
        %v3741 = vpop.permute.xlu0 %3740
        %3742 = vrot.lane.b32.xlu0 %v1093, 3
        %v3743 = vpop.permute.xlu0 %3742
        %3744 = vrot.lane.b32.xlu0 %v1094, 3
        %v3745 = vpop.permute.xlu0 %3744
        %3746 = vrot.lane.b32.xlu0 %v1095, 3
        %v3747 = vpop.permute.xlu0 %3746
        %3748 = vrot.lane.b32.xlu0 %v1096, 3
        %v3749 = vpop.permute.xlu0 %3748
        %3750 = vrot.lane.b32.xlu0 %v1097, 3
        %v3751 = vpop.permute.xlu0 %3750
        %3752 = vrot.lane.b32.xlu0 %v1098, 3
        %v3753 = vpop.permute.xlu0 %3752
        %3754 = vrot.lane.b32.xlu0 %v1099, 3
        %v3755 = vpop.permute.xlu0 %3754
        %3756 = vrot.lane.b32.xlu0 %v1100, 3
        %v3757 = vpop.permute.xlu0 %3756
        %3758 = vrot.lane.b32.xlu0 %v1101, 3
        %v3759 = vpop.permute.xlu0 %3758
        %3760 = vrot.lane.b32.xlu0 %v1102, 3
        %v3761 = vpop.permute.xlu0 %3760
        %3762 = vrot.lane.b32.xlu0 %v1103, 3
        %v3763 = vpop.permute.xlu0 %3762
        %3764 = vrot.lane.b32.xlu0 %v1104, 3
        %v3765 = vpop.permute.xlu0 %3764
        %3766 = vrot.lane.b32.xlu0 %v1105, 3
        %v3767 = vpop.permute.xlu0 %3766
        %3768 = vrot.lane.b32.xlu0 %v1106, 3
        %v3769 = vpop.permute.xlu0 %3768
        %3770 = vrot.lane.b32.xlu0 %v1107, 3
        %v3771 = vpop.permute.xlu0 %3770
        %3772 = vrot.lane.b32.xlu0 %v1108, 3
        %v3773 = vpop.permute.xlu0 %3772
        %3774 = vrot.lane.b32.xlu0 %v1109, 3
        %v3775 = vpop.permute.xlu0 %3774
        %3776 = vrot.lane.b32.xlu0 %v1110, 3
        %v3777 = vpop.permute.xlu0 %3776
        %3778 = vrot.lane.b32.xlu0 %v1111, 3
        %v3779 = vpop.permute.xlu0 %3778
        %3780 = vrot.lane.b32.xlu0 %v1112, 3
        %v3781 = vpop.permute.xlu0 %3780
        %3782 = vrot.lane.b32.xlu0 %v1113, 3
        %v3783 = vpop.permute.xlu0 %3782
        %3784 = vrot.lane.b32.xlu0 %v1114, 3
        %v3785 = vpop.permute.xlu0 %3784
        %3786 = vrot.lane.b32.xlu0 %v1115, 3
        %v3787 = vpop.permute.xlu0 %3786
        %3788 = vrot.lane.b32.xlu0 %v1116, 3
        %v3789 = vpop.permute.xlu0 %3788
        %3790 = vrot.lane.b32.xlu0 %v1117, 3
        %v3791 = vpop.permute.xlu0 %3790
        %3792 = vrot.lane.b32.xlu0 %v1118, 3
        %v3793 = vpop.permute.xlu0 %3792
        %3794 = vrot.lane.b32.xlu0 %v1119, 3
        %v3795 = vpop.permute.xlu0 %3794
        %3796 = vrot.lane.b32.xlu0 %v1120, 3
        %v3797 = vpop.permute.xlu0 %3796
        %3798 = vrot.lane.b32.xlu0 %v1121, 3
        %v3799 = vpop.permute.xlu0 %3798
        %3800 = vrot.lane.b32.xlu0 %v1122, 3
        %v3801 = vpop.permute.xlu0 %3800
        %3802 = vrot.lane.b32.xlu0 %v1123, 3
        %v3803 = vpop.permute.xlu0 %3802
        %3804 = vrot.lane.b32.xlu0 %v1124, 3
        %v3805 = vpop.permute.xlu0 %3804
        %3806 = vrot.lane.b32.xlu0 %v1125, 3
        %v3807 = vpop.permute.xlu0 %3806
        %3808 = vrot.lane.b32.xlu0 %v1126, 3
        %v3809 = vpop.permute.xlu0 %3808
        %3810 = vrot.lane.b32.xlu0 %v1127, 3
        %v3811 = vpop.permute.xlu0 %3810
        %3812 = vrot.lane.b32.xlu0 %v1128, 3
        %v3813 = vpop.permute.xlu0 %3812
        %3814 = vrot.lane.b32.xlu0 %v1129, 3
        %v3815 = vpop.permute.xlu0 %3814
        %3816 = vrot.lane.b32.xlu0 %v1130, 3
        %v3817 = vpop.permute.xlu0 %3816
        %3818 = vrot.lane.b32.xlu0 %v1131, 3
        %v3819 = vpop.permute.xlu0 %3818
        %3820 = vrot.lane.b32.xlu0 %v1132, 3
        %v3821 = vpop.permute.xlu0 %3820
        %3822 = vrot.lane.b32.xlu0 %v1133, 3
        %v3823 = vpop.permute.xlu0 %3822
        %3824 = vrot.lane.b32.xlu0 %v1134, 3
        %v3825 = vpop.permute.xlu0 %3824
        %3826 = vrot.lane.b32.xlu0 %v1135, 3
        %v3827 = vpop.permute.xlu0 %3826
        %3828 = vrot.lane.b32.xlu0 %v1136, 3
        %v3829 = vpop.permute.xlu0 %3828
        %3830 = vrot.lane.b32.xlu0 %v1137, 3
        %v3831 = vpop.permute.xlu0 %3830
        %3832 = vrot.lane.b32.xlu0 %v1138, 3
        %v3833 = vpop.permute.xlu0 %3832
        %3834 = vrot.lane.b32.xlu0 %v1139, 3
        %v3835 = vpop.permute.xlu0 %3834
        %3836 = vrot.lane.b32.xlu0 %v1140, 3
        %v3837 = vpop.permute.xlu0 %3836
        %3838 = vrot.lane.b32.xlu0 %v1175, 3
        %v3839 = vpop.permute.xlu0 %3838
        %3840 = vrot.lane.b32.xlu0 %v1176, 3
        %v3841 = vpop.permute.xlu0 %3840
        %3842 = vrot.lane.b32.xlu0 %v1177, 3
        %v3843 = vpop.permute.xlu0 %3842
        %3844 = vrot.lane.b32.xlu0 %v1178, 3
        %v3845 = vpop.permute.xlu0 %3844
        %4134 = vrot.lane.b32.xlu0 %v3270, 6
        %v4135 = vpop.permute.xlu0 %4134
        %4136 = vrot.lane.b32.xlu0 %v3271, 6
        %v4137 = vpop.permute.xlu0 %4136
        %4138 = vrot.lane.b32.xlu0 %v3272, 6
        %v4139 = vpop.permute.xlu0 %4138
        %4140 = vrot.lane.b32.xlu0 %v3273, 6
        %v4141 = vpop.permute.xlu0 %4140
        %4142 = vrot.lane.b32.xlu0 %v3274, 6
        %v4143 = vpop.permute.xlu0 %4142
        %4144 = vrot.lane.b32.xlu0 %v3275, 6
        %v4145 = vpop.permute.xlu0 %4144
        %4146 = vrot.lane.b32.xlu0 %v3276, 6
        %v4147 = vpop.permute.xlu0 %4146
        %4148 = vrot.lane.b32.xlu0 %v3277, 6
        %v4149 = vpop.permute.xlu0 %4148
        %4150 = vrot.lane.b32.xlu0 %v3278, 6
        %v4151 = vpop.permute.xlu0 %4150
        %4152 = vrot.lane.b32.xlu0 %v3279, 6
        %v4153 = vpop.permute.xlu0 %4152
        %4154 = vrot.lane.b32.xlu0 %v3280, 6
        %v4155 = vpop.permute.xlu0 %4154
        %4156 = vrot.lane.b32.xlu0 %v3281, 6
        %v4157 = vpop.permute.xlu0 %4156
        %4158 = vrot.lane.b32.xlu0 %v3282, 6
        %v4159 = vpop.permute.xlu0 %4158
        %4160 = vrot.lane.b32.xlu0 %v3283, 6
        %v4161 = vpop.permute.xlu0 %4160
        %4162 = vrot.lane.b32.xlu0 %v3284, 6
        %v4163 = vpop.permute.xlu0 %4162
        %4164 = vrot.lane.b32.xlu0 %v3285, 6
        %v4165 = vpop.permute.xlu0 %4164
        %4166 = vrot.lane.b32.xlu0 %v3286, 6
        %v4167 = vpop.permute.xlu0 %4166
        %4168 = vrot.lane.b32.xlu0 %v3287, 6
        %v4169 = vpop.permute.xlu0 %4168
        %4170 = vrot.lane.b32.xlu0 %v3288, 6
        %v4171 = vpop.permute.xlu0 %4170
        %4172 = vrot.lane.b32.xlu0 %v3289, 6
        %v4173 = vpop.permute.xlu0 %4172
        %4174 = vrot.lane.b32.xlu0 %v3290, 6
        %v4175 = vpop.permute.xlu0 %4174
        %4176 = vrot.lane.b32.xlu0 %v3291, 6
        %v4177 = vpop.permute.xlu0 %4176
        %4178 = vrot.lane.b32.xlu0 %v3292, 6
        %v4179 = vpop.permute.xlu0 %4178
        %4180 = vrot.lane.b32.xlu0 %v3293, 6
        %v4181 = vpop.permute.xlu0 %4180
        %4182 = vrot.lane.b32.xlu0 %v3294, 6
        %v4183 = vpop.permute.xlu0 %4182
        %4184 = vrot.lane.b32.xlu0 %v3295, 6
        %v4185 = vpop.permute.xlu0 %4184
        %4186 = vrot.lane.b32.xlu0 %v3296, 6
        %v4187 = vpop.permute.xlu0 %4186
        %4188 = vrot.lane.b32.xlu0 %v3297, 6
        %v4189 = vpop.permute.xlu0 %4188
        %4190 = vrot.lane.b32.xlu0 %v3298, 6
        %v4191 = vpop.permute.xlu0 %4190
        %4192 = vrot.lane.b32.xlu0 %v3299, 6
        %v4193 = vpop.permute.xlu0 %4192
        %4194 = vrot.lane.b32.xlu0 %v3300, 6
        %v4195 = vpop.permute.xlu0 %4194
        %4196 = vrot.lane.b32.xlu0 %v3301, 6
        %v4197 = vpop.permute.xlu0 %4196
        %4198 = vrot.lane.b32.xlu0 %v3302, 6
        %v4199 = vpop.permute.xlu0 %4198
        %4200 = vrot.lane.b32.xlu0 %v3303, 6
        %v4201 = vpop.permute.xlu0 %4200
        %4202 = vrot.lane.b32.xlu0 %v3304, 6
        %v4203 = vpop.permute.xlu0 %4202
        %4204 = vrot.lane.b32.xlu0 %v3305, 6
        %v4205 = vpop.permute.xlu0 %4204
        %4206 = vrot.lane.b32.xlu0 %v3306, 6
        %v4207 = vpop.permute.xlu0 %4206
        %4208 = vrot.lane.b32.xlu0 %v3307, 6
        %v4209 = vpop.permute.xlu0 %4208
        %4210 = vrot.lane.b32.xlu0 %v3308, 6
        %v4211 = vpop.permute.xlu0 %4210
        %4212 = vrot.lane.b32.xlu0 %v3309, 6
        %v4213 = vpop.permute.xlu0 %4212
        %4214 = vrot.lane.b32.xlu0 %v3310, 6
        %v4215 = vpop.permute.xlu0 %4214
        %4216 = vrot.lane.b32.xlu0 %v3311, 6
        %v4217 = vpop.permute.xlu0 %4216
        %4218 = vrot.lane.b32.xlu0 %v3312, 6
        %v4219 = vpop.permute.xlu0 %4218
        %4220 = vrot.lane.b32.xlu0 %v3313, 6
        %v4221 = vpop.permute.xlu0 %4220
        %4222 = vrot.lane.b32.xlu0 %v3314, 6
        %v4223 = vpop.permute.xlu0 %4222
        %4224 = vrot.lane.b32.xlu0 %v3315, 6
        %v4225 = vpop.permute.xlu0 %4224
        %4226 = vrot.lane.b32.xlu0 %v3316, 6
        %v4227 = vpop.permute.xlu0 %4226
        %4228 = vrot.lane.b32.xlu0 %v3317, 6
        %v4229 = vpop.permute.xlu0 %4228
        %4230 = vrot.lane.b32.xlu0 %v3318, 6
        %v4231 = vpop.permute.xlu0 %4230
        %4232 = vrot.lane.b32.xlu0 %v3319, 6
        %v4233 = vpop.permute.xlu0 %4232
        %4234 = vrot.lane.b32.xlu0 %v3320, 6
        %v4235 = vpop.permute.xlu0 %4234
        %4236 = vrot.lane.b32.xlu0 %v3321, 6
        %v4237 = vpop.permute.xlu0 %4236
        %4238 = vrot.lane.b32.xlu0 %v3322, 6
        %v4239 = vpop.permute.xlu0 %4238
        %4240 = vrot.lane.b32.xlu0 %v3323, 6
        %v4241 = vpop.permute.xlu0 %4240
        %4242 = vrot.lane.b32.xlu0 %v3324, 6
        %v4243 = vpop.permute.xlu0 %4242
        %4244 = vrot.lane.b32.xlu0 %v3325, 6
        %v4245 = vpop.permute.xlu0 %4244
        %4246 = vrot.lane.b32.xlu0 %v3326, 6
        %v4247 = vpop.permute.xlu0 %4246
        %4248 = vrot.lane.b32.xlu0 %v3327, 6
        %v4249 = vpop.permute.xlu0 %4248
        %4250 = vrot.lane.b32.xlu0 %v3328, 6
        %v4251 = vpop.permute.xlu0 %4250
        %4252 = vrot.lane.b32.xlu0 %v3329, 6
        %v4253 = vpop.permute.xlu0 %4252
        %4254 = vrot.lane.b32.xlu0 %v3330, 6
        %v4255 = vpop.permute.xlu0 %4254
        %4256 = vrot.lane.b32.xlu0 %v3331, 6
        %v4257 = vpop.permute.xlu0 %4256
        %4258 = vrot.lane.b32.xlu0 %v3332, 6
        %v4259 = vpop.permute.xlu0 %4258
        %4260 = vrot.lane.b32.xlu0 %v3333, 6
        %v4261 = vpop.permute.xlu0 %4260
        %4262 = vrot.lane.b32.xlu0 %v3334, 6
        %v4263 = vpop.permute.xlu0 %4262
        %4264 = vrot.lane.b32.xlu0 %v3335, 6
        %v4265 = vpop.permute.xlu0 %4264
        %4266 = vrot.lane.b32.xlu0 %v3336, 6
        %v4267 = vpop.permute.xlu0 %4266
        %4268 = vrot.lane.b32.xlu0 %v3337, 6
        %v4269 = vpop.permute.xlu0 %4268
        %4270 = vrot.lane.b32.xlu0 %v3338, 6
        %v4271 = vpop.permute.xlu0 %4270
        %4272 = vrot.lane.b32.xlu0 %v3339, 6
        %v4273 = vpop.permute.xlu0 %4272
        %4274 = vrot.lane.b32.xlu0 %v3340, 6
        %v4275 = vpop.permute.xlu0 %4274
        %4276 = vrot.lane.b32.xlu0 %v3341, 6
        %v4277 = vpop.permute.xlu0 %4276
        %4278 = vrot.lane.b32.xlu0 %v3342, 6
        %v4279 = vpop.permute.xlu0 %4278
        %4280 = vrot.lane.b32.xlu0 %v3343, 6
        %v4281 = vpop.permute.xlu0 %4280
        %4282 = vrot.lane.b32.xlu0 %v3344, 6
        %v4283 = vpop.permute.xlu0 %4282
        %4284 = vrot.lane.b32.xlu0 %v3345, 6
        %v4285 = vpop.permute.xlu0 %4284
        %4286 = vrot.lane.b32.xlu0 %v3346, 6
        %v4287 = vpop.permute.xlu0 %4286
        %4288 = vrot.lane.b32.xlu0 %v3347, 6
        %v4289 = vpop.permute.xlu0 %4288
        %4290 = vrot.lane.b32.xlu0 %v3348, 6
        %v4291 = vpop.permute.xlu0 %4290
        %4292 = vrot.lane.b32.xlu0 %v3349, 6
        %v4293 = vpop.permute.xlu0 %4292
        %4294 = vrot.lane.b32.xlu0 %v3350, 6
        %v4295 = vpop.permute.xlu0 %4294
        %4296 = vrot.lane.b32.xlu0 %v3351, 6
        %v4297 = vpop.permute.xlu0 %4296
        %4298 = vrot.lane.b32.xlu0 %v3352, 6
        %v4299 = vpop.permute.xlu0 %4298
        %4300 = vrot.lane.b32.xlu0 %v3353, 6
        %v4301 = vpop.permute.xlu0 %4300
        %4302 = vrot.lane.b32.xlu0 %v3354, 6
        %v4303 = vpop.permute.xlu0 %4302
        %4304 = vrot.lane.b32.xlu0 %v3355, 6
        %v4305 = vpop.permute.xlu0 %4304
        %4306 = vrot.lane.b32.xlu0 %v3356, 6
        %v4307 = vpop.permute.xlu0 %4306
        %4308 = vrot.lane.b32.xlu0 %v3357, 6
        %v4309 = vpop.permute.xlu0 %4308
        %4310 = vrot.lane.b32.xlu0 %v3358, 6
        %v4311 = vpop.permute.xlu0 %4310
        %4312 = vrot.lane.b32.xlu0 %v3359, 6
        %v4313 = vpop.permute.xlu0 %4312
        %4314 = vrot.lane.b32.xlu0 %v3360, 6
        %v4315 = vpop.permute.xlu0 %4314
        %4316 = vrot.lane.b32.xlu0 %v3361, 6
        %v4317 = vpop.permute.xlu0 %4316
        %4318 = vrot.lane.b32.xlu0 %v3362, 6
        %v4319 = vpop.permute.xlu0 %4318
        %4320 = vrot.lane.b32.xlu0 %v3363, 6
        %v4321 = vpop.permute.xlu0 %4320
        %4322 = vrot.lane.b32.xlu0 %v3364, 6
        %v4323 = vpop.permute.xlu0 %4322
        %4324 = vrot.lane.b32.xlu0 %v3365, 6
        %v4325 = vpop.permute.xlu0 %4324
        %4326 = vrot.lane.b32.xlu0 %v3366, 6
        %v4327 = vpop.permute.xlu0 %4326
        %4328 = vrot.lane.b32.xlu0 %v3367, 6
        %v4329 = vpop.permute.xlu0 %4328
        %4330 = vrot.lane.b32.xlu0 %v3368, 6
        %v4331 = vpop.permute.xlu0 %4330
        %4332 = vrot.lane.b32.xlu0 %v3369, 6
        %v4333 = vpop.permute.xlu0 %4332
        %4334 = vrot.lane.b32.xlu0 %v3370, 6
        %v4335 = vpop.permute.xlu0 %4334
        %4336 = vrot.lane.b32.xlu0 %v3371, 6
        %v4337 = vpop.permute.xlu0 %4336
        %4338 = vrot.lane.b32.xlu0 %v3372, 6
        %v4339 = vpop.permute.xlu0 %4338
        %4340 = vrot.lane.b32.xlu0 %v3373, 6
        %v4341 = vpop.permute.xlu0 %4340
        %4342 = vrot.lane.b32.xlu0 %v3374, 6
        %v4343 = vpop.permute.xlu0 %4342
        %4344 = vrot.lane.b32.xlu0 %v3375, 6
        %v4345 = vpop.permute.xlu0 %4344
        %4346 = vrot.lane.b32.xlu0 %v3376, 6
        %v4347 = vpop.permute.xlu0 %4346
        %4348 = vrot.lane.b32.xlu0 %v3377, 6
        %v4349 = vpop.permute.xlu0 %4348
        %4350 = vrot.lane.b32.xlu0 %v3378, 6
        %v4351 = vpop.permute.xlu0 %4350
        %4352 = vrot.lane.b32.xlu0 %v3379, 6
        %v4353 = vpop.permute.xlu0 %4352
        %4354 = vrot.lane.b32.xlu0 %v3380, 6
        %v4355 = vpop.permute.xlu0 %4354
        %4356 = vrot.lane.b32.xlu0 %v3381, 6
        %v4357 = vpop.permute.xlu0 %4356
        %4358 = vrot.lane.b32.xlu0 %v3382, 6
        %v4359 = vpop.permute.xlu0 %4358
        %4360 = vrot.lane.b32.xlu0 %v3383, 6
        %v4361 = vpop.permute.xlu0 %4360
        %4362 = vrot.lane.b32.xlu0 %v3384, 6
        %v4363 = vpop.permute.xlu0 %4362
        %4364 = vrot.lane.b32.xlu0 %v3385, 6
        %v4365 = vpop.permute.xlu0 %4364
        %4366 = vrot.lane.b32.xlu0 %v3386, 6
        %v4367 = vpop.permute.xlu0 %4366
        %4368 = vrot.lane.b32.xlu0 %v3387, 6
        %v4369 = vpop.permute.xlu0 %4368
        %4370 = vrot.lane.b32.xlu0 %v3388, 6
        %v4371 = vpop.permute.xlu0 %4370
        %4372 = vrot.lane.b32.xlu0 %v3389, 6
        %v4373 = vpop.permute.xlu0 %4372
        %4374 = vrot.lane.b32.xlu0 %v3390, 6
        %v4375 = vpop.permute.xlu0 %4374
        %4376 = vrot.lane.b32.xlu0 %v3391, 6
        %v4377 = vpop.permute.xlu0 %4376
        %4378 = vrot.lane.b32.xlu0 %v3392, 6
        %v4379 = vpop.permute.xlu0 %4378
        %4380 = vrot.lane.b32.xlu0 %v3393, 6
        %v4381 = vpop.permute.xlu0 %4380
        %4382 = vrot.lane.b32.xlu0 %v3394, 6
        %v4383 = vpop.permute.xlu0 %4382
        %4384 = vrot.lane.b32.xlu0 %v3395, 6
        %v4385 = vpop.permute.xlu0 %4384
        %4386 = vrot.lane.b32.xlu0 %v3396, 6
        %v4387 = vpop.permute.xlu0 %4386
        %4388 = vrot.lane.b32.xlu0 %v3397, 6
        %v4389 = vpop.permute.xlu0 %4388
        %4390 = vrot.lane.b32.xlu0 %v3398, 6
        %v4391 = vpop.permute.xlu0 %4390
        %4392 = vrot.lane.b32.xlu0 %v3399, 6
        %v4393 = vpop.permute.xlu0 %4392
        %4394 = vrot.lane.b32.xlu0 %v3400, 6
        %v4395 = vpop.permute.xlu0 %4394
        %4396 = vrot.lane.b32.xlu0 %v3401, 6
        %v4397 = vpop.permute.xlu0 %4396
        %4398 = vrot.lane.b32.xlu0 %v3402, 6
        %v4399 = vpop.permute.xlu0 %4398
        %4400 = vrot.lane.b32.xlu0 %v3403, 6
        %v4401 = vpop.permute.xlu0 %4400
        %4402 = vrot.lane.b32.xlu0 %v3404, 6
        %v4403 = vpop.permute.xlu0 %4402
        %4404 = vrot.lane.b32.xlu0 %v3405, 6
        %v4405 = vpop.permute.xlu0 %4404
        %4406 = vrot.lane.b32.xlu0 %v3406, 6
        %v4407 = vpop.permute.xlu0 %4406
        %4408 = vrot.lane.b32.xlu0 %v3407, 6
        %v4409 = vpop.permute.xlu0 %4408
        %4410 = vrot.lane.b32.xlu0 %v3408, 6
        %v4411 = vpop.permute.xlu0 %4410
        %4412 = vrot.lane.b32.xlu0 %v3409, 6
        %v4413 = vpop.permute.xlu0 %4412
        %4414 = vrot.lane.b32.xlu0 %v3410, 6
        %v4415 = vpop.permute.xlu0 %4414
        %4416 = vrot.lane.b32.xlu0 %v3411, 6
        %v4417 = vpop.permute.xlu0 %4416
        %4418 = vrot.lane.b32.xlu0 %v3412, 6
        %v4419 = vpop.permute.xlu0 %4418
        %4420 = vrot.lane.b32.xlu0 %v3413, 6
        %v4421 = vpop.permute.xlu0 %4420
        %vm4566 = vcmask 23552
        %v4567 = vsel %vm4566, %v2621, %v3559
        %v4568 = vsel %vm4566, %v2622, %v3561
        %v4569 = vsel %vm4566, %v2623, %v3563
        %v4570 = vsel %vm4566, %v2624, %v3565
        %v4571 = vsel %vm4566, %v2625, %v3567
        %v4572 = vsel %vm4566, %v2626, %v3569
        %v4573 = vsel %vm4566, %v2627, %v3571
        %v4574 = vsel %vm4566, %v2628, %v3573
        %v4575 = vsel %vm4566, %v2629, %v3575
        %v4576 = vsel %vm4566, %v2630, %v3577
        %v4577 = vsel %vm4566, %v2631, %v3579
        %v4578 = vsel %vm4566, %v2632, %v3581
        %v4579 = vsel %vm4566, %v2633, %v3583
        %v4580 = vsel %vm4566, %v2634, %v3585
        %v4581 = vsel %vm4566, %v2635, %v3587
        %v4582 = vsel %vm4566, %v2636, %v3589
        %v4583 = vsel %vm4566, %v2637, %v3591
        %v4584 = vsel %vm4566, %v2638, %v3593
        %v4585 = vsel %vm4566, %v2639, %v3595
        %v4586 = vsel %vm4566, %v2640, %v3597
        %v4587 = vsel %vm4566, %v2641, %v3599
        %v4588 = vsel %vm4566, %v2642, %v3601
        %v4589 = vsel %vm4566, %v2643, %v3603
        %v4590 = vsel %vm4566, %v2644, %v3605
        %v4591 = vsel %vm4566, %v2645, %v3607
        %v4592 = vsel %vm4566, %v2646, %v3609
        %v4593 = vsel %vm4566, %v2647, %v3611
        %v4594 = vsel %vm4566, %v2648, %v3613
        %v4595 = vsel %vm4566, %v2649, %v3615
        %v4596 = vsel %vm4566, %v2650, %v3617
        %v4597 = vsel %vm4566, %v2651, %v3619
        %v4598 = vsel %vm4566, %v2652, %v3621
        %v4599 = vsel %vm4566, %v2653, %v3623
        %v4600 = vsel %vm4566, %v2654, %v3625
        %v4601 = vsel %vm4566, %v2655, %v3627
        %v4602 = vsel %vm4566, %v2656, %v3629
        %v4603 = vsel %vm4566, %v2657, %v3631
        %v4604 = vsel %vm4566, %v2658, %v3633
        %v4605 = vsel %vm4566, %v2659, %v3635
        %v4606 = vsel %vm4566, %v2660, %v3637
        %v4607 = vsel %vm4566, %v2661, %v3639
        %v4608 = vsel %vm4566, %v2662, %v3641
        %v4609 = vsel %vm4566, %v2663, %v3643
        %v4610 = vsel %vm4566, %v2664, %v3645
        %v4611 = vsel %vm4566, %v2665, %v3647
        %v4612 = vsel %vm4566, %v2666, %v3649
        %v4613 = vsel %vm4566, %v2667, %v3651
        %v4614 = vsel %vm4566, %v2668, %v3653
        %v4615 = vsel %vm4566, %v2669, %v3655
        %v4616 = vsel %vm4566, %v2670, %v3657
        %v4617 = vsel %vm4566, %v2671, %v3659
        %v4618 = vsel %vm4566, %v2672, %v3661
        %v4619 = vsel %vm4566, %v2673, %v3663
        %v4620 = vsel %vm4566, %v2674, %v3665
        %v4621 = vsel %vm4566, %v2675, %v3667
        %v4622 = vsel %vm4566, %v2676, %v3669
        %v4623 = vsel %vm4566, %v2677, %v3671
        %v4624 = vsel %vm4566, %v2678, %v3673
        %v4625 = vsel %vm4566, %v2679, %v3675
        %v4626 = vsel %vm4566, %v2680, %v3677
        %v4627 = vsel %vm4566, %v2681, %v3679
        %v4628 = vsel %vm4566, %v2682, %v3681
        %v4629 = vsel %vm4566, %v2683, %v3683
        %v4630 = vsel %vm4566, %v2684, %v3685
        %v4631 = vsel %vm4566, %v2685, %v3687
        %v4632 = vsel %vm4566, %v2686, %v3689
        %v4633 = vsel %vm4566, %v2687, %v3691
        %v4634 = vsel %vm4566, %v2688, %v3693
        %v4635 = vsel %vm4566, %v2689, %v3695
        %v4636 = vsel %vm4566, %v2690, %v3697
        %v4637 = vsel %vm4566, %v2691, %v3699
        %v4638 = vsel %vm4566, %v2692, %v3701
        %v4639 = vsel %vm4566, %v2693, %v3703
        %v4640 = vsel %vm4566, %v2694, %v3705
        %v4641 = vsel %vm4566, %v2695, %v3707
        %v4642 = vsel %vm4566, %v2696, %v3709
        %v4643 = vsel %vm4566, %v2697, %v3711
        %v4644 = vsel %vm4566, %v2698, %v3713
        %v4645 = vsel %vm4566, %v2699, %v3715
        %v4646 = vsel %vm4566, %v2700, %v3717
        %v4647 = vsel %vm4566, %v2701, %v3719
        %v4648 = vsel %vm4566, %v2702, %v3721
        %v4649 = vsel %vm4566, %v2703, %v3723
        %v4650 = vsel %vm4566, %v2704, %v3725
        %v4651 = vsel %vm4566, %v2705, %v3727
        %v4652 = vsel %vm4566, %v2706, %v3729
        %v4653 = vsel %vm4566, %v2707, %v3731
        %v4654 = vsel %vm4566, %v2708, %v3733
        %v4655 = vsel %vm4566, %v2709, %v3735
        %v4656 = vsel %vm4566, %v2710, %v3737
        %v4657 = vsel %vm4566, %v2711, %v3739
        %v4658 = vsel %vm4566, %v2712, %v3741
        %v4659 = vsel %vm4566, %v2713, %v3743
        %v4660 = vsel %vm4566, %v2714, %v3745
        %v4661 = vsel %vm4566, %v2715, %v3747
        %v4662 = vsel %vm4566, %v2716, %v3749
        %v4663 = vsel %vm4566, %v2717, %v3751
        %v4664 = vsel %vm4566, %v2718, %v3753
        %v4665 = vsel %vm4566, %v2719, %v3755
        %v4666 = vsel %vm4566, %v2720, %v3757
        %v4667 = vsel %vm4566, %v2721, %v3759
        %v4668 = vsel %vm4566, %v2722, %v3761
        %v4669 = vsel %vm4566, %v2723, %v3763
        %v4670 = vsel %vm4566, %v2724, %v3765
        %v4671 = vsel %vm4566, %v2725, %v3767
        %v4672 = vsel %vm4566, %v2726, %v3769
        %v4673 = vsel %vm4566, %v2727, %v3771
        %v4674 = vsel %vm4566, %v2728, %v3773
        %v4675 = vsel %vm4566, %v2729, %v3775
        %v4676 = vsel %vm4566, %v2730, %v3777
        %v4677 = vsel %vm4566, %v2731, %v3779
        %v4678 = vsel %vm4566, %v2732, %v3781
        %v4679 = vsel %vm4566, %v2733, %v3783
        %v4680 = vsel %vm4566, %v2734, %v3785
        %v4681 = vsel %vm4566, %v2735, %v3787
        %v4682 = vsel %vm4566, %v2736, %v3789
        %v4683 = vsel %vm4566, %v2737, %v3791
        %v4684 = vsel %vm4566, %v2738, %v3793
        %v4685 = vsel %vm4566, %v2739, %v3795
        %v4686 = vsel %vm4566, %v2740, %v3797
        %v4687 = vsel %vm4566, %v2741, %v3799
        %v4688 = vsel %vm4566, %v2742, %v3801
        %v4689 = vsel %vm4566, %v2743, %v3803
        %v4690 = vsel %vm4566, %v2744, %v3805
        %v4691 = vsel %vm4566, %v2745, %v3807
        %v4692 = vsel %vm4566, %v2746, %v3809
        %v4693 = vsel %vm4566, %v2747, %v3811
        %v4694 = vsel %vm4566, %v2748, %v3813
        %v4695 = vsel %vm4566, %v2749, %v3815
        %v4696 = vsel %vm4566, %v2750, %v3817
        %v4697 = vsel %vm4566, %v2751, %v3819
        %v4698 = vsel %vm4566, %v2752, %v3821
        %v4699 = vsel %vm4566, %v2753, %v3823
        %v4700 = vsel %vm4566, %v2754, %v3825
        %v4701 = vsel %vm4566, %v2755, %v3827
        %v4702 = vsel %vm4566, %v2756, %v3829
        %v4703 = vsel %vm4566, %v2757, %v3831
        %v4704 = vsel %vm4566, %v2758, %v3833
        %v4705 = vsel %vm4566, %v2759, %v3835
        %v4706 = vsel %vm4566, %v2760, %v3837
        %v4707 = vsel %vm4566, %v2761, %v3839
        %v4708 = vsel %vm4566, %v2762, %v3841
        %v4709 = vsel %vm4566, %v2763, %v3843
        %v4710 = vsel %vm4566, %v2764, %v3845
        %vm4711 = vcmask 48128
        %v4712 = vsel %vm4711, %v4567, %v4135
        %v4713 = vsel %vm4711, %v4568, %v4137
        %v4714 = vsel %vm4711, %v4569, %v4139
        %v4715 = vsel %vm4711, %v4570, %v4141
        %v4716 = vsel %vm4711, %v4571, %v4143
        %v4717 = vsel %vm4711, %v4572, %v4145
        %v4718 = vsel %vm4711, %v4573, %v4147
        %v4719 = vsel %vm4711, %v4574, %v4149
        %v4720 = vsel %vm4711, %v4575, %v4151
        %v4721 = vsel %vm4711, %v4576, %v4153
        %v4722 = vsel %vm4711, %v4577, %v4155
        %v4723 = vsel %vm4711, %v4578, %v4157
        %v4724 = vsel %vm4711, %v4579, %v4159
        %v4725 = vsel %vm4711, %v4580, %v4161
        %v4726 = vsel %vm4711, %v4581, %v4163
        %v4727 = vsel %vm4711, %v4582, %v4165
        %v4728 = vsel %vm4711, %v4583, %v4167
        %v4729 = vsel %vm4711, %v4584, %v4169
        %v4730 = vsel %vm4711, %v4585, %v4171
        %v4731 = vsel %vm4711, %v4586, %v4173
        %v4732 = vsel %vm4711, %v4587, %v4175
        %v4733 = vsel %vm4711, %v4588, %v4177
        %v4734 = vsel %vm4711, %v4589, %v4179
        %v4735 = vsel %vm4711, %v4590, %v4181
        %v4736 = vsel %vm4711, %v4591, %v4183
        %v4737 = vsel %vm4711, %v4592, %v4185
        %v4738 = vsel %vm4711, %v4593, %v4187
        %v4739 = vsel %vm4711, %v4594, %v4189
        %v4740 = vsel %vm4711, %v4595, %v4191
        %v4741 = vsel %vm4711, %v4596, %v4193
        %v4742 = vsel %vm4711, %v4597, %v4195
        %v4743 = vsel %vm4711, %v4598, %v4197
        %v4744 = vsel %vm4711, %v4599, %v4199
        %v4745 = vsel %vm4711, %v4600, %v4201
        %v4746 = vsel %vm4711, %v4601, %v4203
        %v4747 = vsel %vm4711, %v4602, %v4205
        %v4748 = vsel %vm4711, %v4603, %v4207
        %v4749 = vsel %vm4711, %v4604, %v4209
        %v4750 = vsel %vm4711, %v4605, %v4211
        %v4751 = vsel %vm4711, %v4606, %v4213
        %v4752 = vsel %vm4711, %v4607, %v4215
        %v4753 = vsel %vm4711, %v4608, %v4217
        %v4754 = vsel %vm4711, %v4609, %v4219
        %v4755 = vsel %vm4711, %v4610, %v4221
        %v4756 = vsel %vm4711, %v4611, %v4223
        %v4757 = vsel %vm4711, %v4612, %v4225
        %v4758 = vsel %vm4711, %v4613, %v4227
        %v4759 = vsel %vm4711, %v4614, %v4229
        %v4760 = vsel %vm4711, %v4615, %v4231
        %v4761 = vsel %vm4711, %v4616, %v4233
        %v4762 = vsel %vm4711, %v4617, %v4235
        %v4763 = vsel %vm4711, %v4618, %v4237
        %v4764 = vsel %vm4711, %v4619, %v4239
        %v4765 = vsel %vm4711, %v4620, %v4241
        %v4766 = vsel %vm4711, %v4621, %v4243
        %v4767 = vsel %vm4711, %v4622, %v4245
        %v4768 = vsel %vm4711, %v4623, %v4247
        %v4769 = vsel %vm4711, %v4624, %v4249
        %v4770 = vsel %vm4711, %v4625, %v4251
        %v4771 = vsel %vm4711, %v4626, %v4253
        %v4772 = vsel %vm4711, %v4627, %v4255
        %v4773 = vsel %vm4711, %v4628, %v4257
        %v4774 = vsel %vm4711, %v4629, %v4259
        %v4775 = vsel %vm4711, %v4630, %v4261
        %v4776 = vsel %vm4711, %v4631, %v4263
        %v4777 = vsel %vm4711, %v4632, %v4265
        %v4778 = vsel %vm4711, %v4633, %v4267
        %v4779 = vsel %vm4711, %v4634, %v4269
        %v4780 = vsel %vm4711, %v4635, %v4271
        %v4781 = vsel %vm4711, %v4636, %v4273
        %v4782 = vsel %vm4711, %v4637, %v4275
        %v4783 = vsel %vm4711, %v4638, %v4277
        %v4784 = vsel %vm4711, %v4639, %v4279
        %v4785 = vsel %vm4711, %v4640, %v4281
        %v4786 = vsel %vm4711, %v4641, %v4283
        %v4787 = vsel %vm4711, %v4642, %v4285
        %v4788 = vsel %vm4711, %v4643, %v4287
        %v4789 = vsel %vm4711, %v4644, %v4289
        %v4790 = vsel %vm4711, %v4645, %v4291
        %v4791 = vsel %vm4711, %v4646, %v4293
        %v4792 = vsel %vm4711, %v4647, %v4295
        %v4793 = vsel %vm4711, %v4648, %v4297
        %v4794 = vsel %vm4711, %v4649, %v4299
        %v4795 = vsel %vm4711, %v4650, %v4301
        %v4796 = vsel %vm4711, %v4651, %v4303
        %v4797 = vsel %vm4711, %v4652, %v4305
        %v4798 = vsel %vm4711, %v4653, %v4307
        %v4799 = vsel %vm4711, %v4654, %v4309
        %v4800 = vsel %vm4711, %v4655, %v4311
        %v4801 = vsel %vm4711, %v4656, %v4313
        %v4802 = vsel %vm4711, %v4657, %v4315
        %v4803 = vsel %vm4711, %v4658, %v4317
        %v4804 = vsel %vm4711, %v4659, %v4319
        %v4805 = vsel %vm4711, %v4660, %v4321
        %v4806 = vsel %vm4711, %v4661, %v4323
        %v4807 = vsel %vm4711, %v4662, %v4325
        %v4808 = vsel %vm4711, %v4663, %v4327
        %v4809 = vsel %vm4711, %v4664, %v4329
        %v4810 = vsel %vm4711, %v4665, %v4331
        %v4811 = vsel %vm4711, %v4666, %v4333
        %v4812 = vsel %vm4711, %v4667, %v4335
        %v4813 = vsel %vm4711, %v4668, %v4337
        %v4814 = vsel %vm4711, %v4669, %v4339
        %v4815 = vsel %vm4711, %v4670, %v4341
        %v4816 = vsel %vm4711, %v4671, %v4343
        %v4817 = vsel %vm4711, %v4672, %v4345
        %v4818 = vsel %vm4711, %v4673, %v4347
        %v4819 = vsel %vm4711, %v4674, %v4349
        %v4820 = vsel %vm4711, %v4675, %v4351
        %v4821 = vsel %vm4711, %v4676, %v4353
        %v4822 = vsel %vm4711, %v4677, %v4355
        %v4823 = vsel %vm4711, %v4678, %v4357
        %v4824 = vsel %vm4711, %v4679, %v4359
        %v4825 = vsel %vm4711, %v4680, %v4361
        %v4826 = vsel %vm4711, %v4681, %v4363
        %v4827 = vsel %vm4711, %v4682, %v4365
        %v4828 = vsel %vm4711, %v4683, %v4367
        %v4829 = vsel %vm4711, %v4684, %v4369
        %v4830 = vsel %vm4711, %v4685, %v4371
        %v4831 = vsel %vm4711, %v4686, %v4373
        %v4832 = vsel %vm4711, %v4687, %v4375
        %v4833 = vsel %vm4711, %v4688, %v4377
        %v4834 = vsel %vm4711, %v4689, %v4379
        %v4835 = vsel %vm4711, %v4690, %v4381
        %v4836 = vsel %vm4711, %v4691, %v4383
        %v4837 = vsel %vm4711, %v4692, %v4385
        %v4838 = vsel %vm4711, %v4693, %v4387
        %v4839 = vsel %vm4711, %v4694, %v4389
        %v4840 = vsel %vm4711, %v4695, %v4391
        %v4841 = vsel %vm4711, %v4696, %v4393
        %v4842 = vsel %vm4711, %v4697, %v4395
        %v4843 = vsel %vm4711, %v4698, %v4397
        %v4844 = vsel %vm4711, %v4699, %v4399
        %v4845 = vsel %vm4711, %v4700, %v4401
        %v4846 = vsel %vm4711, %v4701, %v4403
        %v4847 = vsel %vm4711, %v4702, %v4405
        %v4848 = vsel %vm4711, %v4703, %v4407
        %v4849 = vsel %vm4711, %v4704, %v4409
        %v4850 = vsel %vm4711, %v4705, %v4411
        %v4851 = vsel %vm4711, %v4706, %v4413
        %v4852 = vsel %vm4711, %v4707, %v4415
        %v4853 = vsel %vm4711, %v4708, %v4417
        %v4854 = vsel %vm4711, %v4709, %v4419
        %v4855 = vsel %vm4711, %v4710, %v4421
        %v4856 = vpack.c.bf16 %v4713, %v4712
        %v4857 = vpack.c.bf16 %v4715, %v4714
        %v4858 = vpack.c.bf16 %v4717, %v4716
        %v4859 = vpack.c.bf16 %v4719, %v4718
        %v4860 = vpack.c.bf16 %v4721, %v4720
        %v4861 = vpack.c.bf16 %v4723, %v4722
        %v4862 = vpack.c.bf16 %v4725, %v4724
        %v4863 = vpack.c.bf16 %v4727, %v4726
        %v4864 = vpack.c.bf16 %v4729, %v4728
        %v4865 = vpack.c.bf16 %v4731, %v4730
        %v4866 = vpack.c.bf16 %v4733, %v4732
        %v4867 = vpack.c.bf16 %v4735, %v4734
        %v4868 = vpack.c.bf16 %v4737, %v4736
        %v4869 = vpack.c.bf16 %v4739, %v4738
        %v4870 = vpack.c.bf16 %v4741, %v4740
        %v4871 = vpack.c.bf16 %v4743, %v4742
        %v4872 = vpack.c.bf16 %v4745, %v4744
        %v4873 = vpack.c.bf16 %v4747, %v4746
        %v4874 = vpack.c.bf16 %v4749, %v4748
        %v4875 = vpack.c.bf16 %v4751, %v4750
        %v4876 = vpack.c.bf16 %v4753, %v4752
        %v4877 = vpack.c.bf16 %v4755, %v4754
        %v4878 = vpack.c.bf16 %v4757, %v4756
        %v4879 = vpack.c.bf16 %v4759, %v4758
        %v4880 = vpack.c.bf16 %v4761, %v4760
        %v4881 = vpack.c.bf16 %v4763, %v4762
        %v4882 = vpack.c.bf16 %v4765, %v4764
        %v4883 = vpack.c.bf16 %v4767, %v4766
        %v4884 = vpack.c.bf16 %v4769, %v4768
        %v4885 = vpack.c.bf16 %v4771, %v4770
        %v4886 = vpack.c.bf16 %v4773, %v4772
        %v4887 = vpack.c.bf16 %v4775, %v4774
        %v4888 = vpack.c.bf16 %v4785, %v4784
        %v4889 = vpack.c.bf16 %v4787, %v4786
        %v4890 = vpack.c.bf16 %v4789, %v4788
        %v4891 = vpack.c.bf16 %v4791, %v4790
        %v4892 = vpack.c.bf16 %v4793, %v4792
        %v4893 = vpack.c.bf16 %v4795, %v4794
        %v4894 = vpack.c.bf16 %v4797, %v4796
        %v4895 = vpack.c.bf16 %v4799, %v4798
        %v4896 = vpack.c.bf16 %v4801, %v4800
        %v4897 = vpack.c.bf16 %v4803, %v4802
        %v4898 = vpack.c.bf16 %v4805, %v4804
        %v4899 = vpack.c.bf16 %v4807, %v4806
        %v4900 = vpack.c.bf16 %v4809, %v4808
        %v4901 = vpack.c.bf16 %v4811, %v4810
        %v4902 = vpack.c.bf16 %v4813, %v4812
        %v4903 = vpack.c.bf16 %v4815, %v4814
        %v4904 = vpack.c.bf16 %v4817, %v4816
        %v4905 = vpack.c.bf16 %v4819, %v4818
        %v4906 = vpack.c.bf16 %v4821, %v4820
        %v4907 = vpack.c.bf16 %v4823, %v4822
        %v4908 = vpack.c.bf16 %v4825, %v4824
        %v4909 = vpack.c.bf16 %v4827, %v4826
        %v4910 = vpack.c.bf16 %v4829, %v4828
        %v4911 = vpack.c.bf16 %v4831, %v4830
        %v4912 = vpack.c.bf16 %v4833, %v4832
        %v4913 = vpack.c.bf16 %v4835, %v4834
        %v4914 = vpack.c.bf16 %v4837, %v4836
        %v4915 = vpack.c.bf16 %v4839, %v4838
        %v4916 = vpack.c.bf16 %v4841, %v4840
        %v4917 = vpack.c.bf16 %v4843, %v4842
        %v4918 = vpack.c.bf16 %v4845, %v4844
        %v4919 = vpack.c.bf16 %v4847, %v4846
        %v4920 = vld [vmem:[%s996] sm:$0xf]
        %v4921 = vld [vmem:[%s996 + $0x4] sm:$0x1]
        %v4922 = vpack.c.bf16 %v4777, %v4776
        %v4923 = vpack.c.bf16 %v4779, %v4778
        %v4924 = vpack.c.bf16 %v4849, %v4848
        %v4925 = vpack.c.bf16 %v4851, %v4850
        %s4926 = scalar_lea.vmem %s996, 8
        %v4927 = vld [vmem:[%s4926] sm:$0xf]
        %v4928 = vld [vmem:[%s4926 + $0x4] sm:$0x1]
        %v4931 = vunpack.c.l.b16 %v4927
        %v4932 = vunpack.c.l.b16 %v4928
        %v4933 = vpack.c.b16 %v4932, %v4931
        %vm4934 = vcmask 72704
        %v4936 = vsel %vm4934, %v4858, 0
        %v4939 = vsel %vm4934, %v4859, 0
        %v4942 = vsel %vm4934, %v4860, 0
        %v4945 = vsel %vm4934, %v4861, 0
        %v4948 = vsel %vm4934, %v4862, 0
        %v4951 = vsel %vm4934, %v4863, 0
        %v4954 = vsel %vm4934, %v4864, 0
        %v4957 = vsel %vm4934, %v4865, 0
        %v4960 = vsel %vm4934, %v4866, 0
        %v4963 = vsel %vm4934, %v4867, 0
        %v4966 = vsel %vm4934, %v4868, 0
        %v4969 = vsel %vm4934, %v4869, 0
        %v4972 = vsel %vm4934, %v4870, 0
        %v4975 = vsel %vm4934, %v4871, 0
        %v4978 = vsel %vm4934, %v4872, 0
        %v4981 = vsel %vm4934, %v4873, 0
        %v4984 = vsel %vm4934, %v4874, 0
        %v4987 = vsel %vm4934, %v4875, 0
        %v4990 = vsel %vm4934, %v4876, 0
        %v4993 = vsel %vm4934, %v4877, 0
        %v4996 = vsel %vm4934, %v4878, 0
        %v4999 = vsel %vm4934, %v4879, 0
        %v5002 = vsel %vm4934, %v4880, 0
        %v5005 = vsel %vm4934, %v4881, 0
        %v5008 = vsel %vm4934, %v4882, 0
        %v5011 = vsel %vm4934, %v4883, 0
        %v5014 = vsel %vm4934, %v4884, 0
        %v5017 = vsel %vm4934, %v4885, 0
        %v5020 = vsel %vm4934, %v4886, 0
        %v5023 = vsel %vm4934, %v4887, 0
        %v5026 = vsel %vm4934, %v4922, 0
        %v5029 = vsel %vm4934, %v4923, 0
        %v5032 = vsel %vm4934, %v4890, 0
        %v5035 = vsel %vm4934, %v4891, 0
        %v5038 = vsel %vm4934, %v4892, 0
        %v5041 = vsel %vm4934, %v4893, 0
        %v5044 = vsel %vm4934, %v4894, 0
        %v5047 = vsel %vm4934, %v4895, 0
        %v5050 = vsel %vm4934, %v4896, 0
        %v5053 = vsel %vm4934, %v4897, 0
        %v5056 = vsel %vm4934, %v4898, 0
        %v5059 = vsel %vm4934, %v4899, 0
        %v5062 = vsel %vm4934, %v4900, 0
        %v5065 = vsel %vm4934, %v4901, 0
        %v5068 = vsel %vm4934, %v4902, 0
        %v5071 = vsel %vm4934, %v4903, 0
        %v5074 = vsel %vm4934, %v4904, 0
        %v5077 = vsel %vm4934, %v4905, 0
        %v5080 = vsel %vm4934, %v4906, 0
        %v5083 = vsel %vm4934, %v4907, 0
        %v5086 = vsel %vm4934, %v4908, 0
        %v5089 = vsel %vm4934, %v4909, 0
        %v5092 = vsel %vm4934, %v4910, 0
        %v5095 = vsel %vm4934, %v4911, 0
        %v5098 = vsel %vm4934, %v4912, 0
        %v5101 = vsel %vm4934, %v4913, 0
        %v5104 = vsel %vm4934, %v4914, 0
        %v5107 = vsel %vm4934, %v4915, 0
        %v5110 = vsel %vm4934, %v4916, 0
        %v5113 = vsel %vm4934, %v4917, 0
        %v5116 = vsel %vm4934, %v4918, 0
        %v5119 = vsel %vm4934, %v4919, 0
        %v5122 = vsel %vm4934, %v4924, 0
        %v5125 = vsel %vm4934, %v4925, 0
        %vm5127 = vcmask 1043456
        %vm5128 = vcmask 1044480
        %v5129 = vsel %vm5127, 4294967295, 65535
        %v5130 = vsel %vm5128, %v5129, 0
        %v5132 = vand.u32 %v4933, %v5130
        %5134 = vmatprep.subr.bf16.mxu0 0
        %5135 = vmatpush1.bf16.msra.mxu0 0
        %5136 = vmatprep.subr.bf16.mxu0 0
        %5137 = vmatpush1.bf16.msra.mxu0 0
        %5138 = vmatprep.subr.bf16.mxu0 0
        %5139 = vmatpush1.bf16.msra.mxu0 0
        %5140 = vmatprep.subr.bf16.mxu0 0
        %5141 = vmatpush1.bf16.msra.mxu0 0
        %5142 = vmatprep.subr.bf16.mxu0 0
        %5143 = vmatpush1.bf16.msra.mxu0 0
        %5144 = vmatprep.subr.bf16.mxu0 0
        %5145 = vmatpush1.bf16.msra.mxu0 0
        %5146 = vmatprep.subr.bf16.mxu0 0
        %5147 = vmatpush1.bf16.msra.mxu0 0
        %5148 = vmatprep.subr.bf16.mxu0 0
        %5149 = vmatpush1.bf16.msra.mxu0 %v5132
        %5150 = vmatprep.subr.bf16.mxu0 0
        %5151 = vmatpush2.bf16.msra.mxu0 0
        %5152 = vmatprep.subr.bf16.mxu0 0
        %5153 = vmatpush2.bf16.msra.mxu0 0
        %5154 = vmatprep.subr.bf16.mxu0 0
        %5155 = vmatpush2.bf16.msra.mxu0 0
        %5156 = vmatprep.subr.bf16.mxu0 0
        %5157 = vmatpush2.bf16.msra.mxu0 0
        %5158 = vmatprep.subr.bf16.mxu0 0
        %5159 = vmatpush2.bf16.msra.mxu0 0
        %5160 = vmatprep.subr.bf16.mxu0 0
        %5161 = vmatpush2.bf16.msra.mxu0 0
        %5162 = vmatprep.subr.bf16.mxu0 0
        %5163 = vmatpush2.bf16.msra.mxu0 0
        %5164 = vmatprep.subr.bf16.mxu0 0
        %5165 = vmatpush2.bf16.msra.mxu0 0
        %5166 = vmatprep.mubr.bf16.mxu0 0
        %5167 = vmatmul.mubr.bf16.gmra.mxu0 %v4936
        %v5168 = vpop.f32.mrf.mxu0
        %v5169 = vadd.f32 0.0, %v5168
        %v5170 = vpop.f32.mrf.mxu0
        %v5171 = vpop.f32.mrf.mxu0
        %v5172 = vadd.f32 0.0, %v5171
        %v5173 = vpop.f32.mrf.mxu0
        %5174 = vmatprep.mubr.bf16.mxu0 0
        %5175 = vmatmul.mubr.bf16.gmra.mxu0 %v4939
        %v5176 = vpop.f32.mrf.mxu0
        %v5177 = vadd.f32 0.0, %v5176
        %v5178 = vpop.f32.mrf.mxu0
        %v5179 = vpop.f32.mrf.mxu0
        %v5180 = vadd.f32 0.0, %v5179
        %v5181 = vpop.f32.mrf.mxu0
        %5182 = vmatprep.mubr.bf16.mxu0 0
        %5183 = vmatmul.mubr.bf16.gmra.mxu0 %v4942
        %v5184 = vpop.f32.mrf.mxu0
        %v5185 = vadd.f32 0.0, %v5184
        %v5186 = vpop.f32.mrf.mxu0
        %v5187 = vpop.f32.mrf.mxu0
        %v5188 = vadd.f32 0.0, %v5187
        %v5189 = vpop.f32.mrf.mxu0
        %5190 = vmatprep.mubr.bf16.mxu0 0
        %5191 = vmatmul.mubr.bf16.gmra.mxu0 %v4945
        %v5192 = vpop.f32.mrf.mxu0
        %v5193 = vadd.f32 0.0, %v5192
        %v5194 = vpop.f32.mrf.mxu0
        %v5195 = vpop.f32.mrf.mxu0
        %v5196 = vadd.f32 0.0, %v5195
        %v5197 = vpop.f32.mrf.mxu0
        %5198 = vmatprep.mubr.bf16.mxu0 0
        %5199 = vmatmul.mubr.bf16.gmra.mxu0 %v4948
        %v5200 = vpop.f32.mrf.mxu0
        %v5201 = vadd.f32 0.0, %v5200
        %v5202 = vpop.f32.mrf.mxu0
        %v5203 = vpop.f32.mrf.mxu0
        %v5204 = vadd.f32 0.0, %v5203
        %v5205 = vpop.f32.mrf.mxu0
        %5206 = vmatprep.mubr.bf16.mxu0 0
        %5207 = vmatmul.mubr.bf16.gmra.mxu0 %v4951
        %v5208 = vpop.f32.mrf.mxu0
        %v5209 = vadd.f32 0.0, %v5208
        %v5210 = vpop.f32.mrf.mxu0
        %v5211 = vpop.f32.mrf.mxu0
        %v5212 = vadd.f32 0.0, %v5211
        %v5213 = vpop.f32.mrf.mxu0
        %5214 = vmatprep.mubr.bf16.mxu0 0
        %5215 = vmatmul.mubr.bf16.gmra.mxu0 %v4954
        %v5216 = vpop.f32.mrf.mxu0
        %v5217 = vadd.f32 0.0, %v5216
        %v5218 = vpop.f32.mrf.mxu0
        %v5219 = vpop.f32.mrf.mxu0
        %v5220 = vadd.f32 0.0, %v5219
        %v5221 = vpop.f32.mrf.mxu0
        %5222 = vmatprep.mubr.bf16.mxu0 0
        %5223 = vmatmul.mubr.bf16.gmra.mxu0 %v4957
        %v5224 = vpop.f32.mrf.mxu0
        %v5225 = vadd.f32 0.0, %v5224
        %v5226 = vpop.f32.mrf.mxu0
        %v5227 = vpop.f32.mrf.mxu0
        %v5228 = vadd.f32 0.0, %v5227
        %v5229 = vpop.f32.mrf.mxu0
        %5230 = vmatprep.mubr.bf16.mxu0 0
        %5231 = vmatmul.mubr.bf16.gmra.mxu0 %v4960
        %v5232 = vpop.f32.mrf.mxu0
        %v5233 = vadd.f32 0.0, %v5232
        %v5234 = vpop.f32.mrf.mxu0
        %v5235 = vpop.f32.mrf.mxu0
        %v5236 = vadd.f32 0.0, %v5235
        %v5237 = vpop.f32.mrf.mxu0
        %5238 = vmatprep.mubr.bf16.mxu0 0
        %5239 = vmatmul.mubr.bf16.gmra.mxu0 %v4963
        %v5240 = vpop.f32.mrf.mxu0
        %v5241 = vadd.f32 0.0, %v5240
        %v5242 = vpop.f32.mrf.mxu0
        %v5243 = vpop.f32.mrf.mxu0
        %v5244 = vadd.f32 0.0, %v5243
        %v5245 = vpop.f32.mrf.mxu0
        %5246 = vmatprep.mubr.bf16.mxu0 0
        %5247 = vmatmul.mubr.bf16.gmra.mxu0 %v4966
        %v5248 = vpop.f32.mrf.mxu0
        %v5249 = vadd.f32 0.0, %v5248
        %v5250 = vpop.f32.mrf.mxu0
        %v5251 = vpop.f32.mrf.mxu0
        %v5252 = vadd.f32 0.0, %v5251
        %v5253 = vpop.f32.mrf.mxu0
        %5254 = vmatprep.mubr.bf16.mxu0 0
        %5255 = vmatmul.mubr.bf16.gmra.mxu0 %v4969
        %v5256 = vpop.f32.mrf.mxu0
        %v5257 = vadd.f32 0.0, %v5256
        %v5258 = vpop.f32.mrf.mxu0
        %v5259 = vpop.f32.mrf.mxu0
        %v5260 = vadd.f32 0.0, %v5259
        %v5261 = vpop.f32.mrf.mxu0
        %5262 = vmatprep.mubr.bf16.mxu0 0
        %5263 = vmatmul.mubr.bf16.gmra.mxu0 %v4972
        %v5264 = vpop.f32.mrf.mxu0
        %v5265 = vadd.f32 0.0, %v5264
        %v5266 = vpop.f32.mrf.mxu0
        %v5267 = vpop.f32.mrf.mxu0
        %v5268 = vadd.f32 0.0, %v5267
        %v5269 = vpop.f32.mrf.mxu0
        %5270 = vmatprep.mubr.bf16.mxu0 0
        %5271 = vmatmul.mubr.bf16.gmra.mxu0 %v4975
        %v5272 = vpop.f32.mrf.mxu0
        %v5273 = vadd.f32 0.0, %v5272
        %v5274 = vpop.f32.mrf.mxu0
        %v5275 = vpop.f32.mrf.mxu0
        %v5276 = vadd.f32 0.0, %v5275
        %v5277 = vpop.f32.mrf.mxu0
        %5278 = vmatprep.mubr.bf16.mxu0 0
        %5279 = vmatmul.mubr.bf16.gmra.mxu0 %v4978
        %v5280 = vpop.f32.mrf.mxu0
        %v5281 = vadd.f32 0.0, %v5280
        %v5282 = vpop.f32.mrf.mxu0
        %v5283 = vpop.f32.mrf.mxu0
        %v5284 = vadd.f32 0.0, %v5283
        %v5285 = vpop.f32.mrf.mxu0
        %5286 = vmatprep.mubr.bf16.mxu0 0
        %5287 = vmatmul.mubr.bf16.gmra.mxu0 %v4981
        %v5288 = vpop.f32.mrf.mxu0
        %v5289 = vadd.f32 0.0, %v5288
        %v5290 = vpop.f32.mrf.mxu0
        %v5291 = vpop.f32.mrf.mxu0
        %v5292 = vadd.f32 0.0, %v5291
        %v5293 = vpop.f32.mrf.mxu0
        %5294 = vmatprep.mubr.bf16.mxu0 0
        %5295 = vmatmul.mubr.bf16.gmra.mxu0 %v4984
        %v5296 = vpop.f32.mrf.mxu0
        %v5297 = vadd.f32 0.0, %v5296
        %v5298 = vpop.f32.mrf.mxu0
        %v5299 = vpop.f32.mrf.mxu0
        %v5300 = vadd.f32 0.0, %v5299
        %v5301 = vpop.f32.mrf.mxu0
        %5302 = vmatprep.mubr.bf16.mxu0 0
        %5303 = vmatmul.mubr.bf16.gmra.mxu0 %v4987
        %v5304 = vpop.f32.mrf.mxu0
        %v5305 = vadd.f32 0.0, %v5304
        %v5306 = vpop.f32.mrf.mxu0
        %v5307 = vpop.f32.mrf.mxu0
        %v5308 = vadd.f32 0.0, %v5307
        %v5309 = vpop.f32.mrf.mxu0
        %5310 = vmatprep.mubr.bf16.mxu0 0
        %5311 = vmatmul.mubr.bf16.gmra.mxu0 %v4990
        %v5312 = vpop.f32.mrf.mxu0
        %v5313 = vadd.f32 0.0, %v5312
        %v5314 = vpop.f32.mrf.mxu0
        %v5315 = vpop.f32.mrf.mxu0
        %v5316 = vadd.f32 0.0, %v5315
        %v5317 = vpop.f32.mrf.mxu0
        %5318 = vmatprep.mubr.bf16.mxu0 0
        %5319 = vmatmul.mubr.bf16.gmra.mxu0 %v4993
        %v5320 = vpop.f32.mrf.mxu0
        %v5321 = vadd.f32 0.0, %v5320
        %v5322 = vpop.f32.mrf.mxu0
        %v5323 = vpop.f32.mrf.mxu0
        %v5324 = vadd.f32 0.0, %v5323
        %v5325 = vpop.f32.mrf.mxu0
        %5326 = vmatprep.mubr.bf16.mxu0 0
        %5327 = vmatmul.mubr.bf16.gmra.mxu0 %v4996
        %v5328 = vpop.f32.mrf.mxu0
        %v5329 = vadd.f32 0.0, %v5328
        %v5330 = vpop.f32.mrf.mxu0
        %v5331 = vpop.f32.mrf.mxu0
        %v5332 = vadd.f32 0.0, %v5331
        %v5333 = vpop.f32.mrf.mxu0
        %5334 = vmatprep.mubr.bf16.mxu0 0
        %5335 = vmatmul.mubr.bf16.gmra.mxu0 %v4999
        %v5336 = vpop.f32.mrf.mxu0
        %v5337 = vadd.f32 0.0, %v5336
        %v5338 = vpop.f32.mrf.mxu0
        %v5339 = vpop.f32.mrf.mxu0
        %v5340 = vadd.f32 0.0, %v5339
        %v5341 = vpop.f32.mrf.mxu0
        %5342 = vmatprep.mubr.bf16.mxu0 0
        %5343 = vmatmul.mubr.bf16.gmra.mxu0 %v5002
        %v5344 = vpop.f32.mrf.mxu0
        %v5345 = vadd.f32 0.0, %v5344
        %v5346 = vpop.f32.mrf.mxu0
        %v5347 = vpop.f32.mrf.mxu0
        %v5348 = vadd.f32 0.0, %v5347
        %v5349 = vpop.f32.mrf.mxu0
        %5350 = vmatprep.mubr.bf16.mxu0 0
        %5351 = vmatmul.mubr.bf16.gmra.mxu0 %v5005
        %v5352 = vpop.f32.mrf.mxu0
        %v5353 = vadd.f32 0.0, %v5352
        %v5354 = vpop.f32.mrf.mxu0
        %v5355 = vpop.f32.mrf.mxu0
        %v5356 = vadd.f32 0.0, %v5355
        %v5357 = vpop.f32.mrf.mxu0
        %5358 = vmatprep.mubr.bf16.mxu0 0
        %5359 = vmatmul.mubr.bf16.gmra.mxu0 %v5008
        %v5360 = vpop.f32.mrf.mxu0
        %v5361 = vadd.f32 0.0, %v5360
        %v5362 = vpop.f32.mrf.mxu0
        %v5363 = vpop.f32.mrf.mxu0
        %v5364 = vadd.f32 0.0, %v5363
        %v5365 = vpop.f32.mrf.mxu0
        %5366 = vmatprep.mubr.bf16.mxu0 0
        %5367 = vmatmul.mubr.bf16.gmra.mxu0 %v5011
        %v5368 = vpop.f32.mrf.mxu0
        %v5369 = vadd.f32 0.0, %v5368
        %v5370 = vpop.f32.mrf.mxu0
        %v5371 = vpop.f32.mrf.mxu0
        %v5372 = vadd.f32 0.0, %v5371
        %v5373 = vpop.f32.mrf.mxu0
        %5374 = vmatprep.mubr.bf16.mxu0 0
        %5375 = vmatmul.mubr.bf16.gmra.mxu0 %v5014
        %v5376 = vpop.f32.mrf.mxu0
        %v5377 = vadd.f32 0.0, %v5376
        %v5378 = vpop.f32.mrf.mxu0
        %v5379 = vpop.f32.mrf.mxu0
        %v5380 = vadd.f32 0.0, %v5379
        %v5381 = vpop.f32.mrf.mxu0
        %5382 = vmatprep.mubr.bf16.mxu0 0
        %5383 = vmatmul.mubr.bf16.gmra.mxu0 %v5017
        %v5384 = vpop.f32.mrf.mxu0
        %v5385 = vadd.f32 0.0, %v5384
        %v5386 = vpop.f32.mrf.mxu0
        %v5387 = vpop.f32.mrf.mxu0
        %v5388 = vadd.f32 0.0, %v5387
        %v5389 = vpop.f32.mrf.mxu0
        %5390 = vmatprep.mubr.bf16.mxu0 0
        %5391 = vmatmul.mubr.bf16.gmra.mxu0 %v5020
        %v5392 = vpop.f32.mrf.mxu0
        %v5393 = vadd.f32 0.0, %v5392
        %v5394 = vpop.f32.mrf.mxu0
        %v5395 = vpop.f32.mrf.mxu0
        %v5396 = vadd.f32 0.0, %v5395
        %v5397 = vpop.f32.mrf.mxu0
        %5398 = vmatprep.mubr.bf16.mxu0 0
        %5399 = vmatmul.mubr.bf16.gmra.mxu0 %v5023
        %v5400 = vpop.f32.mrf.mxu0
        %v5401 = vadd.f32 0.0, %v5400
        %v5402 = vpop.f32.mrf.mxu0
        %v5403 = vpop.f32.mrf.mxu0
        %v5404 = vadd.f32 0.0, %v5403
        %v5405 = vpop.f32.mrf.mxu0
        %5406 = vmatprep.mubr.bf16.mxu0 0
        %5407 = vmatmul.mubr.bf16.gmra.mxu0 %v5026
        %v5408 = vpop.f32.mrf.mxu0
        %v5409 = vadd.f32 0.0, %v5408
        %v5410 = vpop.f32.mrf.mxu0
        %v5411 = vpop.f32.mrf.mxu0
        %v5412 = vadd.f32 0.0, %v5411
        %v5413 = vpop.f32.mrf.mxu0
        %5414 = vmatprep.mubr.bf16.mxu0 0
        %5415 = vmatmul.mubr.bf16.gmra.mxu0 %v5029
        %v5416 = vpop.f32.mrf.mxu0
        %v5417 = vadd.f32 0.0, %v5416
        %v5418 = vpop.f32.mrf.mxu0
        %v5419 = vpop.f32.mrf.mxu0
        %v5420 = vadd.f32 0.0, %v5419
        %v5421 = vpop.f32.mrf.mxu0
        %5422 = vmatprep.mubr.bf16.mxu0 0
        %5423 = vmatmul.mubr.bf16.gmra.mxu0 %v5032
        %v5424 = vpop.f32.mrf.mxu0
        %v5425 = vadd.f32 0.0, %v5424
        %v5426 = vpop.f32.mrf.mxu0
        %v5427 = vpop.f32.mrf.mxu0
        %v5428 = vadd.f32 0.0, %v5427
        %v5429 = vpop.f32.mrf.mxu0
        %5430 = vmatprep.mubr.bf16.mxu0 0
        %5431 = vmatmul.mubr.bf16.gmra.mxu0 %v5035
        %v5432 = vpop.f32.mrf.mxu0
        %v5433 = vadd.f32 0.0, %v5432
        %v5434 = vpop.f32.mrf.mxu0
        %v5435 = vpop.f32.mrf.mxu0
        %v5436 = vadd.f32 0.0, %v5435
        %v5437 = vpop.f32.mrf.mxu0
        %5438 = vmatprep.mubr.bf16.mxu0 0
        %5439 = vmatmul.mubr.bf16.gmra.mxu0 %v5038
        %v5440 = vpop.f32.mrf.mxu0
        %v5441 = vadd.f32 0.0, %v5440
        %v5442 = vpop.f32.mrf.mxu0
        %v5443 = vpop.f32.mrf.mxu0
        %v5444 = vadd.f32 0.0, %v5443
        %v5445 = vpop.f32.mrf.mxu0
        %5446 = vmatprep.mubr.bf16.mxu0 0
        %5447 = vmatmul.mubr.bf16.gmra.mxu0 %v5041
        %v5448 = vpop.f32.mrf.mxu0
        %v5449 = vadd.f32 0.0, %v5448
        %v5450 = vpop.f32.mrf.mxu0
        %v5451 = vpop.f32.mrf.mxu0
        %v5452 = vadd.f32 0.0, %v5451
        %v5453 = vpop.f32.mrf.mxu0
        %5454 = vmatprep.mubr.bf16.mxu0 0
        %5455 = vmatmul.mubr.bf16.gmra.mxu0 %v5044
        %v5456 = vpop.f32.mrf.mxu0
        %v5457 = vadd.f32 0.0, %v5456
        %v5458 = vpop.f32.mrf.mxu0
        %v5459 = vpop.f32.mrf.mxu0
        %v5460 = vadd.f32 0.0, %v5459
        %v5461 = vpop.f32.mrf.mxu0
        %5462 = vmatprep.mubr.bf16.mxu0 0
        %5463 = vmatmul.mubr.bf16.gmra.mxu0 %v5047
        %v5464 = vpop.f32.mrf.mxu0
        %v5465 = vadd.f32 0.0, %v5464
        %v5466 = vpop.f32.mrf.mxu0
        %v5467 = vpop.f32.mrf.mxu0
        %v5468 = vadd.f32 0.0, %v5467
        %v5469 = vpop.f32.mrf.mxu0
        %5470 = vmatprep.mubr.bf16.mxu0 0
        %5471 = vmatmul.mubr.bf16.gmra.mxu0 %v5050
        %v5472 = vpop.f32.mrf.mxu0
        %v5473 = vadd.f32 0.0, %v5472
        %v5474 = vpop.f32.mrf.mxu0
        %v5475 = vpop.f32.mrf.mxu0
        %v5476 = vadd.f32 0.0, %v5475
        %v5477 = vpop.f32.mrf.mxu0
        %5478 = vmatprep.mubr.bf16.mxu0 0
        %5479 = vmatmul.mubr.bf16.gmra.mxu0 %v5053
        %v5480 = vpop.f32.mrf.mxu0
        %v5481 = vadd.f32 0.0, %v5480
        %v5482 = vpop.f32.mrf.mxu0
        %v5483 = vpop.f32.mrf.mxu0
        %v5484 = vadd.f32 0.0, %v5483
        %v5485 = vpop.f32.mrf.mxu0
        %5486 = vmatprep.mubr.bf16.mxu0 0
        %5487 = vmatmul.mubr.bf16.gmra.mxu0 %v5056
        %v5488 = vpop.f32.mrf.mxu0
        %v5489 = vadd.f32 0.0, %v5488
        %v5490 = vpop.f32.mrf.mxu0
        %v5491 = vpop.f32.mrf.mxu0
        %v5492 = vadd.f32 0.0, %v5491
        %v5493 = vpop.f32.mrf.mxu0
        %5494 = vmatprep.mubr.bf16.mxu0 0
        %5495 = vmatmul.mubr.bf16.gmra.mxu0 %v5059
        %v5496 = vpop.f32.mrf.mxu0
        %v5497 = vadd.f32 0.0, %v5496
        %v5498 = vpop.f32.mrf.mxu0
        %v5499 = vpop.f32.mrf.mxu0
        %v5500 = vadd.f32 0.0, %v5499
        %v5501 = vpop.f32.mrf.mxu0
        %5502 = vmatprep.mubr.bf16.mxu0 0
        %5503 = vmatmul.mubr.bf16.gmra.mxu0 %v5062
        %v5504 = vpop.f32.mrf.mxu0
        %v5505 = vadd.f32 0.0, %v5504
        %v5506 = vpop.f32.mrf.mxu0
        %v5507 = vpop.f32.mrf.mxu0
        %v5508 = vadd.f32 0.0, %v5507
        %v5509 = vpop.f32.mrf.mxu0
        %5510 = vmatprep.mubr.bf16.mxu0 0
        %5511 = vmatmul.mubr.bf16.gmra.mxu0 %v5065
        %v5512 = vpop.f32.mrf.mxu0
        %v5513 = vadd.f32 0.0, %v5512
        %v5514 = vpop.f32.mrf.mxu0
        %v5515 = vpop.f32.mrf.mxu0
        %v5516 = vadd.f32 0.0, %v5515
        %v5517 = vpop.f32.mrf.mxu0
        %5518 = vmatprep.mubr.bf16.mxu0 0
        %5519 = vmatmul.mubr.bf16.gmra.mxu0 %v5068
        %v5520 = vpop.f32.mrf.mxu0
        %v5521 = vadd.f32 0.0, %v5520
        %v5522 = vpop.f32.mrf.mxu0
        %v5523 = vpop.f32.mrf.mxu0
        %v5524 = vadd.f32 0.0, %v5523
        %v5525 = vpop.f32.mrf.mxu0
        %5526 = vmatprep.mubr.bf16.mxu0 0
        %5527 = vmatmul.mubr.bf16.gmra.mxu0 %v5071
        %v5528 = vpop.f32.mrf.mxu0
        %v5529 = vadd.f32 0.0, %v5528
        %v5530 = vpop.f32.mrf.mxu0
        %v5531 = vpop.f32.mrf.mxu0
        %v5532 = vadd.f32 0.0, %v5531
        %v5533 = vpop.f32.mrf.mxu0
        %5534 = vmatprep.mubr.bf16.mxu0 0
        %5535 = vmatmul.mubr.bf16.gmra.mxu0 %v5074
        %v5536 = vpop.f32.mrf.mxu0
        %v5537 = vadd.f32 0.0, %v5536
        %v5538 = vpop.f32.mrf.mxu0
        %v5539 = vpop.f32.mrf.mxu0
        %v5540 = vadd.f32 0.0, %v5539
        %v5541 = vpop.f32.mrf.mxu0
        %5542 = vmatprep.mubr.bf16.mxu0 0
        %5543 = vmatmul.mubr.bf16.gmra.mxu0 %v5077
        %v5544 = vpop.f32.mrf.mxu0
        %v5545 = vadd.f32 0.0, %v5544
        %v5546 = vpop.f32.mrf.mxu0
        %v5547 = vpop.f32.mrf.mxu0
        %v5548 = vadd.f32 0.0, %v5547
        %v5549 = vpop.f32.mrf.mxu0
        %5550 = vmatprep.mubr.bf16.mxu0 0
        %5551 = vmatmul.mubr.bf16.gmra.mxu0 %v5080
        %v5552 = vpop.f32.mrf.mxu0
        %v5553 = vadd.f32 0.0, %v5552
        %v5554 = vpop.f32.mrf.mxu0
        %v5555 = vpop.f32.mrf.mxu0
        %v5556 = vadd.f32 0.0, %v5555
        %v5557 = vpop.f32.mrf.mxu0
        %5558 = vmatprep.mubr.bf16.mxu0 0
        %5559 = vmatmul.mubr.bf16.gmra.mxu0 %v5083
        %v5560 = vpop.f32.mrf.mxu0
        %v5561 = vadd.f32 0.0, %v5560
        %v5562 = vpop.f32.mrf.mxu0
        %v5563 = vpop.f32.mrf.mxu0
        %v5564 = vadd.f32 0.0, %v5563
        %v5565 = vpop.f32.mrf.mxu0
        %5566 = vmatprep.mubr.bf16.mxu0 0
        %5567 = vmatmul.mubr.bf16.gmra.mxu0 %v5086
        %v5568 = vpop.f32.mrf.mxu0
        %v5569 = vadd.f32 0.0, %v5568
        %v5570 = vpop.f32.mrf.mxu0
        %v5571 = vpop.f32.mrf.mxu0
        %v5572 = vadd.f32 0.0, %v5571
        %v5573 = vpop.f32.mrf.mxu0
        %5574 = vmatprep.mubr.bf16.mxu0 0
        %5575 = vmatmul.mubr.bf16.gmra.mxu0 %v5089
        %v5576 = vpop.f32.mrf.mxu0
        %v5577 = vadd.f32 0.0, %v5576
        %v5578 = vpop.f32.mrf.mxu0
        %v5579 = vpop.f32.mrf.mxu0
        %v5580 = vadd.f32 0.0, %v5579
        %v5581 = vpop.f32.mrf.mxu0
        %5582 = vmatprep.mubr.bf16.mxu0 0
        %5583 = vmatmul.mubr.bf16.gmra.mxu0 %v5092
        %v5584 = vpop.f32.mrf.mxu0
        %v5585 = vadd.f32 0.0, %v5584
        %v5586 = vpop.f32.mrf.mxu0
        %v5587 = vpop.f32.mrf.mxu0
        %v5588 = vadd.f32 0.0, %v5587
        %v5589 = vpop.f32.mrf.mxu0
        %5590 = vmatprep.mubr.bf16.mxu0 0
        %5591 = vmatmul.mubr.bf16.gmra.mxu0 %v5095
        %v5592 = vpop.f32.mrf.mxu0
        %v5593 = vadd.f32 0.0, %v5592
        %v5594 = vpop.f32.mrf.mxu0
        %v5595 = vpop.f32.mrf.mxu0
        %v5596 = vadd.f32 0.0, %v5595
        %v5597 = vpop.f32.mrf.mxu0
        %5598 = vmatprep.mubr.bf16.mxu0 0
        %5599 = vmatmul.mubr.bf16.gmra.mxu0 %v5098
        %v5600 = vpop.f32.mrf.mxu0
        %v5601 = vadd.f32 0.0, %v5600
        %v5602 = vpop.f32.mrf.mxu0
        %v5603 = vpop.f32.mrf.mxu0
        %v5604 = vadd.f32 0.0, %v5603
        %v5605 = vpop.f32.mrf.mxu0
        %5606 = vmatprep.mubr.bf16.mxu0 0
        %5607 = vmatmul.mubr.bf16.gmra.mxu0 %v5101
        %v5608 = vpop.f32.mrf.mxu0
        %v5609 = vadd.f32 0.0, %v5608
        %v5610 = vpop.f32.mrf.mxu0
        %v5611 = vpop.f32.mrf.mxu0
        %v5612 = vadd.f32 0.0, %v5611
        %v5613 = vpop.f32.mrf.mxu0
        %5614 = vmatprep.mubr.bf16.mxu0 0
        %5615 = vmatmul.mubr.bf16.gmra.mxu0 %v5104
        %v5616 = vpop.f32.mrf.mxu0
        %v5617 = vadd.f32 0.0, %v5616
        %v5618 = vpop.f32.mrf.mxu0
        %v5619 = vpop.f32.mrf.mxu0
        %v5620 = vadd.f32 0.0, %v5619
        %v5621 = vpop.f32.mrf.mxu0
        %5622 = vmatprep.mubr.bf16.mxu0 0
        %5623 = vmatmul.mubr.bf16.gmra.mxu0 %v5107
        %v5624 = vpop.f32.mrf.mxu0
        %v5625 = vadd.f32 0.0, %v5624
        %v5626 = vpop.f32.mrf.mxu0
        %v5627 = vpop.f32.mrf.mxu0
        %v5628 = vadd.f32 0.0, %v5627
        %v5629 = vpop.f32.mrf.mxu0
        %5630 = vmatprep.mubr.bf16.mxu0 0
        %5631 = vmatmul.mubr.bf16.gmra.mxu0 %v5110
        %v5632 = vpop.f32.mrf.mxu0
        %v5633 = vadd.f32 0.0, %v5632
        %v5634 = vpop.f32.mrf.mxu0
        %v5635 = vpop.f32.mrf.mxu0
        %v5636 = vadd.f32 0.0, %v5635
        %v5637 = vpop.f32.mrf.mxu0
        %5638 = vmatprep.mubr.bf16.mxu0 0
        %5639 = vmatmul.mubr.bf16.gmra.mxu0 %v5113
        %v5640 = vpop.f32.mrf.mxu0
        %v5641 = vadd.f32 0.0, %v5640
        %v5642 = vpop.f32.mrf.mxu0
        %v5643 = vpop.f32.mrf.mxu0
        %v5644 = vadd.f32 0.0, %v5643
        %v5645 = vpop.f32.mrf.mxu0
        %5646 = vmatprep.mubr.bf16.mxu0 0
        %5647 = vmatmul.mubr.bf16.gmra.mxu0 %v5116
        %v5648 = vpop.f32.mrf.mxu0
        %v5649 = vadd.f32 0.0, %v5648
        %v5650 = vpop.f32.mrf.mxu0
        %v5651 = vpop.f32.mrf.mxu0
        %v5652 = vadd.f32 0.0, %v5651
        %v5653 = vpop.f32.mrf.mxu0
        %5654 = vmatprep.mubr.bf16.mxu0 0
        %5655 = vmatmul.mubr.bf16.gmra.mxu0 %v5119
        %v5656 = vpop.f32.mrf.mxu0
        %v5657 = vadd.f32 0.0, %v5656
        %v5658 = vpop.f32.mrf.mxu0
        %v5659 = vpop.f32.mrf.mxu0
        %v5660 = vadd.f32 0.0, %v5659
        %v5661 = vpop.f32.mrf.mxu0
        %5662 = vmatprep.mubr.bf16.mxu0 0
        %5663 = vmatmul.mubr.bf16.gmra.mxu0 %v5122
        %v5664 = vpop.f32.mrf.mxu0
        %v5665 = vadd.f32 0.0, %v5664
        %v5666 = vpop.f32.mrf.mxu0
        %v5667 = vpop.f32.mrf.mxu0
        %v5668 = vadd.f32 0.0, %v5667
        %v5669 = vpop.f32.mrf.mxu0
        %5670 = vmatprep.mubr.bf16.mxu0 0
        %5671 = vmatmul.mubr.bf16.gmra.mxu0 %v5125
        %v5672 = vpop.f32.mrf.mxu0
        %v5673 = vadd.f32 0.0, %v5672
        %v5674 = vpop.f32.mrf.mxu0
        %v5675 = vpop.f32.mrf.mxu0
        %v5676 = vadd.f32 0.0, %v5675
        %v5677 = vpop.f32.mrf.mxu0
        %5678 = vdwg.mxu0
        %v5681 = vunpack.c.l.b16 %v4920
        %v5682 = vunpack.c.l.b16 %v4921
        %v5683 = vpack.c.b16 %v5682, %v5681
        %v5685 = vsel %vm4934, %v4856, 0
        %v5688 = vsel %vm4934, %v4857, 0
        %v5691 = vsel %vm4934, %v4888, 0
        %v5694 = vsel %vm4934, %v4889, 0
        %v5697 = vand.u32 %v5683, %v5130
        %5699 = vmatprep.subr.bf16.mxu0 0
        %5700 = vmatpush1.bf16.msra.mxu0 0
        %5701 = vmatprep.subr.bf16.mxu0 0
        %5702 = vmatpush1.bf16.msra.mxu0 0
        %5703 = vmatprep.subr.bf16.mxu0 0
        %5704 = vmatpush1.bf16.msra.mxu0 0
        %5705 = vmatprep.subr.bf16.mxu0 0
        %5706 = vmatpush1.bf16.msra.mxu0 0
        %5707 = vmatprep.subr.bf16.mxu0 0
        %5708 = vmatpush1.bf16.msra.mxu0 0
        %5709 = vmatprep.subr.bf16.mxu0 0
        %5710 = vmatpush1.bf16.msra.mxu0 0
        %5711 = vmatprep.subr.bf16.mxu0 0
        %5712 = vmatpush1.bf16.msra.mxu0 0
        %5713 = vmatprep.subr.bf16.mxu0 0
        %5714 = vmatpush1.bf16.msra.mxu0 %v5697
        %5715 = vmatprep.subr.bf16.mxu0 0
        %5716 = vmatpush2.bf16.msra.mxu0 0
        %5717 = vmatprep.subr.bf16.mxu0 0
        %5718 = vmatpush2.bf16.msra.mxu0 0
        %5719 = vmatprep.subr.bf16.mxu0 0
        %5720 = vmatpush2.bf16.msra.mxu0 0
        %5721 = vmatprep.subr.bf16.mxu0 0
        %5722 = vmatpush2.bf16.msra.mxu0 0
        %5723 = vmatprep.subr.bf16.mxu0 0
        %5724 = vmatpush2.bf16.msra.mxu0 0
        %5725 = vmatprep.subr.bf16.mxu0 0
        %5726 = vmatpush2.bf16.msra.mxu0 0
        %5727 = vmatprep.subr.bf16.mxu0 0
        %5728 = vmatpush2.bf16.msra.mxu0 0
        %5729 = vmatprep.subr.bf16.mxu0 0
        %5730 = vmatpush2.bf16.msra.mxu0 0
        %5731 = vmatprep.mubr.bf16.mxu0 0
        %5732 = vmatmul.mubr.bf16.gmra.mxu0 %v5685
        %v5733 = vpop.f32.mrf.mxu0
        %v5734 = vadd.f32 %v5169, %v5733
        %v5735 = vpop.f32.mrf.mxu0
        %v5736 = vpop.f32.mrf.mxu0
        %v5737 = vadd.f32 %v5172, %v5736
        %v5738 = vpop.f32.mrf.mxu0
        %5739 = vmatprep.mubr.bf16.mxu0 0
        %5740 = vmatmul.mubr.bf16.gmra.mxu0 %v5688
        %v5741 = vpop.f32.mrf.mxu0
        %v5742 = vadd.f32 %v5177, %v5741
        %v5743 = vpop.f32.mrf.mxu0
        %v5744 = vpop.f32.mrf.mxu0
        %v5745 = vadd.f32 %v5180, %v5744
        %v5746 = vpop.f32.mrf.mxu0
        %5747 = vmatprep.mubr.bf16.mxu0 0
        %5748 = vmatmul.mubr.bf16.gmra.mxu0 %v4936
        %v5749 = vpop.f32.mrf.mxu0
        %v5750 = vadd.f32 %v5185, %v5749
        %v5751 = vpop.f32.mrf.mxu0
        %v5752 = vpop.f32.mrf.mxu0
        %v5753 = vadd.f32 %v5188, %v5752
        %v5754 = vpop.f32.mrf.mxu0
        %5755 = vmatprep.mubr.bf16.mxu0 0
        %5756 = vmatmul.mubr.bf16.gmra.mxu0 %v4939
        %v5757 = vpop.f32.mrf.mxu0
        %v5758 = vadd.f32 %v5193, %v5757
        %v5759 = vpop.f32.mrf.mxu0
        %v5760 = vpop.f32.mrf.mxu0
        %v5761 = vadd.f32 %v5196, %v5760
        %v5762 = vpop.f32.mrf.mxu0
        %5763 = vmatprep.mubr.bf16.mxu0 0
        %5764 = vmatmul.mubr.bf16.gmra.mxu0 %v4942
        %v5765 = vpop.f32.mrf.mxu0
        %v5766 = vadd.f32 %v5201, %v5765
        %v5767 = vpop.f32.mrf.mxu0
        %v5768 = vpop.f32.mrf.mxu0
        %v5769 = vadd.f32 %v5204, %v5768
        %v5770 = vpop.f32.mrf.mxu0
        %5771 = vmatprep.mubr.bf16.mxu0 0
        %5772 = vmatmul.mubr.bf16.gmra.mxu0 %v4945
        %v5773 = vpop.f32.mrf.mxu0
        %v5774 = vadd.f32 %v5209, %v5773
        %v5775 = vpop.f32.mrf.mxu0
        %v5776 = vpop.f32.mrf.mxu0
        %v5777 = vadd.f32 %v5212, %v5776
        %v5778 = vpop.f32.mrf.mxu0
        %5779 = vmatprep.mubr.bf16.mxu0 0
        %5780 = vmatmul.mubr.bf16.gmra.mxu0 %v4948
        %v5781 = vpop.f32.mrf.mxu0
        %v5782 = vadd.f32 %v5217, %v5781
        %v5783 = vpop.f32.mrf.mxu0
        %v5784 = vpop.f32.mrf.mxu0
        %v5785 = vadd.f32 %v5220, %v5784
        %v5786 = vpop.f32.mrf.mxu0
        %5787 = vmatprep.mubr.bf16.mxu0 0
        %5788 = vmatmul.mubr.bf16.gmra.mxu0 %v4951
        %v5789 = vpop.f32.mrf.mxu0
        %v5790 = vadd.f32 %v5225, %v5789
        %v5791 = vpop.f32.mrf.mxu0
        %v5792 = vpop.f32.mrf.mxu0
        %v5793 = vadd.f32 %v5228, %v5792
        %v5794 = vpop.f32.mrf.mxu0
        %5795 = vmatprep.mubr.bf16.mxu0 0
        %5796 = vmatmul.mubr.bf16.gmra.mxu0 %v4954
        %v5797 = vpop.f32.mrf.mxu0
        %v5798 = vadd.f32 %v5233, %v5797
        %v5799 = vpop.f32.mrf.mxu0
        %v5800 = vpop.f32.mrf.mxu0
        %v5801 = vadd.f32 %v5236, %v5800
        %v5802 = vpop.f32.mrf.mxu0
        %5803 = vmatprep.mubr.bf16.mxu0 0
        %5804 = vmatmul.mubr.bf16.gmra.mxu0 %v4957
        %v5805 = vpop.f32.mrf.mxu0
        %v5806 = vadd.f32 %v5241, %v5805
        %v5807 = vpop.f32.mrf.mxu0
        %v5808 = vpop.f32.mrf.mxu0
        %v5809 = vadd.f32 %v5244, %v5808
        %v5810 = vpop.f32.mrf.mxu0
        %5811 = vmatprep.mubr.bf16.mxu0 0
        %5812 = vmatmul.mubr.bf16.gmra.mxu0 %v4960
        %v5813 = vpop.f32.mrf.mxu0
        %v5814 = vadd.f32 %v5249, %v5813
        %v5815 = vpop.f32.mrf.mxu0
        %v5816 = vpop.f32.mrf.mxu0
        %v5817 = vadd.f32 %v5252, %v5816
        %v5818 = vpop.f32.mrf.mxu0
        %5819 = vmatprep.mubr.bf16.mxu0 0
        %5820 = vmatmul.mubr.bf16.gmra.mxu0 %v4963
        %v5821 = vpop.f32.mrf.mxu0
        %v5822 = vadd.f32 %v5257, %v5821
        %v5823 = vpop.f32.mrf.mxu0
        %v5824 = vpop.f32.mrf.mxu0
        %v5825 = vadd.f32 %v5260, %v5824
        %v5826 = vpop.f32.mrf.mxu0
        %5827 = vmatprep.mubr.bf16.mxu0 0
        %5828 = vmatmul.mubr.bf16.gmra.mxu0 %v4966
        %v5829 = vpop.f32.mrf.mxu0
        %v5830 = vadd.f32 %v5265, %v5829
        %v5831 = vpop.f32.mrf.mxu0
        %v5832 = vpop.f32.mrf.mxu0
        %v5833 = vadd.f32 %v5268, %v5832
        %v5834 = vpop.f32.mrf.mxu0
        %5835 = vmatprep.mubr.bf16.mxu0 0
        %5836 = vmatmul.mubr.bf16.gmra.mxu0 %v4969
        %v5837 = vpop.f32.mrf.mxu0
        %v5838 = vadd.f32 %v5273, %v5837
        %v5839 = vpop.f32.mrf.mxu0
        %v5840 = vpop.f32.mrf.mxu0
        %v5841 = vadd.f32 %v5276, %v5840
        %v5842 = vpop.f32.mrf.mxu0
        %5843 = vmatprep.mubr.bf16.mxu0 0
        %5844 = vmatmul.mubr.bf16.gmra.mxu0 %v4972
        %v5845 = vpop.f32.mrf.mxu0
        %v5846 = vadd.f32 %v5281, %v5845
        %v5847 = vpop.f32.mrf.mxu0
        %v5848 = vpop.f32.mrf.mxu0
        %v5849 = vadd.f32 %v5284, %v5848
        %v5850 = vpop.f32.mrf.mxu0
        %5851 = vmatprep.mubr.bf16.mxu0 0
        %5852 = vmatmul.mubr.bf16.gmra.mxu0 %v4975
        %v5853 = vpop.f32.mrf.mxu0
        %v5854 = vadd.f32 %v5289, %v5853
        %v5855 = vpop.f32.mrf.mxu0
        %v5856 = vpop.f32.mrf.mxu0
        %v5857 = vadd.f32 %v5292, %v5856
        %v5858 = vpop.f32.mrf.mxu0
        %5859 = vmatprep.mubr.bf16.mxu0 0
        %5860 = vmatmul.mubr.bf16.gmra.mxu0 %v4978
        %v5861 = vpop.f32.mrf.mxu0
        %v5862 = vadd.f32 %v5297, %v5861
        %v5863 = vpop.f32.mrf.mxu0
        %v5864 = vpop.f32.mrf.mxu0
        %v5865 = vadd.f32 %v5300, %v5864
        %v5866 = vpop.f32.mrf.mxu0
        %5867 = vmatprep.mubr.bf16.mxu0 0
        %5868 = vmatmul.mubr.bf16.gmra.mxu0 %v4981
        %v5869 = vpop.f32.mrf.mxu0
        %v5870 = vadd.f32 %v5305, %v5869
        %v5871 = vpop.f32.mrf.mxu0
        %v5872 = vpop.f32.mrf.mxu0
        %v5873 = vadd.f32 %v5308, %v5872
        %v5874 = vpop.f32.mrf.mxu0
        %5875 = vmatprep.mubr.bf16.mxu0 0
        %5876 = vmatmul.mubr.bf16.gmra.mxu0 %v4984
        %v5877 = vpop.f32.mrf.mxu0
        %v5878 = vadd.f32 %v5313, %v5877
        %v5879 = vpop.f32.mrf.mxu0
        %v5880 = vpop.f32.mrf.mxu0
        %v5881 = vadd.f32 %v5316, %v5880
        %v5882 = vpop.f32.mrf.mxu0
        %5883 = vmatprep.mubr.bf16.mxu0 0
        %5884 = vmatmul.mubr.bf16.gmra.mxu0 %v4987
        %v5885 = vpop.f32.mrf.mxu0
        %v5886 = vadd.f32 %v5321, %v5885
        %v5887 = vpop.f32.mrf.mxu0
        %v5888 = vpop.f32.mrf.mxu0
        %v5889 = vadd.f32 %v5324, %v5888
        %v5890 = vpop.f32.mrf.mxu0
        %5891 = vmatprep.mubr.bf16.mxu0 0
        %5892 = vmatmul.mubr.bf16.gmra.mxu0 %v4990
        %v5893 = vpop.f32.mrf.mxu0
        %v5894 = vadd.f32 %v5329, %v5893
        %v5895 = vpop.f32.mrf.mxu0
        %v5896 = vpop.f32.mrf.mxu0
        %v5897 = vadd.f32 %v5332, %v5896
        %v5898 = vpop.f32.mrf.mxu0
        %5899 = vmatprep.mubr.bf16.mxu0 0
        %5900 = vmatmul.mubr.bf16.gmra.mxu0 %v4993
        %v5901 = vpop.f32.mrf.mxu0
        %v5902 = vadd.f32 %v5337, %v5901
        %v5903 = vpop.f32.mrf.mxu0
        %v5904 = vpop.f32.mrf.mxu0
        %v5905 = vadd.f32 %v5340, %v5904
        %v5906 = vpop.f32.mrf.mxu0
        %5907 = vmatprep.mubr.bf16.mxu0 0
        %5908 = vmatmul.mubr.bf16.gmra.mxu0 %v4996
        %v5909 = vpop.f32.mrf.mxu0
        %v5910 = vadd.f32 %v5345, %v5909
        %v5911 = vpop.f32.mrf.mxu0
        %v5912 = vpop.f32.mrf.mxu0
        %v5913 = vadd.f32 %v5348, %v5912
        %v5914 = vpop.f32.mrf.mxu0
        %5915 = vmatprep.mubr.bf16.mxu0 0
        %5916 = vmatmul.mubr.bf16.gmra.mxu0 %v4999
        %v5917 = vpop.f32.mrf.mxu0
        %v5918 = vadd.f32 %v5353, %v5917
        %v5919 = vpop.f32.mrf.mxu0
        %v5920 = vpop.f32.mrf.mxu0
        %v5921 = vadd.f32 %v5356, %v5920
        %v5922 = vpop.f32.mrf.mxu0
        %5923 = vmatprep.mubr.bf16.mxu0 0
        %5924 = vmatmul.mubr.bf16.gmra.mxu0 %v5002
        %v5925 = vpop.f32.mrf.mxu0
        %v5926 = vadd.f32 %v5361, %v5925
        %v5927 = vpop.f32.mrf.mxu0
        %v5928 = vpop.f32.mrf.mxu0
        %v5929 = vadd.f32 %v5364, %v5928
        %v5930 = vpop.f32.mrf.mxu0
        %5931 = vmatprep.mubr.bf16.mxu0 0
        %5932 = vmatmul.mubr.bf16.gmra.mxu0 %v5005
        %v5933 = vpop.f32.mrf.mxu0
        %v5934 = vadd.f32 %v5369, %v5933
        %v5935 = vpop.f32.mrf.mxu0
        %v5936 = vpop.f32.mrf.mxu0
        %v5937 = vadd.f32 %v5372, %v5936
        %v5938 = vpop.f32.mrf.mxu0
        %5939 = vmatprep.mubr.bf16.mxu0 0
        %5940 = vmatmul.mubr.bf16.gmra.mxu0 %v5008
        %v5941 = vpop.f32.mrf.mxu0
        %v5942 = vadd.f32 %v5377, %v5941
        %v5943 = vpop.f32.mrf.mxu0
        %v5944 = vpop.f32.mrf.mxu0
        %v5945 = vadd.f32 %v5380, %v5944
        %v5946 = vpop.f32.mrf.mxu0
        %5947 = vmatprep.mubr.bf16.mxu0 0
        %5948 = vmatmul.mubr.bf16.gmra.mxu0 %v5011
        %v5949 = vpop.f32.mrf.mxu0
        %v5950 = vadd.f32 %v5385, %v5949
        %v5951 = vpop.f32.mrf.mxu0
        %v5952 = vpop.f32.mrf.mxu0
        %v5953 = vadd.f32 %v5388, %v5952
        %v5954 = vpop.f32.mrf.mxu0
        %5955 = vmatprep.mubr.bf16.mxu0 0
        %5956 = vmatmul.mubr.bf16.gmra.mxu0 %v5014
        %v5957 = vpop.f32.mrf.mxu0
        %v5958 = vadd.f32 %v5393, %v5957
        %v5959 = vpop.f32.mrf.mxu0
        %v5960 = vpop.f32.mrf.mxu0
        %v5961 = vadd.f32 %v5396, %v5960
        %v5962 = vpop.f32.mrf.mxu0
        %5963 = vmatprep.mubr.bf16.mxu0 0
        %5964 = vmatmul.mubr.bf16.gmra.mxu0 %v5017
        %v5965 = vpop.f32.mrf.mxu0
        %v5966 = vadd.f32 %v5401, %v5965
        %v5967 = vpop.f32.mrf.mxu0
        %v5968 = vpop.f32.mrf.mxu0
        %v5969 = vadd.f32 %v5404, %v5968
        %v5970 = vpop.f32.mrf.mxu0
        %5971 = vmatprep.mubr.bf16.mxu0 0
        %5972 = vmatmul.mubr.bf16.gmra.mxu0 %v5020
        %v5973 = vpop.f32.mrf.mxu0
        %v5974 = vadd.f32 %v5409, %v5973
        %v5975 = vpop.f32.mrf.mxu0
        %v5976 = vpop.f32.mrf.mxu0
        %v5977 = vadd.f32 %v5412, %v5976
        %v5978 = vpop.f32.mrf.mxu0
        %5979 = vmatprep.mubr.bf16.mxu0 0
        %5980 = vmatmul.mubr.bf16.gmra.mxu0 %v5023
        %v5981 = vpop.f32.mrf.mxu0
        %v5982 = vadd.f32 %v5417, %v5981
        %v5983 = vpop.f32.mrf.mxu0
        %v5984 = vpop.f32.mrf.mxu0
        %v5985 = vadd.f32 %v5420, %v5984
        %v5986 = vpop.f32.mrf.mxu0
        %5987 = vmatprep.mubr.bf16.mxu0 0
        %5988 = vmatmul.mubr.bf16.gmra.mxu0 %v5691
        %v5989 = vpop.f32.mrf.mxu0
        %v5990 = vadd.f32 %v5425, %v5989
        %v5991 = vpop.f32.mrf.mxu0
        %v5992 = vpop.f32.mrf.mxu0
        %v5993 = vadd.f32 %v5428, %v5992
        %v5994 = vpop.f32.mrf.mxu0
        %5995 = vmatprep.mubr.bf16.mxu0 0
        %5996 = vmatmul.mubr.bf16.gmra.mxu0 %v5694
        %v5997 = vpop.f32.mrf.mxu0
        %v5998 = vadd.f32 %v5433, %v5997
        %v5999 = vpop.f32.mrf.mxu0
        %v6000 = vpop.f32.mrf.mxu0
        %v6001 = vadd.f32 %v5436, %v6000
        %v6002 = vpop.f32.mrf.mxu0
        %6003 = vmatprep.mubr.bf16.mxu0 0
        %6004 = vmatmul.mubr.bf16.gmra.mxu0 %v5032
        %v6005 = vpop.f32.mrf.mxu0
        %v6006 = vadd.f32 %v5441, %v6005
        %v6007 = vpop.f32.mrf.mxu0
        %v6008 = vpop.f32.mrf.mxu0
        %v6009 = vadd.f32 %v5444, %v6008
        %v6010 = vpop.f32.mrf.mxu0
        %6011 = vmatprep.mubr.bf16.mxu0 0
        %6012 = vmatmul.mubr.bf16.gmra.mxu0 %v5035
        %v6013 = vpop.f32.mrf.mxu0
        %v6014 = vadd.f32 %v5449, %v6013
        %v6015 = vpop.f32.mrf.mxu0
        %v6016 = vpop.f32.mrf.mxu0
        %v6017 = vadd.f32 %v5452, %v6016
        %v6018 = vpop.f32.mrf.mxu0
        %6019 = vmatprep.mubr.bf16.mxu0 0
        %6020 = vmatmul.mubr.bf16.gmra.mxu0 %v5038
        %v6021 = vpop.f32.mrf.mxu0
        %v6022 = vadd.f32 %v5457, %v6021
        %v6023 = vpop.f32.mrf.mxu0
        %v6024 = vpop.f32.mrf.mxu0
        %v6025 = vadd.f32 %v5460, %v6024
        %v6026 = vpop.f32.mrf.mxu0
        %6027 = vmatprep.mubr.bf16.mxu0 0
        %6028 = vmatmul.mubr.bf16.gmra.mxu0 %v5041
        %v6029 = vpop.f32.mrf.mxu0
        %v6030 = vadd.f32 %v5465, %v6029
        %v6031 = vpop.f32.mrf.mxu0
        %v6032 = vpop.f32.mrf.mxu0
        %v6033 = vadd.f32 %v5468, %v6032
        %v6034 = vpop.f32.mrf.mxu0
        %6035 = vmatprep.mubr.bf16.mxu0 0
        %6036 = vmatmul.mubr.bf16.gmra.mxu0 %v5044
        %v6037 = vpop.f32.mrf.mxu0
        %v6038 = vadd.f32 %v5473, %v6037
        %v6039 = vpop.f32.mrf.mxu0
        %v6040 = vpop.f32.mrf.mxu0
        %v6041 = vadd.f32 %v5476, %v6040
        %v6042 = vpop.f32.mrf.mxu0
        %6043 = vmatprep.mubr.bf16.mxu0 0
        %6044 = vmatmul.mubr.bf16.gmra.mxu0 %v5047
        %v6045 = vpop.f32.mrf.mxu0
        %v6046 = vadd.f32 %v5481, %v6045
        %v6047 = vpop.f32.mrf.mxu0
        %v6048 = vpop.f32.mrf.mxu0
        %v6049 = vadd.f32 %v5484, %v6048
        %v6050 = vpop.f32.mrf.mxu0
        %6051 = vmatprep.mubr.bf16.mxu0 0
        %6052 = vmatmul.mubr.bf16.gmra.mxu0 %v5050
        %v6053 = vpop.f32.mrf.mxu0
        %v6054 = vadd.f32 %v5489, %v6053
        %v6055 = vpop.f32.mrf.mxu0
        %v6056 = vpop.f32.mrf.mxu0
        %v6057 = vadd.f32 %v5492, %v6056
        %v6058 = vpop.f32.mrf.mxu0
        %6059 = vmatprep.mubr.bf16.mxu0 0
        %6060 = vmatmul.mubr.bf16.gmra.mxu0 %v5053
        %v6061 = vpop.f32.mrf.mxu0
        %v6062 = vadd.f32 %v5497, %v6061
        %v6063 = vpop.f32.mrf.mxu0
        %v6064 = vpop.f32.mrf.mxu0
        %v6065 = vadd.f32 %v5500, %v6064
        %v6066 = vpop.f32.mrf.mxu0
        %6067 = vmatprep.mubr.bf16.mxu0 0
        %6068 = vmatmul.mubr.bf16.gmra.mxu0 %v5056
        %v6069 = vpop.f32.mrf.mxu0
        %v6070 = vadd.f32 %v5505, %v6069
        %v6071 = vpop.f32.mrf.mxu0
        %v6072 = vpop.f32.mrf.mxu0
        %v6073 = vadd.f32 %v5508, %v6072
        %v6074 = vpop.f32.mrf.mxu0
        %6075 = vmatprep.mubr.bf16.mxu0 0
        %6076 = vmatmul.mubr.bf16.gmra.mxu0 %v5059
        %v6077 = vpop.f32.mrf.mxu0
        %v6078 = vadd.f32 %v5513, %v6077
        %v6079 = vpop.f32.mrf.mxu0
        %v6080 = vpop.f32.mrf.mxu0
        %v6081 = vadd.f32 %v5516, %v6080
        %v6082 = vpop.f32.mrf.mxu0
        %6083 = vmatprep.mubr.bf16.mxu0 0
        %6084 = vmatmul.mubr.bf16.gmra.mxu0 %v5062
        %v6085 = vpop.f32.mrf.mxu0
        %v6086 = vadd.f32 %v5521, %v6085
        %v6087 = vpop.f32.mrf.mxu0
        %v6088 = vpop.f32.mrf.mxu0
        %v6089 = vadd.f32 %v5524, %v6088
        %v6090 = vpop.f32.mrf.mxu0
        %6091 = vmatprep.mubr.bf16.mxu0 0
        %6092 = vmatmul.mubr.bf16.gmra.mxu0 %v5065
        %v6093 = vpop.f32.mrf.mxu0
        %v6094 = vadd.f32 %v5529, %v6093
        %v6095 = vpop.f32.mrf.mxu0
        %v6096 = vpop.f32.mrf.mxu0
        %v6097 = vadd.f32 %v5532, %v6096
        %v6098 = vpop.f32.mrf.mxu0
        %6099 = vmatprep.mubr.bf16.mxu0 0
        %6100 = vmatmul.mubr.bf16.gmra.mxu0 %v5068
        %v6101 = vpop.f32.mrf.mxu0
        %v6102 = vadd.f32 %v5537, %v6101
        %v6103 = vpop.f32.mrf.mxu0
        %v6104 = vpop.f32.mrf.mxu0
        %v6105 = vadd.f32 %v5540, %v6104
        %v6106 = vpop.f32.mrf.mxu0
        %6107 = vmatprep.mubr.bf16.mxu0 0
        %6108 = vmatmul.mubr.bf16.gmra.mxu0 %v5071
        %v6109 = vpop.f32.mrf.mxu0
        %v6110 = vadd.f32 %v5545, %v6109
        %v6111 = vpop.f32.mrf.mxu0
        %v6112 = vpop.f32.mrf.mxu0
        %v6113 = vadd.f32 %v5548, %v6112
        %v6114 = vpop.f32.mrf.mxu0
        %6115 = vmatprep.mubr.bf16.mxu0 0
        %6116 = vmatmul.mubr.bf16.gmra.mxu0 %v5074
        %v6117 = vpop.f32.mrf.mxu0
        %v6118 = vadd.f32 %v5553, %v6117
        %v6119 = vpop.f32.mrf.mxu0
        %v6120 = vpop.f32.mrf.mxu0
        %v6121 = vadd.f32 %v5556, %v6120
        %v6122 = vpop.f32.mrf.mxu0
        %6123 = vmatprep.mubr.bf16.mxu0 0
        %6124 = vmatmul.mubr.bf16.gmra.mxu0 %v5077
        %v6125 = vpop.f32.mrf.mxu0
        %v6126 = vadd.f32 %v5561, %v6125
        %v6127 = vpop.f32.mrf.mxu0
        %v6128 = vpop.f32.mrf.mxu0
        %v6129 = vadd.f32 %v5564, %v6128
        %v6130 = vpop.f32.mrf.mxu0
        %6131 = vmatprep.mubr.bf16.mxu0 0
        %6132 = vmatmul.mubr.bf16.gmra.mxu0 %v5080
        %v6133 = vpop.f32.mrf.mxu0
        %v6134 = vadd.f32 %v5569, %v6133
        %v6135 = vpop.f32.mrf.mxu0
        %v6136 = vpop.f32.mrf.mxu0
        %v6137 = vadd.f32 %v5572, %v6136
        %v6138 = vpop.f32.mrf.mxu0
        %6139 = vmatprep.mubr.bf16.mxu0 0
        %6140 = vmatmul.mubr.bf16.gmra.mxu0 %v5083
        %v6141 = vpop.f32.mrf.mxu0
        %v6142 = vadd.f32 %v5577, %v6141
        %v6143 = vpop.f32.mrf.mxu0
        %v6144 = vpop.f32.mrf.mxu0
        %v6145 = vadd.f32 %v5580, %v6144
        %v6146 = vpop.f32.mrf.mxu0
        %6147 = vmatprep.mubr.bf16.mxu0 0
        %6148 = vmatmul.mubr.bf16.gmra.mxu0 %v5086
        %v6149 = vpop.f32.mrf.mxu0
        %v6150 = vadd.f32 %v5585, %v6149
        %v6151 = vpop.f32.mrf.mxu0
        %v6152 = vpop.f32.mrf.mxu0
        %v6153 = vadd.f32 %v5588, %v6152
        %v6154 = vpop.f32.mrf.mxu0
        %6155 = vmatprep.mubr.bf16.mxu0 0
        %6156 = vmatmul.mubr.bf16.gmra.mxu0 %v5089
        %v6157 = vpop.f32.mrf.mxu0
        %v6158 = vadd.f32 %v5593, %v6157
        %v6159 = vpop.f32.mrf.mxu0
        %v6160 = vpop.f32.mrf.mxu0
        %v6161 = vadd.f32 %v5596, %v6160
        %v6162 = vpop.f32.mrf.mxu0
        %6163 = vmatprep.mubr.bf16.mxu0 0
        %6164 = vmatmul.mubr.bf16.gmra.mxu0 %v5092
        %v6165 = vpop.f32.mrf.mxu0
        %v6166 = vadd.f32 %v5601, %v6165
        %v6167 = vpop.f32.mrf.mxu0
        %v6168 = vpop.f32.mrf.mxu0
        %v6169 = vadd.f32 %v5604, %v6168
        %v6170 = vpop.f32.mrf.mxu0
        %6171 = vmatprep.mubr.bf16.mxu0 0
        %6172 = vmatmul.mubr.bf16.gmra.mxu0 %v5095
        %v6173 = vpop.f32.mrf.mxu0
        %v6174 = vadd.f32 %v5609, %v6173
        %v6175 = vpop.f32.mrf.mxu0
        %v6176 = vpop.f32.mrf.mxu0
        %v6177 = vadd.f32 %v5612, %v6176
        %v6178 = vpop.f32.mrf.mxu0
        %6179 = vmatprep.mubr.bf16.mxu0 0
        %6180 = vmatmul.mubr.bf16.gmra.mxu0 %v5098
        %v6181 = vpop.f32.mrf.mxu0
        %v6182 = vadd.f32 %v5617, %v6181
        %v6183 = vpop.f32.mrf.mxu0
        %v6184 = vpop.f32.mrf.mxu0
        %v6185 = vadd.f32 %v5620, %v6184
        %v6186 = vpop.f32.mrf.mxu0
        %6187 = vmatprep.mubr.bf16.mxu0 0
        %6188 = vmatmul.mubr.bf16.gmra.mxu0 %v5101
        %v6189 = vpop.f32.mrf.mxu0
        %v6190 = vadd.f32 %v5625, %v6189
        %v6191 = vpop.f32.mrf.mxu0
        %v6192 = vpop.f32.mrf.mxu0
        %v6193 = vadd.f32 %v5628, %v6192
        %v6194 = vpop.f32.mrf.mxu0
        %6195 = vmatprep.mubr.bf16.mxu0 0
        %6196 = vmatmul.mubr.bf16.gmra.mxu0 %v5104
        %v6197 = vpop.f32.mrf.mxu0
        %v6198 = vadd.f32 %v5633, %v6197
        %v6199 = vpop.f32.mrf.mxu0
        %v6200 = vpop.f32.mrf.mxu0
        %v6201 = vadd.f32 %v5636, %v6200
        %v6202 = vpop.f32.mrf.mxu0
        %6203 = vmatprep.mubr.bf16.mxu0 0
        %6204 = vmatmul.mubr.bf16.gmra.mxu0 %v5107
        %v6205 = vpop.f32.mrf.mxu0
        %v6206 = vadd.f32 %v5641, %v6205
        %v6207 = vpop.f32.mrf.mxu0
        %v6208 = vpop.f32.mrf.mxu0
        %v6209 = vadd.f32 %v5644, %v6208
        %v6210 = vpop.f32.mrf.mxu0
        %6211 = vmatprep.mubr.bf16.mxu0 0
        %6212 = vmatmul.mubr.bf16.gmra.mxu0 %v5110
        %v6213 = vpop.f32.mrf.mxu0
        %v6214 = vadd.f32 %v5649, %v6213
        %v6215 = vpop.f32.mrf.mxu0
        %v6216 = vpop.f32.mrf.mxu0
        %v6217 = vadd.f32 %v5652, %v6216
        %v6218 = vpop.f32.mrf.mxu0
        %6219 = vmatprep.mubr.bf16.mxu0 0
        %6220 = vmatmul.mubr.bf16.gmra.mxu0 %v5113
        %v6221 = vpop.f32.mrf.mxu0
        %v6222 = vadd.f32 %v5657, %v6221
        %v6223 = vpop.f32.mrf.mxu0
        %v6224 = vpop.f32.mrf.mxu0
        %v6225 = vadd.f32 %v5660, %v6224
        %v6226 = vpop.f32.mrf.mxu0
        %6227 = vmatprep.mubr.bf16.mxu0 0
        %6228 = vmatmul.mubr.bf16.gmra.mxu0 %v5116
        %v6229 = vpop.f32.mrf.mxu0
        %v6230 = vadd.f32 %v5665, %v6229
        %v6231 = vpop.f32.mrf.mxu0
        %v6232 = vpop.f32.mrf.mxu0
        %v6233 = vadd.f32 %v5668, %v6232
        %v6234 = vpop.f32.mrf.mxu0
        %6235 = vmatprep.mubr.bf16.mxu0 0
        %6236 = vmatmul.mubr.bf16.gmra.mxu0 %v5119
        %v6237 = vpop.f32.mrf.mxu0
        %v6238 = vadd.f32 %v5673, %v6237
        %v6239 = vpop.f32.mrf.mxu0
        %v6240 = vpop.f32.mrf.mxu0
        %v6241 = vadd.f32 %v5676, %v6240
        %v6242 = vpop.f32.mrf.mxu0
        %6243 = vdwg.mxu0
        %v6244 = vpack.c.bf16 %v4781, %v4780
        %v6245 = vpack.c.bf16 %v4783, %v4782
        %v6246 = vpack.c.bf16 %v4853, %v4852
        %v6247 = vpack.c.bf16 %v4855, %v4854
        %s6248 = scalar_lea.vmem %s996, 16
        %v6249 = vld [vmem:[%s6248] sm:$0xf]
        %v6250 = vld [vmem:[%s6248 + $0x4] sm:$0x1]
        %v6253 = vunpack.c.l.b16 %v6249
        %v6254 = vunpack.c.l.b16 %v6250
        %v6255 = vpack.c.b16 %v6254, %v6253
        %v6257 = vsel %vm4934, %v6244, 0
        %v6260 = vsel %vm4934, %v6245, 0
        %v6263 = vsel %vm4934, %v6246, 0
        %v6266 = vsel %vm4934, %v6247, 0
        %v6269 = vand.u32 %v6255, %v5130
        %6271 = vmatprep.subr.bf16.mxu0 0
        %6272 = vmatpush1.bf16.msra.mxu0 0
        %6273 = vmatprep.subr.bf16.mxu0 0
        %6274 = vmatpush1.bf16.msra.mxu0 0
        %6275 = vmatprep.subr.bf16.mxu0 0
        %6276 = vmatpush1.bf16.msra.mxu0 0
        %6277 = vmatprep.subr.bf16.mxu0 0
        %6278 = vmatpush1.bf16.msra.mxu0 0
        %6279 = vmatprep.subr.bf16.mxu0 0
        %6280 = vmatpush1.bf16.msra.mxu0 0
        %6281 = vmatprep.subr.bf16.mxu0 0
        %6282 = vmatpush1.bf16.msra.mxu0 0
        %6283 = vmatprep.subr.bf16.mxu0 0
        %6284 = vmatpush1.bf16.msra.mxu0 0
        %6285 = vmatprep.subr.bf16.mxu0 0
        %6286 = vmatpush1.bf16.msra.mxu0 %v6269
        %6287 = vmatprep.subr.bf16.mxu0 0
        %6288 = vmatpush2.bf16.msra.mxu0 0
        %6289 = vmatprep.subr.bf16.mxu0 0
        %6290 = vmatpush2.bf16.msra.mxu0 0
        %6291 = vmatprep.subr.bf16.mxu0 0
        %6292 = vmatpush2.bf16.msra.mxu0 0
        %6293 = vmatprep.subr.bf16.mxu0 0
        %6294 = vmatpush2.bf16.msra.mxu0 0
        %6295 = vmatprep.subr.bf16.mxu0 0
        %6296 = vmatpush2.bf16.msra.mxu0 0
        %6297 = vmatprep.subr.bf16.mxu0 0
        %6298 = vmatpush2.bf16.msra.mxu0 0
        %6299 = vmatprep.subr.bf16.mxu0 0
        %6300 = vmatpush2.bf16.msra.mxu0 0
        %6301 = vmatprep.subr.bf16.mxu0 0
        %6302 = vmatpush2.bf16.msra.mxu0 0
        %6303 = vmatprep.mubr.bf16.mxu0 0
        %6304 = vmatmul.mubr.bf16.gmra.mxu0 %v4942
        %v6305 = vpop.f32.mrf.mxu0
        %v6306 = vadd.f32 0.0, %v6305
        %v6307 = vpop.f32.mrf.mxu0
        %v6308 = vpop.f32.mrf.mxu0
        %v6309 = vadd.f32 0.0, %v6308
        %v6310 = vpop.f32.mrf.mxu0
        %6311 = vmatprep.mubr.bf16.mxu0 0
        %6312 = vmatmul.mubr.bf16.gmra.mxu0 %v4945
        %v6313 = vpop.f32.mrf.mxu0
        %v6314 = vadd.f32 0.0, %v6313
        %v6315 = vpop.f32.mrf.mxu0
        %v6316 = vpop.f32.mrf.mxu0
        %v6317 = vadd.f32 0.0, %v6316
        %v6318 = vpop.f32.mrf.mxu0
        %6319 = vmatprep.mubr.bf16.mxu0 0
        %6320 = vmatmul.mubr.bf16.gmra.mxu0 %v4948
        %v6321 = vpop.f32.mrf.mxu0
        %v6322 = vadd.f32 0.0, %v6321
        %v6323 = vpop.f32.mrf.mxu0
        %v6324 = vpop.f32.mrf.mxu0
        %v6325 = vadd.f32 0.0, %v6324
        %v6326 = vpop.f32.mrf.mxu0
        %6327 = vmatprep.mubr.bf16.mxu0 0
        %6328 = vmatmul.mubr.bf16.gmra.mxu0 %v4951
        %v6329 = vpop.f32.mrf.mxu0
        %v6330 = vadd.f32 0.0, %v6329
        %v6331 = vpop.f32.mrf.mxu0
        %v6332 = vpop.f32.mrf.mxu0
        %v6333 = vadd.f32 0.0, %v6332
        %v6334 = vpop.f32.mrf.mxu0
        %6335 = vmatprep.mubr.bf16.mxu0 0
        %6336 = vmatmul.mubr.bf16.gmra.mxu0 %v4954
        %v6337 = vpop.f32.mrf.mxu0
        %v6338 = vadd.f32 0.0, %v6337
        %v6339 = vpop.f32.mrf.mxu0
        %v6340 = vpop.f32.mrf.mxu0
        %v6341 = vadd.f32 0.0, %v6340
        %v6342 = vpop.f32.mrf.mxu0
        %6343 = vmatprep.mubr.bf16.mxu0 0
        %6344 = vmatmul.mubr.bf16.gmra.mxu0 %v4957
        %v6345 = vpop.f32.mrf.mxu0
        %v6346 = vadd.f32 0.0, %v6345
        %v6347 = vpop.f32.mrf.mxu0
        %v6348 = vpop.f32.mrf.mxu0
        %v6349 = vadd.f32 0.0, %v6348
        %v6350 = vpop.f32.mrf.mxu0
        %6351 = vmatprep.mubr.bf16.mxu0 0
        %6352 = vmatmul.mubr.bf16.gmra.mxu0 %v4960
        %v6353 = vpop.f32.mrf.mxu0
        %v6354 = vadd.f32 0.0, %v6353
        %v6355 = vpop.f32.mrf.mxu0
        %v6356 = vpop.f32.mrf.mxu0
        %v6357 = vadd.f32 0.0, %v6356
        %v6358 = vpop.f32.mrf.mxu0
        %6359 = vmatprep.mubr.bf16.mxu0 0
        %6360 = vmatmul.mubr.bf16.gmra.mxu0 %v4963
        %v6361 = vpop.f32.mrf.mxu0
        %v6362 = vadd.f32 0.0, %v6361
        %v6363 = vpop.f32.mrf.mxu0
        %v6364 = vpop.f32.mrf.mxu0
        %v6365 = vadd.f32 0.0, %v6364
        %v6366 = vpop.f32.mrf.mxu0
        %6367 = vmatprep.mubr.bf16.mxu0 0
        %6368 = vmatmul.mubr.bf16.gmra.mxu0 %v4966
        %v6369 = vpop.f32.mrf.mxu0
        %v6370 = vadd.f32 0.0, %v6369
        %v6371 = vpop.f32.mrf.mxu0
        %v6372 = vpop.f32.mrf.mxu0
        %v6373 = vadd.f32 0.0, %v6372
        %v6374 = vpop.f32.mrf.mxu0
        %6375 = vmatprep.mubr.bf16.mxu0 0
        %6376 = vmatmul.mubr.bf16.gmra.mxu0 %v4969
        %v6377 = vpop.f32.mrf.mxu0
        %v6378 = vadd.f32 0.0, %v6377
        %v6379 = vpop.f32.mrf.mxu0
        %v6380 = vpop.f32.mrf.mxu0
        %v6381 = vadd.f32 0.0, %v6380
        %v6382 = vpop.f32.mrf.mxu0
        %6383 = vmatprep.mubr.bf16.mxu0 0
        %6384 = vmatmul.mubr.bf16.gmra.mxu0 %v4972
        %v6385 = vpop.f32.mrf.mxu0
        %v6386 = vadd.f32 0.0, %v6385
        %v6387 = vpop.f32.mrf.mxu0
        %v6388 = vpop.f32.mrf.mxu0
        %v6389 = vadd.f32 0.0, %v6388
        %v6390 = vpop.f32.mrf.mxu0
        %6391 = vmatprep.mubr.bf16.mxu0 0
        %6392 = vmatmul.mubr.bf16.gmra.mxu0 %v4975
        %v6393 = vpop.f32.mrf.mxu0
        %v6394 = vadd.f32 0.0, %v6393
        %v6395 = vpop.f32.mrf.mxu0
        %v6396 = vpop.f32.mrf.mxu0
        %v6397 = vadd.f32 0.0, %v6396
        %v6398 = vpop.f32.mrf.mxu0
        %6399 = vmatprep.mubr.bf16.mxu0 0
        %6400 = vmatmul.mubr.bf16.gmra.mxu0 %v4978
        %v6401 = vpop.f32.mrf.mxu0
        %v6402 = vadd.f32 0.0, %v6401
        %v6403 = vpop.f32.mrf.mxu0
        %v6404 = vpop.f32.mrf.mxu0
        %v6405 = vadd.f32 0.0, %v6404
        %v6406 = vpop.f32.mrf.mxu0
        %6407 = vmatprep.mubr.bf16.mxu0 0
        %6408 = vmatmul.mubr.bf16.gmra.mxu0 %v4981
        %v6409 = vpop.f32.mrf.mxu0
        %v6410 = vadd.f32 0.0, %v6409
        %v6411 = vpop.f32.mrf.mxu0
        %v6412 = vpop.f32.mrf.mxu0
        %v6413 = vadd.f32 0.0, %v6412
        %v6414 = vpop.f32.mrf.mxu0
        %6415 = vmatprep.mubr.bf16.mxu0 0
        %6416 = vmatmul.mubr.bf16.gmra.mxu0 %v4984
        %v6417 = vpop.f32.mrf.mxu0
        %v6418 = vadd.f32 0.0, %v6417
        %v6419 = vpop.f32.mrf.mxu0
        %v6420 = vpop.f32.mrf.mxu0
        %v6421 = vadd.f32 0.0, %v6420
        %v6422 = vpop.f32.mrf.mxu0
        %6423 = vmatprep.mubr.bf16.mxu0 0
        %6424 = vmatmul.mubr.bf16.gmra.mxu0 %v4987
        %v6425 = vpop.f32.mrf.mxu0
        %v6426 = vadd.f32 0.0, %v6425
        %v6427 = vpop.f32.mrf.mxu0
        %v6428 = vpop.f32.mrf.mxu0
        %v6429 = vadd.f32 0.0, %v6428
        %v6430 = vpop.f32.mrf.mxu0
        %6431 = vmatprep.mubr.bf16.mxu0 0
        %6432 = vmatmul.mubr.bf16.gmra.mxu0 %v4990
        %v6433 = vpop.f32.mrf.mxu0
        %v6434 = vadd.f32 0.0, %v6433
        %v6435 = vpop.f32.mrf.mxu0
        %v6436 = vpop.f32.mrf.mxu0
        %v6437 = vadd.f32 0.0, %v6436
        %v6438 = vpop.f32.mrf.mxu0
        %6439 = vmatprep.mubr.bf16.mxu0 0
        %6440 = vmatmul.mubr.bf16.gmra.mxu0 %v4993
        %v6441 = vpop.f32.mrf.mxu0
        %v6442 = vadd.f32 0.0, %v6441
        %v6443 = vpop.f32.mrf.mxu0
        %v6444 = vpop.f32.mrf.mxu0
        %v6445 = vadd.f32 0.0, %v6444
        %v6446 = vpop.f32.mrf.mxu0
        %6447 = vmatprep.mubr.bf16.mxu0 0
        %6448 = vmatmul.mubr.bf16.gmra.mxu0 %v4996
        %v6449 = vpop.f32.mrf.mxu0
        %v6450 = vadd.f32 0.0, %v6449
        %v6451 = vpop.f32.mrf.mxu0
        %v6452 = vpop.f32.mrf.mxu0
        %v6453 = vadd.f32 0.0, %v6452
        %v6454 = vpop.f32.mrf.mxu0
        %6455 = vmatprep.mubr.bf16.mxu0 0
        %6456 = vmatmul.mubr.bf16.gmra.mxu0 %v4999
        %v6457 = vpop.f32.mrf.mxu0
        %v6458 = vadd.f32 0.0, %v6457
        %v6459 = vpop.f32.mrf.mxu0
        %v6460 = vpop.f32.mrf.mxu0
        %v6461 = vadd.f32 0.0, %v6460
        %v6462 = vpop.f32.mrf.mxu0
        %6463 = vmatprep.mubr.bf16.mxu0 0
        %6464 = vmatmul.mubr.bf16.gmra.mxu0 %v5002
        %v6465 = vpop.f32.mrf.mxu0
        %v6466 = vadd.f32 0.0, %v6465
        %v6467 = vpop.f32.mrf.mxu0
        %v6468 = vpop.f32.mrf.mxu0
        %v6469 = vadd.f32 0.0, %v6468
        %v6470 = vpop.f32.mrf.mxu0
        %6471 = vmatprep.mubr.bf16.mxu0 0
        %6472 = vmatmul.mubr.bf16.gmra.mxu0 %v5005
        %v6473 = vpop.f32.mrf.mxu0
        %v6474 = vadd.f32 0.0, %v6473
        %v6475 = vpop.f32.mrf.mxu0
        %v6476 = vpop.f32.mrf.mxu0
        %v6477 = vadd.f32 0.0, %v6476
        %v6478 = vpop.f32.mrf.mxu0
        %6479 = vmatprep.mubr.bf16.mxu0 0
        %6480 = vmatmul.mubr.bf16.gmra.mxu0 %v5008
        %v6481 = vpop.f32.mrf.mxu0
        %v6482 = vadd.f32 0.0, %v6481
        %v6483 = vpop.f32.mrf.mxu0
        %v6484 = vpop.f32.mrf.mxu0
        %v6485 = vadd.f32 0.0, %v6484
        %v6486 = vpop.f32.mrf.mxu0
        %6487 = vmatprep.mubr.bf16.mxu0 0
        %6488 = vmatmul.mubr.bf16.gmra.mxu0 %v5011
        %v6489 = vpop.f32.mrf.mxu0
        %v6490 = vadd.f32 0.0, %v6489
        %v6491 = vpop.f32.mrf.mxu0
        %v6492 = vpop.f32.mrf.mxu0
        %v6493 = vadd.f32 0.0, %v6492
        %v6494 = vpop.f32.mrf.mxu0
        %6495 = vmatprep.mubr.bf16.mxu0 0
        %6496 = vmatmul.mubr.bf16.gmra.mxu0 %v5014
        %v6497 = vpop.f32.mrf.mxu0
        %v6498 = vadd.f32 0.0, %v6497
        %v6499 = vpop.f32.mrf.mxu0
        %v6500 = vpop.f32.mrf.mxu0
        %v6501 = vadd.f32 0.0, %v6500
        %v6502 = vpop.f32.mrf.mxu0
        %6503 = vmatprep.mubr.bf16.mxu0 0
        %6504 = vmatmul.mubr.bf16.gmra.mxu0 %v5017
        %v6505 = vpop.f32.mrf.mxu0
        %v6506 = vadd.f32 0.0, %v6505
        %v6507 = vpop.f32.mrf.mxu0
        %v6508 = vpop.f32.mrf.mxu0
        %v6509 = vadd.f32 0.0, %v6508
        %v6510 = vpop.f32.mrf.mxu0
        %6511 = vmatprep.mubr.bf16.mxu0 0
        %6512 = vmatmul.mubr.bf16.gmra.mxu0 %v5020
        %v6513 = vpop.f32.mrf.mxu0
        %v6514 = vadd.f32 0.0, %v6513
        %v6515 = vpop.f32.mrf.mxu0
        %v6516 = vpop.f32.mrf.mxu0
        %v6517 = vadd.f32 0.0, %v6516
        %v6518 = vpop.f32.mrf.mxu0
        %6519 = vmatprep.mubr.bf16.mxu0 0
        %6520 = vmatmul.mubr.bf16.gmra.mxu0 %v5023
        %v6521 = vpop.f32.mrf.mxu0
        %v6522 = vadd.f32 0.0, %v6521
        %v6523 = vpop.f32.mrf.mxu0
        %v6524 = vpop.f32.mrf.mxu0
        %v6525 = vadd.f32 0.0, %v6524
        %v6526 = vpop.f32.mrf.mxu0
        %6527 = vmatprep.mubr.bf16.mxu0 0
        %6528 = vmatmul.mubr.bf16.gmra.mxu0 %v5026
        %v6529 = vpop.f32.mrf.mxu0
        %v6530 = vadd.f32 0.0, %v6529
        %v6531 = vpop.f32.mrf.mxu0
        %v6532 = vpop.f32.mrf.mxu0
        %v6533 = vadd.f32 0.0, %v6532
        %v6534 = vpop.f32.mrf.mxu0
        %6535 = vmatprep.mubr.bf16.mxu0 0
        %6536 = vmatmul.mubr.bf16.gmra.mxu0 %v5029
        %v6537 = vpop.f32.mrf.mxu0
        %v6538 = vadd.f32 0.0, %v6537
        %v6539 = vpop.f32.mrf.mxu0
        %v6540 = vpop.f32.mrf.mxu0
        %v6541 = vadd.f32 0.0, %v6540
        %v6542 = vpop.f32.mrf.mxu0
        %6543 = vmatprep.mubr.bf16.mxu0 0
        %6544 = vmatmul.mubr.bf16.gmra.mxu0 %v6257
        %v6545 = vpop.f32.mrf.mxu0
        %v6546 = vadd.f32 0.0, %v6545
        %v6547 = vpop.f32.mrf.mxu0
        %v6548 = vpop.f32.mrf.mxu0
        %v6549 = vadd.f32 0.0, %v6548
        %v6550 = vpop.f32.mrf.mxu0
        %6551 = vmatprep.mubr.bf16.mxu0 0
        %6552 = vmatmul.mubr.bf16.gmra.mxu0 %v6260
        %v6553 = vpop.f32.mrf.mxu0
        %v6554 = vadd.f32 0.0, %v6553
        %v6555 = vpop.f32.mrf.mxu0
        %v6556 = vpop.f32.mrf.mxu0
        %v6557 = vadd.f32 0.0, %v6556
        %v6558 = vpop.f32.mrf.mxu0
        %6559 = vmatprep.mubr.bf16.mxu0 0
        %6560 = vmatmul.mubr.bf16.gmra.mxu0 %v5038
        %v6561 = vpop.f32.mrf.mxu0
        %v6562 = vadd.f32 0.0, %v6561
        %v6563 = vpop.f32.mrf.mxu0
        %v6564 = vpop.f32.mrf.mxu0
        %v6565 = vadd.f32 0.0, %v6564
        %v6566 = vpop.f32.mrf.mxu0
        %6567 = vmatprep.mubr.bf16.mxu0 0
        %6568 = vmatmul.mubr.bf16.gmra.mxu0 %v5041
        %v6569 = vpop.f32.mrf.mxu0
        %v6570 = vadd.f32 0.0, %v6569
        %v6571 = vpop.f32.mrf.mxu0
        %v6572 = vpop.f32.mrf.mxu0
        %v6573 = vadd.f32 0.0, %v6572
        %v6574 = vpop.f32.mrf.mxu0
        %6575 = vmatprep.mubr.bf16.mxu0 0
        %6576 = vmatmul.mubr.bf16.gmra.mxu0 %v5044
        %v6577 = vpop.f32.mrf.mxu0
        %v6578 = vadd.f32 0.0, %v6577
        %v6579 = vpop.f32.mrf.mxu0
        %v6580 = vpop.f32.mrf.mxu0
        %v6581 = vadd.f32 0.0, %v6580
        %v6582 = vpop.f32.mrf.mxu0
        %6583 = vmatprep.mubr.bf16.mxu0 0
        %6584 = vmatmul.mubr.bf16.gmra.mxu0 %v5047
        %v6585 = vpop.f32.mrf.mxu0
        %v6586 = vadd.f32 0.0, %v6585
        %v6587 = vpop.f32.mrf.mxu0
        %v6588 = vpop.f32.mrf.mxu0
        %v6589 = vadd.f32 0.0, %v6588
        %v6590 = vpop.f32.mrf.mxu0
        %6591 = vmatprep.mubr.bf16.mxu0 0
        %6592 = vmatmul.mubr.bf16.gmra.mxu0 %v5050
        %v6593 = vpop.f32.mrf.mxu0
        %v6594 = vadd.f32 0.0, %v6593
        %v6595 = vpop.f32.mrf.mxu0
        %v6596 = vpop.f32.mrf.mxu0
        %v6597 = vadd.f32 0.0, %v6596
        %v6598 = vpop.f32.mrf.mxu0
        %6599 = vmatprep.mubr.bf16.mxu0 0
        %6600 = vmatmul.mubr.bf16.gmra.mxu0 %v5053
        %v6601 = vpop.f32.mrf.mxu0
        %v6602 = vadd.f32 0.0, %v6601
        %v6603 = vpop.f32.mrf.mxu0
        %v6604 = vpop.f32.mrf.mxu0
        %v6605 = vadd.f32 0.0, %v6604
        %v6606 = vpop.f32.mrf.mxu0
        %6607 = vmatprep.mubr.bf16.mxu0 0
        %6608 = vmatmul.mubr.bf16.gmra.mxu0 %v5056
        %v6609 = vpop.f32.mrf.mxu0
        %v6610 = vadd.f32 0.0, %v6609
        %v6611 = vpop.f32.mrf.mxu0
        %v6612 = vpop.f32.mrf.mxu0
        %v6613 = vadd.f32 0.0, %v6612
        %v6614 = vpop.f32.mrf.mxu0
        %6615 = vmatprep.mubr.bf16.mxu0 0
        %6616 = vmatmul.mubr.bf16.gmra.mxu0 %v5059
        %v6617 = vpop.f32.mrf.mxu0
        %v6618 = vadd.f32 0.0, %v6617
        %v6619 = vpop.f32.mrf.mxu0
        %v6620 = vpop.f32.mrf.mxu0
        %v6621 = vadd.f32 0.0, %v6620
        %v6622 = vpop.f32.mrf.mxu0
        %6623 = vmatprep.mubr.bf16.mxu0 0
        %6624 = vmatmul.mubr.bf16.gmra.mxu0 %v5062
        %v6625 = vpop.f32.mrf.mxu0
        %v6626 = vadd.f32 0.0, %v6625
        %v6627 = vpop.f32.mrf.mxu0
        %v6628 = vpop.f32.mrf.mxu0
        %v6629 = vadd.f32 0.0, %v6628
        %v6630 = vpop.f32.mrf.mxu0
        %6631 = vmatprep.mubr.bf16.mxu0 0
        %6632 = vmatmul.mubr.bf16.gmra.mxu0 %v5065
        %v6633 = vpop.f32.mrf.mxu0
        %v6634 = vadd.f32 0.0, %v6633
        %v6635 = vpop.f32.mrf.mxu0
        %v6636 = vpop.f32.mrf.mxu0
        %v6637 = vadd.f32 0.0, %v6636
        %v6638 = vpop.f32.mrf.mxu0
        %6639 = vmatprep.mubr.bf16.mxu0 0
        %6640 = vmatmul.mubr.bf16.gmra.mxu0 %v5068
        %v6641 = vpop.f32.mrf.mxu0
        %v6642 = vadd.f32 0.0, %v6641
        %v6643 = vpop.f32.mrf.mxu0
        %v6644 = vpop.f32.mrf.mxu0
        %v6645 = vadd.f32 0.0, %v6644
        %v6646 = vpop.f32.mrf.mxu0
        %6647 = vmatprep.mubr.bf16.mxu0 0
        %6648 = vmatmul.mubr.bf16.gmra.mxu0 %v5071
        %v6649 = vpop.f32.mrf.mxu0
        %v6650 = vadd.f32 0.0, %v6649
        %v6651 = vpop.f32.mrf.mxu0
        %v6652 = vpop.f32.mrf.mxu0
        %v6653 = vadd.f32 0.0, %v6652
        %v6654 = vpop.f32.mrf.mxu0
        %6655 = vmatprep.mubr.bf16.mxu0 0
        %6656 = vmatmul.mubr.bf16.gmra.mxu0 %v5074
        %v6657 = vpop.f32.mrf.mxu0
        %v6658 = vadd.f32 0.0, %v6657
        %v6659 = vpop.f32.mrf.mxu0
        %v6660 = vpop.f32.mrf.mxu0
        %v6661 = vadd.f32 0.0, %v6660
        %v6662 = vpop.f32.mrf.mxu0
        %6663 = vmatprep.mubr.bf16.mxu0 0
        %6664 = vmatmul.mubr.bf16.gmra.mxu0 %v5077
        %v6665 = vpop.f32.mrf.mxu0
        %v6666 = vadd.f32 0.0, %v6665
        %v6667 = vpop.f32.mrf.mxu0
        %v6668 = vpop.f32.mrf.mxu0
        %v6669 = vadd.f32 0.0, %v6668
        %v6670 = vpop.f32.mrf.mxu0
        %6671 = vmatprep.mubr.bf16.mxu0 0
        %6672 = vmatmul.mubr.bf16.gmra.mxu0 %v5080
        %v6673 = vpop.f32.mrf.mxu0
        %v6674 = vadd.f32 0.0, %v6673
        %v6675 = vpop.f32.mrf.mxu0
        %v6676 = vpop.f32.mrf.mxu0
        %v6677 = vadd.f32 0.0, %v6676
        %v6678 = vpop.f32.mrf.mxu0
        %6679 = vmatprep.mubr.bf16.mxu0 0
        %6680 = vmatmul.mubr.bf16.gmra.mxu0 %v5083
        %v6681 = vpop.f32.mrf.mxu0
        %v6682 = vadd.f32 0.0, %v6681
        %v6683 = vpop.f32.mrf.mxu0
        %v6684 = vpop.f32.mrf.mxu0
        %v6685 = vadd.f32 0.0, %v6684
        %v6686 = vpop.f32.mrf.mxu0
        %6687 = vmatprep.mubr.bf16.mxu0 0
        %6688 = vmatmul.mubr.bf16.gmra.mxu0 %v5086
        %v6689 = vpop.f32.mrf.mxu0
        %v6690 = vadd.f32 0.0, %v6689
        %v6691 = vpop.f32.mrf.mxu0
        %v6692 = vpop.f32.mrf.mxu0
        %v6693 = vadd.f32 0.0, %v6692
        %v6694 = vpop.f32.mrf.mxu0
        %6695 = vmatprep.mubr.bf16.mxu0 0
        %6696 = vmatmul.mubr.bf16.gmra.mxu0 %v5089
        %v6697 = vpop.f32.mrf.mxu0
        %v6698 = vadd.f32 0.0, %v6697
        %v6699 = vpop.f32.mrf.mxu0
        %v6700 = vpop.f32.mrf.mxu0
        %v6701 = vadd.f32 0.0, %v6700
        %v6702 = vpop.f32.mrf.mxu0
        %6703 = vmatprep.mubr.bf16.mxu0 0
        %6704 = vmatmul.mubr.bf16.gmra.mxu0 %v5092
        %v6705 = vpop.f32.mrf.mxu0
        %v6706 = vadd.f32 0.0, %v6705
        %v6707 = vpop.f32.mrf.mxu0
        %v6708 = vpop.f32.mrf.mxu0
        %v6709 = vadd.f32 0.0, %v6708
        %v6710 = vpop.f32.mrf.mxu0
        %6711 = vmatprep.mubr.bf16.mxu0 0
        %6712 = vmatmul.mubr.bf16.gmra.mxu0 %v5095
        %v6713 = vpop.f32.mrf.mxu0
        %v6714 = vadd.f32 0.0, %v6713
        %v6715 = vpop.f32.mrf.mxu0
        %v6716 = vpop.f32.mrf.mxu0
        %v6717 = vadd.f32 0.0, %v6716
        %v6718 = vpop.f32.mrf.mxu0
        %6719 = vmatprep.mubr.bf16.mxu0 0
        %6720 = vmatmul.mubr.bf16.gmra.mxu0 %v5098
        %v6721 = vpop.f32.mrf.mxu0
        %v6722 = vadd.f32 0.0, %v6721
        %v6723 = vpop.f32.mrf.mxu0
        %v6724 = vpop.f32.mrf.mxu0
        %v6725 = vadd.f32 0.0, %v6724
        %v6726 = vpop.f32.mrf.mxu0
        %6727 = vmatprep.mubr.bf16.mxu0 0
        %6728 = vmatmul.mubr.bf16.gmra.mxu0 %v5101
        %v6729 = vpop.f32.mrf.mxu0
        %v6730 = vadd.f32 0.0, %v6729
        %v6731 = vpop.f32.mrf.mxu0
        %v6732 = vpop.f32.mrf.mxu0
        %v6733 = vadd.f32 0.0, %v6732
        %v6734 = vpop.f32.mrf.mxu0
        %6735 = vmatprep.mubr.bf16.mxu0 0
        %6736 = vmatmul.mubr.bf16.gmra.mxu0 %v5104
        %v6737 = vpop.f32.mrf.mxu0
        %v6738 = vadd.f32 0.0, %v6737
        %v6739 = vpop.f32.mrf.mxu0
        %v6740 = vpop.f32.mrf.mxu0
        %v6741 = vadd.f32 0.0, %v6740
        %v6742 = vpop.f32.mrf.mxu0
        %6743 = vmatprep.mubr.bf16.mxu0 0
        %6744 = vmatmul.mubr.bf16.gmra.mxu0 %v5107
        %v6745 = vpop.f32.mrf.mxu0
        %v6746 = vadd.f32 0.0, %v6745
        %v6747 = vpop.f32.mrf.mxu0
        %v6748 = vpop.f32.mrf.mxu0
        %v6749 = vadd.f32 0.0, %v6748
        %v6750 = vpop.f32.mrf.mxu0
        %6751 = vmatprep.mubr.bf16.mxu0 0
        %6752 = vmatmul.mubr.bf16.gmra.mxu0 %v5110
        %v6753 = vpop.f32.mrf.mxu0
        %v6754 = vadd.f32 0.0, %v6753
        %v6755 = vpop.f32.mrf.mxu0
        %v6756 = vpop.f32.mrf.mxu0
        %v6757 = vadd.f32 0.0, %v6756
        %v6758 = vpop.f32.mrf.mxu0
        %6759 = vmatprep.mubr.bf16.mxu0 0
        %6760 = vmatmul.mubr.bf16.gmra.mxu0 %v5113
        %v6761 = vpop.f32.mrf.mxu0
        %v6762 = vadd.f32 0.0, %v6761
        %v6763 = vpop.f32.mrf.mxu0
        %v6764 = vpop.f32.mrf.mxu0
        %v6765 = vadd.f32 0.0, %v6764
        %v6766 = vpop.f32.mrf.mxu0
        %6767 = vmatprep.mubr.bf16.mxu0 0
        %6768 = vmatmul.mubr.bf16.gmra.mxu0 %v5116
        %v6769 = vpop.f32.mrf.mxu0
        %v6770 = vadd.f32 0.0, %v6769
        %v6771 = vpop.f32.mrf.mxu0
        %v6772 = vpop.f32.mrf.mxu0
        %v6773 = vadd.f32 0.0, %v6772
        %v6774 = vpop.f32.mrf.mxu0
        %6775 = vmatprep.mubr.bf16.mxu0 0
        %6776 = vmatmul.mubr.bf16.gmra.mxu0 %v5119
        %v6777 = vpop.f32.mrf.mxu0
        %v6778 = vadd.f32 0.0, %v6777
        %v6779 = vpop.f32.mrf.mxu0
        %v6780 = vpop.f32.mrf.mxu0
        %v6781 = vadd.f32 0.0, %v6780
        %v6782 = vpop.f32.mrf.mxu0
        %6783 = vmatprep.mubr.bf16.mxu0 0
        %6784 = vmatmul.mubr.bf16.gmra.mxu0 %v5122
        %v6785 = vpop.f32.mrf.mxu0
        %v6786 = vadd.f32 0.0, %v6785
        %v6787 = vpop.f32.mrf.mxu0
        %v6788 = vpop.f32.mrf.mxu0
        %v6789 = vadd.f32 0.0, %v6788
        %v6790 = vpop.f32.mrf.mxu0
        %6791 = vmatprep.mubr.bf16.mxu0 0
        %6792 = vmatmul.mubr.bf16.gmra.mxu0 %v5125
        %v6793 = vpop.f32.mrf.mxu0
        %v6794 = vadd.f32 0.0, %v6793
        %v6795 = vpop.f32.mrf.mxu0
        %v6796 = vpop.f32.mrf.mxu0
        %v6797 = vadd.f32 0.0, %v6796
        %v6798 = vpop.f32.mrf.mxu0
        %6799 = vmatprep.mubr.bf16.mxu0 0
        %6800 = vmatmul.mubr.bf16.gmra.mxu0 %v6263
        %v6801 = vpop.f32.mrf.mxu0
        %v6802 = vadd.f32 0.0, %v6801
        %v6803 = vpop.f32.mrf.mxu0
        %v6804 = vpop.f32.mrf.mxu0
        %v6805 = vadd.f32 0.0, %v6804
        %v6806 = vpop.f32.mrf.mxu0
        %6807 = vmatprep.mubr.bf16.mxu0 0
        %6808 = vmatmul.mubr.bf16.gmra.mxu0 %v6266
        %v6809 = vpop.f32.mrf.mxu0
        %v6810 = vadd.f32 0.0, %v6809
        %v6811 = vpop.f32.mrf.mxu0
        %v6812 = vpop.f32.mrf.mxu0
        %v6813 = vadd.f32 0.0, %v6812
        %v6814 = vpop.f32.mrf.mxu0
        %6815 = vdwg.mxu0
        %v6816 = vadd.f32 %v5734, %v6306
        %v6817 = vadd.f32 %v5737, %v6309
        %v6818 = vadd.f32 %v5742, %v6314
        %v6819 = vadd.f32 %v5745, %v6317
        %v6820 = vadd.f32 %v5750, %v6322
        %v6821 = vadd.f32 %v5753, %v6325
        %v6822 = vadd.f32 %v5758, %v6330
        %v6823 = vadd.f32 %v5761, %v6333
        %v6824 = vadd.f32 %v5766, %v6338
        %v6825 = vadd.f32 %v5769, %v6341
        %v6826 = vadd.f32 %v5774, %v6346
        %v6827 = vadd.f32 %v5777, %v6349
        %v6828 = vadd.f32 %v5782, %v6354
        %v6829 = vadd.f32 %v5785, %v6357
        %v6830 = vadd.f32 %v5790, %v6362
        %v6831 = vadd.f32 %v5793, %v6365
        %v6832 = vadd.f32 %v5798, %v6370
        %v6833 = vadd.f32 %v5801, %v6373
        %v6834 = vadd.f32 %v5806, %v6378
        %v6835 = vadd.f32 %v5809, %v6381
        %v6836 = vadd.f32 %v5814, %v6386
        %v6837 = vadd.f32 %v5817, %v6389
        %v6838 = vadd.f32 %v5822, %v6394
        %v6839 = vadd.f32 %v5825, %v6397
        %v6840 = vadd.f32 %v5830, %v6402
        %v6841 = vadd.f32 %v5833, %v6405
        %v6842 = vadd.f32 %v5838, %v6410
        %v6843 = vadd.f32 %v5841, %v6413
        %v6844 = vadd.f32 %v5846, %v6418
        %v6845 = vadd.f32 %v5849, %v6421
        %v6846 = vadd.f32 %v5854, %v6426
        %v6847 = vadd.f32 %v5857, %v6429
        %v6848 = vadd.f32 %v5862, %v6434
        %v6849 = vadd.f32 %v5865, %v6437
        %v6850 = vadd.f32 %v5870, %v6442
        %v6851 = vadd.f32 %v5873, %v6445
        %v6852 = vadd.f32 %v5878, %v6450
        %v6853 = vadd.f32 %v5881, %v6453
        %v6854 = vadd.f32 %v5886, %v6458
        %v6855 = vadd.f32 %v5889, %v6461
        %v6856 = vadd.f32 %v5894, %v6466
        %v6857 = vadd.f32 %v5897, %v6469
        %v6858 = vadd.f32 %v5902, %v6474
        %v6859 = vadd.f32 %v5905, %v6477
        %v6860 = vadd.f32 %v5910, %v6482
        %v6861 = vadd.f32 %v5913, %v6485
        %v6862 = vadd.f32 %v5918, %v6490
        %v6863 = vadd.f32 %v5921, %v6493
        %v6864 = vadd.f32 %v5926, %v6498
        %v6865 = vadd.f32 %v5929, %v6501
        %v6866 = vadd.f32 %v5934, %v6506
        %v6867 = vadd.f32 %v5937, %v6509
        %v6868 = vadd.f32 %v5942, %v6514
        %v6869 = vadd.f32 %v5945, %v6517
        %v6870 = vadd.f32 %v5950, %v6522
        %v6871 = vadd.f32 %v5953, %v6525
        %v6872 = vadd.f32 %v5958, %v6530
        %v6873 = vadd.f32 %v5961, %v6533
        %v6874 = vadd.f32 %v5966, %v6538
        %v6875 = vadd.f32 %v5969, %v6541
        %v6876 = vadd.f32 %v5974, %v6546
        %v6877 = vadd.f32 %v5977, %v6549
        %v6878 = vadd.f32 %v5982, %v6554
        %v6879 = vadd.f32 %v5985, %v6557
        %v6880 = vadd.f32 %v5990, %v6562
        %v6881 = vadd.f32 %v5993, %v6565
        %v6882 = vadd.f32 %v5998, %v6570
        %v6883 = vadd.f32 %v6001, %v6573
        %v6884 = vadd.f32 %v6006, %v6578
        %v6885 = vadd.f32 %v6009, %v6581
        %v6886 = vadd.f32 %v6014, %v6586
        %v6887 = vadd.f32 %v6017, %v6589
        %v6888 = vadd.f32 %v6022, %v6594
        %v6889 = vadd.f32 %v6025, %v6597
        %v6890 = vadd.f32 %v6030, %v6602
        %v6891 = vadd.f32 %v6033, %v6605
        %v6892 = vadd.f32 %v6038, %v6610
        %v6893 = vadd.f32 %v6041, %v6613
        %v6894 = vadd.f32 %v6046, %v6618
        %v6895 = vadd.f32 %v6049, %v6621
        %v6896 = vadd.f32 %v6054, %v6626
        %v6897 = vadd.f32 %v6057, %v6629
        %v6898 = vadd.f32 %v6062, %v6634
        %v6899 = vadd.f32 %v6065, %v6637
        %v6900 = vadd.f32 %v6070, %v6642
        %v6901 = vadd.f32 %v6073, %v6645
        %v6902 = vadd.f32 %v6078, %v6650
        %v6903 = vadd.f32 %v6081, %v6653
        %v6904 = vadd.f32 %v6086, %v6658
        %v6905 = vadd.f32 %v6089, %v6661
        %v6906 = vadd.f32 %v6094, %v6666
        %v6907 = vadd.f32 %v6097, %v6669
        %v6908 = vadd.f32 %v6102, %v6674
        %v6909 = vadd.f32 %v6105, %v6677
        %v6910 = vadd.f32 %v6110, %v6682
        %v6911 = vadd.f32 %v6113, %v6685
        %v6912 = vadd.f32 %v6118, %v6690
        %v6913 = vadd.f32 %v6121, %v6693
        %v6914 = vadd.f32 %v6126, %v6698
        %v6915 = vadd.f32 %v6129, %v6701
        %v6916 = vadd.f32 %v6134, %v6706
        %v6917 = vadd.f32 %v6137, %v6709
        %v6918 = vadd.f32 %v6142, %v6714
        %v6919 = vadd.f32 %v6145, %v6717
        %v6920 = vadd.f32 %v6150, %v6722
        %v6921 = vadd.f32 %v6153, %v6725
        %v6922 = vadd.f32 %v6158, %v6730
        %v6923 = vadd.f32 %v6161, %v6733
        %v6924 = vadd.f32 %v6166, %v6738
        %v6925 = vadd.f32 %v6169, %v6741
        %v6926 = vadd.f32 %v6174, %v6746
        %v6927 = vadd.f32 %v6177, %v6749
        %v6928 = vadd.f32 %v6182, %v6754
        %v6929 = vadd.f32 %v6185, %v6757
        %v6930 = vadd.f32 %v6190, %v6762
        %v6931 = vadd.f32 %v6193, %v6765
        %v6932 = vadd.f32 %v6198, %v6770
        %v6933 = vadd.f32 %v6201, %v6773
        %v6934 = vadd.f32 %v6206, %v6778
        %v6935 = vadd.f32 %v6209, %v6781
        %v6936 = vadd.f32 %v6214, %v6786
        %v6937 = vadd.f32 %v6217, %v6789
        %v6938 = vadd.f32 %v6222, %v6794
        %v6939 = vadd.f32 %v6225, %v6797
        %v6940 = vadd.f32 %v6230, %v6802
        %v6941 = vadd.f32 %v6233, %v6805
        %v6942 = vadd.f32 %v6238, %v6810
        %v6943 = vadd.f32 %v6241, %v6813
        %v6944 = vld [vmem:[%s999] sm:$0x1]
        %v6946 = vlaneseq
        %v6947 = vshrl.u32 %v6946, 7
        %v6948 = vsub.s32 0, %v6947
        %v6949 = vrot.slane %v6944, %v6948
        %v6951 = vadd.f32 %v6816, %v6949
        %v6952 = vadd.f32 %v6817, %v6949
        %v6953 = vadd.f32 %v6818, %v6949
        %v6954 = vadd.f32 %v6819, %v6949
        %v6955 = vadd.f32 %v6820, %v6949
        %v6956 = vadd.f32 %v6821, %v6949
        %v6957 = vadd.f32 %v6822, %v6949
        %v6958 = vadd.f32 %v6823, %v6949
        %v6959 = vadd.f32 %v6824, %v6949
        %v6960 = vadd.f32 %v6825, %v6949
        %v6961 = vadd.f32 %v6826, %v6949
        %v6962 = vadd.f32 %v6827, %v6949
        %v6963 = vadd.f32 %v6828, %v6949
        %v6964 = vadd.f32 %v6829, %v6949
        %v6965 = vadd.f32 %v6830, %v6949
        %v6966 = vadd.f32 %v6831, %v6949
        %v6967 = vadd.f32 %v6832, %v6949
        %v6968 = vadd.f32 %v6833, %v6949
        %v6969 = vadd.f32 %v6834, %v6949
        %v6970 = vadd.f32 %v6835, %v6949
        %v6971 = vadd.f32 %v6836, %v6949
        %v6972 = vadd.f32 %v6837, %v6949
        %v6973 = vadd.f32 %v6838, %v6949
        %v6974 = vadd.f32 %v6839, %v6949
        %v6975 = vadd.f32 %v6840, %v6949
        %v6976 = vadd.f32 %v6841, %v6949
        %v6977 = vadd.f32 %v6842, %v6949
        %v6978 = vadd.f32 %v6843, %v6949
        %v6979 = vadd.f32 %v6844, %v6949
        %v6980 = vadd.f32 %v6845, %v6949
        %v6981 = vadd.f32 %v6846, %v6949
        %v6982 = vadd.f32 %v6847, %v6949
        %v6983 = vadd.f32 %v6848, %v6949
        %v6984 = vadd.f32 %v6849, %v6949
        %v6985 = vadd.f32 %v6850, %v6949
        %v6986 = vadd.f32 %v6851, %v6949
        %v6987 = vadd.f32 %v6852, %v6949
        %v6988 = vadd.f32 %v6853, %v6949
        %v6989 = vadd.f32 %v6854, %v6949
        %v6990 = vadd.f32 %v6855, %v6949
        %v6991 = vadd.f32 %v6856, %v6949
        %v6992 = vadd.f32 %v6857, %v6949
        %v6993 = vadd.f32 %v6858, %v6949
        %v6994 = vadd.f32 %v6859, %v6949
        %v6995 = vadd.f32 %v6860, %v6949
        %v6996 = vadd.f32 %v6861, %v6949
        %v6997 = vadd.f32 %v6862, %v6949
        %v6998 = vadd.f32 %v6863, %v6949
        %v6999 = vadd.f32 %v6864, %v6949
        %v7000 = vadd.f32 %v6865, %v6949
        %v7001 = vadd.f32 %v6866, %v6949
        %v7002 = vadd.f32 %v6867, %v6949
        %v7003 = vadd.f32 %v6868, %v6949
        %v7004 = vadd.f32 %v6869, %v6949
        %v7005 = vadd.f32 %v6870, %v6949
        %v7006 = vadd.f32 %v6871, %v6949
        %v7007 = vadd.f32 %v6872, %v6949
        %v7008 = vadd.f32 %v6873, %v6949
        %v7009 = vadd.f32 %v6874, %v6949
        %v7010 = vadd.f32 %v6875, %v6949
        %v7011 = vadd.f32 %v6876, %v6949
        %v7012 = vadd.f32 %v6877, %v6949
        %v7013 = vadd.f32 %v6878, %v6949
        %v7014 = vadd.f32 %v6879, %v6949
        %v7015 = vadd.f32 %v6880, %v6949
        %v7016 = vadd.f32 %v6881, %v6949
        %v7017 = vadd.f32 %v6882, %v6949
        %v7018 = vadd.f32 %v6883, %v6949
        %v7019 = vadd.f32 %v6884, %v6949
        %v7020 = vadd.f32 %v6885, %v6949
        %v7021 = vadd.f32 %v6886, %v6949
        %v7022 = vadd.f32 %v6887, %v6949
        %v7023 = vadd.f32 %v6888, %v6949
        %v7024 = vadd.f32 %v6889, %v6949
        %v7025 = vadd.f32 %v6890, %v6949
        %v7026 = vadd.f32 %v6891, %v6949
        %v7027 = vadd.f32 %v6892, %v6949
        %v7028 = vadd.f32 %v6893, %v6949
        %v7029 = vadd.f32 %v6894, %v6949
        %v7030 = vadd.f32 %v6895, %v6949
        %v7031 = vadd.f32 %v6896, %v6949
        %v7032 = vadd.f32 %v6897, %v6949
        %v7033 = vadd.f32 %v6898, %v6949
        %v7034 = vadd.f32 %v6899, %v6949
        %v7035 = vadd.f32 %v6900, %v6949
        %v7036 = vadd.f32 %v6901, %v6949
        %v7037 = vadd.f32 %v6902, %v6949
        %v7038 = vadd.f32 %v6903, %v6949
        %v7039 = vadd.f32 %v6904, %v6949
        %v7040 = vadd.f32 %v6905, %v6949
        %v7041 = vadd.f32 %v6906, %v6949
        %v7042 = vadd.f32 %v6907, %v6949
        %v7043 = vadd.f32 %v6908, %v6949
        %v7044 = vadd.f32 %v6909, %v6949
        %v7045 = vadd.f32 %v6910, %v6949
        %v7046 = vadd.f32 %v6911, %v6949
        %v7047 = vadd.f32 %v6912, %v6949
        %v7048 = vadd.f32 %v6913, %v6949
        %v7049 = vadd.f32 %v6914, %v6949
        %v7050 = vadd.f32 %v6915, %v6949
        %v7051 = vadd.f32 %v6916, %v6949
        %v7052 = vadd.f32 %v6917, %v6949
        %v7053 = vadd.f32 %v6918, %v6949
        %v7054 = vadd.f32 %v6919, %v6949
        %v7055 = vadd.f32 %v6920, %v6949
        %v7056 = vadd.f32 %v6921, %v6949
        %v7057 = vadd.f32 %v6922, %v6949
        %v7058 = vadd.f32 %v6923, %v6949
        %v7059 = vadd.f32 %v6924, %v6949
        %v7060 = vadd.f32 %v6925, %v6949
        %v7061 = vadd.f32 %v6926, %v6949
        %v7062 = vadd.f32 %v6927, %v6949
        %v7063 = vadd.f32 %v6928, %v6949
        %v7064 = vadd.f32 %v6929, %v6949
        %v7065 = vadd.f32 %v6930, %v6949
        %v7066 = vadd.f32 %v6931, %v6949
        %v7067 = vadd.f32 %v6932, %v6949
        %v7068 = vadd.f32 %v6933, %v6949
        %v7069 = vadd.f32 %v6934, %v6949
        %v7070 = vadd.f32 %v6935, %v6949
        %v7071 = vadd.f32 %v6936, %v6949
        %v7072 = vadd.f32 %v6937, %v6949
        %v7073 = vadd.f32 %v6938, %v6949
        %v7074 = vadd.f32 %v6939, %v6949
        %v7075 = vadd.f32 %v6940, %v6949
        %v7076 = vadd.f32 %v6941, %v6949
        %v7077 = vadd.f32 %v6942, %v6949
        %v7078 = vadd.f32 %v6943, %v6949
        %v7079 = vmax.f32 %v6951, 0.0
        %v7080 = vmax.f32 %v6952, 0.0
        %v7081 = vmax.f32 %v6953, 0.0
        %v7082 = vmax.f32 %v6954, 0.0
        %v7083 = vmax.f32 %v6955, 0.0
        %v7084 = vmax.f32 %v6956, 0.0
        %v7085 = vmax.f32 %v6957, 0.0
        %v7086 = vmax.f32 %v6958, 0.0
        %v7087 = vmax.f32 %v6959, 0.0
        %v7088 = vmax.f32 %v6960, 0.0
        %v7089 = vmax.f32 %v6961, 0.0
        %v7090 = vmax.f32 %v6962, 0.0
        %v7091 = vmax.f32 %v6963, 0.0
        %v7092 = vmax.f32 %v6964, 0.0
        %v7093 = vmax.f32 %v6965, 0.0
        %v7094 = vmax.f32 %v6966, 0.0
        %v7095 = vmax.f32 %v6967, 0.0
        %v7096 = vmax.f32 %v6968, 0.0
        %v7097 = vmax.f32 %v6969, 0.0
        %v7098 = vmax.f32 %v6970, 0.0
        %v7099 = vmax.f32 %v6971, 0.0
        %v7100 = vmax.f32 %v6972, 0.0
        %v7101 = vmax.f32 %v6973, 0.0
        %v7102 = vmax.f32 %v6974, 0.0
        %v7103 = vmax.f32 %v6975, 0.0
        %v7104 = vmax.f32 %v6976, 0.0
        %v7105 = vmax.f32 %v6977, 0.0
        %v7106 = vmax.f32 %v6978, 0.0
        %v7107 = vmax.f32 %v6979, 0.0
        %v7108 = vmax.f32 %v6980, 0.0
        %v7109 = vmax.f32 %v6981, 0.0
        %v7110 = vmax.f32 %v6982, 0.0
        %v7111 = vmax.f32 %v6983, 0.0
        %v7112 = vmax.f32 %v6984, 0.0
        %v7113 = vmax.f32 %v6985, 0.0
        %v7114 = vmax.f32 %v6986, 0.0
        %v7115 = vmax.f32 %v6987, 0.0
        %v7116 = vmax.f32 %v6988, 0.0
        %v7117 = vmax.f32 %v6989, 0.0
        %v7118 = vmax.f32 %v6990, 0.0
        %v7119 = vmax.f32 %v6991, 0.0
        %v7120 = vmax.f32 %v6992, 0.0
        %v7121 = vmax.f32 %v6993, 0.0
        %v7122 = vmax.f32 %v6994, 0.0
        %v7123 = vmax.f32 %v6995, 0.0
        %v7124 = vmax.f32 %v6996, 0.0
        %v7125 = vmax.f32 %v6997, 0.0
        %v7126 = vmax.f32 %v6998, 0.0
        %v7127 = vmax.f32 %v6999, 0.0
        %v7128 = vmax.f32 %v7000, 0.0
        %v7129 = vmax.f32 %v7001, 0.0
        %v7130 = vmax.f32 %v7002, 0.0
        %v7131 = vmax.f32 %v7003, 0.0
        %v7132 = vmax.f32 %v7004, 0.0
        %v7133 = vmax.f32 %v7005, 0.0
        %v7134 = vmax.f32 %v7006, 0.0
        %v7135 = vmax.f32 %v7007, 0.0
        %v7136 = vmax.f32 %v7008, 0.0
        %v7137 = vmax.f32 %v7009, 0.0
        %v7138 = vmax.f32 %v7010, 0.0
        %v7139 = vmax.f32 %v7011, 0.0
        %v7140 = vmax.f32 %v7012, 0.0
        %v7141 = vmax.f32 %v7013, 0.0
        %v7142 = vmax.f32 %v7014, 0.0
        %v7143 = vmax.f32 %v7015, 0.0
        %v7144 = vmax.f32 %v7016, 0.0
        %v7145 = vmax.f32 %v7017, 0.0
        %v7146 = vmax.f32 %v7018, 0.0
        %v7147 = vmax.f32 %v7019, 0.0
        %v7148 = vmax.f32 %v7020, 0.0
        %v7149 = vmax.f32 %v7021, 0.0
        %v7150 = vmax.f32 %v7022, 0.0
        %v7151 = vmax.f32 %v7023, 0.0
        %v7152 = vmax.f32 %v7024, 0.0
        %v7153 = vmax.f32 %v7025, 0.0
        %v7154 = vmax.f32 %v7026, 0.0
        %v7155 = vmax.f32 %v7027, 0.0
        %v7156 = vmax.f32 %v7028, 0.0
        %v7157 = vmax.f32 %v7029, 0.0
        %v7158 = vmax.f32 %v7030, 0.0
        %v7159 = vmax.f32 %v7031, 0.0
        %v7160 = vmax.f32 %v7032, 0.0
        %v7161 = vmax.f32 %v7033, 0.0
        %v7162 = vmax.f32 %v7034, 0.0
        %v7163 = vmax.f32 %v7035, 0.0
        %v7164 = vmax.f32 %v7036, 0.0
        %v7165 = vmax.f32 %v7037, 0.0
        %v7166 = vmax.f32 %v7038, 0.0
        %v7167 = vmax.f32 %v7039, 0.0
        %v7168 = vmax.f32 %v7040, 0.0
        %v7169 = vmax.f32 %v7041, 0.0
        %v7170 = vmax.f32 %v7042, 0.0
        %v7171 = vmax.f32 %v7043, 0.0
        %v7172 = vmax.f32 %v7044, 0.0
        %v7173 = vmax.f32 %v7045, 0.0
        %v7174 = vmax.f32 %v7046, 0.0
        %v7175 = vmax.f32 %v7047, 0.0
        %v7176 = vmax.f32 %v7048, 0.0
        %v7177 = vmax.f32 %v7049, 0.0
        %v7178 = vmax.f32 %v7050, 0.0
        %v7179 = vmax.f32 %v7051, 0.0
        %v7180 = vmax.f32 %v7052, 0.0
        %v7181 = vmax.f32 %v7053, 0.0
        %v7182 = vmax.f32 %v7054, 0.0
        %v7183 = vmax.f32 %v7055, 0.0
        %v7184 = vmax.f32 %v7056, 0.0
        %v7185 = vmax.f32 %v7057, 0.0
        %v7186 = vmax.f32 %v7058, 0.0
        %v7187 = vmax.f32 %v7059, 0.0
        %v7188 = vmax.f32 %v7060, 0.0
        %v7189 = vmax.f32 %v7061, 0.0
        %v7190 = vmax.f32 %v7062, 0.0
        %v7191 = vmax.f32 %v7063, 0.0
        %v7192 = vmax.f32 %v7064, 0.0
        %v7193 = vmax.f32 %v7065, 0.0
        %v7194 = vmax.f32 %v7066, 0.0
        %v7195 = vmax.f32 %v7067, 0.0
        %v7196 = vmax.f32 %v7068, 0.0
        %v7197 = vmax.f32 %v7069, 0.0
        %v7198 = vmax.f32 %v7070, 0.0
        %v7199 = vmax.f32 %v7071, 0.0
        %v7200 = vmax.f32 %v7072, 0.0
        %v7201 = vmax.f32 %v7073, 0.0
        %v7202 = vmax.f32 %v7074, 0.0
        %v7203 = vmax.f32 %v7075, 0.0
        %v7204 = vmax.f32 %v7076, 0.0
        %v7205 = vmax.f32 %v7077, 0.0
        %v7206 = vmax.f32 %v7078, 0.0
        %vm7207 = vcmask 523264
        %7208 = vst.msk [vmem:[%s992] sm:$0xff] %vm7207, %v7079
        %7209 = vst.msk [vmem:[%s992 + $0x8] sm:$0xff] %vm7207, %v7080
        %7210 = vst.msk [vmem:[%s992 + $0x10] sm:$0xff] %vm7207, %v7081
        %7211 = vst.msk [vmem:[%s992 + $0x18] sm:$0xff] %vm7207, %v7082
        %7212 = vst.msk [vmem:[%s992 + $0x20] sm:$0xff] %vm7207, %v7083
        %7213 = vst.msk [vmem:[%s992 + $0x28] sm:$0xff] %vm7207, %v7084
        %7214 = vst.msk [vmem:[%s992 + $0x30] sm:$0xff] %vm7207, %v7085
        %7215 = vst.msk [vmem:[%s992 + $0x38] sm:$0xff] %vm7207, %v7086
        %7216 = vst.msk [vmem:[%s992 + $0x40] sm:$0xff] %vm7207, %v7087
        %7217 = vst.msk [vmem:[%s992 + $0x48] sm:$0xff] %vm7207, %v7088
        %7218 = vst.msk [vmem:[%s992 + $0x50] sm:$0xff] %vm7207, %v7089
        %7219 = vst.msk [vmem:[%s992 + $0x58] sm:$0xff] %vm7207, %v7090
        %7220 = vst.msk [vmem:[%s992 + $0x60] sm:$0xff] %vm7207, %v7091
        %7221 = vst.msk [vmem:[%s992 + $0x68] sm:$0xff] %vm7207, %v7092
        %7222 = vst.msk [vmem:[%s992 + $0x70] sm:$0xff] %vm7207, %v7093
        %7223 = vst.msk [vmem:[%s992 + $0x78] sm:$0xff] %vm7207, %v7094
        %7224 = vst.msk [vmem:[%s992 + $0x80] sm:$0xff] %vm7207, %v7095
        %7225 = vst.msk [vmem:[%s992 + $0x88] sm:$0xff] %vm7207, %v7096
        %7226 = vst.msk [vmem:[%s992 + $0x90] sm:$0xff] %vm7207, %v7097
        %7227 = vst.msk [vmem:[%s992 + $0x98] sm:$0xff] %vm7207, %v7098
        %7228 = vst.msk [vmem:[%s992 + $0xa0] sm:$0xff] %vm7207, %v7099
        %7229 = vst.msk [vmem:[%s992 + $0xa8] sm:$0xff] %vm7207, %v7100
        %7230 = vst.msk [vmem:[%s992 + $0xb0] sm:$0xff] %vm7207, %v7101
        %7231 = vst.msk [vmem:[%s992 + $0xb8] sm:$0xff] %vm7207, %v7102
        %7232 = vst.msk [vmem:[%s992 + $0xc0] sm:$0xff] %vm7207, %v7103
        %7233 = vst.msk [vmem:[%s992 + $0xc8] sm:$0xff] %vm7207, %v7104
        %7234 = vst.msk [vmem:[%s992 + $0xd0] sm:$0xff] %vm7207, %v7105
        %7235 = vst.msk [vmem:[%s992 + $0xd8] sm:$0xff] %vm7207, %v7106
        %7236 = vst.msk [vmem:[%s992 + $0xe0] sm:$0xff] %vm7207, %v7107
        %7237 = vst.msk [vmem:[%s992 + $0xe8] sm:$0xff] %vm7207, %v7108
        %7238 = vst.msk [vmem:[%s992 + $0xf0] sm:$0xff] %vm7207, %v7109
        %7239 = vst.msk [vmem:[%s992 + $0xf8] sm:$0xff] %vm7207, %v7110
        %7240 = vst.msk [vmem:[%s992 + $0x100] sm:$0xff] %vm7207, %v7111
        %7241 = vst.msk [vmem:[%s992 + $0x108] sm:$0xff] %vm7207, %v7112
        %7242 = vst.msk [vmem:[%s992 + $0x110] sm:$0xff] %vm7207, %v7113
        %7243 = vst.msk [vmem:[%s992 + $0x118] sm:$0xff] %vm7207, %v7114
        %7244 = vst.msk [vmem:[%s992 + $0x120] sm:$0xff] %vm7207, %v7115
        %7245 = vst.msk [vmem:[%s992 + $0x128] sm:$0xff] %vm7207, %v7116
        %7246 = vst.msk [vmem:[%s992 + $0x130] sm:$0xff] %vm7207, %v7117
        %7247 = vst.msk [vmem:[%s992 + $0x138] sm:$0xff] %vm7207, %v7118
        %7248 = vst.msk [vmem:[%s992 + $0x140] sm:$0xff] %vm7207, %v7119
        %7249 = vst.msk [vmem:[%s992 + $0x148] sm:$0xff] %vm7207, %v7120
        %7250 = vst.msk [vmem:[%s992 + $0x150] sm:$0xff] %vm7207, %v7121
        %7251 = vst.msk [vmem:[%s992 + $0x158] sm:$0xff] %vm7207, %v7122
        %7252 = vst.msk [vmem:[%s992 + $0x160] sm:$0xff] %vm7207, %v7123
        %7253 = vst.msk [vmem:[%s992 + $0x168] sm:$0xff] %vm7207, %v7124
        %7254 = vst.msk [vmem:[%s992 + $0x170] sm:$0xff] %vm7207, %v7125
        %7255 = vst.msk [vmem:[%s992 + $0x178] sm:$0xff] %vm7207, %v7126
        %7256 = vst.msk [vmem:[%s992 + $0x180] sm:$0xff] %vm7207, %v7127
        %7257 = vst.msk [vmem:[%s992 + $0x188] sm:$0xff] %vm7207, %v7128
        %7258 = vst.msk [vmem:[%s992 + $0x190] sm:$0xff] %vm7207, %v7129
        %7259 = vst.msk [vmem:[%s992 + $0x198] sm:$0xff] %vm7207, %v7130
        %7260 = vst.msk [vmem:[%s992 + $0x1a0] sm:$0xff] %vm7207, %v7131
        %7261 = vst.msk [vmem:[%s992 + $0x1a8] sm:$0xff] %vm7207, %v7132
        %7262 = vst.msk [vmem:[%s992 + $0x1b0] sm:$0xff] %vm7207, %v7133
        %7263 = vst.msk [vmem:[%s992 + $0x1b8] sm:$0xff] %vm7207, %v7134
        %7264 = vst.msk [vmem:[%s992 + $0x1c0] sm:$0xff] %vm7207, %v7135
        %7265 = vst.msk [vmem:[%s992 + $0x1c8] sm:$0xff] %vm7207, %v7136
        %7266 = vst.msk [vmem:[%s992 + $0x1d0] sm:$0xff] %vm7207, %v7137
        %7267 = vst.msk [vmem:[%s992 + $0x1d8] sm:$0xff] %vm7207, %v7138
        %7268 = vst.msk [vmem:[%s992 + $0x1e0] sm:$0xff] %vm7207, %v7139
        %7269 = vst.msk [vmem:[%s992 + $0x1e8] sm:$0xff] %vm7207, %v7140
        %7270 = vst.msk [vmem:[%s992 + $0x1f0] sm:$0xff] %vm7207, %v7141
        %7271 = vst.msk [vmem:[%s992 + $0x1f8] sm:$0xff] %vm7207, %v7142
        %7272 = vst.msk [vmem:[%s992 + $0x200] sm:$0xff] %vm7207, %v7143
        %7273 = vst.msk [vmem:[%s992 + $0x208] sm:$0xff] %vm7207, %v7144
        %7274 = vst.msk [vmem:[%s992 + $0x210] sm:$0xff] %vm7207, %v7145
        %7275 = vst.msk [vmem:[%s992 + $0x218] sm:$0xff] %vm7207, %v7146
        %7276 = vst.msk [vmem:[%s992 + $0x220] sm:$0xff] %vm7207, %v7147
        %7277 = vst.msk [vmem:[%s992 + $0x228] sm:$0xff] %vm7207, %v7148
        %7278 = vst.msk [vmem:[%s992 + $0x230] sm:$0xff] %vm7207, %v7149
        %7279 = vst.msk [vmem:[%s992 + $0x238] sm:$0xff] %vm7207, %v7150
        %7280 = vst.msk [vmem:[%s992 + $0x240] sm:$0xff] %vm7207, %v7151
        %7281 = vst.msk [vmem:[%s992 + $0x248] sm:$0xff] %vm7207, %v7152
        %7282 = vst.msk [vmem:[%s992 + $0x250] sm:$0xff] %vm7207, %v7153
        %7283 = vst.msk [vmem:[%s992 + $0x258] sm:$0xff] %vm7207, %v7154
        %7284 = vst.msk [vmem:[%s992 + $0x260] sm:$0xff] %vm7207, %v7155
        %7285 = vst.msk [vmem:[%s992 + $0x268] sm:$0xff] %vm7207, %v7156
        %7286 = vst.msk [vmem:[%s992 + $0x270] sm:$0xff] %vm7207, %v7157
        %7287 = vst.msk [vmem:[%s992 + $0x278] sm:$0xff] %vm7207, %v7158
        %7288 = vst.msk [vmem:[%s992 + $0x280] sm:$0xff] %vm7207, %v7159
        %7289 = vst.msk [vmem:[%s992 + $0x288] sm:$0xff] %vm7207, %v7160
        %7290 = vst.msk [vmem:[%s992 + $0x290] sm:$0xff] %vm7207, %v7161
        %7291 = vst.msk [vmem:[%s992 + $0x298] sm:$0xff] %vm7207, %v7162
        %7292 = vst.msk [vmem:[%s992 + $0x2a0] sm:$0xff] %vm7207, %v7163
        %7293 = vst.msk [vmem:[%s992 + $0x2a8] sm:$0xff] %vm7207, %v7164
        %7294 = vst.msk [vmem:[%s992 + $0x2b0] sm:$0xff] %vm7207, %v7165
        %7295 = vst.msk [vmem:[%s992 + $0x2b8] sm:$0xff] %vm7207, %v7166
        %7296 = vst.msk [vmem:[%s992 + $0x2c0] sm:$0xff] %vm7207, %v7167
        %7297 = vst.msk [vmem:[%s992 + $0x2c8] sm:$0xff] %vm7207, %v7168
        %7298 = vst.msk [vmem:[%s992 + $0x2d0] sm:$0xff] %vm7207, %v7169
        %7299 = vst.msk [vmem:[%s992 + $0x2d8] sm:$0xff] %vm7207, %v7170
        %7300 = vst.msk [vmem:[%s992 + $0x2e0] sm:$0xff] %vm7207, %v7171
        %7301 = vst.msk [vmem:[%s992 + $0x2e8] sm:$0xff] %vm7207, %v7172
        %7302 = vst.msk [vmem:[%s992 + $0x2f0] sm:$0xff] %vm7207, %v7173
        %7303 = vst.msk [vmem:[%s992 + $0x2f8] sm:$0xff] %vm7207, %v7174
        %7304 = vst.msk [vmem:[%s992 + $0x300] sm:$0xff] %vm7207, %v7175
        %7305 = vst.msk [vmem:[%s992 + $0x308] sm:$0xff] %vm7207, %v7176
        %7306 = vst.msk [vmem:[%s992 + $0x310] sm:$0xff] %vm7207, %v7177
        %7307 = vst.msk [vmem:[%s992 + $0x318] sm:$0xff] %vm7207, %v7178
        %7308 = vst.msk [vmem:[%s992 + $0x320] sm:$0xff] %vm7207, %v7179
        %7309 = vst.msk [vmem:[%s992 + $0x328] sm:$0xff] %vm7207, %v7180
        %7310 = vst.msk [vmem:[%s992 + $0x330] sm:$0xff] %vm7207, %v7181
        %7311 = vst.msk [vmem:[%s992 + $0x338] sm:$0xff] %vm7207, %v7182
        %7312 = vst.msk [vmem:[%s992 + $0x340] sm:$0xff] %vm7207, %v7183
        %7313 = vst.msk [vmem:[%s992 + $0x348] sm:$0xff] %vm7207, %v7184
        %7314 = vst.msk [vmem:[%s992 + $0x350] sm:$0xff] %vm7207, %v7185
        %7315 = vst.msk [vmem:[%s992 + $0x358] sm:$0xff] %vm7207, %v7186
        %7316 = vst.msk [vmem:[%s992 + $0x360] sm:$0xff] %vm7207, %v7187
        %7317 = vst.msk [vmem:[%s992 + $0x368] sm:$0xff] %vm7207, %v7188
        %7318 = vst.msk [vmem:[%s992 + $0x370] sm:$0xff] %vm7207, %v7189
        %7319 = vst.msk [vmem:[%s992 + $0x378] sm:$0xff] %vm7207, %v7190
        %7320 = vst.msk [vmem:[%s992 + $0x380] sm:$0xff] %vm7207, %v7191
        %7321 = vst.msk [vmem:[%s992 + $0x388] sm:$0xff] %vm7207, %v7192
        %7322 = vst.msk [vmem:[%s992 + $0x390] sm:$0xff] %vm7207, %v7193
        %7323 = vst.msk [vmem:[%s992 + $0x398] sm:$0xff] %vm7207, %v7194
        %7324 = vst.msk [vmem:[%s992 + $0x3a0] sm:$0xff] %vm7207, %v7195
        %7325 = vst.msk [vmem:[%s992 + $0x3a8] sm:$0xff] %vm7207, %v7196
        %7326 = vst.msk [vmem:[%s992 + $0x3b0] sm:$0xff] %vm7207, %v7197
        %7327 = vst.msk [vmem:[%s992 + $0x3b8] sm:$0xff] %vm7207, %v7198
        %7328 = vst.msk [vmem:[%s992 + $0x3c0] sm:$0xff] %vm7207, %v7199
        %7329 = vst.msk [vmem:[%s992 + $0x3c8] sm:$0xff] %vm7207, %v7200
        %7330 = vst.msk [vmem:[%s992 + $0x3d0] sm:$0xff] %vm7207, %v7201
        %7331 = vst.msk [vmem:[%s992 + $0x3d8] sm:$0xff] %vm7207, %v7202
        %7332 = vst.msk [vmem:[%s992 + $0x3e0] sm:$0xff] %vm7207, %v7203
        %7333 = vst.msk [vmem:[%s992 + $0x3e8] sm:$0xff] %vm7207, %v7204
        %7334 = vst.msk [vmem:[%s992 + $0x3f0] sm:$0xff] %vm7207, %v7205
        %7335 = vst.msk [vmem:[%s992 + $0x3f8] sm:$0xff] %vm7207, %v7206
        %s7336 = sand.u32 %s184, 1
        %s7337 = sand.u32 %s184, 1
        %s7338 = smul.addr %s7337, 1024
        %s7339 = scalar_lea.vmem [#allocation5], %s7338
        // Predicated region
        $region155: #{tpu_custom_call.1} parent=141 // pred_check
          %p7340 = pneg %p194
        $region156: #{tpu_custom_call.1} parent=141 // pred_check_branch
          %7342 = sbr.rel (%p7340) target = $region158
        $region157: #{tpu_custom_call.1} parent=141 // pred_region
          %s7343 = smul.u32 64, %s21
          %s7344 = sadd.s32 %s20, %s7343
          %s7345 = smul.addr %s7344, 8
          %s7346 = scalar_lea.vmem %s5, %s7345
          // Predicated region
          $region159: #{tpu_custom_call.1} parent=157 // pred_check
            _
          $region160: #{tpu_custom_call.1} parent=157 // pred_check_branch
            %7348 = sbr.rel (0) target = $region162
          $region161: #{tpu_custom_call.1} parent=157 // pred_region
            // Predicated region
            $region163: #{tpu_custom_call.1} parent=161 // pred_check
              _
            $region164: #{tpu_custom_call.1} parent=161 // pred_check_branch
              %7350 = sbr.rel (0) target = $region166
            $region165: #{tpu_custom_call.1} parent=161 // pred_region
              // Predicated region
              $region178: #{tpu_custom_call.1} parent=165 // pred_check
                _
              $region179: #{tpu_custom_call.1} parent=165 // pred_check_branch
                %7620 = sbr.rel (0) target = $region181
              $region180: #{tpu_custom_call.1} parent=165 // pred_region
                loop: start=0, step=1, limit=1
                $region182: #{tpu_custom_call.1} parent=180 // loop_pre_header
                  _
                $region183: #{tpu_custom_call.1} parent=180 // loop_header
                  %s7622 = sphi 0, %s7626
                  %p7623 = scmp.ge.s32.totalorder %s7622, 1
                  %s7627 = sphi %s7339, %s7339
                  %s7628 = sphi %s7346, %s7346
                $region184: #{tpu_custom_call.1} parent=180 // loop_header_branch
                  %7625 = sbr.rel (%p7623) target = $region188
                $region185: #{tpu_custom_call.1} parent=180 // loop_body
                  %v7629 = vld [vmem:[%s7627] sm:$0xff]
                  %7630 = vst [vmem:[%s7628] sm:$0xff] %v7629
                  %v7631 = vld [vmem:[%s7627 + $0x8] sm:$0xff]
                  %7632 = vst [vmem:[%s7628 + $0x8] sm:$0xff] %v7631
                  %v7633 = vld [vmem:[%s7627 + $0x10] sm:$0xff]
                  %7634 = vst [vmem:[%s7628 + $0x10] sm:$0xff] %v7633
                  %v7635 = vld [vmem:[%s7627 + $0x18] sm:$0xff]
                  %7636 = vst [vmem:[%s7628 + $0x18] sm:$0xff] %v7635
                  %v7637 = vld [vmem:[%s7627 + $0x20] sm:$0xff]
                  %7638 = vst [vmem:[%s7628 + $0x20] sm:$0xff] %v7637
                  %v7639 = vld [vmem:[%s7627 + $0x28] sm:$0xff]
                  %7640 = vst [vmem:[%s7628 + $0x28] sm:$0xff] %v7639
                  %v7641 = vld [vmem:[%s7627 + $0x30] sm:$0xff]
                  %7642 = vst [vmem:[%s7628 + $0x30] sm:$0xff] %v7641
                  %v7643 = vld [vmem:[%s7627 + $0x38] sm:$0xff]
                  %7644 = vst [vmem:[%s7628 + $0x38] sm:$0xff] %v7643
                  %v7645 = vld [vmem:[%s7627 + $0x40] sm:$0xff]
                  %7646 = vst [vmem:[%s7628 + $0x40] sm:$0xff] %v7645
                  %v7647 = vld [vmem:[%s7627 + $0x48] sm:$0xff]
                  %7648 = vst [vmem:[%s7628 + $0x48] sm:$0xff] %v7647
                  %v7649 = vld [vmem:[%s7627 + $0x50] sm:$0xff]
                  %7650 = vst [vmem:[%s7628 + $0x50] sm:$0xff] %v7649
                  %v7651 = vld [vmem:[%s7627 + $0x58] sm:$0xff]
                  %7652 = vst [vmem:[%s7628 + $0x58] sm:$0xff] %v7651
                  %v7653 = vld [vmem:[%s7627 + $0x60] sm:$0xff]
                  %7654 = vst [vmem:[%s7628 + $0x60] sm:$0xff] %v7653
                  %v7655 = vld [vmem:[%s7627 + $0x68] sm:$0xff]
                  %7656 = vst [vmem:[%s7628 + $0x68] sm:$0xff] %v7655
                  %v7657 = vld [vmem:[%s7627 + $0x70] sm:$0xff]
                  %7658 = vst [vmem:[%s7628 + $0x70] sm:$0xff] %v7657
                  %v7659 = vld [vmem:[%s7627 + $0x78] sm:$0xff]
                  %7660 = vst [vmem:[%s7628 + $0x78] sm:$0xff] %v7659
                  %v7661 = vld [vmem:[%s7627 + $0x80] sm:$0xff]
                  %7662 = vst [vmem:[%s7628 + $0x80] sm:$0xff] %v7661
                  %v7663 = vld [vmem:[%s7627 + $0x88] sm:$0xff]
                  %7664 = vst [vmem:[%s7628 + $0x88] sm:$0xff] %v7663
                  %v7665 = vld [vmem:[%s7627 + $0x90] sm:$0xff]
                  %7666 = vst [vmem:[%s7628 + $0x90] sm:$0xff] %v7665
                  %v7667 = vld [vmem:[%s7627 + $0x98] sm:$0xff]
                  %7668 = vst [vmem:[%s7628 + $0x98] sm:$0xff] %v7667
                  %v7669 = vld [vmem:[%s7627 + $0xa0] sm:$0xff]
                  %7670 = vst [vmem:[%s7628 + $0xa0] sm:$0xff] %v7669
                  %v7671 = vld [vmem:[%s7627 + $0xa8] sm:$0xff]
                  %7672 = vst [vmem:[%s7628 + $0xa8] sm:$0xff] %v7671
                  %v7673 = vld [vmem:[%s7627 + $0xb0] sm:$0xff]
                  %7674 = vst [vmem:[%s7628 + $0xb0] sm:$0xff] %v7673
                  %v7675 = vld [vmem:[%s7627 + $0xb8] sm:$0xff]
                  %7676 = vst [vmem:[%s7628 + $0xb8] sm:$0xff] %v7675
                  %v7677 = vld [vmem:[%s7627 + $0xc0] sm:$0xff]
                  %7678 = vst [vmem:[%s7628 + $0xc0] sm:$0xff] %v7677
                  %v7679 = vld [vmem:[%s7627 + $0xc8] sm:$0xff]
                  %7680 = vst [vmem:[%s7628 + $0xc8] sm:$0xff] %v7679
                  %v7681 = vld [vmem:[%s7627 + $0xd0] sm:$0xff]
                  %7682 = vst [vmem:[%s7628 + $0xd0] sm:$0xff] %v7681
                  %v7683 = vld [vmem:[%s7627 + $0xd8] sm:$0xff]
                  %7684 = vst [vmem:[%s7628 + $0xd8] sm:$0xff] %v7683
                  %v7685 = vld [vmem:[%s7627 + $0xe0] sm:$0xff]
                  %7686 = vst [vmem:[%s7628 + $0xe0] sm:$0xff] %v7685
                  %v7687 = vld [vmem:[%s7627 + $0xe8] sm:$0xff]
                  %7688 = vst [vmem:[%s7628 + $0xe8] sm:$0xff] %v7687
                  %v7689 = vld [vmem:[%s7627 + $0xf0] sm:$0xff]
                  %7690 = vst [vmem:[%s7628 + $0xf0] sm:$0xff] %v7689
                  %v7691 = vld [vmem:[%s7627 + $0xf8] sm:$0xff]
                  %7692 = vst [vmem:[%s7628 + $0xf8] sm:$0xff] %v7691
                  %v7693 = vld [vmem:[%s7627 + $0x100] sm:$0xff]
                  %7694 = vst [vmem:[%s7628 + $0x100] sm:$0xff] %v7693
                  %v7695 = vld [vmem:[%s7627 + $0x108] sm:$0xff]
                  %7696 = vst [vmem:[%s7628 + $0x108] sm:$0xff] %v7695
                  %v7697 = vld [vmem:[%s7627 + $0x110] sm:$0xff]
                  %7698 = vst [vmem:[%s7628 + $0x110] sm:$0xff] %v7697
                  %v7699 = vld [vmem:[%s7627 + $0x118] sm:$0xff]
                  %7700 = vst [vmem:[%s7628 + $0x118] sm:$0xff] %v7699
                  %v7701 = vld [vmem:[%s7627 + $0x120] sm:$0xff]
                  %7702 = vst [vmem:[%s7628 + $0x120] sm:$0xff] %v7701
                  %v7703 = vld [vmem:[%s7627 + $0x128] sm:$0xff]
                  %7704 = vst [vmem:[%s7628 + $0x128] sm:$0xff] %v7703
                  %v7705 = vld [vmem:[%s7627 + $0x130] sm:$0xff]
                  %7706 = vst [vmem:[%s7628 + $0x130] sm:$0xff] %v7705
                  %v7707 = vld [vmem:[%s7627 + $0x138] sm:$0xff]
                  %7708 = vst [vmem:[%s7628 + $0x138] sm:$0xff] %v7707
                  %v7709 = vld [vmem:[%s7627 + $0x140] sm:$0xff]
                  %7710 = vst [vmem:[%s7628 + $0x140] sm:$0xff] %v7709
                  %v7711 = vld [vmem:[%s7627 + $0x148] sm:$0xff]
                  %7712 = vst [vmem:[%s7628 + $0x148] sm:$0xff] %v7711
                  %v7713 = vld [vmem:[%s7627 + $0x150] sm:$0xff]
                  %7714 = vst [vmem:[%s7628 + $0x150] sm:$0xff] %v7713
                  %v7715 = vld [vmem:[%s7627 + $0x158] sm:$0xff]
                  %7716 = vst [vmem:[%s7628 + $0x158] sm:$0xff] %v7715
                  %v7717 = vld [vmem:[%s7627 + $0x160] sm:$0xff]
                  %7718 = vst [vmem:[%s7628 + $0x160] sm:$0xff] %v7717
                  %v7719 = vld [vmem:[%s7627 + $0x168] sm:$0xff]
                  %7720 = vst [vmem:[%s7628 + $0x168] sm:$0xff] %v7719
                  %v7721 = vld [vmem:[%s7627 + $0x170] sm:$0xff]
                  %7722 = vst [vmem:[%s7628 + $0x170] sm:$0xff] %v7721
                  %v7723 = vld [vmem:[%s7627 + $0x178] sm:$0xff]
                  %7724 = vst [vmem:[%s7628 + $0x178] sm:$0xff] %v7723
                  %v7725 = vld [vmem:[%s7627 + $0x180] sm:$0xff]
                  %7726 = vst [vmem:[%s7628 + $0x180] sm:$0xff] %v7725
                  %v7727 = vld [vmem:[%s7627 + $0x188] sm:$0xff]
                  %7728 = vst [vmem:[%s7628 + $0x188] sm:$0xff] %v7727
                  %v7729 = vld [vmem:[%s7627 + $0x190] sm:$0xff]
                  %7730 = vst [vmem:[%s7628 + $0x190] sm:$0xff] %v7729
                  %v7731 = vld [vmem:[%s7627 + $0x198] sm:$0xff]
                  %7732 = vst [vmem:[%s7628 + $0x198] sm:$0xff] %v7731
                  %v7733 = vld [vmem:[%s7627 + $0x1a0] sm:$0xff]
                  %7734 = vst [vmem:[%s7628 + $0x1a0] sm:$0xff] %v7733
                  %v7735 = vld [vmem:[%s7627 + $0x1a8] sm:$0xff]
                  %7736 = vst [vmem:[%s7628 + $0x1a8] sm:$0xff] %v7735
                  %v7737 = vld [vmem:[%s7627 + $0x1b0] sm:$0xff]
                  %7738 = vst [vmem:[%s7628 + $0x1b0] sm:$0xff] %v7737
                  %v7739 = vld [vmem:[%s7627 + $0x1b8] sm:$0xff]
                  %7740 = vst [vmem:[%s7628 + $0x1b8] sm:$0xff] %v7739
                  %v7741 = vld [vmem:[%s7627 + $0x1c0] sm:$0xff]
                  %7742 = vst [vmem:[%s7628 + $0x1c0] sm:$0xff] %v7741
                  %v7743 = vld [vmem:[%s7627 + $0x1c8] sm:$0xff]
                  %7744 = vst [vmem:[%s7628 + $0x1c8] sm:$0xff] %v7743
                  %v7745 = vld [vmem:[%s7627 + $0x1d0] sm:$0xff]
                  %7746 = vst [vmem:[%s7628 + $0x1d0] sm:$0xff] %v7745
                  %v7747 = vld [vmem:[%s7627 + $0x1d8] sm:$0xff]
                  %7748 = vst [vmem:[%s7628 + $0x1d8] sm:$0xff] %v7747
                  %v7749 = vld [vmem:[%s7627 + $0x1e0] sm:$0xff]
                  %7750 = vst [vmem:[%s7628 + $0x1e0] sm:$0xff] %v7749
                  %v7751 = vld [vmem:[%s7627 + $0x1e8] sm:$0xff]
                  %7752 = vst [vmem:[%s7628 + $0x1e8] sm:$0xff] %v7751
                  %v7753 = vld [vmem:[%s7627 + $0x1f0] sm:$0xff]
                  %7754 = vst [vmem:[%s7628 + $0x1f0] sm:$0xff] %v7753
                  %v7755 = vld [vmem:[%s7627 + $0x1f8] sm:$0xff]
                  %7756 = vst [vmem:[%s7628 + $0x1f8] sm:$0xff] %v7755
                  %v7757 = vld [vmem:[%s7627 + $0x200] sm:$0xff]
                  %7758 = vst [vmem:[%s7628 + $0x400] sm:$0xff] %v7757
                  %v7759 = vld [vmem:[%s7627 + $0x208] sm:$0xff]
                  %7760 = vst [vmem:[%s7628 + $0x408] sm:$0xff] %v7759
                  %v7761 = vld [vmem:[%s7627 + $0x210] sm:$0xff]
                  %7762 = vst [vmem:[%s7628 + $0x410] sm:$0xff] %v7761
                  %v7763 = vld [vmem:[%s7627 + $0x218] sm:$0xff]
                  %7764 = vst [vmem:[%s7628 + $0x418] sm:$0xff] %v7763
                  %v7765 = vld [vmem:[%s7627 + $0x220] sm:$0xff]
                  %7766 = vst [vmem:[%s7628 + $0x420] sm:$0xff] %v7765
                  %v7767 = vld [vmem:[%s7627 + $0x228] sm:$0xff]
                  %7768 = vst [vmem:[%s7628 + $0x428] sm:$0xff] %v7767
                  %v7769 = vld [vmem:[%s7627 + $0x230] sm:$0xff]
                  %7770 = vst [vmem:[%s7628 + $0x430] sm:$0xff] %v7769
                  %v7771 = vld [vmem:[%s7627 + $0x238] sm:$0xff]
                  %7772 = vst [vmem:[%s7628 + $0x438] sm:$0xff] %v7771
                  %v7773 = vld [vmem:[%s7627 + $0x240] sm:$0xff]
                  %7774 = vst [vmem:[%s7628 + $0x440] sm:$0xff] %v7773
                  %v7775 = vld [vmem:[%s7627 + $0x248] sm:$0xff]
                  %7776 = vst [vmem:[%s7628 + $0x448] sm:$0xff] %v7775
                  %v7777 = vld [vmem:[%s7627 + $0x250] sm:$0xff]
                  %7778 = vst [vmem:[%s7628 + $0x450] sm:$0xff] %v7777
                  %v7779 = vld [vmem:[%s7627 + $0x258] sm:$0xff]
                  %7780 = vst [vmem:[%s7628 + $0x458] sm:$0xff] %v7779
                  %v7781 = vld [vmem:[%s7627 + $0x260] sm:$0xff]
                  %7782 = vst [vmem:[%s7628 + $0x460] sm:$0xff] %v7781
                  %v7783 = vld [vmem:[%s7627 + $0x268] sm:$0xff]
                  %7784 = vst [vmem:[%s7628 + $0x468] sm:$0xff] %v7783
                  %v7785 = vld [vmem:[%s7627 + $0x270] sm:$0xff]
                  %7786 = vst [vmem:[%s7628 + $0x470] sm:$0xff] %v7785
                  %v7787 = vld [vmem:[%s7627 + $0x278] sm:$0xff]
                  %7788 = vst [vmem:[%s7628 + $0x478] sm:$0xff] %v7787
                  %v7789 = vld [vmem:[%s7627 + $0x280] sm:$0xff]
                  %7790 = vst [vmem:[%s7628 + $0x480] sm:$0xff] %v7789
                  %v7791 = vld [vmem:[%s7627 + $0x288] sm:$0xff]
                  %7792 = vst [vmem:[%s7628 + $0x488] sm:$0xff] %v7791
                  %v7793 = vld [vmem:[%s7627 + $0x290] sm:$0xff]
                  %7794 = vst [vmem:[%s7628 + $0x490] sm:$0xff] %v7793
                  %v7795 = vld [vmem:[%s7627 + $0x298] sm:$0xff]
                  %7796 = vst [vmem:[%s7628 + $0x498] sm:$0xff] %v7795
                  %v7797 = vld [vmem:[%s7627 + $0x2a0] sm:$0xff]
                  %7798 = vst [vmem:[%s7628 + $0x4a0] sm:$0xff] %v7797
                  %v7799 = vld [vmem:[%s7627 + $0x2a8] sm:$0xff]
                  %7800 = vst [vmem:[%s7628 + $0x4a8] sm:$0xff] %v7799
                  %v7801 = vld [vmem:[%s7627 + $0x2b0] sm:$0xff]
                  %7802 = vst [vmem:[%s7628 + $0x4b0] sm:$0xff] %v7801
                  %v7803 = vld [vmem:[%s7627 + $0x2b8] sm:$0xff]
                  %7804 = vst [vmem:[%s7628 + $0x4b8] sm:$0xff] %v7803
                  %v7805 = vld [vmem:[%s7627 + $0x2c0] sm:$0xff]
                  %7806 = vst [vmem:[%s7628 + $0x4c0] sm:$0xff] %v7805
                  %v7807 = vld [vmem:[%s7627 + $0x2c8] sm:$0xff]
                  %7808 = vst [vmem:[%s7628 + $0x4c8] sm:$0xff] %v7807
                  %v7809 = vld [vmem:[%s7627 + $0x2d0] sm:$0xff]
                  %7810 = vst [vmem:[%s7628 + $0x4d0] sm:$0xff] %v7809
                  %v7811 = vld [vmem:[%s7627 + $0x2d8] sm:$0xff]
                  %7812 = vst [vmem:[%s7628 + $0x4d8] sm:$0xff] %v7811
                  %v7813 = vld [vmem:[%s7627 + $0x2e0] sm:$0xff]
                  %7814 = vst [vmem:[%s7628 + $0x4e0] sm:$0xff] %v7813
                  %v7815 = vld [vmem:[%s7627 + $0x2e8] sm:$0xff]
                  %7816 = vst [vmem:[%s7628 + $0x4e8] sm:$0xff] %v7815
                  %v7817 = vld [vmem:[%s7627 + $0x2f0] sm:$0xff]
                  %7818 = vst [vmem:[%s7628 + $0x4f0] sm:$0xff] %v7817
                  %v7819 = vld [vmem:[%s7627 + $0x2f8] sm:$0xff]
                  %7820 = vst [vmem:[%s7628 + $0x4f8] sm:$0xff] %v7819
                  %v7821 = vld [vmem:[%s7627 + $0x300] sm:$0xff]
                  %7822 = vst [vmem:[%s7628 + $0x500] sm:$0xff] %v7821
                  %v7823 = vld [vmem:[%s7627 + $0x308] sm:$0xff]
                  %7824 = vst [vmem:[%s7628 + $0x508] sm:$0xff] %v7823
                  %v7825 = vld [vmem:[%s7627 + $0x310] sm:$0xff]
                  %7826 = vst [vmem:[%s7628 + $0x510] sm:$0xff] %v7825
                  %v7827 = vld [vmem:[%s7627 + $0x318] sm:$0xff]
                  %7828 = vst [vmem:[%s7628 + $0x518] sm:$0xff] %v7827
                  %v7829 = vld [vmem:[%s7627 + $0x320] sm:$0xff]
                  %7830 = vst [vmem:[%s7628 + $0x520] sm:$0xff] %v7829
                  %v7831 = vld [vmem:[%s7627 + $0x328] sm:$0xff]
                  %7832 = vst [vmem:[%s7628 + $0x528] sm:$0xff] %v7831
                  %v7833 = vld [vmem:[%s7627 + $0x330] sm:$0xff]
                  %7834 = vst [vmem:[%s7628 + $0x530] sm:$0xff] %v7833
                  %v7835 = vld [vmem:[%s7627 + $0x338] sm:$0xff]
                  %7836 = vst [vmem:[%s7628 + $0x538] sm:$0xff] %v7835
                  %v7837 = vld [vmem:[%s7627 + $0x340] sm:$0xff]
                  %7838 = vst [vmem:[%s7628 + $0x540] sm:$0xff] %v7837
                  %v7839 = vld [vmem:[%s7627 + $0x348] sm:$0xff]
                  %7840 = vst [vmem:[%s7628 + $0x548] sm:$0xff] %v7839
                  %v7841 = vld [vmem:[%s7627 + $0x350] sm:$0xff]
                  %7842 = vst [vmem:[%s7628 + $0x550] sm:$0xff] %v7841
                  %v7843 = vld [vmem:[%s7627 + $0x358] sm:$0xff]
                  %7844 = vst [vmem:[%s7628 + $0x558] sm:$0xff] %v7843
                  %v7845 = vld [vmem:[%s7627 + $0x360] sm:$0xff]
                  %7846 = vst [vmem:[%s7628 + $0x560] sm:$0xff] %v7845
                  %v7847 = vld [vmem:[%s7627 + $0x368] sm:$0xff]
                  %7848 = vst [vmem:[%s7628 + $0x568] sm:$0xff] %v7847
                  %v7849 = vld [vmem:[%s7627 + $0x370] sm:$0xff]
                  %7850 = vst [vmem:[%s7628 + $0x570] sm:$0xff] %v7849
                  %v7851 = vld [vmem:[%s7627 + $0x378] sm:$0xff]
                  %7852 = vst [vmem:[%s7628 + $0x578] sm:$0xff] %v7851
                  %v7853 = vld [vmem:[%s7627 + $0x380] sm:$0xff]
                  %7854 = vst [vmem:[%s7628 + $0x580] sm:$0xff] %v7853
                  %v7855 = vld [vmem:[%s7627 + $0x388] sm:$0xff]
                  %7856 = vst [vmem:[%s7628 + $0x588] sm:$0xff] %v7855
                  %v7857 = vld [vmem:[%s7627 + $0x390] sm:$0xff]
                  %7858 = vst [vmem:[%s7628 + $0x590] sm:$0xff] %v7857
                  %v7859 = vld [vmem:[%s7627 + $0x398] sm:$0xff]
                  %7860 = vst [vmem:[%s7628 + $0x598] sm:$0xff] %v7859
                  %v7861 = vld [vmem:[%s7627 + $0x3a0] sm:$0xff]
                  %7862 = vst [vmem:[%s7628 + $0x5a0] sm:$0xff] %v7861
                  %v7863 = vld [vmem:[%s7627 + $0x3a8] sm:$0xff]
                  %7864 = vst [vmem:[%s7628 + $0x5a8] sm:$0xff] %v7863
                  %v7865 = vld [vmem:[%s7627 + $0x3b0] sm:$0xff]
                  %7866 = vst [vmem:[%s7628 + $0x5b0] sm:$0xff] %v7865
                  %v7867 = vld [vmem:[%s7627 + $0x3b8] sm:$0xff]
                  %7868 = vst [vmem:[%s7628 + $0x5b8] sm:$0xff] %v7867
                  %v7869 = vld [vmem:[%s7627 + $0x3c0] sm:$0xff]
                  %7870 = vst [vmem:[%s7628 + $0x5c0] sm:$0xff] %v7869
                  %v7871 = vld [vmem:[%s7627 + $0x3c8] sm:$0xff]
                  %7872 = vst [vmem:[%s7628 + $0x5c8] sm:$0xff] %v7871
                  %v7873 = vld [vmem:[%s7627 + $0x3d0] sm:$0xff]
                  %7874 = vst [vmem:[%s7628 + $0x5d0] sm:$0xff] %v7873
                  %v7875 = vld [vmem:[%s7627 + $0x3d8] sm:$0xff]
                  %7876 = vst [vmem:[%s7628 + $0x5d8] sm:$0xff] %v7875
                  %v7877 = vld [vmem:[%s7627 + $0x3e0] sm:$0xff]
                  %7878 = vst [vmem:[%s7628 + $0x5e0] sm:$0xff] %v7877
                  %v7879 = vld [vmem:[%s7627 + $0x3e8] sm:$0xff]
                  %7880 = vst [vmem:[%s7628 + $0x5e8] sm:$0xff] %v7879
                  %v7881 = vld [vmem:[%s7627 + $0x3f0] sm:$0xff]
                  %7882 = vst [vmem:[%s7628 + $0x5f0] sm:$0xff] %v7881
                  %v7883 = vld [vmem:[%s7627 + $0x3f8] sm:$0xff]
                  %7884 = vst [vmem:[%s7628 + $0x5f8] sm:$0xff] %v7883
                $region186: #{tpu_custom_call.1} parent=180 // loop_footer
                  %s7626 = sadd.s32 1, %s7622
                $region187: #{tpu_custom_call.1} parent=180 // loop_footer_branch
                  %7621 = sbr.rel target = $region183
                $region188: #{tpu_custom_call.1} parent=180 // loop_exit
                  _
              $region181: #{tpu_custom_call.1} parent=165 // pred_fallthru
                _
              // Predicated region
              $region189: #{tpu_custom_call.1} parent=165 // pred_check
                _
              $region190: #{tpu_custom_call.1} parent=165 // pred_check_branch
                %7886 = sbr.rel target = $region192
              $region191: #{tpu_custom_call.1} parent=165 // pred_region
                _
              $region192: #{tpu_custom_call.1} parent=165 // pred_fallthru
                _
            $region166: #{tpu_custom_call.1} parent=161 // pred_fallthru
              _
            // Predicated region
            $region167: #{tpu_custom_call.1} parent=161 // pred_check
              _
            $region168: #{tpu_custom_call.1} parent=161 // pred_check_branch
              %7352 = sbr.rel target = $region170
            $region169: #{tpu_custom_call.1} parent=161 // pred_region
              %s7354 = ssub.s32 256, 1
              loop: start=0, step=1, limit=1
              $region171: #{tpu_custom_call.1} parent=169 // loop_pre_header
                _
              $region172: #{tpu_custom_call.1} parent=169 // loop_header
                %s7356 = sphi 0, %s7360
                %p7357 = scmp.ge.s32.totalorder %s7356, 1
                %s7361 = sphi %s7339, %s7339
                %s7362 = sphi %s7346, %s7346
              $region173: #{tpu_custom_call.1} parent=169 // loop_header_branch
                %7359 = sbr.rel (%p7357) target = $region177
              $region174: #{tpu_custom_call.1} parent=169 // loop_body
                %v7363 = vld [vmem:[%s7361] sm:%s7354]
                %7364 = vst [vmem:[%s7362] sm:%s7354] %v7363
                %v7365 = vld [vmem:[%s7361 + $0x8] sm:%s7354]
                %7366 = vst [vmem:[%s7362 + $0x8] sm:%s7354] %v7365
                %v7367 = vld [vmem:[%s7361 + $0x10] sm:%s7354]
                %7368 = vst [vmem:[%s7362 + $0x10] sm:%s7354] %v7367
                %v7369 = vld [vmem:[%s7361 + $0x18] sm:%s7354]
                %7370 = vst [vmem:[%s7362 + $0x18] sm:%s7354] %v7369
                %v7371 = vld [vmem:[%s7361 + $0x20] sm:%s7354]
                %7372 = vst [vmem:[%s7362 + $0x20] sm:%s7354] %v7371
                %v7373 = vld [vmem:[%s7361 + $0x28] sm:%s7354]
                %7374 = vst [vmem:[%s7362 + $0x28] sm:%s7354] %v7373
                %v7375 = vld [vmem:[%s7361 + $0x30] sm:%s7354]
                %7376 = vst [vmem:[%s7362 + $0x30] sm:%s7354] %v7375
                %v7377 = vld [vmem:[%s7361 + $0x38] sm:%s7354]
                %7378 = vst [vmem:[%s7362 + $0x38] sm:%s7354] %v7377
                %v7379 = vld [vmem:[%s7361 + $0x40] sm:%s7354]
                %7380 = vst [vmem:[%s7362 + $0x40] sm:%s7354] %v7379
                %v7381 = vld [vmem:[%s7361 + $0x48] sm:%s7354]
                %7382 = vst [vmem:[%s7362 + $0x48] sm:%s7354] %v7381
                %v7383 = vld [vmem:[%s7361 + $0x50] sm:%s7354]
                %7384 = vst [vmem:[%s7362 + $0x50] sm:%s7354] %v7383
                %v7385 = vld [vmem:[%s7361 + $0x58] sm:%s7354]
                %7386 = vst [vmem:[%s7362 + $0x58] sm:%s7354] %v7385
                %v7387 = vld [vmem:[%s7361 + $0x60] sm:%s7354]
                %7388 = vst [vmem:[%s7362 + $0x60] sm:%s7354] %v7387
                %v7389 = vld [vmem:[%s7361 + $0x68] sm:%s7354]
                %7390 = vst [vmem:[%s7362 + $0x68] sm:%s7354] %v7389
                %v7391 = vld [vmem:[%s7361 + $0x70] sm:%s7354]
                %7392 = vst [vmem:[%s7362 + $0x70] sm:%s7354] %v7391
                %v7393 = vld [vmem:[%s7361 + $0x78] sm:%s7354]
                %7394 = vst [vmem:[%s7362 + $0x78] sm:%s7354] %v7393
                %v7395 = vld [vmem:[%s7361 + $0x80] sm:%s7354]
                %7396 = vst [vmem:[%s7362 + $0x80] sm:%s7354] %v7395
                %v7397 = vld [vmem:[%s7361 + $0x88] sm:%s7354]
                %7398 = vst [vmem:[%s7362 + $0x88] sm:%s7354] %v7397
                %v7399 = vld [vmem:[%s7361 + $0x90] sm:%s7354]
                %7400 = vst [vmem:[%s7362 + $0x90] sm:%s7354] %v7399
                %v7401 = vld [vmem:[%s7361 + $0x98] sm:%s7354]
                %7402 = vst [vmem:[%s7362 + $0x98] sm:%s7354] %v7401
                %v7403 = vld [vmem:[%s7361 + $0xa0] sm:%s7354]
                %7404 = vst [vmem:[%s7362 + $0xa0] sm:%s7354] %v7403
                %v7405 = vld [vmem:[%s7361 + $0xa8] sm:%s7354]
                %7406 = vst [vmem:[%s7362 + $0xa8] sm:%s7354] %v7405
                %v7407 = vld [vmem:[%s7361 + $0xb0] sm:%s7354]
                %7408 = vst [vmem:[%s7362 + $0xb0] sm:%s7354] %v7407
                %v7409 = vld [vmem:[%s7361 + $0xb8] sm:%s7354]
                %7410 = vst [vmem:[%s7362 + $0xb8] sm:%s7354] %v7409
                %v7411 = vld [vmem:[%s7361 + $0xc0] sm:%s7354]
                %7412 = vst [vmem:[%s7362 + $0xc0] sm:%s7354] %v7411
                %v7413 = vld [vmem:[%s7361 + $0xc8] sm:%s7354]
                %7414 = vst [vmem:[%s7362 + $0xc8] sm:%s7354] %v7413
                %v7415 = vld [vmem:[%s7361 + $0xd0] sm:%s7354]
                %7416 = vst [vmem:[%s7362 + $0xd0] sm:%s7354] %v7415
                %v7417 = vld [vmem:[%s7361 + $0xd8] sm:%s7354]
                %7418 = vst [vmem:[%s7362 + $0xd8] sm:%s7354] %v7417
                %v7419 = vld [vmem:[%s7361 + $0xe0] sm:%s7354]
                %7420 = vst [vmem:[%s7362 + $0xe0] sm:%s7354] %v7419
                %v7421 = vld [vmem:[%s7361 + $0xe8] sm:%s7354]
                %7422 = vst [vmem:[%s7362 + $0xe8] sm:%s7354] %v7421
                %v7423 = vld [vmem:[%s7361 + $0xf0] sm:%s7354]
                %7424 = vst [vmem:[%s7362 + $0xf0] sm:%s7354] %v7423
                %v7425 = vld [vmem:[%s7361 + $0xf8] sm:%s7354]
                %7426 = vst [vmem:[%s7362 + $0xf8] sm:%s7354] %v7425
                %v7427 = vld [vmem:[%s7361 + $0x100] sm:%s7354]
                %7428 = vst [vmem:[%s7362 + $0x100] sm:%s7354] %v7427
                %v7429 = vld [vmem:[%s7361 + $0x108] sm:%s7354]
                %7430 = vst [vmem:[%s7362 + $0x108] sm:%s7354] %v7429
                %v7431 = vld [vmem:[%s7361 + $0x110] sm:%s7354]
                %7432 = vst [vmem:[%s7362 + $0x110] sm:%s7354] %v7431
                %v7433 = vld [vmem:[%s7361 + $0x118] sm:%s7354]
                %7434 = vst [vmem:[%s7362 + $0x118] sm:%s7354] %v7433
                %v7435 = vld [vmem:[%s7361 + $0x120] sm:%s7354]
                %7436 = vst [vmem:[%s7362 + $0x120] sm:%s7354] %v7435
                %v7437 = vld [vmem:[%s7361 + $0x128] sm:%s7354]
                %7438 = vst [vmem:[%s7362 + $0x128] sm:%s7354] %v7437
                %v7439 = vld [vmem:[%s7361 + $0x130] sm:%s7354]
                %7440 = vst [vmem:[%s7362 + $0x130] sm:%s7354] %v7439
                %v7441 = vld [vmem:[%s7361 + $0x138] sm:%s7354]
                %7442 = vst [vmem:[%s7362 + $0x138] sm:%s7354] %v7441
                %v7443 = vld [vmem:[%s7361 + $0x140] sm:%s7354]
                %7444 = vst [vmem:[%s7362 + $0x140] sm:%s7354] %v7443
                %v7445 = vld [vmem:[%s7361 + $0x148] sm:%s7354]
                %7446 = vst [vmem:[%s7362 + $0x148] sm:%s7354] %v7445
                %v7447 = vld [vmem:[%s7361 + $0x150] sm:%s7354]
                %7448 = vst [vmem:[%s7362 + $0x150] sm:%s7354] %v7447
                %v7449 = vld [vmem:[%s7361 + $0x158] sm:%s7354]
                %7450 = vst [vmem:[%s7362 + $0x158] sm:%s7354] %v7449
                %v7451 = vld [vmem:[%s7361 + $0x160] sm:%s7354]
                %7452 = vst [vmem:[%s7362 + $0x160] sm:%s7354] %v7451
                %v7453 = vld [vmem:[%s7361 + $0x168] sm:%s7354]
                %7454 = vst [vmem:[%s7362 + $0x168] sm:%s7354] %v7453
                %v7455 = vld [vmem:[%s7361 + $0x170] sm:%s7354]
                %7456 = vst [vmem:[%s7362 + $0x170] sm:%s7354] %v7455
                %v7457 = vld [vmem:[%s7361 + $0x178] sm:%s7354]
                %7458 = vst [vmem:[%s7362 + $0x178] sm:%s7354] %v7457
                %v7459 = vld [vmem:[%s7361 + $0x180] sm:%s7354]
                %7460 = vst [vmem:[%s7362 + $0x180] sm:%s7354] %v7459
                %v7461 = vld [vmem:[%s7361 + $0x188] sm:%s7354]
                %7462 = vst [vmem:[%s7362 + $0x188] sm:%s7354] %v7461
                %v7463 = vld [vmem:[%s7361 + $0x190] sm:%s7354]
                %7464 = vst [vmem:[%s7362 + $0x190] sm:%s7354] %v7463
                %v7465 = vld [vmem:[%s7361 + $0x198] sm:%s7354]
                %7466 = vst [vmem:[%s7362 + $0x198] sm:%s7354] %v7465
                %v7467 = vld [vmem:[%s7361 + $0x1a0] sm:%s7354]
                %7468 = vst [vmem:[%s7362 + $0x1a0] sm:%s7354] %v7467
                %v7469 = vld [vmem:[%s7361 + $0x1a8] sm:%s7354]
                %7470 = vst [vmem:[%s7362 + $0x1a8] sm:%s7354] %v7469
                %v7471 = vld [vmem:[%s7361 + $0x1b0] sm:%s7354]
                %7472 = vst [vmem:[%s7362 + $0x1b0] sm:%s7354] %v7471
                %v7473 = vld [vmem:[%s7361 + $0x1b8] sm:%s7354]
                %7474 = vst [vmem:[%s7362 + $0x1b8] sm:%s7354] %v7473
                %v7475 = vld [vmem:[%s7361 + $0x1c0] sm:%s7354]
                %7476 = vst [vmem:[%s7362 + $0x1c0] sm:%s7354] %v7475
                %v7477 = vld [vmem:[%s7361 + $0x1c8] sm:%s7354]
                %7478 = vst [vmem:[%s7362 + $0x1c8] sm:%s7354] %v7477
                %v7479 = vld [vmem:[%s7361 + $0x1d0] sm:%s7354]
                %7480 = vst [vmem:[%s7362 + $0x1d0] sm:%s7354] %v7479
                %v7481 = vld [vmem:[%s7361 + $0x1d8] sm:%s7354]
                %7482 = vst [vmem:[%s7362 + $0x1d8] sm:%s7354] %v7481
                %v7483 = vld [vmem:[%s7361 + $0x1e0] sm:%s7354]
                %7484 = vst [vmem:[%s7362 + $0x1e0] sm:%s7354] %v7483
                %v7485 = vld [vmem:[%s7361 + $0x1e8] sm:%s7354]
                %7486 = vst [vmem:[%s7362 + $0x1e8] sm:%s7354] %v7485
                %v7487 = vld [vmem:[%s7361 + $0x1f0] sm:%s7354]
                %7488 = vst [vmem:[%s7362 + $0x1f0] sm:%s7354] %v7487
                %v7489 = vld [vmem:[%s7361 + $0x1f8] sm:%s7354]
                %7490 = vst [vmem:[%s7362 + $0x1f8] sm:%s7354] %v7489
                %v7491 = vld [vmem:[%s7361 + $0x200] sm:%s7354]
                %7492 = vst [vmem:[%s7362 + $0x400] sm:%s7354] %v7491
                %v7493 = vld [vmem:[%s7361 + $0x208] sm:%s7354]
                %7494 = vst [vmem:[%s7362 + $0x408] sm:%s7354] %v7493
                %v7495 = vld [vmem:[%s7361 + $0x210] sm:%s7354]
                %7496 = vst [vmem:[%s7362 + $0x410] sm:%s7354] %v7495
                %v7497 = vld [vmem:[%s7361 + $0x218] sm:%s7354]
                %7498 = vst [vmem:[%s7362 + $0x418] sm:%s7354] %v7497
                %v7499 = vld [vmem:[%s7361 + $0x220] sm:%s7354]
                %7500 = vst [vmem:[%s7362 + $0x420] sm:%s7354] %v7499
                %v7501 = vld [vmem:[%s7361 + $0x228] sm:%s7354]
                %7502 = vst [vmem:[%s7362 + $0x428] sm:%s7354] %v7501
                %v7503 = vld [vmem:[%s7361 + $0x230] sm:%s7354]
                %7504 = vst [vmem:[%s7362 + $0x430] sm:%s7354] %v7503
                %v7505 = vld [vmem:[%s7361 + $0x238] sm:%s7354]
                %7506 = vst [vmem:[%s7362 + $0x438] sm:%s7354] %v7505
                %v7507 = vld [vmem:[%s7361 + $0x240] sm:%s7354]
                %7508 = vst [vmem:[%s7362 + $0x440] sm:%s7354] %v7507
                %v7509 = vld [vmem:[%s7361 + $0x248] sm:%s7354]
                %7510 = vst [vmem:[%s7362 + $0x448] sm:%s7354] %v7509
                %v7511 = vld [vmem:[%s7361 + $0x250] sm:%s7354]
                %7512 = vst [vmem:[%s7362 + $0x450] sm:%s7354] %v7511
                %v7513 = vld [vmem:[%s7361 + $0x258] sm:%s7354]
                %7514 = vst [vmem:[%s7362 + $0x458] sm:%s7354] %v7513
                %v7515 = vld [vmem:[%s7361 + $0x260] sm:%s7354]
                %7516 = vst [vmem:[%s7362 + $0x460] sm:%s7354] %v7515
                %v7517 = vld [vmem:[%s7361 + $0x268] sm:%s7354]
                %7518 = vst [vmem:[%s7362 + $0x468] sm:%s7354] %v7517
                %v7519 = vld [vmem:[%s7361 + $0x270] sm:%s7354]
                %7520 = vst [vmem:[%s7362 + $0x470] sm:%s7354] %v7519
                %v7521 = vld [vmem:[%s7361 + $0x278] sm:%s7354]
                %7522 = vst [vmem:[%s7362 + $0x478] sm:%s7354] %v7521
                %v7523 = vld [vmem:[%s7361 + $0x280] sm:%s7354]
                %7524 = vst [vmem:[%s7362 + $0x480] sm:%s7354] %v7523
                %v7525 = vld [vmem:[%s7361 + $0x288] sm:%s7354]
                %7526 = vst [vmem:[%s7362 + $0x488] sm:%s7354] %v7525
                %v7527 = vld [vmem:[%s7361 + $0x290] sm:%s7354]
                %7528 = vst [vmem:[%s7362 + $0x490] sm:%s7354] %v7527
                %v7529 = vld [vmem:[%s7361 + $0x298] sm:%s7354]
                %7530 = vst [vmem:[%s7362 + $0x498] sm:%s7354] %v7529
                %v7531 = vld [vmem:[%s7361 + $0x2a0] sm:%s7354]
                %7532 = vst [vmem:[%s7362 + $0x4a0] sm:%s7354] %v7531
                %v7533 = vld [vmem:[%s7361 + $0x2a8] sm:%s7354]
                %7534 = vst [vmem:[%s7362 + $0x4a8] sm:%s7354] %v7533
                %v7535 = vld [vmem:[%s7361 + $0x2b0] sm:%s7354]
                %7536 = vst [vmem:[%s7362 + $0x4b0] sm:%s7354] %v7535
                %v7537 = vld [vmem:[%s7361 + $0x2b8] sm:%s7354]
                %7538 = vst [vmem:[%s7362 + $0x4b8] sm:%s7354] %v7537
                %v7539 = vld [vmem:[%s7361 + $0x2c0] sm:%s7354]
                %7540 = vst [vmem:[%s7362 + $0x4c0] sm:%s7354] %v7539
                %v7541 = vld [vmem:[%s7361 + $0x2c8] sm:%s7354]
                %7542 = vst [vmem:[%s7362 + $0x4c8] sm:%s7354] %v7541
                %v7543 = vld [vmem:[%s7361 + $0x2d0] sm:%s7354]
                %7544 = vst [vmem:[%s7362 + $0x4d0] sm:%s7354] %v7543
                %v7545 = vld [vmem:[%s7361 + $0x2d8] sm:%s7354]
                %7546 = vst [vmem:[%s7362 + $0x4d8] sm:%s7354] %v7545
                %v7547 = vld [vmem:[%s7361 + $0x2e0] sm:%s7354]
                %7548 = vst [vmem:[%s7362 + $0x4e0] sm:%s7354] %v7547
                %v7549 = vld [vmem:[%s7361 + $0x2e8] sm:%s7354]
                %7550 = vst [vmem:[%s7362 + $0x4e8] sm:%s7354] %v7549
                %v7551 = vld [vmem:[%s7361 + $0x2f0] sm:%s7354]
                %7552 = vst [vmem:[%s7362 + $0x4f0] sm:%s7354] %v7551
                %v7553 = vld [vmem:[%s7361 + $0x2f8] sm:%s7354]
                %7554 = vst [vmem:[%s7362 + $0x4f8] sm:%s7354] %v7553
                %v7555 = vld [vmem:[%s7361 + $0x300] sm:%s7354]
                %7556 = vst [vmem:[%s7362 + $0x500] sm:%s7354] %v7555
                %v7557 = vld [vmem:[%s7361 + $0x308] sm:%s7354]
                %7558 = vst [vmem:[%s7362 + $0x508] sm:%s7354] %v7557
                %v7559 = vld [vmem:[%s7361 + $0x310] sm:%s7354]
                %7560 = vst [vmem:[%s7362 + $0x510] sm:%s7354] %v7559
                %v7561 = vld [vmem:[%s7361 + $0x318] sm:%s7354]
                %7562 = vst [vmem:[%s7362 + $0x518] sm:%s7354] %v7561
                %v7563 = vld [vmem:[%s7361 + $0x320] sm:%s7354]
                %7564 = vst [vmem:[%s7362 + $0x520] sm:%s7354] %v7563
                %v7565 = vld [vmem:[%s7361 + $0x328] sm:%s7354]
                %7566 = vst [vmem:[%s7362 + $0x528] sm:%s7354] %v7565
                %v7567 = vld [vmem:[%s7361 + $0x330] sm:%s7354]
                %7568 = vst [vmem:[%s7362 + $0x530] sm:%s7354] %v7567
                %v7569 = vld [vmem:[%s7361 + $0x338] sm:%s7354]
                %7570 = vst [vmem:[%s7362 + $0x538] sm:%s7354] %v7569
                %v7571 = vld [vmem:[%s7361 + $0x340] sm:%s7354]
                %7572 = vst [vmem:[%s7362 + $0x540] sm:%s7354] %v7571
                %v7573 = vld [vmem:[%s7361 + $0x348] sm:%s7354]
                %7574 = vst [vmem:[%s7362 + $0x548] sm:%s7354] %v7573
                %v7575 = vld [vmem:[%s7361 + $0x350] sm:%s7354]
                %7576 = vst [vmem:[%s7362 + $0x550] sm:%s7354] %v7575
                %v7577 = vld [vmem:[%s7361 + $0x358] sm:%s7354]
                %7578 = vst [vmem:[%s7362 + $0x558] sm:%s7354] %v7577
                %v7579 = vld [vmem:[%s7361 + $0x360] sm:%s7354]
                %7580 = vst [vmem:[%s7362 + $0x560] sm:%s7354] %v7579
                %v7581 = vld [vmem:[%s7361 + $0x368] sm:%s7354]
                %7582 = vst [vmem:[%s7362 + $0x568] sm:%s7354] %v7581
                %v7583 = vld [vmem:[%s7361 + $0x370] sm:%s7354]
                %7584 = vst [vmem:[%s7362 + $0x570] sm:%s7354] %v7583
                %v7585 = vld [vmem:[%s7361 + $0x378] sm:%s7354]
                %7586 = vst [vmem:[%s7362 + $0x578] sm:%s7354] %v7585
                %v7587 = vld [vmem:[%s7361 + $0x380] sm:%s7354]
                %7588 = vst [vmem:[%s7362 + $0x580] sm:%s7354] %v7587
                %v7589 = vld [vmem:[%s7361 + $0x388] sm:%s7354]
                %7590 = vst [vmem:[%s7362 + $0x588] sm:%s7354] %v7589
                %v7591 = vld [vmem:[%s7361 + $0x390] sm:%s7354]
                %7592 = vst [vmem:[%s7362 + $0x590] sm:%s7354] %v7591
                %v7593 = vld [vmem:[%s7361 + $0x398] sm:%s7354]
                %7594 = vst [vmem:[%s7362 + $0x598] sm:%s7354] %v7593
                %v7595 = vld [vmem:[%s7361 + $0x3a0] sm:%s7354]
                %7596 = vst [vmem:[%s7362 + $0x5a0] sm:%s7354] %v7595
                %v7597 = vld [vmem:[%s7361 + $0x3a8] sm:%s7354]
                %7598 = vst [vmem:[%s7362 + $0x5a8] sm:%s7354] %v7597
                %v7599 = vld [vmem:[%s7361 + $0x3b0] sm:%s7354]
                %7600 = vst [vmem:[%s7362 + $0x5b0] sm:%s7354] %v7599
                %v7601 = vld [vmem:[%s7361 + $0x3b8] sm:%s7354]
                %7602 = vst [vmem:[%s7362 + $0x5b8] sm:%s7354] %v7601
                %v7603 = vld [vmem:[%s7361 + $0x3c0] sm:%s7354]
                %7604 = vst [vmem:[%s7362 + $0x5c0] sm:%s7354] %v7603
                %v7605 = vld [vmem:[%s7361 + $0x3c8] sm:%s7354]
                %7606 = vst [vmem:[%s7362 + $0x5c8] sm:%s7354] %v7605
                %v7607 = vld [vmem:[%s7361 + $0x3d0] sm:%s7354]
                %7608 = vst [vmem:[%s7362 + $0x5d0] sm:%s7354] %v7607
                %v7609 = vld [vmem:[%s7361 + $0x3d8] sm:%s7354]
                %7610 = vst [vmem:[%s7362 + $0x5d8] sm:%s7354] %v7609
                %v7611 = vld [vmem:[%s7361 + $0x3e0] sm:%s7354]
                %7612 = vst [vmem:[%s7362 + $0x5e0] sm:%s7354] %v7611
                %v7613 = vld [vmem:[%s7361 + $0x3e8] sm:%s7354]
                %7614 = vst [vmem:[%s7362 + $0x5e8] sm:%s7354] %v7613
                %v7615 = vld [vmem:[%s7361 + $0x3f0] sm:%s7354]
                %7616 = vst [vmem:[%s7362 + $0x5f0] sm:%s7354] %v7615
                %v7617 = vld [vmem:[%s7361 + $0x3f8] sm:%s7354]
                %7618 = vst [vmem:[%s7362 + $0x5f8] sm:%s7354] %v7617
              $region175: #{tpu_custom_call.1} parent=169 // loop_footer
                %s7360 = sadd.s32 1, %s7356
              $region176: #{tpu_custom_call.1} parent=169 // loop_footer_branch
                %7355 = sbr.rel target = $region172
              $region177: #{tpu_custom_call.1} parent=169 // loop_exit
                _
            $region170: #{tpu_custom_call.1} parent=161 // pred_fallthru
              _
          $region162: #{tpu_custom_call.1} parent=157 // pred_fallthru
            _
          %7887 = vnop
        $region158: #{tpu_custom_call.1} parent=141 // pred_fallthru
          _
      $region142: #{tpu_custom_call.1} parent=5 // pred_fallthru
        _
      %p7888 = scmp.le.s32.totalorder 2, %s11
      // Predicated region
      $region193: #{tpu_custom_call.1} parent=5 // pred_check
        %p7889 = pneg %p7888
      $region194: #{tpu_custom_call.1} parent=5 // pred_check_branch
        %7891 = sbr.rel (%p7889) target = $region196
      $region195: #{tpu_custom_call.1} parent=5 // pred_region
        %s7892 = ssub.s32 %s11, 2
        // Predicated region
        $region197: #{tpu_custom_call.1} parent=195 // pred_check
          %p7893 = pneg %p200
        $region198: #{tpu_custom_call.1} parent=195 // pred_check_branch
          %7895 = sbr.rel (%p7893) target = $region200
        $region199: #{tpu_custom_call.1} parent=195 // pred_region
          %s7896 = sand.u32 %s185, 1
          %s7897 = sand.u32 %s185, 1
          %s7898 = smul.addr %s7897, 1024
          %s7899 = scalar_lea.vmem [#allocation5], %s7898
        $region200: #{tpu_custom_call.1} parent=195 // pred_fallthru
          _
      $region196: #{tpu_custom_call.1} parent=5 // pred_fallthru
        _
    $region6: #{tpu_custom_call.1} parent=1 // loop_footer
      %s15 = sadd.s32 1, %s11
    $region7: #{tpu_custom_call.1} parent=1 // loop_footer_branch
      %10 = sbr.rel target = $region3
    $region8: #{tpu_custom_call.1} parent=1 // loop_exit
      _

</llo_original>
